<compile_context>
chip_gen: v5e
topology: v5e:2x2
jax: 0.10.0
libtpu: 0.0.40
codegen_flags: <defaults>
</compile_context>

<pallas_src>
import numpy as np
import jax
import jax.numpy as jnp
from jax.experimental import pallas as pl
from jax.experimental.pallas import tpu as pltpu

# (in_features, out_features) per layer, matching the PyTorch module.
LAYER_DIMS = [
    (784, 392), (392, 196), (196, 98), (98, 16),   # encoder
    (16, 98), (98, 196), (196, 392), (392, 784),   # decoder
]
N_LAYERS = len(LAYER_DIMS)
IN_DIM = LAYER_DIMS[0][0]      # 784, fed to the kernel unpadded (full-array dim)
OUT_DIM = LAYER_DIMS[-1][1]    # 784, written by the kernel unpadded


def _round_up(n, m):
    return ((n + m - 1) // m) * m


# Pad only the internal dims to lane multiples (128); keep the kernel-facing
# input/output dims at 784 so the wrapper never pads or slices feature dims.
PADDED_DIMS = []
for _li, (_fi, _fo) in enumerate(LAYER_DIMS):
    _fi_p = _fi if _li == 0 else _round_up(_fi, 128)
    _fo_p = _fo if _li == N_LAYERS - 1 else _round_up(_fo, 128)
    PADDED_DIMS.append((_fi_p, _fo_p))

TM_MAX = 512        # max batch-tile rows per grid step
TM_MIN_SPLIT = 128  # don't split a small batch below this per-tile size


def _batch_tiling(batch):
    """Pick (tile_rows, padded_batch). Large batches use 512-row tiles; small batches
    get one tile, split 2 ways when possible so v7x's two TCs both get work."""
    bp = _round_up(batch, 8)
    if bp <= TM_MAX:
        if bp % 16 == 0 and bp // 2 >= TM_MIN_SPLIT:
            return bp // 2, bp
        return bp, bp
    return TM_MAX, _round_up(batch, TM_MAX)


def _ae_kernel(x_ref, *refs):
    """Fused forward for one batch tile: 8x (bf16 matmul -> f32 acc -> +bias -> ReLU)."""
    out_ref = refs[-1]
    params = refs[:-1]                      # w0, b0, w1, b1, ..., w7, b7 (all VMEM-resident)
    h = x_ref[...].astype(jnp.bfloat16)     # (TM, 784): f32 -> bf16 cast on-chip (VPU)
    for i in range(N_LAYERS):
        w = params[2 * i][...]              # (in_p, out_p) bf16
        b = params[2 * i + 1][...]          # (1, out_p)    f32
        acc = jnp.dot(h, w, preferred_element_type=jnp.float32) + b
        acc = jnp.maximum(acc, 0.0)         # ReLU after every layer (incl. dec4A)
        if i < N_LAYERS - 1:
            h = acc.astype(jnp.bfloat16)
        else:
            out_ref[...] = acc.astype(out_ref.dtype)


@jax.jit
def ae_forward(x, params):
    """x: (B, 784) float32; params: flat list [w0, b0, ..., w7, b7] (padded, w bf16 / b f32)."""
    batch = x.shape[0]
    tm, bp = _batch_tiling(batch)
    n_tiles = bp // tm

    # Batch is only padded when it isn't tile-aligned (rare); feature dims never are.
    x_in = x if bp == batch else jnp.zeros((bp, IN_DIM), x.dtype).at[:batch].set(x)

    resident = dict(pipeline_mode=pl.Buffered(1))   # fetched once, single-buffered
    in_specs = [pl.BlockSpec((tm, IN_DIM), lambda i: (i, 0))]          # activations stream
    for (fi_p, fo_p) in PADDED_DIMS:
        in_specs.append(pl.BlockSpec((fi_p, fo_p), lambda i: (0, 0), **resident))  # weight
        in_specs.append(pl.BlockSpec((1, fo_p), lambda i: (0, 0), **resident))     # bias
    out_spec = pl.BlockSpec((tm, OUT_DIM), lambda i: (i, 0))

    param_bytes = sum(fi_p * fo_p * 2 + fo_p * 4 for (fi_p, fo_p) in PADDED_DIMS)
    cost = pl.CostEstimate(
        flops=2 * bp * sum(fi_p * fo_p for (fi_p, fo_p) in PADDED_DIMS),
        transcendentals=0,
        bytes_accessed=param_bytes + bp * IN_DIM * 4 + bp * OUT_DIM * 4,
    )

    out = pl.pallas_call(
        _ae_kernel,
        out_shape=jax.ShapeDtypeStruct((bp, OUT_DIM), jnp.float32),
        grid_spec=pltpu.PrefetchScalarGridSpec(
            num_scalar_prefetch=0,
            grid=(n_tiles,),
            in_specs=in_specs,
            out_specs=out_spec,
        ),
        compiler_params=pltpu.CompilerParams(
            dimension_semantics=("parallel",),     # v7x: batch tiles split across the 2 TCs
            vmem_limit_bytes=32 << 20,             # ~12-16 MB live at TM=512; fits all gens
        ),
        cost_estimate=cost,
    )(x_in, *params)

    return out if bp == batch else out[:batch]


def init_params(key):
    """PyTorch nn.Linear-style init (U[-1/sqrt(fan_in), 1/sqrt(fan_in)]), padded; weights bf16."""
    params = []
    for li, (fi, fo) in enumerate(LAYER_DIMS):
        key, kw, kb = jax.random.split(key, 3)
        bound = 1.0 / np.sqrt(fi)
        # Stored as (in, out) == PyTorch weight (out, in) transposed.
        w = jax.random.uniform(kw, (fi, fo), jnp.float32, -bound, bound)
        b = jax.random.uniform(kb, (fo,), jnp.float32, -bound, bound)
        fi_p, fo_p = PADDED_DIMS[li]
        w_p = jnp.zeros((fi_p, fo_p), jnp.float32).at[:fi, :fo].set(w).astype(jnp.bfloat16)
        b_p = jnp.zeros((1, fo_p), jnp.float32).at[0, :fo].set(b)   # padded bias entries stay 0
        params += [w_p, b_p]
    return params


def ae_forward_ref(x, params):
    """Pure-JAX reference mirroring the kernel math (bf16 matmul inputs, f32 accumulate)."""
    h = x.astype(jnp.bfloat16)
    for i in range(N_LAYERS):
        w, b = params[2 * i], params[2 * i + 1]
        acc = jnp.maximum(jnp.dot(h, w, preferred_element_type=jnp.float32) + b, 0.0)
        h = acc.astype(jnp.bfloat16) if i < N_LAYERS - 1 else acc
    return h   # (B, 784): last layer's output dim is unpadded


if __name__ == "__main__":
    key = jax.random.PRNGKey(0)
    key, kx = jax.random.split(key)

    batch = 256   # -> 2 batch tiles of 128 rows: exercises the grid, megacore split, residency
    x = jax.random.uniform(kx, (batch, 784), jnp.float32)   # MNIST-like pixels in [0, 1)

    params = init_params(key)

    out = jax.block_until_ready(ae_forward(x, params))
    ref = ae_forward_ref(x, params)

    assert out.shape == (batch, 784)
    assert jnp.allclose(out, ref, atol=2e-2, rtol=2e-2), "Pallas output mismatch vs JAX reference"

    print("KERNEL_OK")
</pallas_src>

<mosaic_0001>
module attributes {stable_mosaic.version = 11 : i64} {
  func.func @_ae_kernel(%arg0: i32, %arg1: memref<128x784xf32, #tpu.memory_space<vmem>>, %arg2: memref<784x512xbf16, #tpu.memory_space<vmem>>, %arg3: memref<1x512xf32, #tpu.memory_space<vmem>>, %arg4: memref<512x256xbf16, #tpu.memory_space<vmem>>, %arg5: memref<1x256xf32, #tpu.memory_space<vmem>>, %arg6: memref<256x128xbf16, #tpu.memory_space<vmem>>, %arg7: memref<1x128xf32, #tpu.memory_space<vmem>>, %arg8: memref<128x128xbf16, #tpu.memory_space<vmem>>, %arg9: memref<1x128xf32, #tpu.memory_space<vmem>>, %arg10: memref<128x128xbf16, #tpu.memory_space<vmem>>, %arg11: memref<1x128xf32, #tpu.memory_space<vmem>>, %arg12: memref<128x256xbf16, #tpu.memory_space<vmem>>, %arg13: memref<1x256xf32, #tpu.memory_space<vmem>>, %arg14: memref<256x512xbf16, #tpu.memory_space<vmem>>, %arg15: memref<1x512xf32, #tpu.memory_space<vmem>>, %arg16: memref<512x784xbf16, #tpu.memory_space<vmem>>, %arg17: memref<1x784xf32, #tpu.memory_space<vmem>>, %arg18: memref<128x784xf32, #tpu.memory_space<vmem>>) attributes {dimension_semantics = [#tpu.dimension_semantics<parallel>], iteration_bounds = array<i64: 2>, scalar_prefetch = 0 : i64, scratch_operands = 0 : i64, tpu.core_type = #tpu.core_type<tc>, window_params = [{transform_indices = @transform_0, window_bounds = array<i64: 128, 784>}, {pipeline_mode = #tpu.pipeline_mode<synchronous>, transform_indices = @transform_1, window_bounds = array<i64: 784, 512>}, {pipeline_mode = #tpu.pipeline_mode<synchronous>, transform_indices = @transform_2, window_bounds = array<i64: 1, 512>}, {pipeline_mode = #tpu.pipeline_mode<synchronous>, transform_indices = @transform_3, window_bounds = array<i64: 512, 256>}, {pipeline_mode = #tpu.pipeline_mode<synchronous>, transform_indices = @transform_4, window_bounds = array<i64: 1, 256>}, {pipeline_mode = #tpu.pipeline_mode<synchronous>, transform_indices = @transform_5, window_bounds = array<i64: 256, 128>}, {pipeline_mode = #tpu.pipeline_mode<synchronous>, transform_indices = @transform_6, window_bounds = array<i64: 1, 128>}, {pipeline_mode = #tpu.pipeline_mode<synchronous>, transform_indices = @transform_7, window_bounds = array<i64: 128, 128>}, {pipeline_mode = #tpu.pipeline_mode<synchronous>, transform_indices = @transform_8, window_bounds = array<i64: 1, 128>}, {pipeline_mode = #tpu.pipeline_mode<synchronous>, transform_indices = @transform_9, window_bounds = array<i64: 128, 128>}, {pipeline_mode = #tpu.pipeline_mode<synchronous>, transform_indices = @transform_10, window_bounds = array<i64: 1, 128>}, {pipeline_mode = #tpu.pipeline_mode<synchronous>, transform_indices = @transform_11, window_bounds = array<i64: 128, 256>}, {pipeline_mode = #tpu.pipeline_mode<synchronous>, transform_indices = @transform_12, window_bounds = array<i64: 1, 256>}, {pipeline_mode = #tpu.pipeline_mode<synchronous>, transform_indices = @transform_13, window_bounds = array<i64: 256, 512>}, {pipeline_mode = #tpu.pipeline_mode<synchronous>, transform_indices = @transform_14, window_bounds = array<i64: 1, 512>}, {pipeline_mode = #tpu.pipeline_mode<synchronous>, transform_indices = @transform_15, window_bounds = array<i64: 512, 784>}, {pipeline_mode = #tpu.pipeline_mode<synchronous>, transform_indices = @transform_16, window_bounds = array<i64: 1, 784>}, {transform_indices = @transform_17, window_bounds = array<i64: 128, 784>}]} {
    %c0 = arith.constant 0 : index
    %c0_0 = arith.constant 0 : index
    %0 = vector.load %arg1[%c0, %c0_0] : memref<128x784xf32, #tpu.memory_space<vmem>>, vector<128x784xf32>
    %1 = arith.truncf %0 : vector<128x784xf32> to vector<128x784xbf16>
    %c0_1 = arith.constant 0 : index
    %c0_2 = arith.constant 0 : index
    %2 = vector.load %arg2[%c0_1, %c0_2] : memref<784x512xbf16, #tpu.memory_space<vmem>>, vector<784x512xbf16>
    %c0_3 = arith.constant 0 : index
    %c0_4 = arith.constant 0 : index
    %3 = vector.load %arg3[%c0_3, %c0_4] : memref<1x512xf32, #tpu.memory_space<vmem>>, vector<1x512xf32>
    %cst = arith.constant dense<0.000000e+00> : vector<128x512xf32>
    %4 = tpu.matmul %1, %2, %cst {dimension_numbers = #tpu.dot_dimension_numbers<[1], [0], [0], [1], [0, 0, 1, 1], [], []>} : vector<128x784xbf16>, vector<784x512xbf16>, vector<128x512xf32> -> vector<128x512xf32>
    %5 = vector.broadcast %3 : vector<1x512xf32> to vector<128x512xf32>
    %6 = arith.addf %4, %5 : vector<128x512xf32>
    %cst_5 = arith.constant 0.000000e+00 : f32
    %7 = vector.broadcast %cst_5 : f32 to vector<128x512xf32>
    %8 = arith.maximumf %6, %7 : vector<128x512xf32>
    %9 = arith.truncf %8 : vector<128x512xf32> to vector<128x512xbf16>
    %c0_6 = arith.constant 0 : index
    %c0_7 = arith.constant 0 : index
    %10 = vector.load %arg4[%c0_6, %c0_7] : memref<512x256xbf16, #tpu.memory_space<vmem>>, vector<512x256xbf16>
    %c0_8 = arith.constant 0 : index
    %c0_9 = arith.constant 0 : index
    %11 = vector.load %arg5[%c0_8, %c0_9] : memref<1x256xf32, #tpu.memory_space<vmem>>, vector<1x256xf32>
    %cst_10 = arith.constant dense<0.000000e+00> : vector<128x256xf32>
    %12 = tpu.matmul %9, %10, %cst_10 {dimension_numbers = #tpu.dot_dimension_numbers<[1], [0], [0], [1], [0, 0, 1, 1], [], []>} : vector<128x512xbf16>, vector<512x256xbf16>, vector<128x256xf32> -> vector<128x256xf32>
    %13 = vector.broadcast %11 : vector<1x256xf32> to vector<128x256xf32>
    %14 = arith.addf %12, %13 : vector<128x256xf32>
    %cst_11 = arith.constant 0.000000e+00 : f32
    %15 = vector.broadcast %cst_11 : f32 to vector<128x256xf32>
    %16 = arith.maximumf %14, %15 : vector<128x256xf32>
    %17 = arith.truncf %16 : vector<128x256xf32> to vector<128x256xbf16>
    %c0_12 = arith.constant 0 : index
    %c0_13 = arith.constant 0 : index
    %18 = vector.load %arg6[%c0_12, %c0_13] : memref<256x128xbf16, #tpu.memory_space<vmem>>, vector<256x128xbf16>
    %c0_14 = arith.constant 0 : index
    %c0_15 = arith.constant 0 : index
    %19 = vector.load %arg7[%c0_14, %c0_15] : memref<1x128xf32, #tpu.memory_space<vmem>>, vector<1x128xf32>
    %cst_16 = arith.constant dense<0.000000e+00> : vector<128x128xf32>
    %20 = tpu.matmul %17, %18, %cst_16 {dimension_numbers = #tpu.dot_dimension_numbers<[1], [0], [0], [1], [0, 0, 1, 1], [], []>} : vector<128x256xbf16>, vector<256x128xbf16>, vector<128x128xf32> -> vector<128x128xf32>
    %21 = vector.broadcast %19 : vector<1x128xf32> to vector<128x128xf32>
    %22 = arith.addf %20, %21 : vector<128x128xf32>
    %cst_17 = arith.constant 0.000000e+00 : f32
    %23 = vector.broadcast %cst_17 : f32 to vector<128x128xf32>
    %24 = arith.maximumf %22, %23 : vector<128x128xf32>
    %25 = arith.truncf %24 : vector<128x128xf32> to vector<128x128xbf16>
    %c0_18 = arith.constant 0 : index
    %c0_19 = arith.constant 0 : index
    %26 = vector.load %arg8[%c0_18, %c0_19] : memref<128x128xbf16, #tpu.memory_space<vmem>>, vector<128x128xbf16>
    %c0_20 = arith.constant 0 : index
    %c0_21 = arith.constant 0 : index
    %27 = vector.load %arg9[%c0_20, %c0_21] : memref<1x128xf32, #tpu.memory_space<vmem>>, vector<1x128xf32>
    %cst_22 = arith.constant dense<0.000000e+00> : vector<128x128xf32>
    %28 = tpu.matmul %25, %26, %cst_22 {dimension_numbers = #tpu.dot_dimension_numbers<[1], [0], [0], [1], [0, 0, 1, 1], [], []>} : vector<128x128xbf16>, vector<128x128xbf16>, vector<128x128xf32> -> vector<128x128xf32>
    %29 = vector.broadcast %27 : vector<1x128xf32> to vector<128x128xf32>
    %30 = arith.addf %28, %29 : vector<128x128xf32>
    %cst_23 = arith.constant 0.000000e+00 : f32
    %31 = vector.broadcast %cst_23 : f32 to vector<128x128xf32>
    %32 = arith.maximumf %30, %31 : vector<128x128xf32>
    %33 = arith.truncf %32 : vector<128x128xf32> to vector<128x128xbf16>
    %c0_24 = arith.constant 0 : index
    %c0_25 = arith.constant 0 : index
    %34 = vector.load %arg10[%c0_24, %c0_25] : memref<128x128xbf16, #tpu.memory_space<vmem>>, vector<128x128xbf16>
    %c0_26 = arith.constant 0 : index
    %c0_27 = arith.constant 0 : index
    %35 = vector.load %arg11[%c0_26, %c0_27] : memref<1x128xf32, #tpu.memory_space<vmem>>, vector<1x128xf32>
    %cst_28 = arith.constant dense<0.000000e+00> : vector<128x128xf32>
    %36 = tpu.matmul %33, %34, %cst_28 {dimension_numbers = #tpu.dot_dimension_numbers<[1], [0], [0], [1], [0, 0, 1, 1], [], []>} : vector<128x128xbf16>, vector<128x128xbf16>, vector<128x128xf32> -> vector<128x128xf32>
    %37 = vector.broadcast %35 : vector<1x128xf32> to vector<128x128xf32>
    %38 = arith.addf %36, %37 : vector<128x128xf32>
    %cst_29 = arith.constant 0.000000e+00 : f32
    %39 = vector.broadcast %cst_29 : f32 to vector<128x128xf32>
    %40 = arith.maximumf %38, %39 : vector<128x128xf32>
    %41 = arith.truncf %40 : vector<128x128xf32> to vector<128x128xbf16>
    %c0_30 = arith.constant 0 : index
    %c0_31 = arith.constant 0 : index
    %42 = vector.load %arg12[%c0_30, %c0_31] : memref<128x256xbf16, #tpu.memory_space<vmem>>, vector<128x256xbf16>
    %c0_32 = arith.constant 0 : index
    %c0_33 = arith.constant 0 : index
    %43 = vector.load %arg13[%c0_32, %c0_33] : memref<1x256xf32, #tpu.memory_space<vmem>>, vector<1x256xf32>
    %cst_34 = arith.constant dense<0.000000e+00> : vector<128x256xf32>
    %44 = tpu.matmul %41, %42, %cst_34 {dimension_numbers = #tpu.dot_dimension_numbers<[1], [0], [0], [1], [0, 0, 1, 1], [], []>} : vector<128x128xbf16>, vector<128x256xbf16>, vector<128x256xf32> -> vector<128x256xf32>
    %45 = vector.broadcast %43 : vector<1x256xf32> to vector<128x256xf32>
    %46 = arith.addf %44, %45 : vector<128x256xf32>
    %cst_35 = arith.constant 0.000000e+00 : f32
    %47 = vector.broadcast %cst_35 : f32 to vector<128x256xf32>
    %48 = arith.maximumf %46, %47 : vector<128x256xf32>
    %49 = arith.truncf %48 : vector<128x256xf32> to vector<128x256xbf16>
    %c0_36 = arith.constant 0 : index
    %c0_37 = arith.constant 0 : index
    %50 = vector.load %arg14[%c0_36, %c0_37] : memref<256x512xbf16, #tpu.memory_space<vmem>>, vector<256x512xbf16>
    %c0_38 = arith.constant 0 : index
    %c0_39 = arith.constant 0 : index
    %51 = vector.load %arg15[%c0_38, %c0_39] : memref<1x512xf32, #tpu.memory_space<vmem>>, vector<1x512xf32>
    %cst_40 = arith.constant dense<0.000000e+00> : vector<128x512xf32>
    %52 = tpu.matmul %49, %50, %cst_40 {dimension_numbers = #tpu.dot_dimension_numbers<[1], [0], [0], [1], [0, 0, 1, 1], [], []>} : vector<128x256xbf16>, vector<256x512xbf16>, vector<128x512xf32> -> vector<128x512xf32>
    %53 = vector.broadcast %51 : vector<1x512xf32> to vector<128x512xf32>
    %54 = arith.addf %52, %53 : vector<128x512xf32>
    %cst_41 = arith.constant 0.000000e+00 : f32
    %55 = vector.broadcast %cst_41 : f32 to vector<128x512xf32>
    %56 = arith.maximumf %54, %55 : vector<128x512xf32>
    %57 = arith.truncf %56 : vector<128x512xf32> to vector<128x512xbf16>
    %c0_42 = arith.constant 0 : index
    %c0_43 = arith.constant 0 : index
    %58 = vector.load %arg16[%c0_42, %c0_43] : memref<512x784xbf16, #tpu.memory_space<vmem>>, vector<512x784xbf16>
    %c0_44 = arith.constant 0 : index
    %c0_45 = arith.constant 0 : index
    %59 = vector.load %arg17[%c0_44, %c0_45] : memref<1x784xf32, #tpu.memory_space<vmem>>, vector<1x784xf32>
    %cst_46 = arith.constant dense<0.000000e+00> : vector<128x784xf32>
    %60 = tpu.matmul %57, %58, %cst_46 {dimension_numbers = #tpu.dot_dimension_numbers<[1], [0], [0], [1], [0, 0, 1, 1], [], []>} : vector<128x512xbf16>, vector<512x784xbf16>, vector<128x784xf32> -> vector<128x784xf32>
    %61 = vector.broadcast %59 : vector<1x784xf32> to vector<128x784xf32>
    %62 = arith.addf %60, %61 : vector<128x784xf32>
    %cst_47 = arith.constant 0.000000e+00 : f32
    %63 = vector.broadcast %cst_47 : f32 to vector<128x784xf32>
    %64 = arith.maximumf %62, %63 : vector<128x784xf32>
    %c0_48 = arith.constant 0 : index
    %c0_49 = arith.constant 0 : index
    %65 = vector.load %arg18[%c0_48, %c0_49] : memref<128x784xf32, #tpu.memory_space<vmem>>, vector<128x784xf32>
    tpu.vector_store %arg18[%c0_48, %c0_49], %64 {strides = array<i32>} : memref<128x784xf32, #tpu.memory_space<vmem>>, vector<128x784xf32>,
    return
  }
  func.func @transform_0(%arg0: i32) -> (i32, i32) {
    %c0_i32 = arith.constant 0 : i32
    %c0_i32_0 = arith.constant 0 : i32
    return %arg0, %c0_i32 : i32, i32
  }
  func.func @transform_1(%arg0: i32) -> (i32, i32) {
    %c0_i32 = arith.constant 0 : i32
    %c0_i32_0 = arith.constant 0 : i32
    %c0_i32_1 = arith.constant 0 : i32
    return %c0_i32, %c0_i32_0 : i32, i32
  }
  func.func @transform_2(%arg0: i32) -> (i32, i32) {
    %c0_i32 = arith.constant 0 : i32
    %c0_i32_0 = arith.constant 0 : i32
    %c0_i32_1 = arith.constant 0 : i32
    return %c0_i32, %c0_i32_0 : i32, i32
  }
  func.func @transform_3(%arg0: i32) -> (i32, i32) {
    %c0_i32 = arith.constant 0 : i32
    %c0_i32_0 = arith.constant 0 : i32
    %c0_i32_1 = arith.constant 0 : i32
    return %c0_i32, %c0_i32_0 : i32, i32
  }
  func.func @transform_4(%arg0: i32) -> (i32, i32) {
    %c0_i32 = arith.constant 0 : i32
    %c0_i32_0 = arith.constant 0 : i32
    %c0_i32_1 = arith.constant 0 : i32
    return %c0_i32, %c0_i32_0 : i32, i32
  }
  func.func @transform_5(%arg0: i32) -> (i32, i32) {
    %c0_i32 = arith.constant 0 : i32
    %c0_i32_0 = arith.constant 0 : i32
    %c0_i32_1 = arith.constant 0 : i32
    return %c0_i32, %c0_i32_0 : i32, i32
  }
  func.func @transform_6(%arg0: i32) -> (i32, i32) {
    %c0_i32 = arith.constant 0 : i32
    %c0_i32_0 = arith.constant 0 : i32
    %c0_i32_1 = arith.constant 0 : i32
    return %c0_i32, %c0_i32_0 : i32, i32
  }
  func.func @transform_7(%arg0: i32) -> (i32, i32) {
    %c0_i32 = arith.constant 0 : i32
    %c0_i32_0 = arith.constant 0 : i32
    %c0_i32_1 = arith.constant 0 : i32
    return %c0_i32, %c0_i32_0 : i32, i32
  }
  func.func @transform_8(%arg0: i32) -> (i32, i32) {
    %c0_i32 = arith.constant 0 : i32
    %c0_i32_0 = arith.constant 0 : i32
    %c0_i32_1 = arith.constant 0 : i32
    return %c0_i32, %c0_i32_0 : i32, i32
  }
  func.func @transform_9(%arg0: i32) -> (i32, i32) {
    %c0_i32 = arith.constant 0 : i32
    %c0_i32_0 = arith.constant 0 : i32
    %c0_i32_1 = arith.constant 0 : i32
    return %c0_i32, %c0_i32_0 : i32, i32
  }
  func.func @transform_10(%arg0: i32) -> (i32, i32) {
    %c0_i32 = arith.constant 0 : i32
    %c0_i32_0 = arith.constant 0 : i32
    %c0_i32_1 = arith.constant 0 : i32
    return %c0_i32, %c0_i32_0 : i32, i32
  }
  func.func @transform_11(%arg0: i32) -> (i32, i32) {
    %c0_i32 = arith.constant 0 : i32
    %c0_i32_0 = arith.constant 0 : i32
    %c0_i32_1 = arith.constant 0 : i32
    return %c0_i32, %c0_i32_0 : i32, i32
  }
  func.func @transform_12(%arg0: i32) -> (i32, i32) {
    %c0_i32 = arith.constant 0 : i32
    %c0_i32_0 = arith.constant 0 : i32
    %c0_i32_1 = arith.constant 0 : i32
    return %c0_i32, %c0_i32_0 : i32, i32
  }
  func.func @transform_13(%arg0: i32) -> (i32, i32) {
    %c0_i32 = arith.constant 0 : i32
    %c0_i32_0 = arith.constant 0 : i32
    %c0_i32_1 = arith.constant 0 : i32
    return %c0_i32, %c0_i32_0 : i32, i32
  }
  func.func @transform_14(%arg0: i32) -> (i32, i32) {
    %c0_i32 = arith.constant 0 : i32
    %c0_i32_0 = arith.constant 0 : i32
    %c0_i32_1 = arith.constant 0 : i32
    return %c0_i32, %c0_i32_0 : i32, i32
  }
  func.func @transform_15(%arg0: i32) -> (i32, i32) {
    %c0_i32 = arith.constant 0 : i32
    %c0_i32_0 = arith.constant 0 : i32
    %c0_i32_1 = arith.constant 0 : i32
    return %c0_i32, %c0_i32_0 : i32, i32
  }
  func.func @transform_16(%arg0: i32) -> (i32, i32) {
    %c0_i32 = arith.constant 0 : i32
    %c0_i32_0 = arith.constant 0 : i32
    %c0_i32_1 = arith.constant 0 : i32
    return %c0_i32, %c0_i32_0 : i32, i32
  }
  func.func @transform_17(%arg0: i32) -> (i32, i32) {
    %c0_i32 = arith.constant 0 : i32
    %c0_i32_0 = arith.constant 0 : i32
    return %arg0, %c0_i32 : i32, i32
  }
}

</mosaic_0001>

<llo_original>
// kernel: ae_forward.1
$region0: #{ae_forward.1}
  #allocation0 [shape = 'u32[]', space=smem, size = 0x4, offset = 0x4, fixed_abs, tag = 'smem constant byte address 0x4 - core index']
  #allocation1 [shape = 'u32[72,128]{1,0:T(1,128)}', space=vmem, size = 0x9000, scoped, tag = 'internal scratch']
  %s0 = inlined_call_operand.vmem [shape: f32[256,784], index: 0, kind: input, shape index: {}]
  %s1 = inlined_call_operand.vmem [shape: bf16[784,512], index: 1, kind: input, shape index: {}]
  %s2 = inlined_call_operand.vmem [shape: f32[1,512], index: 2, kind: input, shape index: {}]
  %s3 = inlined_call_operand.vmem [shape: bf16[512,256], index: 3, kind: input, shape index: {}]
  %s4 = inlined_call_operand.vmem [shape: f32[1,256], index: 4, kind: input, shape index: {}]
  %s5 = inlined_call_operand.vmem [shape: bf16[256,128], index: 5, kind: input, shape index: {}]
  %s6 = inlined_call_operand.vmem [shape: f32[1,128], index: 6, kind: input, shape index: {}]
  %s7 = inlined_call_operand.vmem [shape: bf16[128,128], index: 7, kind: input, shape index: {}]
  %s8 = inlined_call_operand.vmem [shape: f32[1,128], index: 8, kind: input, shape index: {}]
  %s9 = inlined_call_operand.vmem [shape: bf16[128,128], index: 9, kind: input, shape index: {}]
  %s10 = inlined_call_operand.vmem [shape: f32[1,128], index: 10, kind: input, shape index: {}]
  %s11 = inlined_call_operand.vmem [shape: bf16[128,256], index: 11, kind: input, shape index: {}]
  %s12 = inlined_call_operand.vmem [shape: f32[1,256], index: 12, kind: input, shape index: {}]
  %s13 = inlined_call_operand.vmem [shape: bf16[256,512], index: 13, kind: input, shape index: {}]
  %s14 = inlined_call_operand.vmem [shape: f32[1,512], index: 14, kind: input, shape index: {}]
  %s15 = inlined_call_operand.vmem [shape: bf16[512,784], index: 15, kind: input, shape index: {}]
  %s16 = inlined_call_operand.vmem [shape: f32[1,784], index: 16, kind: input, shape index: {}]
  %s17 = inlined_call_operand.vmem [shape: f32[256,784], index: 17, kind: output, shape index: {}]
  %s18 = sld [smem:[#allocation0]]
  $region101: #{ae_forward.1} parent=0
    _
  %s20 = ssub.s32 1, %s18
  %s21 = scalar_select 0, %s20, %s18
  loop: start=0, step=1, limit=4
  $region2: #{ae_forward.1} parent=0 // loop_pre_header
    _
  $region3: #{ae_forward.1} parent=0 // loop_header
    %s23 = sphi 0, %s27
    %p24 = scmp.ge.s32.totalorder %s23, 4
    %s33 = sphi 0, %s35
    %s36 = sphi 0, %s33
    %s37 = sphi 0, %s36
    %s53 = sphi 0, %s37
    %s57 = sphi 0, %s57
    %s59 = sphi 0, %s57
    %s60 = sphi 0, %s59
    %s74 = sphi 0, %s60
    %s78 = sphi 0, %s78
    %s80 = sphi 0, %s78
    %s81 = sphi 0, %s80
    %s95 = sphi 0, %s81
    %s99 = sphi 0, %s99
    %s101 = sphi 0, %s99
    %s102 = sphi 0, %s101
    %s116 = sphi 0, %s102
    %s120 = sphi 0, %s120
    %s122 = sphi 0, %s120
    %s123 = sphi 0, %s122
    %s137 = sphi 0, %s123
    %s141 = sphi 0, %s141
    %s143 = sphi 0, %s141
    %s144 = sphi 0, %s143
    %s158 = sphi 0, %s144
    %s162 = sphi 0, %s162
    %s164 = sphi 0, %s162
    %s165 = sphi 0, %s164
    %s179 = sphi 0, %s165
    %s183 = sphi 0, %s183
    %s185 = sphi 0, %s183
    %s186 = sphi 0, %s185
    %s200 = sphi 0, %s186
    %s204 = sphi 0, %s204
    %s206 = sphi 0, %s204
    %s207 = sphi 0, %s206
    %s221 = sphi 0, %s207
    %s225 = sphi 0, %s225
    %s227 = sphi 0, %s225
    %s228 = sphi 0, %s227
    %s242 = sphi 0, %s228
    %s246 = sphi 0, %s246
    %s248 = sphi 0, %s246
    %s249 = sphi 0, %s248
    %s263 = sphi 0, %s249
    %s267 = sphi 0, %s267
    %s269 = sphi 0, %s267
    %s270 = sphi 0, %s269
    %s284 = sphi 0, %s270
    %s288 = sphi 0, %s288
    %s290 = sphi 0, %s288
    %s291 = sphi 0, %s290
    %s305 = sphi 0, %s291
    %s309 = sphi 0, %s309
    %s311 = sphi 0, %s309
    %s312 = sphi 0, %s311
    %s326 = sphi 0, %s312
    %s330 = sphi 0, %s330
    %s332 = sphi 0, %s330
    %s333 = sphi 0, %s332
    %s347 = sphi 0, %s333
    %s351 = sphi 0, %s351
    %s353 = sphi 0, %s351
    %s354 = sphi 0, %s353
    %s368 = sphi 0, %s354
    %s372 = sphi 0, %s372
    %s374 = sphi 0, %s372
    %s375 = sphi 0, %s374
    %s389 = sphi 0, %s375
    %s395 = sphi 0, %s397
    %s398 = sphi 0, %s395
    %s399 = sphi 0, %s398
    %s415 = sphi 0, %s399
  $region4: #{ae_forward.1} parent=0 // loop_header_branch
    %26 = sbr.rel (%p24) target = $region8
  $region5: #{ae_forward.1} parent=0 // loop_body
    %s28 = ssub.s32 %s23, 1
    %s29 = ssub.s32 %s23, 2
    %s30 = sadd.s32 %s23, 1
    %s31 = ssub.s32 %s23, %s30
    %p32 = scmp.eq.s32.totalorder %s31, 0
    %s34 = sadd.s32 %s33, 1
    %s35 = scalar_select %p32, %s33, %s34
    %p38 = pneg %p32
    %p39 = scmp.eq.s32.totalorder %s23, 1
    %p40 = por %p38, %p39
    %p41 = scmp.ne.s32.totalorder %s33, %s36
    %p42 = scmp.eq.s32.totalorder %s23, 0
    %p43 = por %p41, %p42
    %p44 = scmp.ne.s32.totalorder %s33, %s36
    %p45 = scmp.eq.s32.totalorder %s28, 1
    %p46 = por %p44, %p45
    %p47 = scmp.ne.s32.totalorder %s36, %s37
    %p48 = scmp.eq.s32.totalorder %s28, 0
    %p49 = por %p47, %p48
    %p50 = scmp.ne.s32.totalorder %s36, %s37
    %p51 = scmp.eq.s32.totalorder %s29, 1
    %p52 = por %p50, %p51
    %p54 = scmp.ne.s32.totalorder %s37, %s53
    %p55 = scmp.eq.s32.totalorder %s29, 0
    %p56 = por %p54, %p55
    %s58 = sadd.s32 %s57, 1
    %p61 = scmp.eq.s32.totalorder %s23, 1
    %p62 = scmp.ne.s32.totalorder %s57, %s59
    %p63 = scmp.eq.s32.totalorder %s23, 0
    %p64 = por %p62, %p63
    %p65 = scmp.ne.s32.totalorder %s57, %s59
    %p66 = scmp.eq.s32.totalorder %s28, 1
    %p67 = por %p65, %p66
    %p68 = scmp.ne.s32.totalorder %s59, %s60
    %p69 = scmp.eq.s32.totalorder %s28, 0
    %p70 = por %p68, %p69
    %p71 = scmp.ne.s32.totalorder %s59, %s60
    %p72 = scmp.eq.s32.totalorder %s29, 1
    %p73 = por %p71, %p72
    %p75 = scmp.ne.s32.totalorder %s60, %s74
    %p76 = scmp.eq.s32.totalorder %s29, 0
    %p77 = por %p75, %p76
    %s79 = sadd.s32 %s78, 1
    %p82 = scmp.eq.s32.totalorder %s23, 1
    %p83 = scmp.ne.s32.totalorder %s78, %s80
    %p84 = scmp.eq.s32.totalorder %s23, 0
    %p85 = por %p83, %p84
    %p86 = scmp.ne.s32.totalorder %s78, %s80
    %p87 = scmp.eq.s32.totalorder %s28, 1
    %p88 = por %p86, %p87
    %p89 = scmp.ne.s32.totalorder %s80, %s81
    %p90 = scmp.eq.s32.totalorder %s28, 0
    %p91 = por %p89, %p90
    %p92 = scmp.ne.s32.totalorder %s80, %s81
    %p93 = scmp.eq.s32.totalorder %s29, 1
    %p94 = por %p92, %p93
    %p96 = scmp.ne.s32.totalorder %s81, %s95
    %p97 = scmp.eq.s32.totalorder %s29, 0
    %p98 = por %p96, %p97
    %s100 = sadd.s32 %s99, 1
    %p103 = scmp.eq.s32.totalorder %s23, 1
    %p104 = scmp.ne.s32.totalorder %s99, %s101
    %p105 = scmp.eq.s32.totalorder %s23, 0
    %p106 = por %p104, %p105
    %p107 = scmp.ne.s32.totalorder %s99, %s101
    %p108 = scmp.eq.s32.totalorder %s28, 1
    %p109 = por %p107, %p108
    %p110 = scmp.ne.s32.totalorder %s101, %s102
    %p111 = scmp.eq.s32.totalorder %s28, 0
    %p112 = por %p110, %p111
    %p113 = scmp.ne.s32.totalorder %s101, %s102
    %p114 = scmp.eq.s32.totalorder %s29, 1
    %p115 = por %p113, %p114
    %p117 = scmp.ne.s32.totalorder %s102, %s116
    %p118 = scmp.eq.s32.totalorder %s29, 0
    %p119 = por %p117, %p118
    %s121 = sadd.s32 %s120, 1
    %p124 = scmp.eq.s32.totalorder %s23, 1
    %p125 = scmp.ne.s32.totalorder %s120, %s122
    %p126 = scmp.eq.s32.totalorder %s23, 0
    %p127 = por %p125, %p126
    %p128 = scmp.ne.s32.totalorder %s120, %s122
    %p129 = scmp.eq.s32.totalorder %s28, 1
    %p130 = por %p128, %p129
    %p131 = scmp.ne.s32.totalorder %s122, %s123
    %p132 = scmp.eq.s32.totalorder %s28, 0
    %p133 = por %p131, %p132
    %p134 = scmp.ne.s32.totalorder %s122, %s123
    %p135 = scmp.eq.s32.totalorder %s29, 1
    %p136 = por %p134, %p135
    %p138 = scmp.ne.s32.totalorder %s123, %s137
    %p139 = scmp.eq.s32.totalorder %s29, 0
    %p140 = por %p138, %p139
    %s142 = sadd.s32 %s141, 1
    %p145 = scmp.eq.s32.totalorder %s23, 1
    %p146 = scmp.ne.s32.totalorder %s141, %s143
    %p147 = scmp.eq.s32.totalorder %s23, 0
    %p148 = por %p146, %p147
    %p149 = scmp.ne.s32.totalorder %s141, %s143
    %p150 = scmp.eq.s32.totalorder %s28, 1
    %p151 = por %p149, %p150
    %p152 = scmp.ne.s32.totalorder %s143, %s144
    %p153 = scmp.eq.s32.totalorder %s28, 0
    %p154 = por %p152, %p153
    %p155 = scmp.ne.s32.totalorder %s143, %s144
    %p156 = scmp.eq.s32.totalorder %s29, 1
    %p157 = por %p155, %p156
    %p159 = scmp.ne.s32.totalorder %s144, %s158
    %p160 = scmp.eq.s32.totalorder %s29, 0
    %p161 = por %p159, %p160
    %s163 = sadd.s32 %s162, 1
    %p166 = scmp.eq.s32.totalorder %s23, 1
    %p167 = scmp.ne.s32.totalorder %s162, %s164
    %p168 = scmp.eq.s32.totalorder %s23, 0
    %p169 = por %p167, %p168
    %p170 = scmp.ne.s32.totalorder %s162, %s164
    %p171 = scmp.eq.s32.totalorder %s28, 1
    %p172 = por %p170, %p171
    %p173 = scmp.ne.s32.totalorder %s164, %s165
    %p174 = scmp.eq.s32.totalorder %s28, 0
    %p175 = por %p173, %p174
    %p176 = scmp.ne.s32.totalorder %s164, %s165
    %p177 = scmp.eq.s32.totalorder %s29, 1
    %p178 = por %p176, %p177
    %p180 = scmp.ne.s32.totalorder %s165, %s179
    %p181 = scmp.eq.s32.totalorder %s29, 0
    %p182 = por %p180, %p181
    %s184 = sadd.s32 %s183, 1
    %p187 = scmp.eq.s32.totalorder %s23, 1
    %p188 = scmp.ne.s32.totalorder %s183, %s185
    %p189 = scmp.eq.s32.totalorder %s23, 0
    %p190 = por %p188, %p189
    %p191 = scmp.ne.s32.totalorder %s183, %s185
    %p192 = scmp.eq.s32.totalorder %s28, 1
    %p193 = por %p191, %p192
    %p194 = scmp.ne.s32.totalorder %s185, %s186
    %p195 = scmp.eq.s32.totalorder %s28, 0
    %p196 = por %p194, %p195
    %p197 = scmp.ne.s32.totalorder %s185, %s186
    %p198 = scmp.eq.s32.totalorder %s29, 1
    %p199 = por %p197, %p198
    %p201 = scmp.ne.s32.totalorder %s186, %s200
    %p202 = scmp.eq.s32.totalorder %s29, 0
    %p203 = por %p201, %p202
    %s205 = sadd.s32 %s204, 1
    %p208 = scmp.eq.s32.totalorder %s23, 1
    %p209 = scmp.ne.s32.totalorder %s204, %s206
    %p210 = scmp.eq.s32.totalorder %s23, 0
    %p211 = por %p209, %p210
    %p212 = scmp.ne.s32.totalorder %s204, %s206
    %p213 = scmp.eq.s32.totalorder %s28, 1
    %p214 = por %p212, %p213
    %p215 = scmp.ne.s32.totalorder %s206, %s207
    %p216 = scmp.eq.s32.totalorder %s28, 0
    %p217 = por %p215, %p216
    %p218 = scmp.ne.s32.totalorder %s206, %s207
    %p219 = scmp.eq.s32.totalorder %s29, 1
    %p220 = por %p218, %p219
    %p222 = scmp.ne.s32.totalorder %s207, %s221
    %p223 = scmp.eq.s32.totalorder %s29, 0
    %p224 = por %p222, %p223
    %s226 = sadd.s32 %s225, 1
    %p229 = scmp.eq.s32.totalorder %s23, 1
    %p230 = scmp.ne.s32.totalorder %s225, %s227
    %p231 = scmp.eq.s32.totalorder %s23, 0
    %p232 = por %p230, %p231
    %p233 = scmp.ne.s32.totalorder %s225, %s227
    %p234 = scmp.eq.s32.totalorder %s28, 1
    %p235 = por %p233, %p234
    %p236 = scmp.ne.s32.totalorder %s227, %s228
    %p237 = scmp.eq.s32.totalorder %s28, 0
    %p238 = por %p236, %p237
    %p239 = scmp.ne.s32.totalorder %s227, %s228
    %p240 = scmp.eq.s32.totalorder %s29, 1
    %p241 = por %p239, %p240
    %p243 = scmp.ne.s32.totalorder %s228, %s242
    %p244 = scmp.eq.s32.totalorder %s29, 0
    %p245 = por %p243, %p244
    %s247 = sadd.s32 %s246, 1
    %p250 = scmp.eq.s32.totalorder %s23, 1
    %p251 = scmp.ne.s32.totalorder %s246, %s248
    %p252 = scmp.eq.s32.totalorder %s23, 0
    %p253 = por %p251, %p252
    %p254 = scmp.ne.s32.totalorder %s246, %s248
    %p255 = scmp.eq.s32.totalorder %s28, 1
    %p256 = por %p254, %p255
    %p257 = scmp.ne.s32.totalorder %s248, %s249
    %p258 = scmp.eq.s32.totalorder %s28, 0
    %p259 = por %p257, %p258
    %p260 = scmp.ne.s32.totalorder %s248, %s249
    %p261 = scmp.eq.s32.totalorder %s29, 1
    %p262 = por %p260, %p261
    %p264 = scmp.ne.s32.totalorder %s249, %s263
    %p265 = scmp.eq.s32.totalorder %s29, 0
    %p266 = por %p264, %p265
    %s268 = sadd.s32 %s267, 1
    %p271 = scmp.eq.s32.totalorder %s23, 1
    %p272 = scmp.ne.s32.totalorder %s267, %s269
    %p273 = scmp.eq.s32.totalorder %s23, 0
    %p274 = por %p272, %p273
    %p275 = scmp.ne.s32.totalorder %s267, %s269
    %p276 = scmp.eq.s32.totalorder %s28, 1
    %p277 = por %p275, %p276
    %p278 = scmp.ne.s32.totalorder %s269, %s270
    %p279 = scmp.eq.s32.totalorder %s28, 0
    %p280 = por %p278, %p279
    %p281 = scmp.ne.s32.totalorder %s269, %s270
    %p282 = scmp.eq.s32.totalorder %s29, 1
    %p283 = por %p281, %p282
    %p285 = scmp.ne.s32.totalorder %s270, %s284
    %p286 = scmp.eq.s32.totalorder %s29, 0
    %p287 = por %p285, %p286
    %s289 = sadd.s32 %s288, 1
    %p292 = scmp.eq.s32.totalorder %s23, 1
    %p293 = scmp.ne.s32.totalorder %s288, %s290
    %p294 = scmp.eq.s32.totalorder %s23, 0
    %p295 = por %p293, %p294
    %p296 = scmp.ne.s32.totalorder %s288, %s290
    %p297 = scmp.eq.s32.totalorder %s28, 1
    %p298 = por %p296, %p297
    %p299 = scmp.ne.s32.totalorder %s290, %s291
    %p300 = scmp.eq.s32.totalorder %s28, 0
    %p301 = por %p299, %p300
    %p302 = scmp.ne.s32.totalorder %s290, %s291
    %p303 = scmp.eq.s32.totalorder %s29, 1
    %p304 = por %p302, %p303
    %p306 = scmp.ne.s32.totalorder %s291, %s305
    %p307 = scmp.eq.s32.totalorder %s29, 0
    %p308 = por %p306, %p307
    %s310 = sadd.s32 %s309, 1
    %p313 = scmp.eq.s32.totalorder %s23, 1
    %p314 = scmp.ne.s32.totalorder %s309, %s311
    %p315 = scmp.eq.s32.totalorder %s23, 0
    %p316 = por %p314, %p315
    %p317 = scmp.ne.s32.totalorder %s309, %s311
    %p318 = scmp.eq.s32.totalorder %s28, 1
    %p319 = por %p317, %p318
    %p320 = scmp.ne.s32.totalorder %s311, %s312
    %p321 = scmp.eq.s32.totalorder %s28, 0
    %p322 = por %p320, %p321
    %p323 = scmp.ne.s32.totalorder %s311, %s312
    %p324 = scmp.eq.s32.totalorder %s29, 1
    %p325 = por %p323, %p324
    %p327 = scmp.ne.s32.totalorder %s312, %s326
    %p328 = scmp.eq.s32.totalorder %s29, 0
    %p329 = por %p327, %p328
    %s331 = sadd.s32 %s330, 1
    %p334 = scmp.eq.s32.totalorder %s23, 1
    %p335 = scmp.ne.s32.totalorder %s330, %s332
    %p336 = scmp.eq.s32.totalorder %s23, 0
    %p337 = por %p335, %p336
    %p338 = scmp.ne.s32.totalorder %s330, %s332
    %p339 = scmp.eq.s32.totalorder %s28, 1
    %p340 = por %p338, %p339
    %p341 = scmp.ne.s32.totalorder %s332, %s333
    %p342 = scmp.eq.s32.totalorder %s28, 0
    %p343 = por %p341, %p342
    %p344 = scmp.ne.s32.totalorder %s332, %s333
    %p345 = scmp.eq.s32.totalorder %s29, 1
    %p346 = por %p344, %p345
    %p348 = scmp.ne.s32.totalorder %s333, %s347
    %p349 = scmp.eq.s32.totalorder %s29, 0
    %p350 = por %p348, %p349
    %s352 = sadd.s32 %s351, 1
    %p355 = scmp.eq.s32.totalorder %s23, 1
    %p356 = scmp.ne.s32.totalorder %s351, %s353
    %p357 = scmp.eq.s32.totalorder %s23, 0
    %p358 = por %p356, %p357
    %p359 = scmp.ne.s32.totalorder %s351, %s353
    %p360 = scmp.eq.s32.totalorder %s28, 1
    %p361 = por %p359, %p360
    %p362 = scmp.ne.s32.totalorder %s353, %s354
    %p363 = scmp.eq.s32.totalorder %s28, 0
    %p364 = por %p362, %p363
    %p365 = scmp.ne.s32.totalorder %s353, %s354
    %p366 = scmp.eq.s32.totalorder %s29, 1
    %p367 = por %p365, %p366
    %p369 = scmp.ne.s32.totalorder %s354, %s368
    %p370 = scmp.eq.s32.totalorder %s29, 0
    %p371 = por %p369, %p370
    %s373 = sadd.s32 %s372, 1
    %p376 = scmp.eq.s32.totalorder %s23, 1
    %p377 = scmp.ne.s32.totalorder %s372, %s374
    %p378 = scmp.eq.s32.totalorder %s23, 0
    %p379 = por %p377, %p378
    %p380 = scmp.ne.s32.totalorder %s372, %s374
    %p381 = scmp.eq.s32.totalorder %s28, 1
    %p382 = por %p380, %p381
    %p383 = scmp.ne.s32.totalorder %s374, %s375
    %p384 = scmp.eq.s32.totalorder %s28, 0
    %p385 = por %p383, %p384
    %p386 = scmp.ne.s32.totalorder %s374, %s375
    %p387 = scmp.eq.s32.totalorder %s29, 1
    %p388 = por %p386, %p387
    %p390 = scmp.ne.s32.totalorder %s375, %s389
    %p391 = scmp.eq.s32.totalorder %s29, 0
    %p392 = por %p390, %p391
    %s393 = ssub.s32 %s23, %s30
    %p394 = scmp.eq.s32.totalorder %s393, 0
    %s396 = sadd.s32 %s395, 1
    %s397 = scalar_select %p394, %s395, %s396
    %p400 = pneg %p394
    %p401 = scmp.eq.s32.totalorder %s23, 1
    %p402 = por %p400, %p401
    %p403 = scmp.ne.s32.totalorder %s395, %s398
    %p404 = scmp.eq.s32.totalorder %s23, 0
    %p405 = por %p403, %p404
    %p406 = scmp.ne.s32.totalorder %s395, %s398
    %p407 = scmp.eq.s32.totalorder %s28, 1
    %p408 = por %p406, %p407
    %p409 = scmp.ne.s32.totalorder %s398, %s399
    %p410 = scmp.eq.s32.totalorder %s28, 0
    %p411 = por %p409, %p410
    %p412 = scmp.ne.s32.totalorder %s398, %s399
    %p413 = scmp.eq.s32.totalorder %s29, 1
    %p414 = por %p412, %p413
    %p416 = scmp.ne.s32.totalorder %s399, %s415
    %p417 = scmp.eq.s32.totalorder %s29, 0
    %p418 = por %p416, %p417
    %p419 = scmp.le.s32.totalorder 1, %s23
    %p420 = scmp.lt.s32.totalorder %s23, 3
    %p421 = pnand %p419, %p420
    %p422 = pneg %p421
    // Predicated region
    $region9: #{ae_forward.1} parent=5 // pred_check
      _
    $region10: #{ae_forward.1} parent=5 // pred_check_branch
      %424 = sbr.rel (%p421) target = $region12
    $region11: #{ae_forward.1} parent=5 // pred_region
      %s425 = ssub.s32 %s23, 1
      // Predicated region
      $region13: #{ae_forward.1} parent=11 // pred_check
        %p426 = pneg %p70
      $region14: #{ae_forward.1} parent=11 // pred_check_branch
        %428 = sbr.rel (%p426) target = $region16
      $region15: #{ae_forward.1} parent=11 // pred_region
        _
      $region16: #{ae_forward.1} parent=11 // pred_fallthru
        _
      // Predicated region
      $region17: #{ae_forward.1} parent=11 // pred_check
        %p429 = pneg %p91
      $region18: #{ae_forward.1} parent=11 // pred_check_branch
        %431 = sbr.rel (%p429) target = $region20
      $region19: #{ae_forward.1} parent=11 // pred_region
        _
      $region20: #{ae_forward.1} parent=11 // pred_fallthru
        _
      // Predicated region
      $region21: #{ae_forward.1} parent=11 // pred_check
        %p432 = pneg %p112
      $region22: #{ae_forward.1} parent=11 // pred_check_branch
        %434 = sbr.rel (%p432) target = $region24
      $region23: #{ae_forward.1} parent=11 // pred_region
        _
      $region24: #{ae_forward.1} parent=11 // pred_fallthru
        _
      // Predicated region
      $region25: #{ae_forward.1} parent=11 // pred_check
        %p435 = pneg %p133
      $region26: #{ae_forward.1} parent=11 // pred_check_branch
        %437 = sbr.rel (%p435) target = $region28
      $region27: #{ae_forward.1} parent=11 // pred_region
        _
      $region28: #{ae_forward.1} parent=11 // pred_fallthru
        _
      // Predicated region
      $region29: #{ae_forward.1} parent=11 // pred_check
        %p438 = pneg %p154
      $region30: #{ae_forward.1} parent=11 // pred_check_branch
        %440 = sbr.rel (%p438) target = $region32
      $region31: #{ae_forward.1} parent=11 // pred_region
        _
      $region32: #{ae_forward.1} parent=11 // pred_fallthru
        _
      // Predicated region
      $region33: #{ae_forward.1} parent=11 // pred_check
        %p441 = pneg %p175
      $region34: #{ae_forward.1} parent=11 // pred_check_branch
        %443 = sbr.rel (%p441) target = $region36
      $region35: #{ae_forward.1} parent=11 // pred_region
        _
      $region36: #{ae_forward.1} parent=11 // pred_fallthru
        _
      // Predicated region
      $region37: #{ae_forward.1} parent=11 // pred_check
        %p444 = pneg %p196
      $region38: #{ae_forward.1} parent=11 // pred_check_branch
        %446 = sbr.rel (%p444) target = $region40
      $region39: #{ae_forward.1} parent=11 // pred_region
        _
      $region40: #{ae_forward.1} parent=11 // pred_fallthru
        _
      // Predicated region
      $region41: #{ae_forward.1} parent=11 // pred_check
        %p447 = pneg %p217
      $region42: #{ae_forward.1} parent=11 // pred_check_branch
        %449 = sbr.rel (%p447) target = $region44
      $region43: #{ae_forward.1} parent=11 // pred_region
        _
      $region44: #{ae_forward.1} parent=11 // pred_fallthru
        _
      // Predicated region
      $region45: #{ae_forward.1} parent=11 // pred_check
        %p450 = pneg %p238
      $region46: #{ae_forward.1} parent=11 // pred_check_branch
        %452 = sbr.rel (%p450) target = $region48
      $region47: #{ae_forward.1} parent=11 // pred_region
        _
      $region48: #{ae_forward.1} parent=11 // pred_fallthru
        _
      // Predicated region
      $region49: #{ae_forward.1} parent=11 // pred_check
        %p453 = pneg %p259
      $region50: #{ae_forward.1} parent=11 // pred_check_branch
        %455 = sbr.rel (%p453) target = $region52
      $region51: #{ae_forward.1} parent=11 // pred_region
        _
      $region52: #{ae_forward.1} parent=11 // pred_fallthru
        _
      // Predicated region
      $region53: #{ae_forward.1} parent=11 // pred_check
        %p456 = pneg %p280
      $region54: #{ae_forward.1} parent=11 // pred_check_branch
        %458 = sbr.rel (%p456) target = $region56
      $region55: #{ae_forward.1} parent=11 // pred_region
        _
      $region56: #{ae_forward.1} parent=11 // pred_fallthru
        _
      // Predicated region
      $region57: #{ae_forward.1} parent=11 // pred_check
        %p459 = pneg %p301
      $region58: #{ae_forward.1} parent=11 // pred_check_branch
        %461 = sbr.rel (%p459) target = $region60
      $region59: #{ae_forward.1} parent=11 // pred_region
        _
      $region60: #{ae_forward.1} parent=11 // pred_fallthru
        _
      // Predicated region
      $region61: #{ae_forward.1} parent=11 // pred_check
        %p462 = pneg %p322
      $region62: #{ae_forward.1} parent=11 // pred_check_branch
        %464 = sbr.rel (%p462) target = $region64
      $region63: #{ae_forward.1} parent=11 // pred_region
        _
      $region64: #{ae_forward.1} parent=11 // pred_fallthru
        _
      // Predicated region
      $region65: #{ae_forward.1} parent=11 // pred_check
        %p465 = pneg %p343
      $region66: #{ae_forward.1} parent=11 // pred_check_branch
        %467 = sbr.rel (%p465) target = $region68
      $region67: #{ae_forward.1} parent=11 // pred_region
        _
      $region68: #{ae_forward.1} parent=11 // pred_fallthru
        _
      // Predicated region
      $region69: #{ae_forward.1} parent=11 // pred_check
        %p468 = pneg %p364
      $region70: #{ae_forward.1} parent=11 // pred_check_branch
        %470 = sbr.rel (%p468) target = $region72
      $region71: #{ae_forward.1} parent=11 // pred_region
        _
      $region72: #{ae_forward.1} parent=11 // pred_fallthru
        _
      // Predicated region
      $region73: #{ae_forward.1} parent=11 // pred_check
        %p471 = pneg %p385
      $region74: #{ae_forward.1} parent=11 // pred_check_branch
        %473 = sbr.rel (%p471) target = $region76
      $region75: #{ae_forward.1} parent=11 // pred_region
        _
      $region76: #{ae_forward.1} parent=11 // pred_fallthru
        _
    $region12: #{ae_forward.1} parent=5 // pred_fallthru
      _
    %p474 = scmp.lt.s32.totalorder %s23, 2
    // Predicated region
    $region77: #{ae_forward.1} parent=5 // pred_check
      %p475 = pneg %p474
    $region78: #{ae_forward.1} parent=5 // pred_check_branch
      %477 = sbr.rel (%p475) target = $region80
    $region79: #{ae_forward.1} parent=5 // pred_region
      // Predicated region
      $region81: #{ae_forward.1} parent=79 // pred_check
        %p478 = pneg %p43
      $region82: #{ae_forward.1} parent=79 // pred_check_branch
        %480 = sbr.rel (%p478) target = $region84
      $region83: #{ae_forward.1} parent=79 // pred_region
        %s481 = smul.u32 16, %s23
        %p482 = scmp.lt.s32.totalorder %s481, 31
        %s483 = scalar_select %p482, %s481, 31
        %s484 = smul.addr %s483, 7
        %s485 = smul.addr %s484, 8
        %s486 = scalar_lea.vmem %s0, %s485
        %s487 = smul.u32 16, %s23
      $region84: #{ae_forward.1} parent=79 // pred_fallthru
        _
    $region80: #{ae_forward.1} parent=5 // pred_fallthru
      _
    %p488 = scmp.le.s32.totalorder 1, %s23
    %p489 = scmp.lt.s32.totalorder %s23, 3
    %p490 = pnand %p488, %p489
    %p491 = pneg %p490
    // Predicated region
    $region85: #{ae_forward.1} parent=5 // pred_check
      _
    $region86: #{ae_forward.1} parent=5 // pred_check_branch
      %493 = sbr.rel (%p490) target = $region88
    $region87: #{ae_forward.1} parent=5 // pred_region
      %s494 = ssub.s32 %s23, 1
      %s495 = smul.u32 16, %s28
      %p496 = scmp.lt.s32.totalorder %s495, 31
      %s497 = scalar_select %p496, %s495, 31
      %s498 = smul.addr %s497, 7
      %s499 = smul.addr %s498, 8
      %s500 = scalar_lea.vmem %s0, %s499
      %p501 = pneg %p49
      %p502 = pneg %p46
      %p503 = pneg %p70
      %p504 = pneg %p67
      %p505 = pneg %p91
      %p506 = pneg %p88
      %p507 = pneg %p112
      %p508 = pneg %p109
      %p509 = pneg %p133
      %p510 = pneg %p130
      %p511 = pneg %p154
      %p512 = pneg %p151
      %p513 = pneg %p175
      %p514 = pneg %p172
      %p515 = pneg %p196
      %p516 = pneg %p193
      %p517 = pneg %p217
      %p518 = pneg %p214
      %p519 = pneg %p238
      %p520 = pneg %p235
      %p521 = pneg %p259
      %p522 = pneg %p256
      %p523 = pneg %p280
      %p524 = pneg %p277
      %p525 = pneg %p301
      %p526 = pneg %p298
      %p527 = pneg %p322
      %p528 = pneg %p319
      %p529 = pneg %p343
      %p530 = pneg %p340
      %p531 = pneg %p364
      %p532 = pneg %p361
      %p533 = pneg %p385
      %p534 = pneg %p382
      %p535 = pneg %p411
      %p536 = pneg %p408
      %s537 = smul.u32 16, %s28
      %p538 = scmp.lt.s32.totalorder %s537, 31
      %s539 = scalar_select %p538, %s537, 31
      %s540 = smul.addr %s539, 7
      %s541 = smul.addr %s540, 8
      %s542 = scalar_lea.vmem %s17, %s541
      %s543 = smul.u32 16, %s28
      %p544 = scmp.lt.s32.totalorder %s543, 31
      %s545 = scalar_select %p544, %s543, 31
      %s546 = smul.addr %s545, 7
      %s547 = smul.addr %s546, 8
      %s548 = scalar_lea.vmem %s0, %s547
      %s549 = smul.u32 16, %s28
      %s550 = smul.u32 16, %s28
      %p551 = scmp.lt.s32.totalorder %s550, 31
      %s552 = scalar_select %p551, %s550, 31
      %s553 = smul.addr %s552, 7
      %s554 = smul.addr %s553, 8
      %s555 = scalar_lea.vmem %s17, %s554
      %s556 = smul.u32 16, %s28
      %v558 = vld [vmem:[%s548] sm:$0xff]
      %v559 = vld [vmem:[%s548 + $0x8] sm:$0xff]
      %v560 = vld [vmem:[%s548 + $0x10] sm:$0xff]
      %v561 = vld [vmem:[%s548 + $0x18] sm:$0xff]
      %v562 = vld [vmem:[%s548 + $0x20] sm:$0xff]
      %v563 = vld [vmem:[%s548 + $0x28] sm:$0xff]
      %v564 = vld [vmem:[%s548 + $0x30] sm:$0xff]
      %v565 = vld [vmem:[%s548 + $0x38] sm:$0xff]
      %v566 = vld [vmem:[%s548 + $0x40] sm:$0xff]
      %v567 = vld [vmem:[%s548 + $0x48] sm:$0xff]
      %v568 = vld [vmem:[%s548 + $0x50] sm:$0xff]
      %v569 = vld [vmem:[%s548 + $0x58] sm:$0xff]
      %v570 = vld [vmem:[%s548 + $0x60] sm:$0xff]
      %v571 = vld [vmem:[%s548 + $0x68] sm:$0xff]
      %v572 = vld [vmem:[%s548 + $0x70] sm:$0xff]
      %v573 = vld [vmem:[%s548 + $0x78] sm:$0xff]
      %v574 = vld [vmem:[%s548 + $0x80] sm:$0xff]
      %v575 = vld [vmem:[%s548 + $0x88] sm:$0xff]
      %v576 = vld [vmem:[%s548 + $0x90] sm:$0xff]
      %v577 = vld [vmem:[%s548 + $0x98] sm:$0xff]
      %v578 = vld [vmem:[%s548 + $0xa0] sm:$0xff]
      %v579 = vld [vmem:[%s548 + $0xa8] sm:$0xff]
      %v580 = vld [vmem:[%s548 + $0xb0] sm:$0xff]
      %v581 = vld [vmem:[%s548 + $0xb8] sm:$0xff]
      %v582 = vld [vmem:[%s548 + $0xc0] sm:$0xff]
      %v583 = vld [vmem:[%s548 + $0xc8] sm:$0xff]
      %v584 = vld [vmem:[%s548 + $0xd0] sm:$0xff]
      %v585 = vld [vmem:[%s548 + $0xd8] sm:$0xff]
      %v586 = vld [vmem:[%s548 + $0xe0] sm:$0xff]
      %v587 = vld [vmem:[%s548 + $0xe8] sm:$0xff]
      %v588 = vld [vmem:[%s548 + $0xf0] sm:$0xff]
      %v589 = vld [vmem:[%s548 + $0xf8] sm:$0xff]
      %v590 = vld [vmem:[%s548 + $0x100] sm:$0xff]
      %v591 = vld [vmem:[%s548 + $0x108] sm:$0xff]
      %v592 = vld [vmem:[%s548 + $0x110] sm:$0xff]
      %v593 = vld [vmem:[%s548 + $0x118] sm:$0xff]
      %v594 = vld [vmem:[%s548 + $0x120] sm:$0xff]
      %v595 = vld [vmem:[%s548 + $0x128] sm:$0xff]
      %v596 = vld [vmem:[%s548 + $0x130] sm:$0xff]
      %v597 = vld [vmem:[%s548 + $0x138] sm:$0xff]
      %v598 = vld [vmem:[%s548 + $0x140] sm:$0xff]
      %v599 = vld [vmem:[%s548 + $0x148] sm:$0xff]
      %v600 = vld [vmem:[%s548 + $0x150] sm:$0xff]
      %v601 = vld [vmem:[%s548 + $0x158] sm:$0xff]
      %v602 = vld [vmem:[%s548 + $0x160] sm:$0xff]
      %v603 = vld [vmem:[%s548 + $0x168] sm:$0xff]
      %v604 = vld [vmem:[%s548 + $0x170] sm:$0xff]
      %v605 = vld [vmem:[%s548 + $0x178] sm:$0xff]
      %v606 = vld [vmem:[%s548 + $0x180] sm:$0xff]
      %v607 = vld [vmem:[%s548 + $0x188] sm:$0xff]
      %v608 = vld [vmem:[%s548 + $0x190] sm:$0xff]
      %v609 = vld [vmem:[%s548 + $0x198] sm:$0xff]
      %v610 = vld [vmem:[%s548 + $0x1a0] sm:$0xff]
      %v611 = vld [vmem:[%s548 + $0x1a8] sm:$0xff]
      %v612 = vld [vmem:[%s548 + $0x1b0] sm:$0xff]
      %v613 = vld [vmem:[%s548 + $0x1b8] sm:$0xff]
      %v614 = vld [vmem:[%s548 + $0x1c0] sm:$0xff]
      %v615 = vld [vmem:[%s548 + $0x1c8] sm:$0xff]
      %v616 = vld [vmem:[%s548 + $0x1d0] sm:$0xff]
      %v617 = vld [vmem:[%s548 + $0x1d8] sm:$0xff]
      %v618 = vld [vmem:[%s548 + $0x1e0] sm:$0xff]
      %v619 = vld [vmem:[%s548 + $0x1e8] sm:$0xff]
      %v620 = vld [vmem:[%s548 + $0x1f0] sm:$0xff]
      %v621 = vld [vmem:[%s548 + $0x1f8] sm:$0xff]
      %v622 = vld [vmem:[%s548 + $0x200] sm:$0xff]
      %v623 = vld [vmem:[%s548 + $0x208] sm:$0xff]
      %v624 = vld [vmem:[%s548 + $0x210] sm:$0xff]
      %v625 = vld [vmem:[%s548 + $0x218] sm:$0xff]
      %v626 = vld [vmem:[%s548 + $0x220] sm:$0xff]
      %v627 = vld [vmem:[%s548 + $0x228] sm:$0xff]
      %v628 = vld [vmem:[%s548 + $0x230] sm:$0xff]
      %v629 = vld [vmem:[%s548 + $0x238] sm:$0xff]
      %v630 = vld [vmem:[%s548 + $0x240] sm:$0xff]
      %v631 = vld [vmem:[%s548 + $0x248] sm:$0xff]
      %v632 = vld [vmem:[%s548 + $0x250] sm:$0xff]
      %v633 = vld [vmem:[%s548 + $0x258] sm:$0xff]
      %v634 = vld [vmem:[%s548 + $0x260] sm:$0xff]
      %v635 = vld [vmem:[%s548 + $0x268] sm:$0xff]
      %v636 = vld [vmem:[%s548 + $0x270] sm:$0xff]
      %v637 = vld [vmem:[%s548 + $0x278] sm:$0xff]
      %v638 = vld [vmem:[%s548 + $0x280] sm:$0xff]
      %v639 = vld [vmem:[%s548 + $0x288] sm:$0xff]
      %v640 = vld [vmem:[%s548 + $0x290] sm:$0xff]
      %v641 = vld [vmem:[%s548 + $0x298] sm:$0xff]
      %v642 = vld [vmem:[%s548 + $0x2a0] sm:$0xff]
      %v643 = vld [vmem:[%s548 + $0x2a8] sm:$0xff]
      %v644 = vld [vmem:[%s548 + $0x2b0] sm:$0xff]
      %v645 = vld [vmem:[%s548 + $0x2b8] sm:$0xff]
      %v646 = vld [vmem:[%s548 + $0x2c0] sm:$0xff]
      %v647 = vld [vmem:[%s548 + $0x2c8] sm:$0xff]
      %v648 = vld [vmem:[%s548 + $0x2d0] sm:$0xff]
      %v649 = vld [vmem:[%s548 + $0x2d8] sm:$0xff]
      %v650 = vld [vmem:[%s548 + $0x2e0] sm:$0xff]
      %v651 = vld [vmem:[%s548 + $0x2e8] sm:$0xff]
      %v652 = vld [vmem:[%s548 + $0x2f0] sm:$0xff]
      %v653 = vld [vmem:[%s548 + $0x2f8] sm:$0xff]
      %v654 = vld [vmem:[%s548 + $0x300] sm:$0xff]
      %v655 = vld [vmem:[%s548 + $0x308] sm:$0xff]
      %v656 = vld [vmem:[%s548 + $0x310] sm:$0xff]
      %v657 = vld [vmem:[%s548 + $0x318] sm:$0xff]
      %v658 = vld [vmem:[%s548 + $0x320] sm:$0xff]
      %v659 = vld [vmem:[%s548 + $0x328] sm:$0xff]
      %v660 = vld [vmem:[%s548 + $0x330] sm:$0xff]
      %v661 = vld [vmem:[%s548 + $0x338] sm:$0xff]
      %v662 = vld [vmem:[%s548 + $0x340] sm:$0xff]
      %v663 = vld [vmem:[%s548 + $0x348] sm:$0xff]
      %v664 = vld [vmem:[%s548 + $0x350] sm:$0xff]
      %v665 = vld [vmem:[%s548 + $0x358] sm:$0xff]
      %v666 = vld [vmem:[%s548 + $0x360] sm:$0xff]
      %v667 = vld [vmem:[%s548 + $0x368] sm:$0xff]
      %v668 = vld [vmem:[%s548 + $0x370] sm:$0xff]
      %v669 = vld [vmem:[%s548 + $0x378] sm:$0xff]
      %v670 = vpack.c.bf16 %v565, %v558
      %v671 = vpack.c.bf16 %v566, %v559
      %v672 = vpack.c.bf16 %v567, %v560
      %v673 = vpack.c.bf16 %v568, %v561
      %v674 = vpack.c.bf16 %v569, %v562
      %v675 = vpack.c.bf16 %v570, %v563
      %v676 = vpack.c.bf16 %v571, %v564
      %v677 = vpack.c.bf16 %v579, %v572
      %v678 = vpack.c.bf16 %v580, %v573
      %v679 = vpack.c.bf16 %v581, %v574
      %v680 = vpack.c.bf16 %v582, %v575
      %v681 = vpack.c.bf16 %v583, %v576
      %v682 = vpack.c.bf16 %v584, %v577
      %v683 = vpack.c.bf16 %v585, %v578
      %v684 = vpack.c.bf16 %v593, %v586
      %v685 = vpack.c.bf16 %v594, %v587
      %v686 = vpack.c.bf16 %v595, %v588
      %v687 = vpack.c.bf16 %v596, %v589
      %v688 = vpack.c.bf16 %v597, %v590
      %v689 = vpack.c.bf16 %v598, %v591
      %v690 = vpack.c.bf16 %v599, %v592
      %v691 = vpack.c.bf16 %v607, %v600
      %v692 = vpack.c.bf16 %v608, %v601
      %v693 = vpack.c.bf16 %v609, %v602
      %v694 = vpack.c.bf16 %v610, %v603
      %v695 = vpack.c.bf16 %v611, %v604
      %v696 = vpack.c.bf16 %v612, %v605
      %v697 = vpack.c.bf16 %v613, %v606
      %v698 = vpack.c.bf16 %v621, %v614
      %v699 = vpack.c.bf16 %v622, %v615
      %v700 = vpack.c.bf16 %v623, %v616
      %v701 = vpack.c.bf16 %v624, %v617
      %v702 = vpack.c.bf16 %v625, %v618
      %v703 = vpack.c.bf16 %v626, %v619
      %v704 = vpack.c.bf16 %v627, %v620
      %v705 = vpack.c.bf16 %v635, %v628
      %v706 = vpack.c.bf16 %v636, %v629
      %v707 = vpack.c.bf16 %v637, %v630
      %v708 = vpack.c.bf16 %v638, %v631
      %v709 = vpack.c.bf16 %v639, %v632
      %v710 = vpack.c.bf16 %v640, %v633
      %v711 = vpack.c.bf16 %v641, %v634
      %v712 = vpack.c.bf16 %v649, %v642
      %v713 = vpack.c.bf16 %v650, %v643
      %v714 = vpack.c.bf16 %v651, %v644
      %v715 = vpack.c.bf16 %v652, %v645
      %v716 = vpack.c.bf16 %v653, %v646
      %v717 = vpack.c.bf16 %v654, %v647
      %v718 = vpack.c.bf16 %v655, %v648
      %v719 = vpack.c.bf16 %v663, %v656
      %v720 = vpack.c.bf16 %v664, %v657
      %v721 = vpack.c.bf16 %v665, %v658
      %v722 = vpack.c.bf16 %v666, %v659
      %v723 = vpack.c.bf16 %v667, %v660
      %v724 = vpack.c.bf16 %v668, %v661
      %v725 = vpack.c.bf16 %v669, %v662
      %v726 = vld [vmem:[%s1] sm:$0xff]
      %v727 = vld [vmem:[%s1 + $0x8] sm:$0xff]
      %v728 = vld [vmem:[%s1 + $0x10] sm:$0xff]
      %v729 = vld [vmem:[%s1 + $0x18] sm:$0xff]
      %v730 = vld [vmem:[%s1 + $0x20] sm:$0xff]
      %v731 = vld [vmem:[%s1 + $0x28] sm:$0xff]
      %v732 = vld [vmem:[%s1 + $0x30] sm:$0xff]
      %v733 = vld [vmem:[%s1 + $0x38] sm:$0xff]
      %v734 = vld [vmem:[%s1 + $0x40] sm:$0xff]
      %v735 = vld [vmem:[%s1 + $0x48] sm:$0xff]
      %v736 = vld [vmem:[%s1 + $0x50] sm:$0xff]
      %v737 = vld [vmem:[%s1 + $0x58] sm:$0xff]
      %v738 = vld [vmem:[%s1 + $0x60] sm:$0xff]
      %v739 = vld [vmem:[%s1 + $0x68] sm:$0xff]
      %v740 = vld [vmem:[%s1 + $0x70] sm:$0xff]
      %v741 = vld [vmem:[%s1 + $0x78] sm:$0xff]
      %v742 = vld [vmem:[%s1 + $0x80] sm:$0xff]
      %v743 = vld [vmem:[%s1 + $0x88] sm:$0xff]
      %v744 = vld [vmem:[%s1 + $0x90] sm:$0xff]
      %v745 = vld [vmem:[%s1 + $0x98] sm:$0xff]
      %v746 = vld [vmem:[%s1 + $0xa0] sm:$0xff]
      %v747 = vld [vmem:[%s1 + $0xa8] sm:$0xff]
      %v748 = vld [vmem:[%s1 + $0xb0] sm:$0xff]
      %v749 = vld [vmem:[%s1 + $0xb8] sm:$0xff]
      %v750 = vld [vmem:[%s1 + $0xc0] sm:$0xff]
      %v751 = vld [vmem:[%s1 + $0xc8] sm:$0xff]
      %v752 = vld [vmem:[%s1 + $0xd0] sm:$0xff]
      %v753 = vld [vmem:[%s1 + $0xd8] sm:$0xff]
      %v754 = vld [vmem:[%s1 + $0xe0] sm:$0xff]
      %v755 = vld [vmem:[%s1 + $0xe8] sm:$0xff]
      %v756 = vld [vmem:[%s1 + $0xf0] sm:$0xff]
      %v757 = vld [vmem:[%s1 + $0xf8] sm:$0xff]
      %v758 = vld [vmem:[%s1 + $0x100] sm:$0xff]
      %v759 = vld [vmem:[%s1 + $0x108] sm:$0xff]
      %v760 = vld [vmem:[%s1 + $0x110] sm:$0xff]
      %v761 = vld [vmem:[%s1 + $0x118] sm:$0xff]
      %v762 = vld [vmem:[%s1 + $0x120] sm:$0xff]
      %v763 = vld [vmem:[%s1 + $0x128] sm:$0xff]
      %v764 = vld [vmem:[%s1 + $0x130] sm:$0xff]
      %v765 = vld [vmem:[%s1 + $0x138] sm:$0xff]
      %v766 = vld [vmem:[%s1 + $0x140] sm:$0xff]
      %v767 = vld [vmem:[%s1 + $0x148] sm:$0xff]
      %v768 = vld [vmem:[%s1 + $0x150] sm:$0xff]
      %v769 = vld [vmem:[%s1 + $0x158] sm:$0xff]
      %v770 = vld [vmem:[%s1 + $0x160] sm:$0xff]
      %v771 = vld [vmem:[%s1 + $0x168] sm:$0xff]
      %v772 = vld [vmem:[%s1 + $0x170] sm:$0xff]
      %v773 = vld [vmem:[%s1 + $0x178] sm:$0xff]
      %v774 = vld [vmem:[%s1 + $0x180] sm:$0xff]
      %v775 = vld [vmem:[%s1 + $0x188] sm:$0xff]
      %v776 = vld [vmem:[%s1 + $0x190] sm:$0xff]
      %v777 = vld [vmem:[%s1 + $0x198] sm:$0xff]
      %v778 = vld [vmem:[%s1 + $0x1a0] sm:$0xff]
      %v779 = vld [vmem:[%s1 + $0x1a8] sm:$0xff]
      %v780 = vld [vmem:[%s1 + $0x1b0] sm:$0xff]
      %v781 = vld [vmem:[%s1 + $0x1b8] sm:$0xff]
      %v782 = vld [vmem:[%s1 + $0x1c0] sm:$0xff]
      %v783 = vld [vmem:[%s1 + $0x1c8] sm:$0xff]
      %v784 = vld [vmem:[%s1 + $0x1d0] sm:$0xff]
      %v785 = vld [vmem:[%s1 + $0x1d8] sm:$0xff]
      %v786 = vld [vmem:[%s1 + $0x1e0] sm:$0xff]
      %v787 = vld [vmem:[%s1 + $0x1e8] sm:$0xff]
      %v788 = vld [vmem:[%s1 + $0x1f0] sm:$0xff]
      %v789 = vld [vmem:[%s1 + $0x1f8] sm:$0xff]
      %v790 = vld [vmem:[%s1 + $0x200] sm:$0xff]
      %v791 = vld [vmem:[%s1 + $0x208] sm:$0xff]
      %v792 = vld [vmem:[%s1 + $0x210] sm:$0xff]
      %v793 = vld [vmem:[%s1 + $0x218] sm:$0xff]
      %v794 = vld [vmem:[%s1 + $0x220] sm:$0xff]
      %v795 = vld [vmem:[%s1 + $0x228] sm:$0xff]
      %v796 = vld [vmem:[%s1 + $0x230] sm:$0xff]
      %v797 = vld [vmem:[%s1 + $0x238] sm:$0xff]
      %v798 = vld [vmem:[%s1 + $0x240] sm:$0xff]
      %v799 = vld [vmem:[%s1 + $0x248] sm:$0xff]
      %v800 = vld [vmem:[%s1 + $0x250] sm:$0xff]
      %v801 = vld [vmem:[%s1 + $0x258] sm:$0xff]
      %v802 = vld [vmem:[%s1 + $0x260] sm:$0xff]
      %v803 = vld [vmem:[%s1 + $0x268] sm:$0xff]
      %v804 = vld [vmem:[%s1 + $0x270] sm:$0xff]
      %v805 = vld [vmem:[%s1 + $0x278] sm:$0xff]
      %v806 = vld [vmem:[%s1 + $0x280] sm:$0xff]
      %v807 = vld [vmem:[%s1 + $0x288] sm:$0xff]
      %v808 = vld [vmem:[%s1 + $0x290] sm:$0xff]
      %v809 = vld [vmem:[%s1 + $0x298] sm:$0xff]
      %v810 = vld [vmem:[%s1 + $0x2a0] sm:$0xff]
      %v811 = vld [vmem:[%s1 + $0x2a8] sm:$0xff]
      %v812 = vld [vmem:[%s1 + $0x2b0] sm:$0xff]
      %v813 = vld [vmem:[%s1 + $0x2b8] sm:$0xff]
      %v814 = vld [vmem:[%s1 + $0x2c0] sm:$0xff]
      %v815 = vld [vmem:[%s1 + $0x2c8] sm:$0xff]
      %v816 = vld [vmem:[%s1 + $0x2d0] sm:$0xff]
      %v817 = vld [vmem:[%s1 + $0x2d8] sm:$0xff]
      %v818 = vld [vmem:[%s1 + $0x2e0] sm:$0xff]
      %v819 = vld [vmem:[%s1 + $0x2e8] sm:$0xff]
      %v820 = vld [vmem:[%s1 + $0x2f0] sm:$0xff]
      %v821 = vld [vmem:[%s1 + $0x2f8] sm:$0xff]
      %v822 = vld [vmem:[%s1 + $0x300] sm:$0xff]
      %v823 = vld [vmem:[%s1 + $0x308] sm:$0xff]
      %v824 = vld [vmem:[%s1 + $0x310] sm:$0xff]
      %v825 = vld [vmem:[%s1 + $0x318] sm:$0xff]
      %v826 = vld [vmem:[%s1 + $0x320] sm:$0xff]
      %v827 = vld [vmem:[%s1 + $0x328] sm:$0xff]
      %v828 = vld [vmem:[%s1 + $0x330] sm:$0xff]
      %v829 = vld [vmem:[%s1 + $0x338] sm:$0xff]
      %v830 = vld [vmem:[%s1 + $0x340] sm:$0xff]
      %v831 = vld [vmem:[%s1 + $0x348] sm:$0xff]
      %v832 = vld [vmem:[%s1 + $0x350] sm:$0xff]
      %v833 = vld [vmem:[%s1 + $0x358] sm:$0xff]
      %v834 = vld [vmem:[%s1 + $0x360] sm:$0xff]
      %v835 = vld [vmem:[%s1 + $0x368] sm:$0xff]
      %v836 = vld [vmem:[%s1 + $0x370] sm:$0xff]
      %v837 = vld [vmem:[%s1 + $0x378] sm:$0xff]
      %v838 = vld [vmem:[%s1 + $0x380] sm:$0xff]
      %v839 = vld [vmem:[%s1 + $0x388] sm:$0xff]
      %v840 = vld [vmem:[%s1 + $0x390] sm:$0xff]
      %v841 = vld [vmem:[%s1 + $0x398] sm:$0xff]
      %v842 = vld [vmem:[%s1 + $0x3a0] sm:$0xff]
      %v843 = vld [vmem:[%s1 + $0x3a8] sm:$0xff]
      %v844 = vld [vmem:[%s1 + $0x3b0] sm:$0xff]
      %v845 = vld [vmem:[%s1 + $0x3b8] sm:$0xff]
      %v846 = vld [vmem:[%s1 + $0x3c0] sm:$0xff]
      %v847 = vld [vmem:[%s1 + $0x3c8] sm:$0xff]
      %v848 = vld [vmem:[%s1 + $0x3d0] sm:$0xff]
      %v849 = vld [vmem:[%s1 + $0x3d8] sm:$0xff]
      %v850 = vld [vmem:[%s1 + $0x3e0] sm:$0xff]
      %v851 = vld [vmem:[%s1 + $0x3e8] sm:$0xff]
      %v852 = vld [vmem:[%s1 + $0x3f0] sm:$0xff]
      %v853 = vld [vmem:[%s1 + $0x3f8] sm:$0xff]
      %v854 = vld [vmem:[%s1 + $0x400] sm:$0xff]
      %v855 = vld [vmem:[%s1 + $0x408] sm:$0xff]
      %v856 = vld [vmem:[%s1 + $0x410] sm:$0xff]
      %v857 = vld [vmem:[%s1 + $0x418] sm:$0xff]
      %v858 = vld [vmem:[%s1 + $0x420] sm:$0xff]
      %v859 = vld [vmem:[%s1 + $0x428] sm:$0xff]
      %v860 = vld [vmem:[%s1 + $0x430] sm:$0xff]
      %v861 = vld [vmem:[%s1 + $0x438] sm:$0xff]
      %v862 = vld [vmem:[%s1 + $0x440] sm:$0xff]
      %v863 = vld [vmem:[%s1 + $0x448] sm:$0xff]
      %v864 = vld [vmem:[%s1 + $0x450] sm:$0xff]
      %v865 = vld [vmem:[%s1 + $0x458] sm:$0xff]
      %v866 = vld [vmem:[%s1 + $0x460] sm:$0xff]
      %v867 = vld [vmem:[%s1 + $0x468] sm:$0xff]
      %v868 = vld [vmem:[%s1 + $0x470] sm:$0xff]
      %v869 = vld [vmem:[%s1 + $0x478] sm:$0xff]
      %v870 = vld [vmem:[%s1 + $0x480] sm:$0xff]
      %v871 = vld [vmem:[%s1 + $0x488] sm:$0xff]
      %v872 = vld [vmem:[%s1 + $0x490] sm:$0xff]
      %v873 = vld [vmem:[%s1 + $0x498] sm:$0xff]
      %v874 = vld [vmem:[%s1 + $0x4a0] sm:$0xff]
      %v875 = vld [vmem:[%s1 + $0x4a8] sm:$0xff]
      %v876 = vld [vmem:[%s1 + $0x4b0] sm:$0xff]
      %v877 = vld [vmem:[%s1 + $0x4b8] sm:$0xff]
      %v878 = vld [vmem:[%s1 + $0x4c0] sm:$0xff]
      %v879 = vld [vmem:[%s1 + $0x4c8] sm:$0xff]
      %v880 = vld [vmem:[%s1 + $0x4d0] sm:$0xff]
      %v881 = vld [vmem:[%s1 + $0x4d8] sm:$0xff]
      %v882 = vld [vmem:[%s1 + $0x4e0] sm:$0xff]
      %v883 = vld [vmem:[%s1 + $0x4e8] sm:$0xff]
      %v884 = vld [vmem:[%s1 + $0x4f0] sm:$0xff]
      %v885 = vld [vmem:[%s1 + $0x4f8] sm:$0xff]
      %v886 = vld [vmem:[%s1 + $0x500] sm:$0xff]
      %v887 = vld [vmem:[%s1 + $0x508] sm:$0xff]
      %v888 = vld [vmem:[%s1 + $0x510] sm:$0xff]
      %v889 = vld [vmem:[%s1 + $0x518] sm:$0xff]
      %v890 = vld [vmem:[%s1 + $0x520] sm:$0xff]
      %v891 = vld [vmem:[%s1 + $0x528] sm:$0xff]
      %v892 = vld [vmem:[%s1 + $0x530] sm:$0xff]
      %v893 = vld [vmem:[%s1 + $0x538] sm:$0xff]
      %v894 = vld [vmem:[%s1 + $0x540] sm:$0xff]
      %v895 = vld [vmem:[%s1 + $0x548] sm:$0xff]
      %v896 = vld [vmem:[%s1 + $0x550] sm:$0xff]
      %v897 = vld [vmem:[%s1 + $0x558] sm:$0xff]
      %v898 = vld [vmem:[%s1 + $0x560] sm:$0xff]
      %v899 = vld [vmem:[%s1 + $0x568] sm:$0xff]
      %v900 = vld [vmem:[%s1 + $0x570] sm:$0xff]
      %v901 = vld [vmem:[%s1 + $0x578] sm:$0xff]
      %v902 = vld [vmem:[%s1 + $0x580] sm:$0xff]
      %v903 = vld [vmem:[%s1 + $0x588] sm:$0xff]
      %v904 = vld [vmem:[%s1 + $0x590] sm:$0xff]
      %v905 = vld [vmem:[%s1 + $0x598] sm:$0xff]
      %v906 = vld [vmem:[%s1 + $0x5a0] sm:$0xff]
      %v907 = vld [vmem:[%s1 + $0x5a8] sm:$0xff]
      %v908 = vld [vmem:[%s1 + $0x5b0] sm:$0xff]
      %v909 = vld [vmem:[%s1 + $0x5b8] sm:$0xff]
      %v910 = vld [vmem:[%s1 + $0x5c0] sm:$0xff]
      %v911 = vld [vmem:[%s1 + $0x5c8] sm:$0xff]
      %v912 = vld [vmem:[%s1 + $0x5d0] sm:$0xff]
      %v913 = vld [vmem:[%s1 + $0x5d8] sm:$0xff]
      %v914 = vld [vmem:[%s1 + $0x5e0] sm:$0xff]
      %v915 = vld [vmem:[%s1 + $0x5e8] sm:$0xff]
      %v916 = vld [vmem:[%s1 + $0x5f0] sm:$0xff]
      %v917 = vld [vmem:[%s1 + $0x5f8] sm:$0xff]
      %v918 = vld [vmem:[%s1 + $0x600] sm:$0xff]
      %v919 = vld [vmem:[%s1 + $0x608] sm:$0xff]
      %v920 = vld [vmem:[%s1 + $0x610] sm:$0xff]
      %v921 = vld [vmem:[%s1 + $0x618] sm:$0xff]
      %v922 = vld [vmem:[%s2] sm:$0xf]
      %v924 = vperm.slane %v922, 0
      %v925 = vperm.slane %v922, 1
      %v926 = vperm.slane %v922, 2
      %v927 = vperm.slane %v922, 3
      %v1128 = vunpack.c.l.b16 %v726
      %v1129 = vunpack.c.h.b16 %v726
      %v1130 = vunpack.c.l.b16 %v727
      %v1131 = vunpack.c.h.b16 %v727
      %v1132 = vunpack.c.l.b16 %v728
      %v1133 = vunpack.c.h.b16 %v728
      %v1134 = vunpack.c.l.b16 %v729
      %v1135 = vunpack.c.h.b16 %v729
      %v1136 = vunpack.c.l.b16 %v730
      %v1137 = vunpack.c.h.b16 %v730
      %v1138 = vunpack.c.l.b16 %v731
      %v1139 = vunpack.c.h.b16 %v731
      %v1140 = vunpack.c.l.b16 %v732
      %v1141 = vunpack.c.h.b16 %v732
      %v1142 = vunpack.c.l.b16 %v733
      %v1143 = vunpack.c.h.b16 %v733
      %v1144 = vunpack.c.l.b16 %v734
      %v1145 = vunpack.c.h.b16 %v734
      %v1146 = vunpack.c.l.b16 %v735
      %v1147 = vunpack.c.h.b16 %v735
      %v1148 = vunpack.c.l.b16 %v736
      %v1149 = vunpack.c.h.b16 %v736
      %v1150 = vunpack.c.l.b16 %v737
      %v1151 = vunpack.c.h.b16 %v737
      %v1152 = vunpack.c.l.b16 %v738
      %v1153 = vunpack.c.h.b16 %v738
      %v1154 = vunpack.c.l.b16 %v739
      %v1155 = vunpack.c.h.b16 %v739
      %v1156 = vunpack.c.l.b16 %v740
      %v1157 = vunpack.c.h.b16 %v740
      %v1158 = vunpack.c.l.b16 %v741
      %v1159 = vunpack.c.h.b16 %v741
      %v1160 = vunpack.c.l.b16 %v742
      %v1161 = vunpack.c.h.b16 %v742
      %v1162 = vunpack.c.l.b16 %v743
      %v1163 = vunpack.c.h.b16 %v743
      %v1164 = vunpack.c.l.b16 %v744
      %v1165 = vunpack.c.h.b16 %v744
      %v1166 = vunpack.c.l.b16 %v745
      %v1167 = vunpack.c.h.b16 %v745
      %v1168 = vunpack.c.l.b16 %v746
      %v1169 = vunpack.c.h.b16 %v746
      %v1170 = vunpack.c.l.b16 %v747
      %v1171 = vunpack.c.h.b16 %v747
      %v1172 = vunpack.c.l.b16 %v748
      %v1173 = vunpack.c.h.b16 %v748
      %v1174 = vunpack.c.l.b16 %v749
      %v1175 = vunpack.c.h.b16 %v749
      %v1176 = vunpack.c.l.b16 %v750
      %v1177 = vunpack.c.h.b16 %v750
      %v1178 = vunpack.c.l.b16 %v751
      %v1179 = vunpack.c.h.b16 %v751
      %v1180 = vunpack.c.l.b16 %v752
      %v1181 = vunpack.c.h.b16 %v752
      %v1182 = vunpack.c.l.b16 %v753
      %v1183 = vunpack.c.h.b16 %v753
      %v1184 = vunpack.c.l.b16 %v754
      %v1185 = vunpack.c.h.b16 %v754
      %v1186 = vunpack.c.l.b16 %v755
      %v1187 = vunpack.c.h.b16 %v755
      %v1188 = vunpack.c.l.b16 %v756
      %v1189 = vunpack.c.h.b16 %v756
      %v1190 = vunpack.c.l.b16 %v757
      %v1191 = vunpack.c.h.b16 %v757
      %v1192 = vunpack.c.l.b16 %v758
      %v1193 = vunpack.c.h.b16 %v758
      %v1194 = vunpack.c.l.b16 %v759
      %v1195 = vunpack.c.h.b16 %v759
      %v1196 = vunpack.c.l.b16 %v760
      %v1197 = vunpack.c.h.b16 %v760
      %v1198 = vunpack.c.l.b16 %v761
      %v1199 = vunpack.c.h.b16 %v761
      %v1200 = vunpack.c.l.b16 %v762
      %v1201 = vunpack.c.h.b16 %v762
      %v1202 = vunpack.c.l.b16 %v763
      %v1203 = vunpack.c.h.b16 %v763
      %v1204 = vunpack.c.l.b16 %v764
      %v1205 = vunpack.c.h.b16 %v764
      %v1206 = vunpack.c.l.b16 %v765
      %v1207 = vunpack.c.h.b16 %v765
      %v1208 = vunpack.c.l.b16 %v766
      %v1209 = vunpack.c.h.b16 %v766
      %v1210 = vunpack.c.l.b16 %v767
      %v1211 = vunpack.c.h.b16 %v767
      %v1212 = vunpack.c.l.b16 %v768
      %v1213 = vunpack.c.h.b16 %v768
      %v1214 = vunpack.c.l.b16 %v769
      %v1215 = vunpack.c.h.b16 %v769
      %v1216 = vunpack.c.l.b16 %v770
      %v1217 = vunpack.c.h.b16 %v770
      %v1218 = vunpack.c.l.b16 %v771
      %v1219 = vunpack.c.h.b16 %v771
      %v1220 = vunpack.c.l.b16 %v772
      %v1221 = vunpack.c.h.b16 %v772
      %v1222 = vunpack.c.l.b16 %v773
      %v1223 = vunpack.c.h.b16 %v773
      %v1224 = vunpack.c.l.b16 %v774
      %v1225 = vunpack.c.h.b16 %v774
      %v1226 = vunpack.c.l.b16 %v775
      %v1227 = vunpack.c.h.b16 %v775
      %v1228 = vunpack.c.l.b16 %v776
      %v1229 = vunpack.c.h.b16 %v776
      %v1230 = vunpack.c.l.b16 %v777
      %v1231 = vunpack.c.h.b16 %v777
      %v1232 = vunpack.c.l.b16 %v778
      %v1233 = vunpack.c.h.b16 %v778
      %v1234 = vunpack.c.l.b16 %v779
      %v1235 = vunpack.c.h.b16 %v779
      %v1236 = vunpack.c.l.b16 %v780
      %v1237 = vunpack.c.h.b16 %v780
      %v1238 = vunpack.c.l.b16 %v781
      %v1239 = vunpack.c.h.b16 %v781
      %v1240 = vunpack.c.l.b16 %v782
      %v1241 = vunpack.c.h.b16 %v782
      %v1242 = vunpack.c.l.b16 %v783
      %v1243 = vunpack.c.h.b16 %v783
      %v1244 = vunpack.c.l.b16 %v784
      %v1245 = vunpack.c.h.b16 %v784
      %v1246 = vunpack.c.l.b16 %v785
      %v1247 = vunpack.c.h.b16 %v785
      %v1248 = vunpack.c.l.b16 %v786
      %v1249 = vunpack.c.h.b16 %v786
      %v1250 = vunpack.c.l.b16 %v787
      %v1251 = vunpack.c.h.b16 %v787
      %v1252 = vunpack.c.l.b16 %v788
      %v1253 = vunpack.c.h.b16 %v788
      %v1254 = vunpack.c.l.b16 %v789
      %v1255 = vunpack.c.h.b16 %v789
      %v1256 = vunpack.c.l.b16 %v790
      %v1257 = vunpack.c.h.b16 %v790
      %v1258 = vunpack.c.l.b16 %v791
      %v1259 = vunpack.c.h.b16 %v791
      %v1260 = vunpack.c.l.b16 %v792
      %v1261 = vunpack.c.h.b16 %v792
      %v1262 = vunpack.c.l.b16 %v793
      %v1263 = vunpack.c.h.b16 %v793
      %v1264 = vunpack.c.l.b16 %v794
      %v1265 = vunpack.c.h.b16 %v794
      %v1266 = vunpack.c.l.b16 %v795
      %v1267 = vunpack.c.h.b16 %v795
      %v1268 = vunpack.c.l.b16 %v796
      %v1269 = vunpack.c.h.b16 %v796
      %v1270 = vunpack.c.l.b16 %v797
      %v1271 = vunpack.c.h.b16 %v797
      %v1272 = vunpack.c.l.b16 %v798
      %v1273 = vunpack.c.h.b16 %v798
      %v1274 = vunpack.c.l.b16 %v799
      %v1275 = vunpack.c.h.b16 %v799
      %v1276 = vunpack.c.l.b16 %v800
      %v1277 = vunpack.c.h.b16 %v800
      %v1278 = vunpack.c.l.b16 %v801
      %v1279 = vunpack.c.h.b16 %v801
      %v1280 = vunpack.c.l.b16 %v802
      %v1281 = vunpack.c.h.b16 %v802
      %v1282 = vunpack.c.l.b16 %v803
      %v1283 = vunpack.c.h.b16 %v803
      %v1284 = vunpack.c.l.b16 %v804
      %v1285 = vunpack.c.h.b16 %v804
      %v1286 = vunpack.c.l.b16 %v805
      %v1287 = vunpack.c.h.b16 %v805
      %v1288 = vunpack.c.l.b16 %v806
      %v1289 = vunpack.c.h.b16 %v806
      %v1290 = vunpack.c.l.b16 %v807
      %v1291 = vunpack.c.h.b16 %v807
      %v1292 = vunpack.c.l.b16 %v808
      %v1293 = vunpack.c.h.b16 %v808
      %v1294 = vunpack.c.l.b16 %v809
      %v1295 = vunpack.c.h.b16 %v809
      %v1296 = vunpack.c.l.b16 %v810
      %v1297 = vunpack.c.h.b16 %v810
      %v1298 = vunpack.c.l.b16 %v811
      %v1299 = vunpack.c.h.b16 %v811
      %v1300 = vunpack.c.l.b16 %v812
      %v1301 = vunpack.c.h.b16 %v812
      %v1302 = vunpack.c.l.b16 %v813
      %v1303 = vunpack.c.h.b16 %v813
      %v1304 = vunpack.c.l.b16 %v814
      %v1305 = vunpack.c.h.b16 %v814
      %v1306 = vunpack.c.l.b16 %v815
      %v1307 = vunpack.c.h.b16 %v815
      %v1308 = vunpack.c.l.b16 %v816
      %v1309 = vunpack.c.h.b16 %v816
      %v1310 = vunpack.c.l.b16 %v817
      %v1311 = vunpack.c.h.b16 %v817
      %v1312 = vunpack.c.l.b16 %v818
      %v1313 = vunpack.c.h.b16 %v818
      %v1314 = vunpack.c.l.b16 %v819
      %v1315 = vunpack.c.h.b16 %v819
      %v1316 = vunpack.c.l.b16 %v820
      %v1317 = vunpack.c.h.b16 %v820
      %v1318 = vunpack.c.l.b16 %v821
      %v1319 = vunpack.c.h.b16 %v821
      %v1320 = vunpack.c.l.b16 %v822
      %v1321 = vunpack.c.h.b16 %v822
      %v1322 = vunpack.c.l.b16 %v823
      %v1323 = vunpack.c.h.b16 %v823
      %v1324 = vunpack.c.l.b16 %v824
      %v1325 = vunpack.c.h.b16 %v824
      %v1326 = vunpack.c.l.b16 %v825
      %v1327 = vunpack.c.h.b16 %v825
      %v1328 = vunpack.c.l.b16 %v826
      %v1329 = vunpack.c.h.b16 %v826
      %v1330 = vunpack.c.l.b16 %v827
      %v1331 = vunpack.c.h.b16 %v827
      %v1332 = vunpack.c.l.b16 %v828
      %v1333 = vunpack.c.h.b16 %v828
      %v1334 = vunpack.c.l.b16 %v829
      %v1335 = vunpack.c.h.b16 %v829
      %v1336 = vunpack.c.l.b16 %v830
      %v1337 = vunpack.c.h.b16 %v830
      %v1338 = vunpack.c.l.b16 %v831
      %v1339 = vunpack.c.h.b16 %v831
      %v1340 = vunpack.c.l.b16 %v832
      %v1341 = vunpack.c.h.b16 %v832
      %v1342 = vunpack.c.l.b16 %v833
      %v1343 = vunpack.c.h.b16 %v833
      %v1344 = vunpack.c.l.b16 %v834
      %v1345 = vunpack.c.h.b16 %v834
      %v1346 = vunpack.c.l.b16 %v835
      %v1347 = vunpack.c.h.b16 %v835
      %v1348 = vunpack.c.l.b16 %v836
      %v1349 = vunpack.c.h.b16 %v836
      %v1350 = vunpack.c.l.b16 %v837
      %v1351 = vunpack.c.h.b16 %v837
      %v1352 = vunpack.c.l.b16 %v838
      %v1353 = vunpack.c.h.b16 %v838
      %v1354 = vunpack.c.l.b16 %v839
      %v1355 = vunpack.c.h.b16 %v839
      %v1356 = vunpack.c.l.b16 %v840
      %v1357 = vunpack.c.h.b16 %v840
      %v1358 = vunpack.c.l.b16 %v841
      %v1359 = vunpack.c.h.b16 %v841
      %v1360 = vunpack.c.l.b16 %v842
      %v1361 = vunpack.c.h.b16 %v842
      %v1362 = vunpack.c.l.b16 %v843
      %v1363 = vunpack.c.h.b16 %v843
      %v1364 = vunpack.c.l.b16 %v844
      %v1365 = vunpack.c.h.b16 %v844
      %v1366 = vunpack.c.l.b16 %v845
      %v1367 = vunpack.c.h.b16 %v845
      %v1368 = vunpack.c.l.b16 %v846
      %v1369 = vunpack.c.h.b16 %v846
      %v1370 = vunpack.c.l.b16 %v847
      %v1371 = vunpack.c.h.b16 %v847
      %v1372 = vunpack.c.l.b16 %v848
      %v1373 = vunpack.c.h.b16 %v848
      %v1374 = vunpack.c.l.b16 %v849
      %v1375 = vunpack.c.h.b16 %v849
      %v1376 = vunpack.c.l.b16 %v850
      %v1377 = vunpack.c.h.b16 %v850
      %v1378 = vunpack.c.l.b16 %v851
      %v1379 = vunpack.c.h.b16 %v851
      %v1380 = vunpack.c.l.b16 %v852
      %v1381 = vunpack.c.h.b16 %v852
      %v1382 = vunpack.c.l.b16 %v853
      %v1383 = vunpack.c.h.b16 %v853
      %v1384 = vunpack.c.l.b16 %v854
      %v1385 = vunpack.c.h.b16 %v854
      %v1386 = vunpack.c.l.b16 %v855
      %v1387 = vunpack.c.h.b16 %v855
      %v1388 = vunpack.c.l.b16 %v856
      %v1389 = vunpack.c.h.b16 %v856
      %v1390 = vunpack.c.l.b16 %v857
      %v1391 = vunpack.c.h.b16 %v857
      %v1392 = vunpack.c.l.b16 %v858
      %v1393 = vunpack.c.h.b16 %v858
      %v1394 = vunpack.c.l.b16 %v859
      %v1395 = vunpack.c.h.b16 %v859
      %v1396 = vunpack.c.l.b16 %v860
      %v1397 = vunpack.c.h.b16 %v860
      %v1398 = vunpack.c.l.b16 %v861
      %v1399 = vunpack.c.h.b16 %v861
      %v1400 = vunpack.c.l.b16 %v862
      %v1401 = vunpack.c.h.b16 %v862
      %v1402 = vunpack.c.l.b16 %v863
      %v1403 = vunpack.c.h.b16 %v863
      %v1404 = vunpack.c.l.b16 %v864
      %v1405 = vunpack.c.h.b16 %v864
      %v1406 = vunpack.c.l.b16 %v865
      %v1407 = vunpack.c.h.b16 %v865
      %v1408 = vunpack.c.l.b16 %v866
      %v1409 = vunpack.c.h.b16 %v866
      %v1410 = vunpack.c.l.b16 %v867
      %v1411 = vunpack.c.h.b16 %v867
      %v1412 = vunpack.c.l.b16 %v868
      %v1413 = vunpack.c.h.b16 %v868
      %v1414 = vunpack.c.l.b16 %v869
      %v1415 = vunpack.c.h.b16 %v869
      %v1416 = vunpack.c.l.b16 %v870
      %v1417 = vunpack.c.h.b16 %v870
      %v1418 = vunpack.c.l.b16 %v871
      %v1419 = vunpack.c.h.b16 %v871
      %v1420 = vunpack.c.l.b16 %v872
      %v1421 = vunpack.c.h.b16 %v872
      %v1422 = vunpack.c.l.b16 %v873
      %v1423 = vunpack.c.h.b16 %v873
      %v1424 = vunpack.c.l.b16 %v874
      %v1425 = vunpack.c.h.b16 %v874
      %v1426 = vunpack.c.l.b16 %v875
      %v1427 = vunpack.c.h.b16 %v875
      %v1428 = vunpack.c.l.b16 %v876
      %v1429 = vunpack.c.h.b16 %v876
      %v1430 = vunpack.c.l.b16 %v877
      %v1431 = vunpack.c.h.b16 %v877
      %v1432 = vunpack.c.l.b16 %v878
      %v1433 = vunpack.c.h.b16 %v878
      %v1434 = vunpack.c.l.b16 %v879
      %v1435 = vunpack.c.h.b16 %v879
      %v1436 = vunpack.c.l.b16 %v880
      %v1437 = vunpack.c.h.b16 %v880
      %v1438 = vunpack.c.l.b16 %v881
      %v1439 = vunpack.c.h.b16 %v881
      %v1440 = vunpack.c.l.b16 %v882
      %v1441 = vunpack.c.h.b16 %v882
      %v1442 = vunpack.c.l.b16 %v883
      %v1443 = vunpack.c.h.b16 %v883
      %v1444 = vunpack.c.l.b16 %v884
      %v1445 = vunpack.c.h.b16 %v884
      %v1446 = vunpack.c.l.b16 %v885
      %v1447 = vunpack.c.h.b16 %v885
      %v1448 = vunpack.c.l.b16 %v886
      %v1449 = vunpack.c.h.b16 %v886
      %v1450 = vunpack.c.l.b16 %v887
      %v1451 = vunpack.c.h.b16 %v887
      %v1452 = vunpack.c.l.b16 %v888
      %v1453 = vunpack.c.h.b16 %v888
      %v1454 = vunpack.c.l.b16 %v889
      %v1455 = vunpack.c.h.b16 %v889
      %v1456 = vunpack.c.l.b16 %v890
      %v1457 = vunpack.c.h.b16 %v890
      %v1458 = vunpack.c.l.b16 %v891
      %v1459 = vunpack.c.h.b16 %v891
      %v1460 = vunpack.c.l.b16 %v892
      %v1461 = vunpack.c.h.b16 %v892
      %v1462 = vunpack.c.l.b16 %v893
      %v1463 = vunpack.c.h.b16 %v893
      %v1464 = vunpack.c.l.b16 %v894
      %v1465 = vunpack.c.h.b16 %v894
      %v1466 = vunpack.c.l.b16 %v895
      %v1467 = vunpack.c.h.b16 %v895
      %v1468 = vunpack.c.l.b16 %v896
      %v1469 = vunpack.c.h.b16 %v896
      %v1470 = vunpack.c.l.b16 %v897
      %v1471 = vunpack.c.h.b16 %v897
      %v1472 = vunpack.c.l.b16 %v898
      %v1473 = vunpack.c.h.b16 %v898
      %v1474 = vunpack.c.l.b16 %v899
      %v1475 = vunpack.c.h.b16 %v899
      %v1476 = vunpack.c.l.b16 %v900
      %v1477 = vunpack.c.h.b16 %v900
      %v1478 = vunpack.c.l.b16 %v901
      %v1479 = vunpack.c.h.b16 %v901
      %v1480 = vunpack.c.l.b16 %v902
      %v1481 = vunpack.c.h.b16 %v902
      %v1482 = vunpack.c.l.b16 %v903
      %v1483 = vunpack.c.h.b16 %v903
      %v1484 = vunpack.c.l.b16 %v904
      %v1485 = vunpack.c.h.b16 %v904
      %v1486 = vunpack.c.l.b16 %v905
      %v1487 = vunpack.c.h.b16 %v905
      %v1488 = vunpack.c.l.b16 %v906
      %v1489 = vunpack.c.h.b16 %v906
      %v1490 = vunpack.c.l.b16 %v907
      %v1491 = vunpack.c.h.b16 %v907
      %v1492 = vunpack.c.l.b16 %v908
      %v1493 = vunpack.c.h.b16 %v908
      %v1494 = vunpack.c.l.b16 %v909
      %v1495 = vunpack.c.h.b16 %v909
      %v1496 = vunpack.c.l.b16 %v910
      %v1497 = vunpack.c.h.b16 %v910
      %v1498 = vunpack.c.l.b16 %v911
      %v1499 = vunpack.c.h.b16 %v911
      %v1500 = vunpack.c.l.b16 %v912
      %v1501 = vunpack.c.h.b16 %v912
      %v1502 = vunpack.c.l.b16 %v913
      %v1503 = vunpack.c.h.b16 %v913
      %v1504 = vunpack.c.l.b16 %v914
      %v1505 = vunpack.c.h.b16 %v914
      %v1506 = vunpack.c.l.b16 %v915
      %v1507 = vunpack.c.h.b16 %v915
      %v1508 = vunpack.c.l.b16 %v916
      %v1509 = vunpack.c.h.b16 %v916
      %v1510 = vunpack.c.l.b16 %v917
      %v1511 = vunpack.c.h.b16 %v917
      %v1512 = vunpack.c.l.b16 %v918
      %v1513 = vunpack.c.h.b16 %v918
      %v1514 = vunpack.c.l.b16 %v919
      %v1515 = vunpack.c.h.b16 %v919
      %v1516 = vunpack.c.l.b16 %v920
      %v1517 = vunpack.c.h.b16 %v920
      %v1518 = vunpack.c.l.b16 %v921
      %v1519 = vunpack.c.h.b16 %v921
      %v1520 = vpack.c.b16 %v1132, %v1128
      %v1521 = vpack.c.b16 %v1133, %v1129
      %v1522 = vpack.c.b16 %v1134, %v1130
      %v1523 = vpack.c.b16 %v1135, %v1131
      %v1524 = vpack.c.b16 %v1140, %v1136
      %v1525 = vpack.c.b16 %v1141, %v1137
      %v1526 = vpack.c.b16 %v1142, %v1138
      %v1527 = vpack.c.b16 %v1143, %v1139
      %v1528 = vpack.c.b16 %v1148, %v1144
      %v1529 = vpack.c.b16 %v1149, %v1145
      %v1530 = vpack.c.b16 %v1150, %v1146
      %v1531 = vpack.c.b16 %v1151, %v1147
      %v1532 = vpack.c.b16 %v1156, %v1152
      %v1533 = vpack.c.b16 %v1157, %v1153
      %v1534 = vpack.c.b16 %v1158, %v1154
      %v1535 = vpack.c.b16 %v1159, %v1155
      %v1536 = vpack.c.b16 %v1164, %v1160
      %v1537 = vpack.c.b16 %v1165, %v1161
      %v1538 = vpack.c.b16 %v1166, %v1162
      %v1539 = vpack.c.b16 %v1167, %v1163
      %v1540 = vpack.c.b16 %v1172, %v1168
      %v1541 = vpack.c.b16 %v1173, %v1169
      %v1542 = vpack.c.b16 %v1174, %v1170
      %v1543 = vpack.c.b16 %v1175, %v1171
      %v1544 = vpack.c.b16 %v1180, %v1176
      %v1545 = vpack.c.b16 %v1181, %v1177
      %v1546 = vpack.c.b16 %v1182, %v1178
      %v1547 = vpack.c.b16 %v1183, %v1179
      %v1548 = vpack.c.b16 %v1188, %v1184
      %v1549 = vpack.c.b16 %v1189, %v1185
      %v1550 = vpack.c.b16 %v1190, %v1186
      %v1551 = vpack.c.b16 %v1191, %v1187
      %v1552 = vpack.c.b16 %v1196, %v1192
      %v1553 = vpack.c.b16 %v1197, %v1193
      %v1554 = vpack.c.b16 %v1198, %v1194
      %v1555 = vpack.c.b16 %v1199, %v1195
      %v1556 = vpack.c.b16 %v1204, %v1200
      %v1557 = vpack.c.b16 %v1205, %v1201
      %v1558 = vpack.c.b16 %v1206, %v1202
      %v1559 = vpack.c.b16 %v1207, %v1203
      %v1560 = vpack.c.b16 %v1212, %v1208
      %v1561 = vpack.c.b16 %v1213, %v1209
      %v1562 = vpack.c.b16 %v1214, %v1210
      %v1563 = vpack.c.b16 %v1215, %v1211
      %v1564 = vpack.c.b16 %v1220, %v1216
      %v1565 = vpack.c.b16 %v1221, %v1217
      %v1566 = vpack.c.b16 %v1222, %v1218
      %v1567 = vpack.c.b16 %v1223, %v1219
      %v1568 = vpack.c.b16 %v1228, %v1224
      %v1569 = vpack.c.b16 %v1229, %v1225
      %v1570 = vpack.c.b16 %v1230, %v1226
      %v1571 = vpack.c.b16 %v1231, %v1227
      %v1572 = vpack.c.b16 %v1236, %v1232
      %v1573 = vpack.c.b16 %v1237, %v1233
      %v1574 = vpack.c.b16 %v1238, %v1234
      %v1575 = vpack.c.b16 %v1239, %v1235
      %v1576 = vpack.c.b16 %v1244, %v1240
      %v1577 = vpack.c.b16 %v1245, %v1241
      %v1578 = vpack.c.b16 %v1246, %v1242
      %v1579 = vpack.c.b16 %v1247, %v1243
      %v1580 = vpack.c.b16 %v1252, %v1248
      %v1581 = vpack.c.b16 %v1253, %v1249
      %v1582 = vpack.c.b16 %v1254, %v1250
      %v1583 = vpack.c.b16 %v1255, %v1251
      %v1584 = vpack.c.b16 %v1260, %v1256
      %v1585 = vpack.c.b16 %v1261, %v1257
      %v1586 = vpack.c.b16 %v1262, %v1258
      %v1587 = vpack.c.b16 %v1263, %v1259
      %v1588 = vpack.c.b16 %v1268, %v1264
      %v1589 = vpack.c.b16 %v1269, %v1265
      %v1590 = vpack.c.b16 %v1270, %v1266
      %v1591 = vpack.c.b16 %v1271, %v1267
      %v1592 = vpack.c.b16 %v1276, %v1272
      %v1593 = vpack.c.b16 %v1277, %v1273
      %v1594 = vpack.c.b16 %v1278, %v1274
      %v1595 = vpack.c.b16 %v1279, %v1275
      %v1596 = vpack.c.b16 %v1284, %v1280
      %v1597 = vpack.c.b16 %v1285, %v1281
      %v1598 = vpack.c.b16 %v1286, %v1282
      %v1599 = vpack.c.b16 %v1287, %v1283
      %v1600 = vpack.c.b16 %v1292, %v1288
      %v1601 = vpack.c.b16 %v1293, %v1289
      %v1602 = vpack.c.b16 %v1294, %v1290
      %v1603 = vpack.c.b16 %v1295, %v1291
      %v1604 = vpack.c.b16 %v1300, %v1296
      %v1605 = vpack.c.b16 %v1301, %v1297
      %v1606 = vpack.c.b16 %v1302, %v1298
      %v1607 = vpack.c.b16 %v1303, %v1299
      %v1608 = vpack.c.b16 %v1308, %v1304
      %v1609 = vpack.c.b16 %v1309, %v1305
      %v1610 = vpack.c.b16 %v1310, %v1306
      %v1611 = vpack.c.b16 %v1311, %v1307
      %v1612 = vpack.c.b16 %v1316, %v1312
      %v1613 = vpack.c.b16 %v1317, %v1313
      %v1614 = vpack.c.b16 %v1318, %v1314
      %v1615 = vpack.c.b16 %v1319, %v1315
      %v1616 = vpack.c.b16 %v1324, %v1320
      %v1617 = vpack.c.b16 %v1325, %v1321
      %v1618 = vpack.c.b16 %v1326, %v1322
      %v1619 = vpack.c.b16 %v1327, %v1323
      %v1620 = vpack.c.b16 %v1332, %v1328
      %v1621 = vpack.c.b16 %v1333, %v1329
      %v1622 = vpack.c.b16 %v1334, %v1330
      %v1623 = vpack.c.b16 %v1335, %v1331
      %v1624 = vpack.c.b16 %v1340, %v1336
      %v1625 = vpack.c.b16 %v1341, %v1337
      %v1626 = vpack.c.b16 %v1342, %v1338
      %v1627 = vpack.c.b16 %v1343, %v1339
      %v1628 = vpack.c.b16 %v1348, %v1344
      %v1629 = vpack.c.b16 %v1349, %v1345
      %v1630 = vpack.c.b16 %v1350, %v1346
      %v1631 = vpack.c.b16 %v1351, %v1347
      %v1632 = vpack.c.b16 %v1356, %v1352
      %v1633 = vpack.c.b16 %v1357, %v1353
      %v1634 = vpack.c.b16 %v1358, %v1354
      %v1635 = vpack.c.b16 %v1359, %v1355
      %v1636 = vpack.c.b16 %v1364, %v1360
      %v1637 = vpack.c.b16 %v1365, %v1361
      %v1638 = vpack.c.b16 %v1366, %v1362
      %v1639 = vpack.c.b16 %v1367, %v1363
      %v1640 = vpack.c.b16 %v1372, %v1368
      %v1641 = vpack.c.b16 %v1373, %v1369
      %v1642 = vpack.c.b16 %v1374, %v1370
      %v1643 = vpack.c.b16 %v1375, %v1371
      %v1644 = vpack.c.b16 %v1380, %v1376
      %v1645 = vpack.c.b16 %v1381, %v1377
      %v1646 = vpack.c.b16 %v1382, %v1378
      %v1647 = vpack.c.b16 %v1383, %v1379
      %v1648 = vpack.c.b16 %v1388, %v1384
      %v1649 = vpack.c.b16 %v1389, %v1385
      %v1650 = vpack.c.b16 %v1390, %v1386
      %v1651 = vpack.c.b16 %v1391, %v1387
      %v1652 = vpack.c.b16 %v1396, %v1392
      %v1653 = vpack.c.b16 %v1397, %v1393
      %v1654 = vpack.c.b16 %v1398, %v1394
      %v1655 = vpack.c.b16 %v1399, %v1395
      %v1656 = vpack.c.b16 %v1404, %v1400
      %v1657 = vpack.c.b16 %v1405, %v1401
      %v1658 = vpack.c.b16 %v1406, %v1402
      %v1659 = vpack.c.b16 %v1407, %v1403
      %v1660 = vpack.c.b16 %v1412, %v1408
      %v1661 = vpack.c.b16 %v1413, %v1409
      %v1662 = vpack.c.b16 %v1414, %v1410
      %v1663 = vpack.c.b16 %v1415, %v1411
      %v1664 = vpack.c.b16 %v1420, %v1416
      %v1665 = vpack.c.b16 %v1421, %v1417
      %v1666 = vpack.c.b16 %v1422, %v1418
      %v1667 = vpack.c.b16 %v1423, %v1419
      %v1668 = vpack.c.b16 %v1428, %v1424
      %v1669 = vpack.c.b16 %v1429, %v1425
      %v1670 = vpack.c.b16 %v1430, %v1426
      %v1671 = vpack.c.b16 %v1431, %v1427
      %v1672 = vpack.c.b16 %v1436, %v1432
      %v1673 = vpack.c.b16 %v1437, %v1433
      %v1674 = vpack.c.b16 %v1438, %v1434
      %v1675 = vpack.c.b16 %v1439, %v1435
      %v1676 = vpack.c.b16 %v1444, %v1440
      %v1677 = vpack.c.b16 %v1445, %v1441
      %v1678 = vpack.c.b16 %v1446, %v1442
      %v1679 = vpack.c.b16 %v1447, %v1443
      %v1680 = vpack.c.b16 %v1452, %v1448
      %v1681 = vpack.c.b16 %v1453, %v1449
      %v1682 = vpack.c.b16 %v1454, %v1450
      %v1683 = vpack.c.b16 %v1455, %v1451
      %v1684 = vpack.c.b16 %v1460, %v1456
      %v1685 = vpack.c.b16 %v1461, %v1457
      %v1686 = vpack.c.b16 %v1462, %v1458
      %v1687 = vpack.c.b16 %v1463, %v1459
      %v1688 = vpack.c.b16 %v1468, %v1464
      %v1689 = vpack.c.b16 %v1469, %v1465
      %v1690 = vpack.c.b16 %v1470, %v1466
      %v1691 = vpack.c.b16 %v1471, %v1467
      %v1692 = vpack.c.b16 %v1476, %v1472
      %v1693 = vpack.c.b16 %v1477, %v1473
      %v1694 = vpack.c.b16 %v1478, %v1474
      %v1695 = vpack.c.b16 %v1479, %v1475
      %v1696 = vpack.c.b16 %v1484, %v1480
      %v1697 = vpack.c.b16 %v1485, %v1481
      %v1698 = vpack.c.b16 %v1486, %v1482
      %v1699 = vpack.c.b16 %v1487, %v1483
      %v1700 = vpack.c.b16 %v1492, %v1488
      %v1701 = vpack.c.b16 %v1493, %v1489
      %v1702 = vpack.c.b16 %v1494, %v1490
      %v1703 = vpack.c.b16 %v1495, %v1491
      %v1704 = vpack.c.b16 %v1500, %v1496
      %v1705 = vpack.c.b16 %v1501, %v1497
      %v1706 = vpack.c.b16 %v1502, %v1498
      %v1707 = vpack.c.b16 %v1503, %v1499
      %v1708 = vpack.c.b16 %v1508, %v1504
      %v1709 = vpack.c.b16 %v1509, %v1505
      %v1710 = vpack.c.b16 %v1510, %v1506
      %v1711 = vpack.c.b16 %v1511, %v1507
      %v1712 = vpack.c.b16 %v1516, %v1512
      %v1713 = vpack.c.b16 %v1517, %v1513
      %v1714 = vpack.c.b16 %v1518, %v1514
      %v1715 = vpack.c.b16 %v1519, %v1515
      %vm1912 = vcmask 130048
      %v1914 = vsel %vm1912, %v676, 0
      %v1917 = vsel %vm1912, %v683, 0
      %v1920 = vsel %vm1912, %v690, 0
      %v1923 = vsel %vm1912, %v697, 0
      %v1926 = vsel %vm1912, %v704, 0
      %v1929 = vsel %vm1912, %v711, 0
      %v1932 = vsel %vm1912, %v718, 0
      %v1935 = vsel %vm1912, %v725, 0
      %1937 = vmatpush.bf16.msra.mxu0 %v1548
      %1938 = vmatpush.bf16.msra.mxu0 %v1544
      %1939 = vmatpush.bf16.msra.mxu0 %v1540
      %1940 = vmatpush.bf16.msra.mxu0 %v1536
      %1941 = vmatpush.bf16.msra.mxu0 %v1532
      %1942 = vmatpush.bf16.msra.mxu0 %v1528
      %1943 = vmatpush.bf16.msra.mxu0 %v1524
      %1944 = vmatpush.bf16.msra.mxu0 %v1520
      %1945 = vmatmul.bf16.gmra.mxu0 %v670
      %v1946 = vpop.f32.mrf.mxu0
      %v1947 = vadd.f32 %v924, %v1946
      %v1948 = vpop.f32.mrf.mxu0
      %v1949 = vadd.f32 %v924, %v1948
      %1950 = vmatmul.bf16.gmra.mxu0 %v677
      %v1951 = vpop.f32.mrf.mxu0
      %v1952 = vadd.f32 %v924, %v1951
      %v1953 = vpop.f32.mrf.mxu0
      %v1954 = vadd.f32 %v924, %v1953
      %1955 = vmatmul.bf16.gmra.mxu0 %v684
      %v1956 = vpop.f32.mrf.mxu0
      %v1957 = vadd.f32 %v924, %v1956
      %v1958 = vpop.f32.mrf.mxu0
      %v1959 = vadd.f32 %v924, %v1958
      %1960 = vmatmul.bf16.gmra.mxu0 %v691
      %v1961 = vpop.f32.mrf.mxu0
      %v1962 = vadd.f32 %v924, %v1961
      %v1963 = vpop.f32.mrf.mxu0
      %v1964 = vadd.f32 %v924, %v1963
      %1965 = vmatmul.bf16.gmra.mxu0 %v698
      %v1966 = vpop.f32.mrf.mxu0
      %v1967 = vadd.f32 %v924, %v1966
      %v1968 = vpop.f32.mrf.mxu0
      %v1969 = vadd.f32 %v924, %v1968
      %1970 = vmatmul.bf16.gmra.mxu0 %v705
      %v1971 = vpop.f32.mrf.mxu0
      %v1972 = vadd.f32 %v924, %v1971
      %v1973 = vpop.f32.mrf.mxu0
      %v1974 = vadd.f32 %v924, %v1973
      %1975 = vmatmul.bf16.gmra.mxu0 %v712
      %v1976 = vpop.f32.mrf.mxu0
      %v1977 = vadd.f32 %v924, %v1976
      %v1978 = vpop.f32.mrf.mxu0
      %v1979 = vadd.f32 %v924, %v1978
      %1980 = vmatmul.bf16.gmra.mxu0 %v719
      %v1981 = vpop.f32.mrf.mxu0
      %v1982 = vadd.f32 %v924, %v1981
      %v1983 = vpop.f32.mrf.mxu0
      %v1984 = vadd.f32 %v924, %v1983
      %1985 = vdwg.mxu0
      %1986 = vmatpush.bf16.msra.mxu0 %v1580
      %1987 = vmatpush.bf16.msra.mxu0 %v1576
      %1988 = vmatpush.bf16.msra.mxu0 %v1572
      %1989 = vmatpush.bf16.msra.mxu0 %v1568
      %1990 = vmatpush.bf16.msra.mxu0 %v1564
      %1991 = vmatpush.bf16.msra.mxu0 %v1560
      %1992 = vmatpush.bf16.msra.mxu0 %v1556
      %1993 = vmatpush.bf16.msra.mxu0 %v1552
      %1994 = vmatmul.bf16.gmra.mxu0 %v671
      %v1995 = vpop.f32.mrf.mxu0
      %v1996 = vadd.f32 %v1947, %v1995
      %v1997 = vpop.f32.mrf.mxu0
      %v1998 = vadd.f32 %v1949, %v1997
      %1999 = vmatmul.bf16.gmra.mxu0 %v678
      %v2000 = vpop.f32.mrf.mxu0
      %v2001 = vadd.f32 %v1952, %v2000
      %v2002 = vpop.f32.mrf.mxu0
      %v2003 = vadd.f32 %v1954, %v2002
      %2004 = vmatmul.bf16.gmra.mxu0 %v685
      %v2005 = vpop.f32.mrf.mxu0
      %v2006 = vadd.f32 %v1957, %v2005
      %v2007 = vpop.f32.mrf.mxu0
      %v2008 = vadd.f32 %v1959, %v2007
      %2009 = vmatmul.bf16.gmra.mxu0 %v692
      %v2010 = vpop.f32.mrf.mxu0
      %v2011 = vadd.f32 %v1962, %v2010
      %v2012 = vpop.f32.mrf.mxu0
      %v2013 = vadd.f32 %v1964, %v2012
      %2014 = vmatmul.bf16.gmra.mxu0 %v699
      %v2015 = vpop.f32.mrf.mxu0
      %v2016 = vadd.f32 %v1967, %v2015
      %v2017 = vpop.f32.mrf.mxu0
      %v2018 = vadd.f32 %v1969, %v2017
      %2019 = vmatmul.bf16.gmra.mxu0 %v706
      %v2020 = vpop.f32.mrf.mxu0
      %v2021 = vadd.f32 %v1972, %v2020
      %v2022 = vpop.f32.mrf.mxu0
      %v2023 = vadd.f32 %v1974, %v2022
      %2024 = vmatmul.bf16.gmra.mxu0 %v713
      %v2025 = vpop.f32.mrf.mxu0
      %v2026 = vadd.f32 %v1977, %v2025
      %v2027 = vpop.f32.mrf.mxu0
      %v2028 = vadd.f32 %v1979, %v2027
      %2029 = vmatmul.bf16.gmra.mxu0 %v720
      %v2030 = vpop.f32.mrf.mxu0
      %v2031 = vadd.f32 %v1982, %v2030
      %v2032 = vpop.f32.mrf.mxu0
      %v2033 = vadd.f32 %v1984, %v2032
      %2034 = vdwg.mxu0
      %2035 = vmatpush.bf16.msra.mxu0 %v1612
      %2036 = vmatpush.bf16.msra.mxu0 %v1608
      %2037 = vmatpush.bf16.msra.mxu0 %v1604
      %2038 = vmatpush.bf16.msra.mxu0 %v1600
      %2039 = vmatpush.bf16.msra.mxu0 %v1596
      %2040 = vmatpush.bf16.msra.mxu0 %v1592
      %2041 = vmatpush.bf16.msra.mxu0 %v1588
      %2042 = vmatpush.bf16.msra.mxu0 %v1584
      %2043 = vmatmul.bf16.gmra.mxu0 %v672
      %v2044 = vpop.f32.mrf.mxu0
      %v2045 = vadd.f32 %v1996, %v2044
      %v2046 = vpop.f32.mrf.mxu0
      %v2047 = vadd.f32 %v1998, %v2046
      %2048 = vmatmul.bf16.gmra.mxu0 %v679
      %v2049 = vpop.f32.mrf.mxu0
      %v2050 = vadd.f32 %v2001, %v2049
      %v2051 = vpop.f32.mrf.mxu0
      %v2052 = vadd.f32 %v2003, %v2051
      %2053 = vmatmul.bf16.gmra.mxu0 %v686
      %v2054 = vpop.f32.mrf.mxu0
      %v2055 = vadd.f32 %v2006, %v2054
      %v2056 = vpop.f32.mrf.mxu0
      %v2057 = vadd.f32 %v2008, %v2056
      %2058 = vmatmul.bf16.gmra.mxu0 %v693
      %v2059 = vpop.f32.mrf.mxu0
      %v2060 = vadd.f32 %v2011, %v2059
      %v2061 = vpop.f32.mrf.mxu0
      %v2062 = vadd.f32 %v2013, %v2061
      %2063 = vmatmul.bf16.gmra.mxu0 %v700
      %v2064 = vpop.f32.mrf.mxu0
      %v2065 = vadd.f32 %v2016, %v2064
      %v2066 = vpop.f32.mrf.mxu0
      %v2067 = vadd.f32 %v2018, %v2066
      %2068 = vmatmul.bf16.gmra.mxu0 %v707
      %v2069 = vpop.f32.mrf.mxu0
      %v2070 = vadd.f32 %v2021, %v2069
      %v2071 = vpop.f32.mrf.mxu0
      %v2072 = vadd.f32 %v2023, %v2071
      %2073 = vmatmul.bf16.gmra.mxu0 %v714
      %v2074 = vpop.f32.mrf.mxu0
      %v2075 = vadd.f32 %v2026, %v2074
      %v2076 = vpop.f32.mrf.mxu0
      %v2077 = vadd.f32 %v2028, %v2076
      %2078 = vmatmul.bf16.gmra.mxu0 %v721
      %v2079 = vpop.f32.mrf.mxu0
      %v2080 = vadd.f32 %v2031, %v2079
      %v2081 = vpop.f32.mrf.mxu0
      %v2082 = vadd.f32 %v2033, %v2081
      %2083 = vdwg.mxu0
      %2084 = vmatpush.bf16.msra.mxu0 %v1644
      %2085 = vmatpush.bf16.msra.mxu0 %v1640
      %2086 = vmatpush.bf16.msra.mxu0 %v1636
      %2087 = vmatpush.bf16.msra.mxu0 %v1632
      %2088 = vmatpush.bf16.msra.mxu0 %v1628
      %2089 = vmatpush.bf16.msra.mxu0 %v1624
      %2090 = vmatpush.bf16.msra.mxu0 %v1620
      %2091 = vmatpush.bf16.msra.mxu0 %v1616
      %2092 = vmatmul.bf16.gmra.mxu0 %v673
      %v2093 = vpop.f32.mrf.mxu0
      %v2094 = vadd.f32 %v2045, %v2093
      %v2095 = vpop.f32.mrf.mxu0
      %v2096 = vadd.f32 %v2047, %v2095
      %2097 = vmatmul.bf16.gmra.mxu0 %v680
      %v2098 = vpop.f32.mrf.mxu0
      %v2099 = vadd.f32 %v2050, %v2098
      %v2100 = vpop.f32.mrf.mxu0
      %v2101 = vadd.f32 %v2052, %v2100
      %2102 = vmatmul.bf16.gmra.mxu0 %v687
      %v2103 = vpop.f32.mrf.mxu0
      %v2104 = vadd.f32 %v2055, %v2103
      %v2105 = vpop.f32.mrf.mxu0
      %v2106 = vadd.f32 %v2057, %v2105
      %2107 = vmatmul.bf16.gmra.mxu0 %v694
      %v2108 = vpop.f32.mrf.mxu0
      %v2109 = vadd.f32 %v2060, %v2108
      %v2110 = vpop.f32.mrf.mxu0
      %v2111 = vadd.f32 %v2062, %v2110
      %2112 = vmatmul.bf16.gmra.mxu0 %v701
      %v2113 = vpop.f32.mrf.mxu0
      %v2114 = vadd.f32 %v2065, %v2113
      %v2115 = vpop.f32.mrf.mxu0
      %v2116 = vadd.f32 %v2067, %v2115
      %2117 = vmatmul.bf16.gmra.mxu0 %v708
      %v2118 = vpop.f32.mrf.mxu0
      %v2119 = vadd.f32 %v2070, %v2118
      %v2120 = vpop.f32.mrf.mxu0
      %v2121 = vadd.f32 %v2072, %v2120
      %2122 = vmatmul.bf16.gmra.mxu0 %v715
      %v2123 = vpop.f32.mrf.mxu0
      %v2124 = vadd.f32 %v2075, %v2123
      %v2125 = vpop.f32.mrf.mxu0
      %v2126 = vadd.f32 %v2077, %v2125
      %2127 = vmatmul.bf16.gmra.mxu0 %v722
      %v2128 = vpop.f32.mrf.mxu0
      %v2129 = vadd.f32 %v2080, %v2128
      %v2130 = vpop.f32.mrf.mxu0
      %v2131 = vadd.f32 %v2082, %v2130
      %2132 = vdwg.mxu0
      %2133 = vmatpush.bf16.msra.mxu0 %v1676
      %2134 = vmatpush.bf16.msra.mxu0 %v1672
      %2135 = vmatpush.bf16.msra.mxu0 %v1668
      %2136 = vmatpush.bf16.msra.mxu0 %v1664
      %2137 = vmatpush.bf16.msra.mxu0 %v1660
      %2138 = vmatpush.bf16.msra.mxu0 %v1656
      %2139 = vmatpush.bf16.msra.mxu0 %v1652
      %2140 = vmatpush.bf16.msra.mxu0 %v1648
      %2141 = vmatmul.bf16.gmra.mxu0 %v674
      %v2142 = vpop.f32.mrf.mxu0
      %v2143 = vadd.f32 %v2094, %v2142
      %v2144 = vpop.f32.mrf.mxu0
      %v2145 = vadd.f32 %v2096, %v2144
      %2146 = vmatmul.bf16.gmra.mxu0 %v681
      %v2147 = vpop.f32.mrf.mxu0
      %v2148 = vadd.f32 %v2099, %v2147
      %v2149 = vpop.f32.mrf.mxu0
      %v2150 = vadd.f32 %v2101, %v2149
      %2151 = vmatmul.bf16.gmra.mxu0 %v688
      %v2152 = vpop.f32.mrf.mxu0
      %v2153 = vadd.f32 %v2104, %v2152
      %v2154 = vpop.f32.mrf.mxu0
      %v2155 = vadd.f32 %v2106, %v2154
      %2156 = vmatmul.bf16.gmra.mxu0 %v695
      %v2157 = vpop.f32.mrf.mxu0
      %v2158 = vadd.f32 %v2109, %v2157
      %v2159 = vpop.f32.mrf.mxu0
      %v2160 = vadd.f32 %v2111, %v2159
      %2161 = vmatmul.bf16.gmra.mxu0 %v702
      %v2162 = vpop.f32.mrf.mxu0
      %v2163 = vadd.f32 %v2114, %v2162
      %v2164 = vpop.f32.mrf.mxu0
      %v2165 = vadd.f32 %v2116, %v2164
      %2166 = vmatmul.bf16.gmra.mxu0 %v709
      %v2167 = vpop.f32.mrf.mxu0
      %v2168 = vadd.f32 %v2119, %v2167
      %v2169 = vpop.f32.mrf.mxu0
      %v2170 = vadd.f32 %v2121, %v2169
      %2171 = vmatmul.bf16.gmra.mxu0 %v716
      %v2172 = vpop.f32.mrf.mxu0
      %v2173 = vadd.f32 %v2124, %v2172
      %v2174 = vpop.f32.mrf.mxu0
      %v2175 = vadd.f32 %v2126, %v2174
      %2176 = vmatmul.bf16.gmra.mxu0 %v723
      %v2177 = vpop.f32.mrf.mxu0
      %v2178 = vadd.f32 %v2129, %v2177
      %v2179 = vpop.f32.mrf.mxu0
      %v2180 = vadd.f32 %v2131, %v2179
      %2181 = vdwg.mxu0
      %2182 = vmatpush.bf16.msra.mxu0 %v1708
      %2183 = vmatpush.bf16.msra.mxu0 %v1704
      %2184 = vmatpush.bf16.msra.mxu0 %v1700
      %2185 = vmatpush.bf16.msra.mxu0 %v1696
      %2186 = vmatpush.bf16.msra.mxu0 %v1692
      %2187 = vmatpush.bf16.msra.mxu0 %v1688
      %2188 = vmatpush.bf16.msra.mxu0 %v1684
      %2189 = vmatpush.bf16.msra.mxu0 %v1680
      %2190 = vmatmul.bf16.gmra.mxu0 %v675
      %v2191 = vpop.f32.mrf.mxu0
      %v2192 = vadd.f32 %v2143, %v2191
      %v2193 = vpop.f32.mrf.mxu0
      %v2194 = vadd.f32 %v2145, %v2193
      %2195 = vmatmul.bf16.gmra.mxu0 %v682
      %v2196 = vpop.f32.mrf.mxu0
      %v2197 = vadd.f32 %v2148, %v2196
      %v2198 = vpop.f32.mrf.mxu0
      %v2199 = vadd.f32 %v2150, %v2198
      %2200 = vmatmul.bf16.gmra.mxu0 %v689
      %v2201 = vpop.f32.mrf.mxu0
      %v2202 = vadd.f32 %v2153, %v2201
      %v2203 = vpop.f32.mrf.mxu0
      %v2204 = vadd.f32 %v2155, %v2203
      %2205 = vmatmul.bf16.gmra.mxu0 %v696
      %v2206 = vpop.f32.mrf.mxu0
      %v2207 = vadd.f32 %v2158, %v2206
      %v2208 = vpop.f32.mrf.mxu0
      %v2209 = vadd.f32 %v2160, %v2208
      %2210 = vmatmul.bf16.gmra.mxu0 %v703
      %v2211 = vpop.f32.mrf.mxu0
      %v2212 = vadd.f32 %v2163, %v2211
      %v2213 = vpop.f32.mrf.mxu0
      %v2214 = vadd.f32 %v2165, %v2213
      %2215 = vmatmul.bf16.gmra.mxu0 %v710
      %v2216 = vpop.f32.mrf.mxu0
      %v2217 = vadd.f32 %v2168, %v2216
      %v2218 = vpop.f32.mrf.mxu0
      %v2219 = vadd.f32 %v2170, %v2218
      %2220 = vmatmul.bf16.gmra.mxu0 %v717
      %v2221 = vpop.f32.mrf.mxu0
      %v2222 = vadd.f32 %v2173, %v2221
      %v2223 = vpop.f32.mrf.mxu0
      %v2224 = vadd.f32 %v2175, %v2223
      %2225 = vmatmul.bf16.gmra.mxu0 %v724
      %v2226 = vpop.f32.mrf.mxu0
      %v2227 = vadd.f32 %v2178, %v2226
      %v2228 = vpop.f32.mrf.mxu0
      %v2229 = vadd.f32 %v2180, %v2228
      %2230 = vdwg.mxu0
      %2231 = vmatpush.bf16.msra.mxu0 0
      %2232 = vmatpush.bf16.msra.mxu0 0
      %2233 = vmatpush.bf16.msra.mxu0 0
      %2234 = vmatpush.bf16.msra.mxu0 0
      %2235 = vmatpush.bf16.msra.mxu0 0
      %2236 = vmatpush.bf16.msra.mxu0 0
      %2237 = vmatpush.bf16.msra.mxu0 0
      %2238 = vmatpush.bf16.msra.mxu0 %v1712
      %2239 = vmatmul.bf16.gmra.mxu0 %v1914
      %v2240 = vpop.f32.mrf.mxu0
      %v2241 = vadd.f32 %v2192, %v2240
      %v2242 = vpop.f32.mrf.mxu0
      %v2243 = vadd.f32 %v2194, %v2242
      %2244 = vmatmul.bf16.gmra.mxu0 %v1917
      %v2245 = vpop.f32.mrf.mxu0
      %v2246 = vadd.f32 %v2197, %v2245
      %v2247 = vpop.f32.mrf.mxu0
      %v2248 = vadd.f32 %v2199, %v2247
      %2249 = vmatmul.bf16.gmra.mxu0 %v1920
      %v2250 = vpop.f32.mrf.mxu0
      %v2251 = vadd.f32 %v2202, %v2250
      %v2252 = vpop.f32.mrf.mxu0
      %v2253 = vadd.f32 %v2204, %v2252
      %2254 = vmatmul.bf16.gmra.mxu0 %v1923
      %v2255 = vpop.f32.mrf.mxu0
      %v2256 = vadd.f32 %v2207, %v2255
      %v2257 = vpop.f32.mrf.mxu0
      %v2258 = vadd.f32 %v2209, %v2257
      %2259 = vmatmul.bf16.gmra.mxu0 %v1926
      %v2260 = vpop.f32.mrf.mxu0
      %v2261 = vadd.f32 %v2212, %v2260
      %v2262 = vpop.f32.mrf.mxu0
      %v2263 = vadd.f32 %v2214, %v2262
      %2264 = vmatmul.bf16.gmra.mxu0 %v1929
      %v2265 = vpop.f32.mrf.mxu0
      %v2266 = vadd.f32 %v2217, %v2265
      %v2267 = vpop.f32.mrf.mxu0
      %v2268 = vadd.f32 %v2219, %v2267
      %2269 = vmatmul.bf16.gmra.mxu0 %v1932
      %v2270 = vpop.f32.mrf.mxu0
      %v2271 = vadd.f32 %v2222, %v2270
      %v2272 = vpop.f32.mrf.mxu0
      %v2273 = vadd.f32 %v2224, %v2272
      %2274 = vmatmul.bf16.gmra.mxu0 %v1935
      %v2275 = vpop.f32.mrf.mxu0
      %v2276 = vadd.f32 %v2227, %v2275
      %v2277 = vpop.f32.mrf.mxu0
      %v2278 = vadd.f32 %v2229, %v2277
      %2279 = vdwg.mxu0
      %2280 = vmatpush.bf16.msra.mxu0 %v1549
      %2281 = vmatpush.bf16.msra.mxu0 %v1545
      %2282 = vmatpush.bf16.msra.mxu0 %v1541
      %2283 = vmatpush.bf16.msra.mxu0 %v1537
      %2284 = vmatpush.bf16.msra.mxu0 %v1533
      %2285 = vmatpush.bf16.msra.mxu0 %v1529
      %2286 = vmatpush.bf16.msra.mxu0 %v1525
      %2287 = vmatpush.bf16.msra.mxu0 %v1521
      %2288 = vmatmul.bf16.gmra.mxu0 %v670
      %v2289 = vpop.f32.mrf.mxu0
      %v2290 = vadd.f32 %v925, %v2289
      %v2291 = vpop.f32.mrf.mxu0
      %v2292 = vadd.f32 %v925, %v2291
      %2293 = vmatmul.bf16.gmra.mxu0 %v677
      %v2294 = vpop.f32.mrf.mxu0
      %v2295 = vadd.f32 %v925, %v2294
      %v2296 = vpop.f32.mrf.mxu0
      %v2297 = vadd.f32 %v925, %v2296
      %2298 = vmatmul.bf16.gmra.mxu0 %v684
      %v2299 = vpop.f32.mrf.mxu0
      %v2300 = vadd.f32 %v925, %v2299
      %v2301 = vpop.f32.mrf.mxu0
      %v2302 = vadd.f32 %v925, %v2301
      %2303 = vmatmul.bf16.gmra.mxu0 %v691
      %v2304 = vpop.f32.mrf.mxu0
      %v2305 = vadd.f32 %v925, %v2304
      %v2306 = vpop.f32.mrf.mxu0
      %v2307 = vadd.f32 %v925, %v2306
      %2308 = vmatmul.bf16.gmra.mxu0 %v698
      %v2309 = vpop.f32.mrf.mxu0
      %v2310 = vadd.f32 %v925, %v2309
      %v2311 = vpop.f32.mrf.mxu0
      %v2312 = vadd.f32 %v925, %v2311
      %2313 = vmatmul.bf16.gmra.mxu0 %v705
      %v2314 = vpop.f32.mrf.mxu0
      %v2315 = vadd.f32 %v925, %v2314
      %v2316 = vpop.f32.mrf.mxu0
      %v2317 = vadd.f32 %v925, %v2316
      %2318 = vmatmul.bf16.gmra.mxu0 %v712
      %v2319 = vpop.f32.mrf.mxu0
      %v2320 = vadd.f32 %v925, %v2319
      %v2321 = vpop.f32.mrf.mxu0
      %v2322 = vadd.f32 %v925, %v2321
      %2323 = vmatmul.bf16.gmra.mxu0 %v719
      %v2324 = vpop.f32.mrf.mxu0
      %v2325 = vadd.f32 %v925, %v2324
      %v2326 = vpop.f32.mrf.mxu0
      %v2327 = vadd.f32 %v925, %v2326
      %2328 = vdwg.mxu0
      %2329 = vmatpush.bf16.msra.mxu0 %v1581
      %2330 = vmatpush.bf16.msra.mxu0 %v1577
      %2331 = vmatpush.bf16.msra.mxu0 %v1573
      %2332 = vmatpush.bf16.msra.mxu0 %v1569
      %2333 = vmatpush.bf16.msra.mxu0 %v1565
      %2334 = vmatpush.bf16.msra.mxu0 %v1561
      %2335 = vmatpush.bf16.msra.mxu0 %v1557
      %2336 = vmatpush.bf16.msra.mxu0 %v1553
      %2337 = vmatmul.bf16.gmra.mxu0 %v671
      %v2338 = vpop.f32.mrf.mxu0
      %v2339 = vadd.f32 %v2290, %v2338
      %v2340 = vpop.f32.mrf.mxu0
      %v2341 = vadd.f32 %v2292, %v2340
      %2342 = vmatmul.bf16.gmra.mxu0 %v678
      %v2343 = vpop.f32.mrf.mxu0
      %v2344 = vadd.f32 %v2295, %v2343
      %v2345 = vpop.f32.mrf.mxu0
      %v2346 = vadd.f32 %v2297, %v2345
      %2347 = vmatmul.bf16.gmra.mxu0 %v685
      %v2348 = vpop.f32.mrf.mxu0
      %v2349 = vadd.f32 %v2300, %v2348
      %v2350 = vpop.f32.mrf.mxu0
      %v2351 = vadd.f32 %v2302, %v2350
      %2352 = vmatmul.bf16.gmra.mxu0 %v692
      %v2353 = vpop.f32.mrf.mxu0
      %v2354 = vadd.f32 %v2305, %v2353
      %v2355 = vpop.f32.mrf.mxu0
      %v2356 = vadd.f32 %v2307, %v2355
      %2357 = vmatmul.bf16.gmra.mxu0 %v699
      %v2358 = vpop.f32.mrf.mxu0
      %v2359 = vadd.f32 %v2310, %v2358
      %v2360 = vpop.f32.mrf.mxu0
      %v2361 = vadd.f32 %v2312, %v2360
      %2362 = vmatmul.bf16.gmra.mxu0 %v706
      %v2363 = vpop.f32.mrf.mxu0
      %v2364 = vadd.f32 %v2315, %v2363
      %v2365 = vpop.f32.mrf.mxu0
      %v2366 = vadd.f32 %v2317, %v2365
      %2367 = vmatmul.bf16.gmra.mxu0 %v713
      %v2368 = vpop.f32.mrf.mxu0
      %v2369 = vadd.f32 %v2320, %v2368
      %v2370 = vpop.f32.mrf.mxu0
      %v2371 = vadd.f32 %v2322, %v2370
      %2372 = vmatmul.bf16.gmra.mxu0 %v720
      %v2373 = vpop.f32.mrf.mxu0
      %v2374 = vadd.f32 %v2325, %v2373
      %v2375 = vpop.f32.mrf.mxu0
      %v2376 = vadd.f32 %v2327, %v2375
      %2377 = vdwg.mxu0
      %2378 = vmatpush.bf16.msra.mxu0 %v1613
      %2379 = vmatpush.bf16.msra.mxu0 %v1609
      %2380 = vmatpush.bf16.msra.mxu0 %v1605
      %2381 = vmatpush.bf16.msra.mxu0 %v1601
      %2382 = vmatpush.bf16.msra.mxu0 %v1597
      %2383 = vmatpush.bf16.msra.mxu0 %v1593
      %2384 = vmatpush.bf16.msra.mxu0 %v1589
      %2385 = vmatpush.bf16.msra.mxu0 %v1585
      %2386 = vmatmul.bf16.gmra.mxu0 %v672
      %v2387 = vpop.f32.mrf.mxu0
      %v2388 = vadd.f32 %v2339, %v2387
      %v2389 = vpop.f32.mrf.mxu0
      %v2390 = vadd.f32 %v2341, %v2389
      %2391 = vmatmul.bf16.gmra.mxu0 %v679
      %v2392 = vpop.f32.mrf.mxu0
      %v2393 = vadd.f32 %v2344, %v2392
      %v2394 = vpop.f32.mrf.mxu0
      %v2395 = vadd.f32 %v2346, %v2394
      %2396 = vmatmul.bf16.gmra.mxu0 %v686
      %v2397 = vpop.f32.mrf.mxu0
      %v2398 = vadd.f32 %v2349, %v2397
      %v2399 = vpop.f32.mrf.mxu0
      %v2400 = vadd.f32 %v2351, %v2399
      %2401 = vmatmul.bf16.gmra.mxu0 %v693
      %v2402 = vpop.f32.mrf.mxu0
      %v2403 = vadd.f32 %v2354, %v2402
      %v2404 = vpop.f32.mrf.mxu0
      %v2405 = vadd.f32 %v2356, %v2404
      %2406 = vmatmul.bf16.gmra.mxu0 %v700
      %v2407 = vpop.f32.mrf.mxu0
      %v2408 = vadd.f32 %v2359, %v2407
      %v2409 = vpop.f32.mrf.mxu0
      %v2410 = vadd.f32 %v2361, %v2409
      %2411 = vmatmul.bf16.gmra.mxu0 %v707
      %v2412 = vpop.f32.mrf.mxu0
      %v2413 = vadd.f32 %v2364, %v2412
      %v2414 = vpop.f32.mrf.mxu0
      %v2415 = vadd.f32 %v2366, %v2414
      %2416 = vmatmul.bf16.gmra.mxu0 %v714
      %v2417 = vpop.f32.mrf.mxu0
      %v2418 = vadd.f32 %v2369, %v2417
      %v2419 = vpop.f32.mrf.mxu0
      %v2420 = vadd.f32 %v2371, %v2419
      %2421 = vmatmul.bf16.gmra.mxu0 %v721
      %v2422 = vpop.f32.mrf.mxu0
      %v2423 = vadd.f32 %v2374, %v2422
      %v2424 = vpop.f32.mrf.mxu0
      %v2425 = vadd.f32 %v2376, %v2424
      %2426 = vdwg.mxu0
      %2427 = vmatpush.bf16.msra.mxu0 %v1645
      %2428 = vmatpush.bf16.msra.mxu0 %v1641
      %2429 = vmatpush.bf16.msra.mxu0 %v1637
      %2430 = vmatpush.bf16.msra.mxu0 %v1633
      %2431 = vmatpush.bf16.msra.mxu0 %v1629
      %2432 = vmatpush.bf16.msra.mxu0 %v1625
      %2433 = vmatpush.bf16.msra.mxu0 %v1621
      %2434 = vmatpush.bf16.msra.mxu0 %v1617
      %2435 = vmatmul.bf16.gmra.mxu0 %v673
      %v2436 = vpop.f32.mrf.mxu0
      %v2437 = vadd.f32 %v2388, %v2436
      %v2438 = vpop.f32.mrf.mxu0
      %v2439 = vadd.f32 %v2390, %v2438
      %2440 = vmatmul.bf16.gmra.mxu0 %v680
      %v2441 = vpop.f32.mrf.mxu0
      %v2442 = vadd.f32 %v2393, %v2441
      %v2443 = vpop.f32.mrf.mxu0
      %v2444 = vadd.f32 %v2395, %v2443
      %2445 = vmatmul.bf16.gmra.mxu0 %v687
      %v2446 = vpop.f32.mrf.mxu0
      %v2447 = vadd.f32 %v2398, %v2446
      %v2448 = vpop.f32.mrf.mxu0
      %v2449 = vadd.f32 %v2400, %v2448
      %2450 = vmatmul.bf16.gmra.mxu0 %v694
      %v2451 = vpop.f32.mrf.mxu0
      %v2452 = vadd.f32 %v2403, %v2451
      %v2453 = vpop.f32.mrf.mxu0
      %v2454 = vadd.f32 %v2405, %v2453
      %2455 = vmatmul.bf16.gmra.mxu0 %v701
      %v2456 = vpop.f32.mrf.mxu0
      %v2457 = vadd.f32 %v2408, %v2456
      %v2458 = vpop.f32.mrf.mxu0
      %v2459 = vadd.f32 %v2410, %v2458
      %2460 = vmatmul.bf16.gmra.mxu0 %v708
      %v2461 = vpop.f32.mrf.mxu0
      %v2462 = vadd.f32 %v2413, %v2461
      %v2463 = vpop.f32.mrf.mxu0
      %v2464 = vadd.f32 %v2415, %v2463
      %2465 = vmatmul.bf16.gmra.mxu0 %v715
      %v2466 = vpop.f32.mrf.mxu0
      %v2467 = vadd.f32 %v2418, %v2466
      %v2468 = vpop.f32.mrf.mxu0
      %v2469 = vadd.f32 %v2420, %v2468
      %2470 = vmatmul.bf16.gmra.mxu0 %v722
      %v2471 = vpop.f32.mrf.mxu0
      %v2472 = vadd.f32 %v2423, %v2471
      %v2473 = vpop.f32.mrf.mxu0
      %v2474 = vadd.f32 %v2425, %v2473
      %2475 = vdwg.mxu0
      %2476 = vmatpush.bf16.msra.mxu0 %v1677
      %2477 = vmatpush.bf16.msra.mxu0 %v1673
      %2478 = vmatpush.bf16.msra.mxu0 %v1669
      %2479 = vmatpush.bf16.msra.mxu0 %v1665
      %2480 = vmatpush.bf16.msra.mxu0 %v1661
      %2481 = vmatpush.bf16.msra.mxu0 %v1657
      %2482 = vmatpush.bf16.msra.mxu0 %v1653
      %2483 = vmatpush.bf16.msra.mxu0 %v1649
      %2484 = vmatmul.bf16.gmra.mxu0 %v674
      %v2485 = vpop.f32.mrf.mxu0
      %v2486 = vadd.f32 %v2437, %v2485
      %v2487 = vpop.f32.mrf.mxu0
      %v2488 = vadd.f32 %v2439, %v2487
      %2489 = vmatmul.bf16.gmra.mxu0 %v681
      %v2490 = vpop.f32.mrf.mxu0
      %v2491 = vadd.f32 %v2442, %v2490
      %v2492 = vpop.f32.mrf.mxu0
      %v2493 = vadd.f32 %v2444, %v2492
      %2494 = vmatmul.bf16.gmra.mxu0 %v688
      %v2495 = vpop.f32.mrf.mxu0
      %v2496 = vadd.f32 %v2447, %v2495
      %v2497 = vpop.f32.mrf.mxu0
      %v2498 = vadd.f32 %v2449, %v2497
      %2499 = vmatmul.bf16.gmra.mxu0 %v695
      %v2500 = vpop.f32.mrf.mxu0
      %v2501 = vadd.f32 %v2452, %v2500
      %v2502 = vpop.f32.mrf.mxu0
      %v2503 = vadd.f32 %v2454, %v2502
      %2504 = vmatmul.bf16.gmra.mxu0 %v702
      %v2505 = vpop.f32.mrf.mxu0
      %v2506 = vadd.f32 %v2457, %v2505
      %v2507 = vpop.f32.mrf.mxu0
      %v2508 = vadd.f32 %v2459, %v2507
      %2509 = vmatmul.bf16.gmra.mxu0 %v709
      %v2510 = vpop.f32.mrf.mxu0
      %v2511 = vadd.f32 %v2462, %v2510
      %v2512 = vpop.f32.mrf.mxu0
      %v2513 = vadd.f32 %v2464, %v2512
      %2514 = vmatmul.bf16.gmra.mxu0 %v716
      %v2515 = vpop.f32.mrf.mxu0
      %v2516 = vadd.f32 %v2467, %v2515
      %v2517 = vpop.f32.mrf.mxu0
      %v2518 = vadd.f32 %v2469, %v2517
      %2519 = vmatmul.bf16.gmra.mxu0 %v723
      %v2520 = vpop.f32.mrf.mxu0
      %v2521 = vadd.f32 %v2472, %v2520
      %v2522 = vpop.f32.mrf.mxu0
      %v2523 = vadd.f32 %v2474, %v2522
      %2524 = vdwg.mxu0
      %2525 = vmatpush.bf16.msra.mxu0 %v1709
      %2526 = vmatpush.bf16.msra.mxu0 %v1705
      %2527 = vmatpush.bf16.msra.mxu0 %v1701
      %2528 = vmatpush.bf16.msra.mxu0 %v1697
      %2529 = vmatpush.bf16.msra.mxu0 %v1693
      %2530 = vmatpush.bf16.msra.mxu0 %v1689
      %2531 = vmatpush.bf16.msra.mxu0 %v1685
      %2532 = vmatpush.bf16.msra.mxu0 %v1681
      %2533 = vmatmul.bf16.gmra.mxu0 %v675
      %v2534 = vpop.f32.mrf.mxu0
      %v2535 = vadd.f32 %v2486, %v2534
      %v2536 = vpop.f32.mrf.mxu0
      %v2537 = vadd.f32 %v2488, %v2536
      %2538 = vmatmul.bf16.gmra.mxu0 %v682
      %v2539 = vpop.f32.mrf.mxu0
      %v2540 = vadd.f32 %v2491, %v2539
      %v2541 = vpop.f32.mrf.mxu0
      %v2542 = vadd.f32 %v2493, %v2541
      %2543 = vmatmul.bf16.gmra.mxu0 %v689
      %v2544 = vpop.f32.mrf.mxu0
      %v2545 = vadd.f32 %v2496, %v2544
      %v2546 = vpop.f32.mrf.mxu0
      %v2547 = vadd.f32 %v2498, %v2546
      %2548 = vmatmul.bf16.gmra.mxu0 %v696
      %v2549 = vpop.f32.mrf.mxu0
      %v2550 = vadd.f32 %v2501, %v2549
      %v2551 = vpop.f32.mrf.mxu0
      %v2552 = vadd.f32 %v2503, %v2551
      %2553 = vmatmul.bf16.gmra.mxu0 %v703
      %v2554 = vpop.f32.mrf.mxu0
      %v2555 = vadd.f32 %v2506, %v2554
      %v2556 = vpop.f32.mrf.mxu0
      %v2557 = vadd.f32 %v2508, %v2556
      %2558 = vmatmul.bf16.gmra.mxu0 %v710
      %v2559 = vpop.f32.mrf.mxu0
      %v2560 = vadd.f32 %v2511, %v2559
      %v2561 = vpop.f32.mrf.mxu0
      %v2562 = vadd.f32 %v2513, %v2561
      %2563 = vmatmul.bf16.gmra.mxu0 %v717
      %v2564 = vpop.f32.mrf.mxu0
      %v2565 = vadd.f32 %v2516, %v2564
      %v2566 = vpop.f32.mrf.mxu0
      %v2567 = vadd.f32 %v2518, %v2566
      %2568 = vmatmul.bf16.gmra.mxu0 %v724
      %v2569 = vpop.f32.mrf.mxu0
      %v2570 = vadd.f32 %v2521, %v2569
      %v2571 = vpop.f32.mrf.mxu0
      %v2572 = vadd.f32 %v2523, %v2571
      %2573 = vdwg.mxu0
      %2574 = vmatpush.bf16.msra.mxu0 0
      %2575 = vmatpush.bf16.msra.mxu0 0
      %2576 = vmatpush.bf16.msra.mxu0 0
      %2577 = vmatpush.bf16.msra.mxu0 0
      %2578 = vmatpush.bf16.msra.mxu0 0
      %2579 = vmatpush.bf16.msra.mxu0 0
      %2580 = vmatpush.bf16.msra.mxu0 0
      %2581 = vmatpush.bf16.msra.mxu0 %v1713
      %2582 = vmatmul.bf16.gmra.mxu0 %v1914
      %v2583 = vpop.f32.mrf.mxu0
      %v2584 = vadd.f32 %v2535, %v2583
      %v2585 = vpop.f32.mrf.mxu0
      %v2586 = vadd.f32 %v2537, %v2585
      %2587 = vmatmul.bf16.gmra.mxu0 %v1917
      %v2588 = vpop.f32.mrf.mxu0
      %v2589 = vadd.f32 %v2540, %v2588
      %v2590 = vpop.f32.mrf.mxu0
      %v2591 = vadd.f32 %v2542, %v2590
      %2592 = vmatmul.bf16.gmra.mxu0 %v1920
      %v2593 = vpop.f32.mrf.mxu0
      %v2594 = vadd.f32 %v2545, %v2593
      %v2595 = vpop.f32.mrf.mxu0
      %v2596 = vadd.f32 %v2547, %v2595
      %2597 = vmatmul.bf16.gmra.mxu0 %v1923
      %v2598 = vpop.f32.mrf.mxu0
      %v2599 = vadd.f32 %v2550, %v2598
      %v2600 = vpop.f32.mrf.mxu0
      %v2601 = vadd.f32 %v2552, %v2600
      %2602 = vmatmul.bf16.gmra.mxu0 %v1926
      %v2603 = vpop.f32.mrf.mxu0
      %v2604 = vadd.f32 %v2555, %v2603
      %v2605 = vpop.f32.mrf.mxu0
      %v2606 = vadd.f32 %v2557, %v2605
      %2607 = vmatmul.bf16.gmra.mxu0 %v1929
      %v2608 = vpop.f32.mrf.mxu0
      %v2609 = vadd.f32 %v2560, %v2608
      %v2610 = vpop.f32.mrf.mxu0
      %v2611 = vadd.f32 %v2562, %v2610
      %2612 = vmatmul.bf16.gmra.mxu0 %v1932
      %v2613 = vpop.f32.mrf.mxu0
      %v2614 = vadd.f32 %v2565, %v2613
      %v2615 = vpop.f32.mrf.mxu0
      %v2616 = vadd.f32 %v2567, %v2615
      %2617 = vmatmul.bf16.gmra.mxu0 %v1935
      %v2618 = vpop.f32.mrf.mxu0
      %v2619 = vadd.f32 %v2570, %v2618
      %v2620 = vpop.f32.mrf.mxu0
      %v2621 = vadd.f32 %v2572, %v2620
      %2622 = vdwg.mxu0
      %2623 = vmatpush.bf16.msra.mxu0 %v1550
      %2624 = vmatpush.bf16.msra.mxu0 %v1546
      %2625 = vmatpush.bf16.msra.mxu0 %v1542
      %2626 = vmatpush.bf16.msra.mxu0 %v1538
      %2627 = vmatpush.bf16.msra.mxu0 %v1534
      %2628 = vmatpush.bf16.msra.mxu0 %v1530
      %2629 = vmatpush.bf16.msra.mxu0 %v1526
      %2630 = vmatpush.bf16.msra.mxu0 %v1522
      %2631 = vmatmul.bf16.gmra.mxu0 %v670
      %v2632 = vpop.f32.mrf.mxu0
      %v2633 = vadd.f32 %v926, %v2632
      %v2634 = vpop.f32.mrf.mxu0
      %v2635 = vadd.f32 %v926, %v2634
      %2636 = vmatmul.bf16.gmra.mxu0 %v677
      %v2637 = vpop.f32.mrf.mxu0
      %v2638 = vadd.f32 %v926, %v2637
      %v2639 = vpop.f32.mrf.mxu0
      %v2640 = vadd.f32 %v926, %v2639
      %2641 = vmatmul.bf16.gmra.mxu0 %v684
      %v2642 = vpop.f32.mrf.mxu0
      %v2643 = vadd.f32 %v926, %v2642
      %v2644 = vpop.f32.mrf.mxu0
      %v2645 = vadd.f32 %v926, %v2644
      %2646 = vmatmul.bf16.gmra.mxu0 %v691
      %v2647 = vpop.f32.mrf.mxu0
      %v2648 = vadd.f32 %v926, %v2647
      %v2649 = vpop.f32.mrf.mxu0
      %v2650 = vadd.f32 %v926, %v2649
      %2651 = vmatmul.bf16.gmra.mxu0 %v698
      %v2652 = vpop.f32.mrf.mxu0
      %v2653 = vadd.f32 %v926, %v2652
      %v2654 = vpop.f32.mrf.mxu0
      %v2655 = vadd.f32 %v926, %v2654
      %2656 = vmatmul.bf16.gmra.mxu0 %v705
      %v2657 = vpop.f32.mrf.mxu0
      %v2658 = vadd.f32 %v926, %v2657
      %v2659 = vpop.f32.mrf.mxu0
      %v2660 = vadd.f32 %v926, %v2659
      %2661 = vmatmul.bf16.gmra.mxu0 %v712
      %v2662 = vpop.f32.mrf.mxu0
      %v2663 = vadd.f32 %v926, %v2662
      %v2664 = vpop.f32.mrf.mxu0
      %v2665 = vadd.f32 %v926, %v2664
      %2666 = vmatmul.bf16.gmra.mxu0 %v719
      %v2667 = vpop.f32.mrf.mxu0
      %v2668 = vadd.f32 %v926, %v2667
      %v2669 = vpop.f32.mrf.mxu0
      %v2670 = vadd.f32 %v926, %v2669
      %2671 = vdwg.mxu0
      %2672 = vmatpush.bf16.msra.mxu0 %v1582
      %2673 = vmatpush.bf16.msra.mxu0 %v1578
      %2674 = vmatpush.bf16.msra.mxu0 %v1574
      %2675 = vmatpush.bf16.msra.mxu0 %v1570
      %2676 = vmatpush.bf16.msra.mxu0 %v1566
      %2677 = vmatpush.bf16.msra.mxu0 %v1562
      %2678 = vmatpush.bf16.msra.mxu0 %v1558
      %2679 = vmatpush.bf16.msra.mxu0 %v1554
      %2680 = vmatmul.bf16.gmra.mxu0 %v671
      %v2681 = vpop.f32.mrf.mxu0
      %v2682 = vadd.f32 %v2633, %v2681
      %v2683 = vpop.f32.mrf.mxu0
      %v2684 = vadd.f32 %v2635, %v2683
      %2685 = vmatmul.bf16.gmra.mxu0 %v678
      %v2686 = vpop.f32.mrf.mxu0
      %v2687 = vadd.f32 %v2638, %v2686
      %v2688 = vpop.f32.mrf.mxu0
      %v2689 = vadd.f32 %v2640, %v2688
      %2690 = vmatmul.bf16.gmra.mxu0 %v685
      %v2691 = vpop.f32.mrf.mxu0
      %v2692 = vadd.f32 %v2643, %v2691
      %v2693 = vpop.f32.mrf.mxu0
      %v2694 = vadd.f32 %v2645, %v2693
      %2695 = vmatmul.bf16.gmra.mxu0 %v692
      %v2696 = vpop.f32.mrf.mxu0
      %v2697 = vadd.f32 %v2648, %v2696
      %v2698 = vpop.f32.mrf.mxu0
      %v2699 = vadd.f32 %v2650, %v2698
      %2700 = vmatmul.bf16.gmra.mxu0 %v699
      %v2701 = vpop.f32.mrf.mxu0
      %v2702 = vadd.f32 %v2653, %v2701
      %v2703 = vpop.f32.mrf.mxu0
      %v2704 = vadd.f32 %v2655, %v2703
      %2705 = vmatmul.bf16.gmra.mxu0 %v706
      %v2706 = vpop.f32.mrf.mxu0
      %v2707 = vadd.f32 %v2658, %v2706
      %v2708 = vpop.f32.mrf.mxu0
      %v2709 = vadd.f32 %v2660, %v2708
      %2710 = vmatmul.bf16.gmra.mxu0 %v713
      %v2711 = vpop.f32.mrf.mxu0
      %v2712 = vadd.f32 %v2663, %v2711
      %v2713 = vpop.f32.mrf.mxu0
      %v2714 = vadd.f32 %v2665, %v2713
      %2715 = vmatmul.bf16.gmra.mxu0 %v720
      %v2716 = vpop.f32.mrf.mxu0
      %v2717 = vadd.f32 %v2668, %v2716
      %v2718 = vpop.f32.mrf.mxu0
      %v2719 = vadd.f32 %v2670, %v2718
      %2720 = vdwg.mxu0
      %2721 = vmatpush.bf16.msra.mxu0 %v1614
      %2722 = vmatpush.bf16.msra.mxu0 %v1610
      %2723 = vmatpush.bf16.msra.mxu0 %v1606
      %2724 = vmatpush.bf16.msra.mxu0 %v1602
      %2725 = vmatpush.bf16.msra.mxu0 %v1598
      %2726 = vmatpush.bf16.msra.mxu0 %v1594
      %2727 = vmatpush.bf16.msra.mxu0 %v1590
      %2728 = vmatpush.bf16.msra.mxu0 %v1586
      %2729 = vmatmul.bf16.gmra.mxu0 %v672
      %v2730 = vpop.f32.mrf.mxu0
      %v2731 = vadd.f32 %v2682, %v2730
      %v2732 = vpop.f32.mrf.mxu0
      %v2733 = vadd.f32 %v2684, %v2732
      %2734 = vmatmul.bf16.gmra.mxu0 %v679
      %v2735 = vpop.f32.mrf.mxu0
      %v2736 = vadd.f32 %v2687, %v2735
      %v2737 = vpop.f32.mrf.mxu0
      %v2738 = vadd.f32 %v2689, %v2737
      %2739 = vmatmul.bf16.gmra.mxu0 %v686
      %v2740 = vpop.f32.mrf.mxu0
      %v2741 = vadd.f32 %v2692, %v2740
      %v2742 = vpop.f32.mrf.mxu0
      %v2743 = vadd.f32 %v2694, %v2742
      %2744 = vmatmul.bf16.gmra.mxu0 %v693
      %v2745 = vpop.f32.mrf.mxu0
      %v2746 = vadd.f32 %v2697, %v2745
      %v2747 = vpop.f32.mrf.mxu0
      %v2748 = vadd.f32 %v2699, %v2747
      %2749 = vmatmul.bf16.gmra.mxu0 %v700
      %v2750 = vpop.f32.mrf.mxu0
      %v2751 = vadd.f32 %v2702, %v2750
      %v2752 = vpop.f32.mrf.mxu0
      %v2753 = vadd.f32 %v2704, %v2752
      %2754 = vmatmul.bf16.gmra.mxu0 %v707
      %v2755 = vpop.f32.mrf.mxu0
      %v2756 = vadd.f32 %v2707, %v2755
      %v2757 = vpop.f32.mrf.mxu0
      %v2758 = vadd.f32 %v2709, %v2757
      %2759 = vmatmul.bf16.gmra.mxu0 %v714
      %v2760 = vpop.f32.mrf.mxu0
      %v2761 = vadd.f32 %v2712, %v2760
      %v2762 = vpop.f32.mrf.mxu0
      %v2763 = vadd.f32 %v2714, %v2762
      %2764 = vmatmul.bf16.gmra.mxu0 %v721
      %v2765 = vpop.f32.mrf.mxu0
      %v2766 = vadd.f32 %v2717, %v2765
      %v2767 = vpop.f32.mrf.mxu0
      %v2768 = vadd.f32 %v2719, %v2767
      %2769 = vdwg.mxu0
      %2770 = vmatpush.bf16.msra.mxu0 %v1646
      %2771 = vmatpush.bf16.msra.mxu0 %v1642
      %2772 = vmatpush.bf16.msra.mxu0 %v1638
      %2773 = vmatpush.bf16.msra.mxu0 %v1634
      %2774 = vmatpush.bf16.msra.mxu0 %v1630
      %2775 = vmatpush.bf16.msra.mxu0 %v1626
      %2776 = vmatpush.bf16.msra.mxu0 %v1622
      %2777 = vmatpush.bf16.msra.mxu0 %v1618
      %2778 = vmatmul.bf16.gmra.mxu0 %v673
      %v2779 = vpop.f32.mrf.mxu0
      %v2780 = vadd.f32 %v2731, %v2779
      %v2781 = vpop.f32.mrf.mxu0
      %v2782 = vadd.f32 %v2733, %v2781
      %2783 = vmatmul.bf16.gmra.mxu0 %v680
      %v2784 = vpop.f32.mrf.mxu0
      %v2785 = vadd.f32 %v2736, %v2784
      %v2786 = vpop.f32.mrf.mxu0
      %v2787 = vadd.f32 %v2738, %v2786
      %2788 = vmatmul.bf16.gmra.mxu0 %v687
      %v2789 = vpop.f32.mrf.mxu0
      %v2790 = vadd.f32 %v2741, %v2789
      %v2791 = vpop.f32.mrf.mxu0
      %v2792 = vadd.f32 %v2743, %v2791
      %2793 = vmatmul.bf16.gmra.mxu0 %v694
      %v2794 = vpop.f32.mrf.mxu0
      %v2795 = vadd.f32 %v2746, %v2794
      %v2796 = vpop.f32.mrf.mxu0
      %v2797 = vadd.f32 %v2748, %v2796
      %2798 = vmatmul.bf16.gmra.mxu0 %v701
      %v2799 = vpop.f32.mrf.mxu0
      %v2800 = vadd.f32 %v2751, %v2799
      %v2801 = vpop.f32.mrf.mxu0
      %v2802 = vadd.f32 %v2753, %v2801
      %2803 = vmatmul.bf16.gmra.mxu0 %v708
      %v2804 = vpop.f32.mrf.mxu0
      %v2805 = vadd.f32 %v2756, %v2804
      %v2806 = vpop.f32.mrf.mxu0
      %v2807 = vadd.f32 %v2758, %v2806
      %2808 = vmatmul.bf16.gmra.mxu0 %v715
      %v2809 = vpop.f32.mrf.mxu0
      %v2810 = vadd.f32 %v2761, %v2809
      %v2811 = vpop.f32.mrf.mxu0
      %v2812 = vadd.f32 %v2763, %v2811
      %2813 = vmatmul.bf16.gmra.mxu0 %v722
      %v2814 = vpop.f32.mrf.mxu0
      %v2815 = vadd.f32 %v2766, %v2814
      %v2816 = vpop.f32.mrf.mxu0
      %v2817 = vadd.f32 %v2768, %v2816
      %2818 = vdwg.mxu0
      %2819 = vmatpush.bf16.msra.mxu0 %v1678
      %2820 = vmatpush.bf16.msra.mxu0 %v1674
      %2821 = vmatpush.bf16.msra.mxu0 %v1670
      %2822 = vmatpush.bf16.msra.mxu0 %v1666
      %2823 = vmatpush.bf16.msra.mxu0 %v1662
      %2824 = vmatpush.bf16.msra.mxu0 %v1658
      %2825 = vmatpush.bf16.msra.mxu0 %v1654
      %2826 = vmatpush.bf16.msra.mxu0 %v1650
      %2827 = vmatmul.bf16.gmra.mxu0 %v674
      %v2828 = vpop.f32.mrf.mxu0
      %v2829 = vadd.f32 %v2780, %v2828
      %v2830 = vpop.f32.mrf.mxu0
      %v2831 = vadd.f32 %v2782, %v2830
      %2832 = vmatmul.bf16.gmra.mxu0 %v681
      %v2833 = vpop.f32.mrf.mxu0
      %v2834 = vadd.f32 %v2785, %v2833
      %v2835 = vpop.f32.mrf.mxu0
      %v2836 = vadd.f32 %v2787, %v2835
      %2837 = vmatmul.bf16.gmra.mxu0 %v688
      %v2838 = vpop.f32.mrf.mxu0
      %v2839 = vadd.f32 %v2790, %v2838
      %v2840 = vpop.f32.mrf.mxu0
      %v2841 = vadd.f32 %v2792, %v2840
      %2842 = vmatmul.bf16.gmra.mxu0 %v695
      %v2843 = vpop.f32.mrf.mxu0
      %v2844 = vadd.f32 %v2795, %v2843
      %v2845 = vpop.f32.mrf.mxu0
      %v2846 = vadd.f32 %v2797, %v2845
      %2847 = vmatmul.bf16.gmra.mxu0 %v702
      %v2848 = vpop.f32.mrf.mxu0
      %v2849 = vadd.f32 %v2800, %v2848
      %v2850 = vpop.f32.mrf.mxu0
      %v2851 = vadd.f32 %v2802, %v2850
      %2852 = vmatmul.bf16.gmra.mxu0 %v709
      %v2853 = vpop.f32.mrf.mxu0
      %v2854 = vadd.f32 %v2805, %v2853
      %v2855 = vpop.f32.mrf.mxu0
      %v2856 = vadd.f32 %v2807, %v2855
      %2857 = vmatmul.bf16.gmra.mxu0 %v716
      %v2858 = vpop.f32.mrf.mxu0
      %v2859 = vadd.f32 %v2810, %v2858
      %v2860 = vpop.f32.mrf.mxu0
      %v2861 = vadd.f32 %v2812, %v2860
      %2862 = vmatmul.bf16.gmra.mxu0 %v723
      %v2863 = vpop.f32.mrf.mxu0
      %v2864 = vadd.f32 %v2815, %v2863
      %v2865 = vpop.f32.mrf.mxu0
      %v2866 = vadd.f32 %v2817, %v2865
      %2867 = vdwg.mxu0
      %2868 = vmatpush.bf16.msra.mxu0 %v1710
      %2869 = vmatpush.bf16.msra.mxu0 %v1706
      %2870 = vmatpush.bf16.msra.mxu0 %v1702
      %2871 = vmatpush.bf16.msra.mxu0 %v1698
      %2872 = vmatpush.bf16.msra.mxu0 %v1694
      %2873 = vmatpush.bf16.msra.mxu0 %v1690
      %2874 = vmatpush.bf16.msra.mxu0 %v1686
      %2875 = vmatpush.bf16.msra.mxu0 %v1682
      %2876 = vmatmul.bf16.gmra.mxu0 %v675
      %v2877 = vpop.f32.mrf.mxu0
      %v2878 = vadd.f32 %v2829, %v2877
      %v2879 = vpop.f32.mrf.mxu0
      %v2880 = vadd.f32 %v2831, %v2879
      %2881 = vmatmul.bf16.gmra.mxu0 %v682
      %v2882 = vpop.f32.mrf.mxu0
      %v2883 = vadd.f32 %v2834, %v2882
      %v2884 = vpop.f32.mrf.mxu0
      %v2885 = vadd.f32 %v2836, %v2884
      %2886 = vmatmul.bf16.gmra.mxu0 %v689
      %v2887 = vpop.f32.mrf.mxu0
      %v2888 = vadd.f32 %v2839, %v2887
      %v2889 = vpop.f32.mrf.mxu0
      %v2890 = vadd.f32 %v2841, %v2889
      %2891 = vmatmul.bf16.gmra.mxu0 %v696
      %v2892 = vpop.f32.mrf.mxu0
      %v2893 = vadd.f32 %v2844, %v2892
      %v2894 = vpop.f32.mrf.mxu0
      %v2895 = vadd.f32 %v2846, %v2894
      %2896 = vmatmul.bf16.gmra.mxu0 %v703
      %v2897 = vpop.f32.mrf.mxu0
      %v2898 = vadd.f32 %v2849, %v2897
      %v2899 = vpop.f32.mrf.mxu0
      %v2900 = vadd.f32 %v2851, %v2899
      %2901 = vmatmul.bf16.gmra.mxu0 %v710
      %v2902 = vpop.f32.mrf.mxu0
      %v2903 = vadd.f32 %v2854, %v2902
      %v2904 = vpop.f32.mrf.mxu0
      %v2905 = vadd.f32 %v2856, %v2904
      %2906 = vmatmul.bf16.gmra.mxu0 %v717
      %v2907 = vpop.f32.mrf.mxu0
      %v2908 = vadd.f32 %v2859, %v2907
      %v2909 = vpop.f32.mrf.mxu0
      %v2910 = vadd.f32 %v2861, %v2909
      %2911 = vmatmul.bf16.gmra.mxu0 %v724
      %v2912 = vpop.f32.mrf.mxu0
      %v2913 = vadd.f32 %v2864, %v2912
      %v2914 = vpop.f32.mrf.mxu0
      %v2915 = vadd.f32 %v2866, %v2914
      %2916 = vdwg.mxu0
      %2917 = vmatpush.bf16.msra.mxu0 0
      %2918 = vmatpush.bf16.msra.mxu0 0
      %2919 = vmatpush.bf16.msra.mxu0 0
      %2920 = vmatpush.bf16.msra.mxu0 0
      %2921 = vmatpush.bf16.msra.mxu0 0
      %2922 = vmatpush.bf16.msra.mxu0 0
      %2923 = vmatpush.bf16.msra.mxu0 0
      %2924 = vmatpush.bf16.msra.mxu0 %v1714
      %2925 = vmatmul.bf16.gmra.mxu0 %v1914
      %v2926 = vpop.f32.mrf.mxu0
      %v2927 = vadd.f32 %v2878, %v2926
      %v2928 = vpop.f32.mrf.mxu0
      %v2929 = vadd.f32 %v2880, %v2928
      %2930 = vmatmul.bf16.gmra.mxu0 %v1917
      %v2931 = vpop.f32.mrf.mxu0
      %v2932 = vadd.f32 %v2883, %v2931
      %v2933 = vpop.f32.mrf.mxu0
      %v2934 = vadd.f32 %v2885, %v2933
      %2935 = vmatmul.bf16.gmra.mxu0 %v1920
      %v2936 = vpop.f32.mrf.mxu0
      %v2937 = vadd.f32 %v2888, %v2936
      %v2938 = vpop.f32.mrf.mxu0
      %v2939 = vadd.f32 %v2890, %v2938
      %2940 = vmatmul.bf16.gmra.mxu0 %v1923
      %v2941 = vpop.f32.mrf.mxu0
      %v2942 = vadd.f32 %v2893, %v2941
      %v2943 = vpop.f32.mrf.mxu0
      %v2944 = vadd.f32 %v2895, %v2943
      %2945 = vmatmul.bf16.gmra.mxu0 %v1926
      %v2946 = vpop.f32.mrf.mxu0
      %v2947 = vadd.f32 %v2898, %v2946
      %v2948 = vpop.f32.mrf.mxu0
      %v2949 = vadd.f32 %v2900, %v2948
      %2950 = vmatmul.bf16.gmra.mxu0 %v1929
      %v2951 = vpop.f32.mrf.mxu0
      %v2952 = vadd.f32 %v2903, %v2951
      %v2953 = vpop.f32.mrf.mxu0
      %v2954 = vadd.f32 %v2905, %v2953
      %2955 = vmatmul.bf16.gmra.mxu0 %v1932
      %v2956 = vpop.f32.mrf.mxu0
      %v2957 = vadd.f32 %v2908, %v2956
      %v2958 = vpop.f32.mrf.mxu0
      %v2959 = vadd.f32 %v2910, %v2958
      %2960 = vmatmul.bf16.gmra.mxu0 %v1935
      %v2961 = vpop.f32.mrf.mxu0
      %v2962 = vadd.f32 %v2913, %v2961
      %v2963 = vpop.f32.mrf.mxu0
      %v2964 = vadd.f32 %v2915, %v2963
      %2965 = vdwg.mxu0
      %2966 = vmatpush.bf16.msra.mxu0 %v1551
      %2967 = vmatpush.bf16.msra.mxu0 %v1547
      %2968 = vmatpush.bf16.msra.mxu0 %v1543
      %2969 = vmatpush.bf16.msra.mxu0 %v1539
      %2970 = vmatpush.bf16.msra.mxu0 %v1535
      %2971 = vmatpush.bf16.msra.mxu0 %v1531
      %2972 = vmatpush.bf16.msra.mxu0 %v1527
      %2973 = vmatpush.bf16.msra.mxu0 %v1523
      %2974 = vmatmul.bf16.gmra.mxu0 %v670
      %v2975 = vpop.f32.mrf.mxu0
      %v2976 = vadd.f32 %v927, %v2975
      %v2977 = vpop.f32.mrf.mxu0
      %v2978 = vadd.f32 %v927, %v2977
      %2979 = vmatmul.bf16.gmra.mxu0 %v677
      %v2980 = vpop.f32.mrf.mxu0
      %v2981 = vadd.f32 %v927, %v2980
      %v2982 = vpop.f32.mrf.mxu0
      %v2983 = vadd.f32 %v927, %v2982
      %2984 = vmatmul.bf16.gmra.mxu0 %v684
      %v2985 = vpop.f32.mrf.mxu0
      %v2986 = vadd.f32 %v927, %v2985
      %v2987 = vpop.f32.mrf.mxu0
      %v2988 = vadd.f32 %v927, %v2987
      %2989 = vmatmul.bf16.gmra.mxu0 %v691
      %v2990 = vpop.f32.mrf.mxu0
      %v2991 = vadd.f32 %v927, %v2990
      %v2992 = vpop.f32.mrf.mxu0
      %v2993 = vadd.f32 %v927, %v2992
      %2994 = vmatmul.bf16.gmra.mxu0 %v698
      %v2995 = vpop.f32.mrf.mxu0
      %v2996 = vadd.f32 %v927, %v2995
      %v2997 = vpop.f32.mrf.mxu0
      %v2998 = vadd.f32 %v927, %v2997
      %2999 = vmatmul.bf16.gmra.mxu0 %v705
      %v3000 = vpop.f32.mrf.mxu0
      %v3001 = vadd.f32 %v927, %v3000
      %v3002 = vpop.f32.mrf.mxu0
      %v3003 = vadd.f32 %v927, %v3002
      %3004 = vmatmul.bf16.gmra.mxu0 %v712
      %v3005 = vpop.f32.mrf.mxu0
      %v3006 = vadd.f32 %v927, %v3005
      %v3007 = vpop.f32.mrf.mxu0
      %v3008 = vadd.f32 %v927, %v3007
      %3009 = vmatmul.bf16.gmra.mxu0 %v719
      %v3010 = vpop.f32.mrf.mxu0
      %v3011 = vadd.f32 %v927, %v3010
      %v3012 = vpop.f32.mrf.mxu0
      %v3013 = vadd.f32 %v927, %v3012
      %3014 = vdwg.mxu0
      %3015 = vmatpush.bf16.msra.mxu0 %v1583
      %3016 = vmatpush.bf16.msra.mxu0 %v1579
      %3017 = vmatpush.bf16.msra.mxu0 %v1575
      %3018 = vmatpush.bf16.msra.mxu0 %v1571
      %3019 = vmatpush.bf16.msra.mxu0 %v1567
      %3020 = vmatpush.bf16.msra.mxu0 %v1563
      %3021 = vmatpush.bf16.msra.mxu0 %v1559
      %3022 = vmatpush.bf16.msra.mxu0 %v1555
      %3023 = vmatmul.bf16.gmra.mxu0 %v671
      %v3024 = vpop.f32.mrf.mxu0
      %v3025 = vadd.f32 %v2976, %v3024
      %v3026 = vpop.f32.mrf.mxu0
      %v3027 = vadd.f32 %v2978, %v3026
      %3028 = vmatmul.bf16.gmra.mxu0 %v678
      %v3029 = vpop.f32.mrf.mxu0
      %v3030 = vadd.f32 %v2981, %v3029
      %v3031 = vpop.f32.mrf.mxu0
      %v3032 = vadd.f32 %v2983, %v3031
      %3033 = vmatmul.bf16.gmra.mxu0 %v685
      %v3034 = vpop.f32.mrf.mxu0
      %v3035 = vadd.f32 %v2986, %v3034
      %v3036 = vpop.f32.mrf.mxu0
      %v3037 = vadd.f32 %v2988, %v3036
      %3038 = vmatmul.bf16.gmra.mxu0 %v692
      %v3039 = vpop.f32.mrf.mxu0
      %v3040 = vadd.f32 %v2991, %v3039
      %v3041 = vpop.f32.mrf.mxu0
      %v3042 = vadd.f32 %v2993, %v3041
      %3043 = vmatmul.bf16.gmra.mxu0 %v699
      %v3044 = vpop.f32.mrf.mxu0
      %v3045 = vadd.f32 %v2996, %v3044
      %v3046 = vpop.f32.mrf.mxu0
      %v3047 = vadd.f32 %v2998, %v3046
      %3048 = vmatmul.bf16.gmra.mxu0 %v706
      %v3049 = vpop.f32.mrf.mxu0
      %v3050 = vadd.f32 %v3001, %v3049
      %v3051 = vpop.f32.mrf.mxu0
      %v3052 = vadd.f32 %v3003, %v3051
      %3053 = vmatmul.bf16.gmra.mxu0 %v713
      %v3054 = vpop.f32.mrf.mxu0
      %v3055 = vadd.f32 %v3006, %v3054
      %v3056 = vpop.f32.mrf.mxu0
      %v3057 = vadd.f32 %v3008, %v3056
      %3058 = vmatmul.bf16.gmra.mxu0 %v720
      %v3059 = vpop.f32.mrf.mxu0
      %v3060 = vadd.f32 %v3011, %v3059
      %v3061 = vpop.f32.mrf.mxu0
      %v3062 = vadd.f32 %v3013, %v3061
      %3063 = vdwg.mxu0
      %3064 = vmatpush.bf16.msra.mxu0 %v1615
      %3065 = vmatpush.bf16.msra.mxu0 %v1611
      %3066 = vmatpush.bf16.msra.mxu0 %v1607
      %3067 = vmatpush.bf16.msra.mxu0 %v1603
      %3068 = vmatpush.bf16.msra.mxu0 %v1599
      %3069 = vmatpush.bf16.msra.mxu0 %v1595
      %3070 = vmatpush.bf16.msra.mxu0 %v1591
      %3071 = vmatpush.bf16.msra.mxu0 %v1587
      %3072 = vmatmul.bf16.gmra.mxu0 %v672
      %v3073 = vpop.f32.mrf.mxu0
      %v3074 = vadd.f32 %v3025, %v3073
      %v3075 = vpop.f32.mrf.mxu0
      %v3076 = vadd.f32 %v3027, %v3075
      %3077 = vmatmul.bf16.gmra.mxu0 %v679
      %v3078 = vpop.f32.mrf.mxu0
      %v3079 = vadd.f32 %v3030, %v3078
      %v3080 = vpop.f32.mrf.mxu0
      %v3081 = vadd.f32 %v3032, %v3080
      %3082 = vmatmul.bf16.gmra.mxu0 %v686
      %v3083 = vpop.f32.mrf.mxu0
      %v3084 = vadd.f32 %v3035, %v3083
      %v3085 = vpop.f32.mrf.mxu0
      %v3086 = vadd.f32 %v3037, %v3085
      %3087 = vmatmul.bf16.gmra.mxu0 %v693
      %v3088 = vpop.f32.mrf.mxu0
      %v3089 = vadd.f32 %v3040, %v3088
      %v3090 = vpop.f32.mrf.mxu0
      %v3091 = vadd.f32 %v3042, %v3090
      %3092 = vmatmul.bf16.gmra.mxu0 %v700
      %v3093 = vpop.f32.mrf.mxu0
      %v3094 = vadd.f32 %v3045, %v3093
      %v3095 = vpop.f32.mrf.mxu0
      %v3096 = vadd.f32 %v3047, %v3095
      %3097 = vmatmul.bf16.gmra.mxu0 %v707
      %v3098 = vpop.f32.mrf.mxu0
      %v3099 = vadd.f32 %v3050, %v3098
      %v3100 = vpop.f32.mrf.mxu0
      %v3101 = vadd.f32 %v3052, %v3100
      %3102 = vmatmul.bf16.gmra.mxu0 %v714
      %v3103 = vpop.f32.mrf.mxu0
      %v3104 = vadd.f32 %v3055, %v3103
      %v3105 = vpop.f32.mrf.mxu0
      %v3106 = vadd.f32 %v3057, %v3105
      %3107 = vmatmul.bf16.gmra.mxu0 %v721
      %v3108 = vpop.f32.mrf.mxu0
      %v3109 = vadd.f32 %v3060, %v3108
      %v3110 = vpop.f32.mrf.mxu0
      %v3111 = vadd.f32 %v3062, %v3110
      %3112 = vdwg.mxu0
      %3113 = vmatpush.bf16.msra.mxu0 %v1647
      %3114 = vmatpush.bf16.msra.mxu0 %v1643
      %3115 = vmatpush.bf16.msra.mxu0 %v1639
      %3116 = vmatpush.bf16.msra.mxu0 %v1635
      %3117 = vmatpush.bf16.msra.mxu0 %v1631
      %3118 = vmatpush.bf16.msra.mxu0 %v1627
      %3119 = vmatpush.bf16.msra.mxu0 %v1623
      %3120 = vmatpush.bf16.msra.mxu0 %v1619
      %3121 = vmatmul.bf16.gmra.mxu0 %v673
      %v3122 = vpop.f32.mrf.mxu0
      %v3123 = vadd.f32 %v3074, %v3122
      %v3124 = vpop.f32.mrf.mxu0
      %v3125 = vadd.f32 %v3076, %v3124
      %3126 = vmatmul.bf16.gmra.mxu0 %v680
      %v3127 = vpop.f32.mrf.mxu0
      %v3128 = vadd.f32 %v3079, %v3127
      %v3129 = vpop.f32.mrf.mxu0
      %v3130 = vadd.f32 %v3081, %v3129
      %3131 = vmatmul.bf16.gmra.mxu0 %v687
      %v3132 = vpop.f32.mrf.mxu0
      %v3133 = vadd.f32 %v3084, %v3132
      %v3134 = vpop.f32.mrf.mxu0
      %v3135 = vadd.f32 %v3086, %v3134
      %3136 = vmatmul.bf16.gmra.mxu0 %v694
      %v3137 = vpop.f32.mrf.mxu0
      %v3138 = vadd.f32 %v3089, %v3137
      %v3139 = vpop.f32.mrf.mxu0
      %v3140 = vadd.f32 %v3091, %v3139
      %3141 = vmatmul.bf16.gmra.mxu0 %v701
      %v3142 = vpop.f32.mrf.mxu0
      %v3143 = vadd.f32 %v3094, %v3142
      %v3144 = vpop.f32.mrf.mxu0
      %v3145 = vadd.f32 %v3096, %v3144
      %3146 = vmatmul.bf16.gmra.mxu0 %v708
      %v3147 = vpop.f32.mrf.mxu0
      %v3148 = vadd.f32 %v3099, %v3147
      %v3149 = vpop.f32.mrf.mxu0
      %v3150 = vadd.f32 %v3101, %v3149
      %3151 = vmatmul.bf16.gmra.mxu0 %v715
      %v3152 = vpop.f32.mrf.mxu0
      %v3153 = vadd.f32 %v3104, %v3152
      %v3154 = vpop.f32.mrf.mxu0
      %v3155 = vadd.f32 %v3106, %v3154
      %3156 = vmatmul.bf16.gmra.mxu0 %v722
      %v3157 = vpop.f32.mrf.mxu0
      %v3158 = vadd.f32 %v3109, %v3157
      %v3159 = vpop.f32.mrf.mxu0
      %v3160 = vadd.f32 %v3111, %v3159
      %3161 = vdwg.mxu0
      %3162 = vmatpush.bf16.msra.mxu0 %v1679
      %3163 = vmatpush.bf16.msra.mxu0 %v1675
      %3164 = vmatpush.bf16.msra.mxu0 %v1671
      %3165 = vmatpush.bf16.msra.mxu0 %v1667
      %3166 = vmatpush.bf16.msra.mxu0 %v1663
      %3167 = vmatpush.bf16.msra.mxu0 %v1659
      %3168 = vmatpush.bf16.msra.mxu0 %v1655
      %3169 = vmatpush.bf16.msra.mxu0 %v1651
      %3170 = vmatmul.bf16.gmra.mxu0 %v674
      %v3171 = vpop.f32.mrf.mxu0
      %v3172 = vadd.f32 %v3123, %v3171
      %v3173 = vpop.f32.mrf.mxu0
      %v3174 = vadd.f32 %v3125, %v3173
      %3175 = vmatmul.bf16.gmra.mxu0 %v681
      %v3176 = vpop.f32.mrf.mxu0
      %v3177 = vadd.f32 %v3128, %v3176
      %v3178 = vpop.f32.mrf.mxu0
      %v3179 = vadd.f32 %v3130, %v3178
      %3180 = vmatmul.bf16.gmra.mxu0 %v688
      %v3181 = vpop.f32.mrf.mxu0
      %v3182 = vadd.f32 %v3133, %v3181
      %v3183 = vpop.f32.mrf.mxu0
      %v3184 = vadd.f32 %v3135, %v3183
      %3185 = vmatmul.bf16.gmra.mxu0 %v695
      %v3186 = vpop.f32.mrf.mxu0
      %v3187 = vadd.f32 %v3138, %v3186
      %v3188 = vpop.f32.mrf.mxu0
      %v3189 = vadd.f32 %v3140, %v3188
      %3190 = vmatmul.bf16.gmra.mxu0 %v702
      %v3191 = vpop.f32.mrf.mxu0
      %v3192 = vadd.f32 %v3143, %v3191
      %v3193 = vpop.f32.mrf.mxu0
      %v3194 = vadd.f32 %v3145, %v3193
      %3195 = vmatmul.bf16.gmra.mxu0 %v709
      %v3196 = vpop.f32.mrf.mxu0
      %v3197 = vadd.f32 %v3148, %v3196
      %v3198 = vpop.f32.mrf.mxu0
      %v3199 = vadd.f32 %v3150, %v3198
      %3200 = vmatmul.bf16.gmra.mxu0 %v716
      %v3201 = vpop.f32.mrf.mxu0
      %v3202 = vadd.f32 %v3153, %v3201
      %v3203 = vpop.f32.mrf.mxu0
      %v3204 = vadd.f32 %v3155, %v3203
      %3205 = vmatmul.bf16.gmra.mxu0 %v723
      %v3206 = vpop.f32.mrf.mxu0
      %v3207 = vadd.f32 %v3158, %v3206
      %v3208 = vpop.f32.mrf.mxu0
      %v3209 = vadd.f32 %v3160, %v3208
      %3210 = vdwg.mxu0
      %3211 = vmatpush.bf16.msra.mxu0 %v1711
      %3212 = vmatpush.bf16.msra.mxu0 %v1707
      %3213 = vmatpush.bf16.msra.mxu0 %v1703
      %3214 = vmatpush.bf16.msra.mxu0 %v1699
      %3215 = vmatpush.bf16.msra.mxu0 %v1695
      %3216 = vmatpush.bf16.msra.mxu0 %v1691
      %3217 = vmatpush.bf16.msra.mxu0 %v1687
      %3218 = vmatpush.bf16.msra.mxu0 %v1683
      %3219 = vmatmul.bf16.gmra.mxu0 %v675
      %v3220 = vpop.f32.mrf.mxu0
      %v3221 = vadd.f32 %v3172, %v3220
      %v3222 = vpop.f32.mrf.mxu0
      %v3223 = vadd.f32 %v3174, %v3222
      %3224 = vmatmul.bf16.gmra.mxu0 %v682
      %v3225 = vpop.f32.mrf.mxu0
      %v3226 = vadd.f32 %v3177, %v3225
      %v3227 = vpop.f32.mrf.mxu0
      %v3228 = vadd.f32 %v3179, %v3227
      %3229 = vmatmul.bf16.gmra.mxu0 %v689
      %v3230 = vpop.f32.mrf.mxu0
      %v3231 = vadd.f32 %v3182, %v3230
      %v3232 = vpop.f32.mrf.mxu0
      %v3233 = vadd.f32 %v3184, %v3232
      %3234 = vmatmul.bf16.gmra.mxu0 %v696
      %v3235 = vpop.f32.mrf.mxu0
      %v3236 = vadd.f32 %v3187, %v3235
      %v3237 = vpop.f32.mrf.mxu0
      %v3238 = vadd.f32 %v3189, %v3237
      %3239 = vmatmul.bf16.gmra.mxu0 %v703
      %v3240 = vpop.f32.mrf.mxu0
      %v3241 = vadd.f32 %v3192, %v3240
      %v3242 = vpop.f32.mrf.mxu0
      %v3243 = vadd.f32 %v3194, %v3242
      %3244 = vmatmul.bf16.gmra.mxu0 %v710
      %v3245 = vpop.f32.mrf.mxu0
      %v3246 = vadd.f32 %v3197, %v3245
      %v3247 = vpop.f32.mrf.mxu0
      %v3248 = vadd.f32 %v3199, %v3247
      %3249 = vmatmul.bf16.gmra.mxu0 %v717
      %v3250 = vpop.f32.mrf.mxu0
      %v3251 = vadd.f32 %v3202, %v3250
      %v3252 = vpop.f32.mrf.mxu0
      %v3253 = vadd.f32 %v3204, %v3252
      %3254 = vmatmul.bf16.gmra.mxu0 %v724
      %v3255 = vpop.f32.mrf.mxu0
      %v3256 = vadd.f32 %v3207, %v3255
      %v3257 = vpop.f32.mrf.mxu0
      %v3258 = vadd.f32 %v3209, %v3257
      %3259 = vdwg.mxu0
      %3260 = vmatpush.bf16.msra.mxu0 0
      %3261 = vmatpush.bf16.msra.mxu0 0
      %3262 = vmatpush.bf16.msra.mxu0 0
      %3263 = vmatpush.bf16.msra.mxu0 0
      %3264 = vmatpush.bf16.msra.mxu0 0
      %3265 = vmatpush.bf16.msra.mxu0 0
      %3266 = vmatpush.bf16.msra.mxu0 0
      %3267 = vmatpush.bf16.msra.mxu0 %v1715
      %3268 = vmatmul.bf16.gmra.mxu0 %v1914
      %v3269 = vpop.f32.mrf.mxu0
      %v3270 = vadd.f32 %v3221, %v3269
      %v3271 = vpop.f32.mrf.mxu0
      %v3272 = vadd.f32 %v3223, %v3271
      %3273 = vmatmul.bf16.gmra.mxu0 %v1917
      %v3274 = vpop.f32.mrf.mxu0
      %v3275 = vadd.f32 %v3226, %v3274
      %v3276 = vpop.f32.mrf.mxu0
      %v3277 = vadd.f32 %v3228, %v3276
      %3278 = vmatmul.bf16.gmra.mxu0 %v1920
      %v3279 = vpop.f32.mrf.mxu0
      %v3280 = vadd.f32 %v3231, %v3279
      %v3281 = vpop.f32.mrf.mxu0
      %v3282 = vadd.f32 %v3233, %v3281
      %3283 = vmatmul.bf16.gmra.mxu0 %v1923
      %v3284 = vpop.f32.mrf.mxu0
      %v3285 = vadd.f32 %v3236, %v3284
      %v3286 = vpop.f32.mrf.mxu0
      %v3287 = vadd.f32 %v3238, %v3286
      %3288 = vmatmul.bf16.gmra.mxu0 %v1926
      %v3289 = vpop.f32.mrf.mxu0
      %v3290 = vadd.f32 %v3241, %v3289
      %v3291 = vpop.f32.mrf.mxu0
      %v3292 = vadd.f32 %v3243, %v3291
      %3293 = vmatmul.bf16.gmra.mxu0 %v1929
      %v3294 = vpop.f32.mrf.mxu0
      %v3295 = vadd.f32 %v3246, %v3294
      %v3296 = vpop.f32.mrf.mxu0
      %v3297 = vadd.f32 %v3248, %v3296
      %3298 = vmatmul.bf16.gmra.mxu0 %v1932
      %v3299 = vpop.f32.mrf.mxu0
      %v3300 = vadd.f32 %v3251, %v3299
      %v3301 = vpop.f32.mrf.mxu0
      %v3302 = vadd.f32 %v3253, %v3301
      %3303 = vmatmul.bf16.gmra.mxu0 %v1935
      %v3304 = vpop.f32.mrf.mxu0
      %v3305 = vadd.f32 %v3256, %v3304
      %v3306 = vpop.f32.mrf.mxu0
      %v3307 = vadd.f32 %v3258, %v3306
      %3308 = vdwg.mxu0
      %v3309 = vmax.f32 %v2241, 0.0
      %v3310 = vmax.f32 %v2584, 0.0
      %v3311 = vmax.f32 %v2927, 0.0
      %v3312 = vmax.f32 %v3270, 0.0
      %v3313 = vmax.f32 %v2243, 0.0
      %v3314 = vmax.f32 %v2586, 0.0
      %v3315 = vmax.f32 %v2929, 0.0
      %v3316 = vmax.f32 %v3272, 0.0
      %v3317 = vmax.f32 %v2246, 0.0
      %v3318 = vmax.f32 %v2589, 0.0
      %v3319 = vmax.f32 %v2932, 0.0
      %v3320 = vmax.f32 %v3275, 0.0
      %v3321 = vmax.f32 %v2248, 0.0
      %v3322 = vmax.f32 %v2591, 0.0
      %v3323 = vmax.f32 %v2934, 0.0
      %v3324 = vmax.f32 %v3277, 0.0
      %v3325 = vmax.f32 %v2251, 0.0
      %v3326 = vmax.f32 %v2594, 0.0
      %v3327 = vmax.f32 %v2937, 0.0
      %v3328 = vmax.f32 %v3280, 0.0
      %v3329 = vmax.f32 %v2253, 0.0
      %v3330 = vmax.f32 %v2596, 0.0
      %v3331 = vmax.f32 %v2939, 0.0
      %v3332 = vmax.f32 %v3282, 0.0
      %v3333 = vmax.f32 %v2256, 0.0
      %v3334 = vmax.f32 %v2599, 0.0
      %v3335 = vmax.f32 %v2942, 0.0
      %v3336 = vmax.f32 %v3285, 0.0
      %v3337 = vmax.f32 %v2258, 0.0
      %v3338 = vmax.f32 %v2601, 0.0
      %v3339 = vmax.f32 %v2944, 0.0
      %v3340 = vmax.f32 %v3287, 0.0
      %v3341 = vmax.f32 %v2261, 0.0
      %v3342 = vmax.f32 %v2604, 0.0
      %v3343 = vmax.f32 %v2947, 0.0
      %v3344 = vmax.f32 %v3290, 0.0
      %v3345 = vmax.f32 %v2263, 0.0
      %v3346 = vmax.f32 %v2606, 0.0
      %v3347 = vmax.f32 %v2949, 0.0
      %v3348 = vmax.f32 %v3292, 0.0
      %v3349 = vmax.f32 %v2266, 0.0
      %v3350 = vmax.f32 %v2609, 0.0
      %v3351 = vmax.f32 %v2952, 0.0
      %v3352 = vmax.f32 %v3295, 0.0
      %v3353 = vmax.f32 %v2268, 0.0
      %v3354 = vmax.f32 %v2611, 0.0
      %v3355 = vmax.f32 %v2954, 0.0
      %v3356 = vmax.f32 %v3297, 0.0
      %v3357 = vmax.f32 %v2271, 0.0
      %v3358 = vmax.f32 %v2614, 0.0
      %v3359 = vmax.f32 %v2957, 0.0
      %v3360 = vmax.f32 %v3300, 0.0
      %v3361 = vmax.f32 %v2273, 0.0
      %v3362 = vmax.f32 %v2616, 0.0
      %v3363 = vmax.f32 %v2959, 0.0
      %v3364 = vmax.f32 %v3302, 0.0
      %v3365 = vmax.f32 %v2276, 0.0
      %v3366 = vmax.f32 %v2619, 0.0
      %v3367 = vmax.f32 %v2962, 0.0
      %v3368 = vmax.f32 %v3305, 0.0
      %v3369 = vmax.f32 %v2278, 0.0
      %v3370 = vmax.f32 %v2621, 0.0
      %v3371 = vmax.f32 %v2964, 0.0
      %v3372 = vmax.f32 %v3307, 0.0
      %v3373 = vpack.c.bf16 %v3313, %v3309
      %v3374 = vpack.c.bf16 %v3314, %v3310
      %v3375 = vpack.c.bf16 %v3315, %v3311
      %v3376 = vpack.c.bf16 %v3316, %v3312
      %v3377 = vpack.c.bf16 %v3321, %v3317
      %v3378 = vpack.c.bf16 %v3322, %v3318
      %v3379 = vpack.c.bf16 %v3323, %v3319
      %v3380 = vpack.c.bf16 %v3324, %v3320
      %v3381 = vpack.c.bf16 %v3329, %v3325
      %v3382 = vpack.c.bf16 %v3330, %v3326
      %v3383 = vpack.c.bf16 %v3331, %v3327
      %v3384 = vpack.c.bf16 %v3332, %v3328
      %v3385 = vpack.c.bf16 %v3337, %v3333
      %v3386 = vpack.c.bf16 %v3338, %v3334
      %v3387 = vpack.c.bf16 %v3339, %v3335
      %v3388 = vpack.c.bf16 %v3340, %v3336
      %v3389 = vpack.c.bf16 %v3345, %v3341
      %v3390 = vpack.c.bf16 %v3346, %v3342
      %v3391 = vpack.c.bf16 %v3347, %v3343
      %v3392 = vpack.c.bf16 %v3348, %v3344
      %v3393 = vpack.c.bf16 %v3353, %v3349
      %v3394 = vpack.c.bf16 %v3354, %v3350
      %v3395 = vpack.c.bf16 %v3355, %v3351
      %v3396 = vpack.c.bf16 %v3356, %v3352
      %v3397 = vpack.c.bf16 %v3361, %v3357
      %v3398 = vpack.c.bf16 %v3362, %v3358
      %v3399 = vpack.c.bf16 %v3363, %v3359
      %v3400 = vpack.c.bf16 %v3364, %v3360
      %v3401 = vpack.c.bf16 %v3369, %v3365
      %v3402 = vpack.c.bf16 %v3370, %v3366
      %v3403 = vpack.c.bf16 %v3371, %v3367
      %v3404 = vpack.c.bf16 %v3372, %v3368
      %v3405 = vld [vmem:[%s3] sm:$0xff]
      %v3406 = vld [vmem:[%s3 + $0x8] sm:$0xff]
      %v3407 = vld [vmem:[%s3 + $0x10] sm:$0xff]
      %v3408 = vld [vmem:[%s3 + $0x18] sm:$0xff]
      %v3409 = vld [vmem:[%s3 + $0x20] sm:$0xff]
      %v3410 = vld [vmem:[%s3 + $0x28] sm:$0xff]
      %v3411 = vld [vmem:[%s3 + $0x30] sm:$0xff]
      %v3412 = vld [vmem:[%s3 + $0x38] sm:$0xff]
      %v3413 = vld [vmem:[%s3 + $0x40] sm:$0xff]
      %v3414 = vld [vmem:[%s3 + $0x48] sm:$0xff]
      %v3415 = vld [vmem:[%s3 + $0x50] sm:$0xff]
      %v3416 = vld [vmem:[%s3 + $0x58] sm:$0xff]
      %v3417 = vld [vmem:[%s3 + $0x60] sm:$0xff]
      %v3418 = vld [vmem:[%s3 + $0x68] sm:$0xff]
      %v3419 = vld [vmem:[%s3 + $0x70] sm:$0xff]
      %v3420 = vld [vmem:[%s3 + $0x78] sm:$0xff]
      %v3421 = vld [vmem:[%s3 + $0x80] sm:$0xff]
      %v3422 = vld [vmem:[%s3 + $0x88] sm:$0xff]
      %v3423 = vld [vmem:[%s3 + $0x90] sm:$0xff]
      %v3424 = vld [vmem:[%s3 + $0x98] sm:$0xff]
      %v3425 = vld [vmem:[%s3 + $0xa0] sm:$0xff]
      %v3426 = vld [vmem:[%s3 + $0xa8] sm:$0xff]
      %v3427 = vld [vmem:[%s3 + $0xb0] sm:$0xff]
      %v3428 = vld [vmem:[%s3 + $0xb8] sm:$0xff]
      %v3429 = vld [vmem:[%s3 + $0xc0] sm:$0xff]
      %v3430 = vld [vmem:[%s3 + $0xc8] sm:$0xff]
      %v3431 = vld [vmem:[%s3 + $0xd0] sm:$0xff]
      %v3432 = vld [vmem:[%s3 + $0xd8] sm:$0xff]
      %v3433 = vld [vmem:[%s3 + $0xe0] sm:$0xff]
      %v3434 = vld [vmem:[%s3 + $0xe8] sm:$0xff]
      %v3435 = vld [vmem:[%s3 + $0xf0] sm:$0xff]
      %v3436 = vld [vmem:[%s3 + $0xf8] sm:$0xff]
      %v3437 = vld [vmem:[%s3 + $0x100] sm:$0xff]
      %v3438 = vld [vmem:[%s3 + $0x108] sm:$0xff]
      %v3439 = vld [vmem:[%s3 + $0x110] sm:$0xff]
      %v3440 = vld [vmem:[%s3 + $0x118] sm:$0xff]
      %v3441 = vld [vmem:[%s3 + $0x120] sm:$0xff]
      %v3442 = vld [vmem:[%s3 + $0x128] sm:$0xff]
      %v3443 = vld [vmem:[%s3 + $0x130] sm:$0xff]
      %v3444 = vld [vmem:[%s3 + $0x138] sm:$0xff]
      %v3445 = vld [vmem:[%s3 + $0x140] sm:$0xff]
      %v3446 = vld [vmem:[%s3 + $0x148] sm:$0xff]
      %v3447 = vld [vmem:[%s3 + $0x150] sm:$0xff]
      %v3448 = vld [vmem:[%s3 + $0x158] sm:$0xff]
      %v3449 = vld [vmem:[%s3 + $0x160] sm:$0xff]
      %v3450 = vld [vmem:[%s3 + $0x168] sm:$0xff]
      %v3451 = vld [vmem:[%s3 + $0x170] sm:$0xff]
      %v3452 = vld [vmem:[%s3 + $0x178] sm:$0xff]
      %v3453 = vld [vmem:[%s3 + $0x180] sm:$0xff]
      %v3454 = vld [vmem:[%s3 + $0x188] sm:$0xff]
      %v3455 = vld [vmem:[%s3 + $0x190] sm:$0xff]
      %v3456 = vld [vmem:[%s3 + $0x198] sm:$0xff]
      %v3457 = vld [vmem:[%s3 + $0x1a0] sm:$0xff]
      %v3458 = vld [vmem:[%s3 + $0x1a8] sm:$0xff]
      %v3459 = vld [vmem:[%s3 + $0x1b0] sm:$0xff]
      %v3460 = vld [vmem:[%s3 + $0x1b8] sm:$0xff]
      %v3461 = vld [vmem:[%s3 + $0x1c0] sm:$0xff]
      %v3462 = vld [vmem:[%s3 + $0x1c8] sm:$0xff]
      %v3463 = vld [vmem:[%s3 + $0x1d0] sm:$0xff]
      %v3464 = vld [vmem:[%s3 + $0x1d8] sm:$0xff]
      %v3465 = vld [vmem:[%s3 + $0x1e0] sm:$0xff]
      %v3466 = vld [vmem:[%s3 + $0x1e8] sm:$0xff]
      %v3467 = vld [vmem:[%s3 + $0x1f0] sm:$0xff]
      %v3468 = vld [vmem:[%s3 + $0x1f8] sm:$0xff]
      %v3469 = vld [vmem:[%s4] sm:$0x3]
      %v3471 = vperm.slane %v3469, 0
      %v3472 = vperm.slane %v3469, 1
      %v3539 = vunpack.c.l.b16 %v3405
      %v3540 = vunpack.c.h.b16 %v3405
      %v3541 = vunpack.c.l.b16 %v3406
      %v3542 = vunpack.c.h.b16 %v3406
      %v3543 = vunpack.c.l.b16 %v3407
      %v3544 = vunpack.c.h.b16 %v3407
      %v3545 = vunpack.c.l.b16 %v3408
      %v3546 = vunpack.c.h.b16 %v3408
      %v3547 = vunpack.c.l.b16 %v3409
      %v3548 = vunpack.c.h.b16 %v3409
      %v3549 = vunpack.c.l.b16 %v3410
      %v3550 = vunpack.c.h.b16 %v3410
      %v3551 = vunpack.c.l.b16 %v3411
      %v3552 = vunpack.c.h.b16 %v3411
      %v3553 = vunpack.c.l.b16 %v3412
      %v3554 = vunpack.c.h.b16 %v3412
      %v3555 = vunpack.c.l.b16 %v3413
      %v3556 = vunpack.c.h.b16 %v3413
      %v3557 = vunpack.c.l.b16 %v3414
      %v3558 = vunpack.c.h.b16 %v3414
      %v3559 = vunpack.c.l.b16 %v3415
      %v3560 = vunpack.c.h.b16 %v3415
      %v3561 = vunpack.c.l.b16 %v3416
      %v3562 = vunpack.c.h.b16 %v3416
      %v3563 = vunpack.c.l.b16 %v3417
      %v3564 = vunpack.c.h.b16 %v3417
      %v3565 = vunpack.c.l.b16 %v3418
      %v3566 = vunpack.c.h.b16 %v3418
      %v3567 = vunpack.c.l.b16 %v3419
      %v3568 = vunpack.c.h.b16 %v3419
      %v3569 = vunpack.c.l.b16 %v3420
      %v3570 = vunpack.c.h.b16 %v3420
      %v3571 = vunpack.c.l.b16 %v3421
      %v3572 = vunpack.c.h.b16 %v3421
      %v3573 = vunpack.c.l.b16 %v3422
      %v3574 = vunpack.c.h.b16 %v3422
      %v3575 = vunpack.c.l.b16 %v3423
      %v3576 = vunpack.c.h.b16 %v3423
      %v3577 = vunpack.c.l.b16 %v3424
      %v3578 = vunpack.c.h.b16 %v3424
      %v3579 = vunpack.c.l.b16 %v3425
      %v3580 = vunpack.c.h.b16 %v3425
      %v3581 = vunpack.c.l.b16 %v3426
      %v3582 = vunpack.c.h.b16 %v3426
      %v3583 = vunpack.c.l.b16 %v3427
      %v3584 = vunpack.c.h.b16 %v3427
      %v3585 = vunpack.c.l.b16 %v3428
      %v3586 = vunpack.c.h.b16 %v3428
      %v3587 = vunpack.c.l.b16 %v3429
      %v3588 = vunpack.c.h.b16 %v3429
      %v3589 = vunpack.c.l.b16 %v3430
      %v3590 = vunpack.c.h.b16 %v3430
      %v3591 = vunpack.c.l.b16 %v3431
      %v3592 = vunpack.c.h.b16 %v3431
      %v3593 = vunpack.c.l.b16 %v3432
      %v3594 = vunpack.c.h.b16 %v3432
      %v3595 = vunpack.c.l.b16 %v3433
      %v3596 = vunpack.c.h.b16 %v3433
      %v3597 = vunpack.c.l.b16 %v3434
      %v3598 = vunpack.c.h.b16 %v3434
      %v3599 = vunpack.c.l.b16 %v3435
      %v3600 = vunpack.c.h.b16 %v3435
      %v3601 = vunpack.c.l.b16 %v3436
      %v3602 = vunpack.c.h.b16 %v3436
      %v3603 = vunpack.c.l.b16 %v3437
      %v3604 = vunpack.c.h.b16 %v3437
      %v3605 = vunpack.c.l.b16 %v3438
      %v3606 = vunpack.c.h.b16 %v3438
      %v3607 = vunpack.c.l.b16 %v3439
      %v3608 = vunpack.c.h.b16 %v3439
      %v3609 = vunpack.c.l.b16 %v3440
      %v3610 = vunpack.c.h.b16 %v3440
      %v3611 = vunpack.c.l.b16 %v3441
      %v3612 = vunpack.c.h.b16 %v3441
      %v3613 = vunpack.c.l.b16 %v3442
      %v3614 = vunpack.c.h.b16 %v3442
      %v3615 = vunpack.c.l.b16 %v3443
      %v3616 = vunpack.c.h.b16 %v3443
      %v3617 = vunpack.c.l.b16 %v3444
      %v3618 = vunpack.c.h.b16 %v3444
      %v3619 = vunpack.c.l.b16 %v3445
      %v3620 = vunpack.c.h.b16 %v3445
      %v3621 = vunpack.c.l.b16 %v3446
      %v3622 = vunpack.c.h.b16 %v3446
      %v3623 = vunpack.c.l.b16 %v3447
      %v3624 = vunpack.c.h.b16 %v3447
      %v3625 = vunpack.c.l.b16 %v3448
      %v3626 = vunpack.c.h.b16 %v3448
      %v3627 = vunpack.c.l.b16 %v3449
      %v3628 = vunpack.c.h.b16 %v3449
      %v3629 = vunpack.c.l.b16 %v3450
      %v3630 = vunpack.c.h.b16 %v3450
      %v3631 = vunpack.c.l.b16 %v3451
      %v3632 = vunpack.c.h.b16 %v3451
      %v3633 = vunpack.c.l.b16 %v3452
      %v3634 = vunpack.c.h.b16 %v3452
      %v3635 = vunpack.c.l.b16 %v3453
      %v3636 = vunpack.c.h.b16 %v3453
      %v3637 = vunpack.c.l.b16 %v3454
      %v3638 = vunpack.c.h.b16 %v3454
      %v3639 = vunpack.c.l.b16 %v3455
      %v3640 = vunpack.c.h.b16 %v3455
      %v3641 = vunpack.c.l.b16 %v3456
      %v3642 = vunpack.c.h.b16 %v3456
      %v3643 = vunpack.c.l.b16 %v3457
      %v3644 = vunpack.c.h.b16 %v3457
      %v3645 = vunpack.c.l.b16 %v3458
      %v3646 = vunpack.c.h.b16 %v3458
      %v3647 = vunpack.c.l.b16 %v3459
      %v3648 = vunpack.c.h.b16 %v3459
      %v3649 = vunpack.c.l.b16 %v3460
      %v3650 = vunpack.c.h.b16 %v3460
      %v3651 = vunpack.c.l.b16 %v3461
      %v3652 = vunpack.c.h.b16 %v3461
      %v3653 = vunpack.c.l.b16 %v3462
      %v3654 = vunpack.c.h.b16 %v3462
      %v3655 = vunpack.c.l.b16 %v3463
      %v3656 = vunpack.c.h.b16 %v3463
      %v3657 = vunpack.c.l.b16 %v3464
      %v3658 = vunpack.c.h.b16 %v3464
      %v3659 = vunpack.c.l.b16 %v3465
      %v3660 = vunpack.c.h.b16 %v3465
      %v3661 = vunpack.c.l.b16 %v3466
      %v3662 = vunpack.c.h.b16 %v3466
      %v3663 = vunpack.c.l.b16 %v3467
      %v3664 = vunpack.c.h.b16 %v3467
      %v3665 = vunpack.c.l.b16 %v3468
      %v3666 = vunpack.c.h.b16 %v3468
      %v3667 = vpack.c.b16 %v3541, %v3539
      %v3668 = vpack.c.b16 %v3542, %v3540
      %v3669 = vpack.c.b16 %v3545, %v3543
      %v3670 = vpack.c.b16 %v3546, %v3544
      %v3671 = vpack.c.b16 %v3549, %v3547
      %v3672 = vpack.c.b16 %v3550, %v3548
      %v3673 = vpack.c.b16 %v3553, %v3551
      %v3674 = vpack.c.b16 %v3554, %v3552
      %v3675 = vpack.c.b16 %v3557, %v3555
      %v3676 = vpack.c.b16 %v3558, %v3556
      %v3677 = vpack.c.b16 %v3561, %v3559
      %v3678 = vpack.c.b16 %v3562, %v3560
      %v3679 = vpack.c.b16 %v3565, %v3563
      %v3680 = vpack.c.b16 %v3566, %v3564
      %v3681 = vpack.c.b16 %v3569, %v3567
      %v3682 = vpack.c.b16 %v3570, %v3568
      %v3683 = vpack.c.b16 %v3573, %v3571
      %v3684 = vpack.c.b16 %v3574, %v3572
      %v3685 = vpack.c.b16 %v3577, %v3575
      %v3686 = vpack.c.b16 %v3578, %v3576
      %v3687 = vpack.c.b16 %v3581, %v3579
      %v3688 = vpack.c.b16 %v3582, %v3580
      %v3689 = vpack.c.b16 %v3585, %v3583
      %v3690 = vpack.c.b16 %v3586, %v3584
      %v3691 = vpack.c.b16 %v3589, %v3587
      %v3692 = vpack.c.b16 %v3590, %v3588
      %v3693 = vpack.c.b16 %v3593, %v3591
      %v3694 = vpack.c.b16 %v3594, %v3592
      %v3695 = vpack.c.b16 %v3597, %v3595
      %v3696 = vpack.c.b16 %v3598, %v3596
      %v3697 = vpack.c.b16 %v3601, %v3599
      %v3698 = vpack.c.b16 %v3602, %v3600
      %v3699 = vpack.c.b16 %v3605, %v3603
      %v3700 = vpack.c.b16 %v3606, %v3604
      %v3701 = vpack.c.b16 %v3609, %v3607
      %v3702 = vpack.c.b16 %v3610, %v3608
      %v3703 = vpack.c.b16 %v3613, %v3611
      %v3704 = vpack.c.b16 %v3614, %v3612
      %v3705 = vpack.c.b16 %v3617, %v3615
      %v3706 = vpack.c.b16 %v3618, %v3616
      %v3707 = vpack.c.b16 %v3621, %v3619
      %v3708 = vpack.c.b16 %v3622, %v3620
      %v3709 = vpack.c.b16 %v3625, %v3623
      %v3710 = vpack.c.b16 %v3626, %v3624
      %v3711 = vpack.c.b16 %v3629, %v3627
      %v3712 = vpack.c.b16 %v3630, %v3628
      %v3713 = vpack.c.b16 %v3633, %v3631
      %v3714 = vpack.c.b16 %v3634, %v3632
      %v3715 = vpack.c.b16 %v3637, %v3635
      %v3716 = vpack.c.b16 %v3638, %v3636
      %v3717 = vpack.c.b16 %v3641, %v3639
      %v3718 = vpack.c.b16 %v3642, %v3640
      %v3719 = vpack.c.b16 %v3645, %v3643
      %v3720 = vpack.c.b16 %v3646, %v3644
      %v3721 = vpack.c.b16 %v3649, %v3647
      %v3722 = vpack.c.b16 %v3650, %v3648
      %v3723 = vpack.c.b16 %v3653, %v3651
      %v3724 = vpack.c.b16 %v3654, %v3652
      %v3725 = vpack.c.b16 %v3657, %v3655
      %v3726 = vpack.c.b16 %v3658, %v3656
      %v3727 = vpack.c.b16 %v3661, %v3659
      %v3728 = vpack.c.b16 %v3662, %v3660
      %v3729 = vpack.c.b16 %v3665, %v3663
      %v3730 = vpack.c.b16 %v3666, %v3664
      %3795 = vmatpush.bf16.msra.mxu0 %v3681
      %3796 = vmatpush.bf16.msra.mxu0 %v3679
      %3797 = vmatpush.bf16.msra.mxu0 %v3677
      %3798 = vmatpush.bf16.msra.mxu0 %v3675
      %3799 = vmatpush.bf16.msra.mxu0 %v3673
      %3800 = vmatpush.bf16.msra.mxu0 %v3671
      %3801 = vmatpush.bf16.msra.mxu0 %v3669
      %3802 = vmatpush.bf16.msra.mxu0 %v3667
      %3803 = vmatmul.bf16.gmra.mxu0 %v3373
      %v3804 = vpop.f32.mrf.mxu0
      %v3805 = vadd.f32 %v3471, %v3804
      %v3806 = vpop.f32.mrf.mxu0
      %v3807 = vadd.f32 %v3471, %v3806
      %3808 = vmatmul.bf16.gmra.mxu0 %v3377
      %v3809 = vpop.f32.mrf.mxu0
      %v3810 = vadd.f32 %v3471, %v3809
      %v3811 = vpop.f32.mrf.mxu0
      %v3812 = vadd.f32 %v3471, %v3811
      %3813 = vmatmul.bf16.gmra.mxu0 %v3381
      %v3814 = vpop.f32.mrf.mxu0
      %v3815 = vadd.f32 %v3471, %v3814
      %v3816 = vpop.f32.mrf.mxu0
      %v3817 = vadd.f32 %v3471, %v3816
      %3818 = vmatmul.bf16.gmra.mxu0 %v3385
      %v3819 = vpop.f32.mrf.mxu0
      %v3820 = vadd.f32 %v3471, %v3819
      %v3821 = vpop.f32.mrf.mxu0
      %v3822 = vadd.f32 %v3471, %v3821
      %3823 = vmatmul.bf16.gmra.mxu0 %v3389
      %v3824 = vpop.f32.mrf.mxu0
      %v3825 = vadd.f32 %v3471, %v3824
      %v3826 = vpop.f32.mrf.mxu0
      %v3827 = vadd.f32 %v3471, %v3826
      %3828 = vmatmul.bf16.gmra.mxu0 %v3393
      %v3829 = vpop.f32.mrf.mxu0
      %v3830 = vadd.f32 %v3471, %v3829
      %v3831 = vpop.f32.mrf.mxu0
      %v3832 = vadd.f32 %v3471, %v3831
      %3833 = vmatmul.bf16.gmra.mxu0 %v3397
      %v3834 = vpop.f32.mrf.mxu0
      %v3835 = vadd.f32 %v3471, %v3834
      %v3836 = vpop.f32.mrf.mxu0
      %v3837 = vadd.f32 %v3471, %v3836
      %3838 = vmatmul.bf16.gmra.mxu0 %v3401
      %v3839 = vpop.f32.mrf.mxu0
      %v3840 = vadd.f32 %v3471, %v3839
      %v3841 = vpop.f32.mrf.mxu0
      %v3842 = vadd.f32 %v3471, %v3841
      %3843 = vdwg.mxu0
      %3844 = vmatpush.bf16.msra.mxu0 %v3697
      %3845 = vmatpush.bf16.msra.mxu0 %v3695
      %3846 = vmatpush.bf16.msra.mxu0 %v3693
      %3847 = vmatpush.bf16.msra.mxu0 %v3691
      %3848 = vmatpush.bf16.msra.mxu0 %v3689
      %3849 = vmatpush.bf16.msra.mxu0 %v3687
      %3850 = vmatpush.bf16.msra.mxu0 %v3685
      %3851 = vmatpush.bf16.msra.mxu0 %v3683
      %3852 = vmatmul.bf16.gmra.mxu0 %v3374
      %v3853 = vpop.f32.mrf.mxu0
      %v3854 = vadd.f32 %v3805, %v3853
      %v3855 = vpop.f32.mrf.mxu0
      %v3856 = vadd.f32 %v3807, %v3855
      %3857 = vmatmul.bf16.gmra.mxu0 %v3378
      %v3858 = vpop.f32.mrf.mxu0
      %v3859 = vadd.f32 %v3810, %v3858
      %v3860 = vpop.f32.mrf.mxu0
      %v3861 = vadd.f32 %v3812, %v3860
      %3862 = vmatmul.bf16.gmra.mxu0 %v3382
      %v3863 = vpop.f32.mrf.mxu0
      %v3864 = vadd.f32 %v3815, %v3863
      %v3865 = vpop.f32.mrf.mxu0
      %v3866 = vadd.f32 %v3817, %v3865
      %3867 = vmatmul.bf16.gmra.mxu0 %v3386
      %v3868 = vpop.f32.mrf.mxu0
      %v3869 = vadd.f32 %v3820, %v3868
      %v3870 = vpop.f32.mrf.mxu0
      %v3871 = vadd.f32 %v3822, %v3870
      %3872 = vmatmul.bf16.gmra.mxu0 %v3390
      %v3873 = vpop.f32.mrf.mxu0
      %v3874 = vadd.f32 %v3825, %v3873
      %v3875 = vpop.f32.mrf.mxu0
      %v3876 = vadd.f32 %v3827, %v3875
      %3877 = vmatmul.bf16.gmra.mxu0 %v3394
      %v3878 = vpop.f32.mrf.mxu0
      %v3879 = vadd.f32 %v3830, %v3878
      %v3880 = vpop.f32.mrf.mxu0
      %v3881 = vadd.f32 %v3832, %v3880
      %3882 = vmatmul.bf16.gmra.mxu0 %v3398
      %v3883 = vpop.f32.mrf.mxu0
      %v3884 = vadd.f32 %v3835, %v3883
      %v3885 = vpop.f32.mrf.mxu0
      %v3886 = vadd.f32 %v3837, %v3885
      %3887 = vmatmul.bf16.gmra.mxu0 %v3402
      %v3888 = vpop.f32.mrf.mxu0
      %v3889 = vadd.f32 %v3840, %v3888
      %v3890 = vpop.f32.mrf.mxu0
      %v3891 = vadd.f32 %v3842, %v3890
      %3892 = vdwg.mxu0
      %3893 = vmatpush.bf16.msra.mxu0 %v3713
      %3894 = vmatpush.bf16.msra.mxu0 %v3711
      %3895 = vmatpush.bf16.msra.mxu0 %v3709
      %3896 = vmatpush.bf16.msra.mxu0 %v3707
      %3897 = vmatpush.bf16.msra.mxu0 %v3705
      %3898 = vmatpush.bf16.msra.mxu0 %v3703
      %3899 = vmatpush.bf16.msra.mxu0 %v3701
      %3900 = vmatpush.bf16.msra.mxu0 %v3699
      %3901 = vmatmul.bf16.gmra.mxu0 %v3375
      %v3902 = vpop.f32.mrf.mxu0
      %v3903 = vadd.f32 %v3854, %v3902
      %v3904 = vpop.f32.mrf.mxu0
      %v3905 = vadd.f32 %v3856, %v3904
      %3906 = vmatmul.bf16.gmra.mxu0 %v3379
      %v3907 = vpop.f32.mrf.mxu0
      %v3908 = vadd.f32 %v3859, %v3907
      %v3909 = vpop.f32.mrf.mxu0
      %v3910 = vadd.f32 %v3861, %v3909
      %3911 = vmatmul.bf16.gmra.mxu0 %v3383
      %v3912 = vpop.f32.mrf.mxu0
      %v3913 = vadd.f32 %v3864, %v3912
      %v3914 = vpop.f32.mrf.mxu0
      %v3915 = vadd.f32 %v3866, %v3914
      %3916 = vmatmul.bf16.gmra.mxu0 %v3387
      %v3917 = vpop.f32.mrf.mxu0
      %v3918 = vadd.f32 %v3869, %v3917
      %v3919 = vpop.f32.mrf.mxu0
      %v3920 = vadd.f32 %v3871, %v3919
      %3921 = vmatmul.bf16.gmra.mxu0 %v3391
      %v3922 = vpop.f32.mrf.mxu0
      %v3923 = vadd.f32 %v3874, %v3922
      %v3924 = vpop.f32.mrf.mxu0
      %v3925 = vadd.f32 %v3876, %v3924
      %3926 = vmatmul.bf16.gmra.mxu0 %v3395
      %v3927 = vpop.f32.mrf.mxu0
      %v3928 = vadd.f32 %v3879, %v3927
      %v3929 = vpop.f32.mrf.mxu0
      %v3930 = vadd.f32 %v3881, %v3929
      %3931 = vmatmul.bf16.gmra.mxu0 %v3399
      %v3932 = vpop.f32.mrf.mxu0
      %v3933 = vadd.f32 %v3884, %v3932
      %v3934 = vpop.f32.mrf.mxu0
      %v3935 = vadd.f32 %v3886, %v3934
      %3936 = vmatmul.bf16.gmra.mxu0 %v3403
      %v3937 = vpop.f32.mrf.mxu0
      %v3938 = vadd.f32 %v3889, %v3937
      %v3939 = vpop.f32.mrf.mxu0
      %v3940 = vadd.f32 %v3891, %v3939
      %3941 = vdwg.mxu0
      %3942 = vmatpush.bf16.msra.mxu0 %v3729
      %3943 = vmatpush.bf16.msra.mxu0 %v3727
      %3944 = vmatpush.bf16.msra.mxu0 %v3725
      %3945 = vmatpush.bf16.msra.mxu0 %v3723
      %3946 = vmatpush.bf16.msra.mxu0 %v3721
      %3947 = vmatpush.bf16.msra.mxu0 %v3719
      %3948 = vmatpush.bf16.msra.mxu0 %v3717
      %3949 = vmatpush.bf16.msra.mxu0 %v3715
      %3950 = vmatmul.bf16.gmra.mxu0 %v3376
      %v3951 = vpop.f32.mrf.mxu0
      %v3952 = vadd.f32 %v3903, %v3951
      %v3953 = vpop.f32.mrf.mxu0
      %v3954 = vadd.f32 %v3905, %v3953
      %3955 = vmatmul.bf16.gmra.mxu0 %v3380
      %v3956 = vpop.f32.mrf.mxu0
      %v3957 = vadd.f32 %v3908, %v3956
      %v3958 = vpop.f32.mrf.mxu0
      %v3959 = vadd.f32 %v3910, %v3958
      %3960 = vmatmul.bf16.gmra.mxu0 %v3384
      %v3961 = vpop.f32.mrf.mxu0
      %v3962 = vadd.f32 %v3913, %v3961
      %v3963 = vpop.f32.mrf.mxu0
      %v3964 = vadd.f32 %v3915, %v3963
      %3965 = vmatmul.bf16.gmra.mxu0 %v3388
      %v3966 = vpop.f32.mrf.mxu0
      %v3967 = vadd.f32 %v3918, %v3966
      %v3968 = vpop.f32.mrf.mxu0
      %v3969 = vadd.f32 %v3920, %v3968
      %3970 = vmatmul.bf16.gmra.mxu0 %v3392
      %v3971 = vpop.f32.mrf.mxu0
      %v3972 = vadd.f32 %v3923, %v3971
      %v3973 = vpop.f32.mrf.mxu0
      %v3974 = vadd.f32 %v3925, %v3973
      %3975 = vmatmul.bf16.gmra.mxu0 %v3396
      %v3976 = vpop.f32.mrf.mxu0
      %v3977 = vadd.f32 %v3928, %v3976
      %v3978 = vpop.f32.mrf.mxu0
      %v3979 = vadd.f32 %v3930, %v3978
      %3980 = vmatmul.bf16.gmra.mxu0 %v3400
      %v3981 = vpop.f32.mrf.mxu0
      %v3982 = vadd.f32 %v3933, %v3981
      %v3983 = vpop.f32.mrf.mxu0
      %v3984 = vadd.f32 %v3935, %v3983
      %3985 = vmatmul.bf16.gmra.mxu0 %v3404
      %v3986 = vpop.f32.mrf.mxu0
      %v3987 = vadd.f32 %v3938, %v3986
      %v3988 = vpop.f32.mrf.mxu0
      %v3989 = vadd.f32 %v3940, %v3988
      %3990 = vdwg.mxu0
      %3991 = vmatpush.bf16.msra.mxu0 %v3682
      %3992 = vmatpush.bf16.msra.mxu0 %v3680
      %3993 = vmatpush.bf16.msra.mxu0 %v3678
      %3994 = vmatpush.bf16.msra.mxu0 %v3676
      %3995 = vmatpush.bf16.msra.mxu0 %v3674
      %3996 = vmatpush.bf16.msra.mxu0 %v3672
      %3997 = vmatpush.bf16.msra.mxu0 %v3670
      %3998 = vmatpush.bf16.msra.mxu0 %v3668
      %3999 = vmatmul.bf16.gmra.mxu0 %v3373
      %v4000 = vpop.f32.mrf.mxu0
      %v4001 = vadd.f32 %v3472, %v4000
      %v4002 = vpop.f32.mrf.mxu0
      %v4003 = vadd.f32 %v3472, %v4002
      %4004 = vmatmul.bf16.gmra.mxu0 %v3377
      %v4005 = vpop.f32.mrf.mxu0
      %v4006 = vadd.f32 %v3472, %v4005
      %v4007 = vpop.f32.mrf.mxu0
      %v4008 = vadd.f32 %v3472, %v4007
      %4009 = vmatmul.bf16.gmra.mxu0 %v3381
      %v4010 = vpop.f32.mrf.mxu0
      %v4011 = vadd.f32 %v3472, %v4010
      %v4012 = vpop.f32.mrf.mxu0
      %v4013 = vadd.f32 %v3472, %v4012
      %4014 = vmatmul.bf16.gmra.mxu0 %v3385
      %v4015 = vpop.f32.mrf.mxu0
      %v4016 = vadd.f32 %v3472, %v4015
      %v4017 = vpop.f32.mrf.mxu0
      %v4018 = vadd.f32 %v3472, %v4017
      %4019 = vmatmul.bf16.gmra.mxu0 %v3389
      %v4020 = vpop.f32.mrf.mxu0
      %v4021 = vadd.f32 %v3472, %v4020
      %v4022 = vpop.f32.mrf.mxu0
      %v4023 = vadd.f32 %v3472, %v4022
      %4024 = vmatmul.bf16.gmra.mxu0 %v3393
      %v4025 = vpop.f32.mrf.mxu0
      %v4026 = vadd.f32 %v3472, %v4025
      %v4027 = vpop.f32.mrf.mxu0
      %v4028 = vadd.f32 %v3472, %v4027
      %4029 = vmatmul.bf16.gmra.mxu0 %v3397
      %v4030 = vpop.f32.mrf.mxu0
      %v4031 = vadd.f32 %v3472, %v4030
      %v4032 = vpop.f32.mrf.mxu0
      %v4033 = vadd.f32 %v3472, %v4032
      %4034 = vmatmul.bf16.gmra.mxu0 %v3401
      %v4035 = vpop.f32.mrf.mxu0
      %v4036 = vadd.f32 %v3472, %v4035
      %v4037 = vpop.f32.mrf.mxu0
      %v4038 = vadd.f32 %v3472, %v4037
      %4039 = vdwg.mxu0
      %4040 = vmatpush.bf16.msra.mxu0 %v3698
      %4041 = vmatpush.bf16.msra.mxu0 %v3696
      %4042 = vmatpush.bf16.msra.mxu0 %v3694
      %4043 = vmatpush.bf16.msra.mxu0 %v3692
      %4044 = vmatpush.bf16.msra.mxu0 %v3690
      %4045 = vmatpush.bf16.msra.mxu0 %v3688
      %4046 = vmatpush.bf16.msra.mxu0 %v3686
      %4047 = vmatpush.bf16.msra.mxu0 %v3684
      %4048 = vmatmul.bf16.gmra.mxu0 %v3374
      %v4049 = vpop.f32.mrf.mxu0
      %v4050 = vadd.f32 %v4001, %v4049
      %v4051 = vpop.f32.mrf.mxu0
      %v4052 = vadd.f32 %v4003, %v4051
      %4053 = vmatmul.bf16.gmra.mxu0 %v3378
      %v4054 = vpop.f32.mrf.mxu0
      %v4055 = vadd.f32 %v4006, %v4054
      %v4056 = vpop.f32.mrf.mxu0
      %v4057 = vadd.f32 %v4008, %v4056
      %4058 = vmatmul.bf16.gmra.mxu0 %v3382
      %v4059 = vpop.f32.mrf.mxu0
      %v4060 = vadd.f32 %v4011, %v4059
      %v4061 = vpop.f32.mrf.mxu0
      %v4062 = vadd.f32 %v4013, %v4061
      %4063 = vmatmul.bf16.gmra.mxu0 %v3386
      %v4064 = vpop.f32.mrf.mxu0
      %v4065 = vadd.f32 %v4016, %v4064
      %v4066 = vpop.f32.mrf.mxu0
      %v4067 = vadd.f32 %v4018, %v4066
      %4068 = vmatmul.bf16.gmra.mxu0 %v3390
      %v4069 = vpop.f32.mrf.mxu0
      %v4070 = vadd.f32 %v4021, %v4069
      %v4071 = vpop.f32.mrf.mxu0
      %v4072 = vadd.f32 %v4023, %v4071
      %4073 = vmatmul.bf16.gmra.mxu0 %v3394
      %v4074 = vpop.f32.mrf.mxu0
      %v4075 = vadd.f32 %v4026, %v4074
      %v4076 = vpop.f32.mrf.mxu0
      %v4077 = vadd.f32 %v4028, %v4076
      %4078 = vmatmul.bf16.gmra.mxu0 %v3398
      %v4079 = vpop.f32.mrf.mxu0
      %v4080 = vadd.f32 %v4031, %v4079
      %v4081 = vpop.f32.mrf.mxu0
      %v4082 = vadd.f32 %v4033, %v4081
      %4083 = vmatmul.bf16.gmra.mxu0 %v3402
      %v4084 = vpop.f32.mrf.mxu0
      %v4085 = vadd.f32 %v4036, %v4084
      %v4086 = vpop.f32.mrf.mxu0
      %v4087 = vadd.f32 %v4038, %v4086
      %4088 = vdwg.mxu0
      %4089 = vmatpush.bf16.msra.mxu0 %v3714
      %4090 = vmatpush.bf16.msra.mxu0 %v3712
      %4091 = vmatpush.bf16.msra.mxu0 %v3710
      %4092 = vmatpush.bf16.msra.mxu0 %v3708
      %4093 = vmatpush.bf16.msra.mxu0 %v3706
      %4094 = vmatpush.bf16.msra.mxu0 %v3704
      %4095 = vmatpush.bf16.msra.mxu0 %v3702
      %4096 = vmatpush.bf16.msra.mxu0 %v3700
      %4097 = vmatmul.bf16.gmra.mxu0 %v3375
      %v4098 = vpop.f32.mrf.mxu0
      %v4099 = vadd.f32 %v4050, %v4098
      %v4100 = vpop.f32.mrf.mxu0
      %v4101 = vadd.f32 %v4052, %v4100
      %4102 = vmatmul.bf16.gmra.mxu0 %v3379
      %v4103 = vpop.f32.mrf.mxu0
      %v4104 = vadd.f32 %v4055, %v4103
      %v4105 = vpop.f32.mrf.mxu0
      %v4106 = vadd.f32 %v4057, %v4105
      %4107 = vmatmul.bf16.gmra.mxu0 %v3383
      %v4108 = vpop.f32.mrf.mxu0
      %v4109 = vadd.f32 %v4060, %v4108
      %v4110 = vpop.f32.mrf.mxu0
      %v4111 = vadd.f32 %v4062, %v4110
      %4112 = vmatmul.bf16.gmra.mxu0 %v3387
      %v4113 = vpop.f32.mrf.mxu0
      %v4114 = vadd.f32 %v4065, %v4113
      %v4115 = vpop.f32.mrf.mxu0
      %v4116 = vadd.f32 %v4067, %v4115
      %4117 = vmatmul.bf16.gmra.mxu0 %v3391
      %v4118 = vpop.f32.mrf.mxu0
      %v4119 = vadd.f32 %v4070, %v4118
      %v4120 = vpop.f32.mrf.mxu0
      %v4121 = vadd.f32 %v4072, %v4120
      %4122 = vmatmul.bf16.gmra.mxu0 %v3395
      %v4123 = vpop.f32.mrf.mxu0
      %v4124 = vadd.f32 %v4075, %v4123
      %v4125 = vpop.f32.mrf.mxu0
      %v4126 = vadd.f32 %v4077, %v4125
      %4127 = vmatmul.bf16.gmra.mxu0 %v3399
      %v4128 = vpop.f32.mrf.mxu0
      %v4129 = vadd.f32 %v4080, %v4128
      %v4130 = vpop.f32.mrf.mxu0
      %v4131 = vadd.f32 %v4082, %v4130
      %4132 = vmatmul.bf16.gmra.mxu0 %v3403
      %v4133 = vpop.f32.mrf.mxu0
      %v4134 = vadd.f32 %v4085, %v4133
      %v4135 = vpop.f32.mrf.mxu0
      %v4136 = vadd.f32 %v4087, %v4135
      %4137 = vdwg.mxu0
      %4138 = vmatpush.bf16.msra.mxu0 %v3730
      %4139 = vmatpush.bf16.msra.mxu0 %v3728
      %4140 = vmatpush.bf16.msra.mxu0 %v3726
      %4141 = vmatpush.bf16.msra.mxu0 %v3724
      %4142 = vmatpush.bf16.msra.mxu0 %v3722
      %4143 = vmatpush.bf16.msra.mxu0 %v3720
      %4144 = vmatpush.bf16.msra.mxu0 %v3718
      %4145 = vmatpush.bf16.msra.mxu0 %v3716
      %4146 = vmatmul.bf16.gmra.mxu0 %v3376
      %v4147 = vpop.f32.mrf.mxu0
      %v4148 = vadd.f32 %v4099, %v4147
      %v4149 = vpop.f32.mrf.mxu0
      %v4150 = vadd.f32 %v4101, %v4149
      %4151 = vmatmul.bf16.gmra.mxu0 %v3380
      %v4152 = vpop.f32.mrf.mxu0
      %v4153 = vadd.f32 %v4104, %v4152
      %v4154 = vpop.f32.mrf.mxu0
      %v4155 = vadd.f32 %v4106, %v4154
      %4156 = vmatmul.bf16.gmra.mxu0 %v3384
      %v4157 = vpop.f32.mrf.mxu0
      %v4158 = vadd.f32 %v4109, %v4157
      %v4159 = vpop.f32.mrf.mxu0
      %v4160 = vadd.f32 %v4111, %v4159
      %4161 = vmatmul.bf16.gmra.mxu0 %v3388
      %v4162 = vpop.f32.mrf.mxu0
      %v4163 = vadd.f32 %v4114, %v4162
      %v4164 = vpop.f32.mrf.mxu0
      %v4165 = vadd.f32 %v4116, %v4164
      %4166 = vmatmul.bf16.gmra.mxu0 %v3392
      %v4167 = vpop.f32.mrf.mxu0
      %v4168 = vadd.f32 %v4119, %v4167
      %v4169 = vpop.f32.mrf.mxu0
      %v4170 = vadd.f32 %v4121, %v4169
      %4171 = vmatmul.bf16.gmra.mxu0 %v3396
      %v4172 = vpop.f32.mrf.mxu0
      %v4173 = vadd.f32 %v4124, %v4172
      %v4174 = vpop.f32.mrf.mxu0
      %v4175 = vadd.f32 %v4126, %v4174
      %4176 = vmatmul.bf16.gmra.mxu0 %v3400
      %v4177 = vpop.f32.mrf.mxu0
      %v4178 = vadd.f32 %v4129, %v4177
      %v4179 = vpop.f32.mrf.mxu0
      %v4180 = vadd.f32 %v4131, %v4179
      %4181 = vmatmul.bf16.gmra.mxu0 %v3404
      %v4182 = vpop.f32.mrf.mxu0
      %v4183 = vadd.f32 %v4134, %v4182
      %v4184 = vpop.f32.mrf.mxu0
      %v4185 = vadd.f32 %v4136, %v4184
      %4186 = vdwg.mxu0
      %v4187 = vmax.f32 %v3952, 0.0
      %v4188 = vmax.f32 %v4148, 0.0
      %v4189 = vmax.f32 %v3954, 0.0
      %v4190 = vmax.f32 %v4150, 0.0
      %v4191 = vmax.f32 %v3957, 0.0
      %v4192 = vmax.f32 %v4153, 0.0
      %v4193 = vmax.f32 %v3959, 0.0
      %v4194 = vmax.f32 %v4155, 0.0
      %v4195 = vmax.f32 %v3962, 0.0
      %v4196 = vmax.f32 %v4158, 0.0
      %v4197 = vmax.f32 %v3964, 0.0
      %v4198 = vmax.f32 %v4160, 0.0
      %v4199 = vmax.f32 %v3967, 0.0
      %v4200 = vmax.f32 %v4163, 0.0
      %v4201 = vmax.f32 %v3969, 0.0
      %v4202 = vmax.f32 %v4165, 0.0
      %v4203 = vmax.f32 %v3972, 0.0
      %v4204 = vmax.f32 %v4168, 0.0
      %v4205 = vmax.f32 %v3974, 0.0
      %v4206 = vmax.f32 %v4170, 0.0
      %v4207 = vmax.f32 %v3977, 0.0
      %v4208 = vmax.f32 %v4173, 0.0
      %v4209 = vmax.f32 %v3979, 0.0
      %v4210 = vmax.f32 %v4175, 0.0
      %v4211 = vmax.f32 %v3982, 0.0
      %v4212 = vmax.f32 %v4178, 0.0
      %v4213 = vmax.f32 %v3984, 0.0
      %v4214 = vmax.f32 %v4180, 0.0
      %v4215 = vmax.f32 %v3987, 0.0
      %v4216 = vmax.f32 %v4183, 0.0
      %v4217 = vmax.f32 %v3989, 0.0
      %v4218 = vmax.f32 %v4185, 0.0
      %v4219 = vpack.c.bf16 %v4189, %v4187
      %v4220 = vpack.c.bf16 %v4190, %v4188
      %v4221 = vpack.c.bf16 %v4193, %v4191
      %v4222 = vpack.c.bf16 %v4194, %v4192
      %v4223 = vpack.c.bf16 %v4197, %v4195
      %v4224 = vpack.c.bf16 %v4198, %v4196
      %v4225 = vpack.c.bf16 %v4201, %v4199
      %v4226 = vpack.c.bf16 %v4202, %v4200
      %v4227 = vpack.c.bf16 %v4205, %v4203
      %v4228 = vpack.c.bf16 %v4206, %v4204
      %v4229 = vpack.c.bf16 %v4209, %v4207
      %v4230 = vpack.c.bf16 %v4210, %v4208
      %v4231 = vpack.c.bf16 %v4213, %v4211
      %v4232 = vpack.c.bf16 %v4214, %v4212
      %v4233 = vpack.c.bf16 %v4217, %v4215
      %v4234 = vpack.c.bf16 %v4218, %v4216
      %v4235 = vld [vmem:[%s5] sm:$0xf]
      %v4236 = vld [vmem:[%s5 + $0x4] sm:$0xf]
      %v4237 = vld [vmem:[%s5 + $0x8] sm:$0xf]
      %v4238 = vld [vmem:[%s5 + $0xc] sm:$0xf]
      %v4239 = vld [vmem:[%s5 + $0x10] sm:$0xf]
      %v4240 = vld [vmem:[%s5 + $0x14] sm:$0xf]
      %v4241 = vld [vmem:[%s5 + $0x18] sm:$0xf]
      %v4242 = vld [vmem:[%s5 + $0x1c] sm:$0xf]
      %v4243 = vld [vmem:[%s5 + $0x20] sm:$0xf]
      %v4244 = vld [vmem:[%s5 + $0x24] sm:$0xf]
      %v4245 = vld [vmem:[%s5 + $0x28] sm:$0xf]
      %v4246 = vld [vmem:[%s5 + $0x2c] sm:$0xf]
      %v4247 = vld [vmem:[%s5 + $0x30] sm:$0xf]
      %v4248 = vld [vmem:[%s5 + $0x34] sm:$0xf]
      %v4249 = vld [vmem:[%s5 + $0x38] sm:$0xf]
      %v4250 = vld [vmem:[%s5 + $0x3c] sm:$0xf]
      %v4251 = vld [vmem:[%s5 + $0x40] sm:$0xf]
      %v4252 = vld [vmem:[%s5 + $0x44] sm:$0xf]
      %v4253 = vld [vmem:[%s5 + $0x48] sm:$0xf]
      %v4254 = vld [vmem:[%s5 + $0x4c] sm:$0xf]
      %v4255 = vld [vmem:[%s5 + $0x50] sm:$0xf]
      %v4256 = vld [vmem:[%s5 + $0x54] sm:$0xf]
      %v4257 = vld [vmem:[%s5 + $0x58] sm:$0xf]
      %v4258 = vld [vmem:[%s5 + $0x5c] sm:$0xf]
      %v4259 = vld [vmem:[%s5 + $0x60] sm:$0xf]
      %v4260 = vld [vmem:[%s5 + $0x64] sm:$0xf]
      %v4261 = vld [vmem:[%s5 + $0x68] sm:$0xf]
      %v4262 = vld [vmem:[%s5 + $0x6c] sm:$0xf]
      %v4263 = vld [vmem:[%s5 + $0x70] sm:$0xf]
      %v4264 = vld [vmem:[%s5 + $0x74] sm:$0xf]
      %v4265 = vld [vmem:[%s5 + $0x78] sm:$0xf]
      %v4266 = vld [vmem:[%s5 + $0x7c] sm:$0xf]
      %v4267 = vld [vmem:[%s6] sm:$0x1]
      %v4269 = vperm.slane %v4267, 0
      %v4303 = vunpack.c.l.b16 %v4235
      %v4304 = vunpack.c.l.b16 %v4236
      %v4305 = vunpack.c.l.b16 %v4237
      %v4306 = vunpack.c.l.b16 %v4238
      %v4307 = vunpack.c.l.b16 %v4239
      %v4308 = vunpack.c.l.b16 %v4240
      %v4309 = vunpack.c.l.b16 %v4241
      %v4310 = vunpack.c.l.b16 %v4242
      %v4311 = vunpack.c.l.b16 %v4243
      %v4312 = vunpack.c.l.b16 %v4244
      %v4313 = vunpack.c.l.b16 %v4245
      %v4314 = vunpack.c.l.b16 %v4246
      %v4315 = vunpack.c.l.b16 %v4247
      %v4316 = vunpack.c.l.b16 %v4248
      %v4317 = vunpack.c.l.b16 %v4249
      %v4318 = vunpack.c.l.b16 %v4250
      %v4319 = vunpack.c.l.b16 %v4251
      %v4320 = vunpack.c.l.b16 %v4252
      %v4321 = vunpack.c.l.b16 %v4253
      %v4322 = vunpack.c.l.b16 %v4254
      %v4323 = vunpack.c.l.b16 %v4255
      %v4324 = vunpack.c.l.b16 %v4256
      %v4325 = vunpack.c.l.b16 %v4257
      %v4326 = vunpack.c.l.b16 %v4258
      %v4327 = vunpack.c.l.b16 %v4259
      %v4328 = vunpack.c.l.b16 %v4260
      %v4329 = vunpack.c.l.b16 %v4261
      %v4330 = vunpack.c.l.b16 %v4262
      %v4331 = vunpack.c.l.b16 %v4263
      %v4332 = vunpack.c.l.b16 %v4264
      %v4333 = vunpack.c.l.b16 %v4265
      %v4334 = vunpack.c.l.b16 %v4266
      %v4335 = vpack.c.b16 %v4304, %v4303
      %v4336 = vpack.c.b16 %v4306, %v4305
      %v4337 = vpack.c.b16 %v4308, %v4307
      %v4338 = vpack.c.b16 %v4310, %v4309
      %v4339 = vpack.c.b16 %v4312, %v4311
      %v4340 = vpack.c.b16 %v4314, %v4313
      %v4341 = vpack.c.b16 %v4316, %v4315
      %v4342 = vpack.c.b16 %v4318, %v4317
      %v4343 = vpack.c.b16 %v4320, %v4319
      %v4344 = vpack.c.b16 %v4322, %v4321
      %v4345 = vpack.c.b16 %v4324, %v4323
      %v4346 = vpack.c.b16 %v4326, %v4325
      %v4347 = vpack.c.b16 %v4328, %v4327
      %v4348 = vpack.c.b16 %v4330, %v4329
      %v4349 = vpack.c.b16 %v4332, %v4331
      %v4350 = vpack.c.b16 %v4334, %v4333
      %4367 = vmatpush.bf16.msra.mxu0 %v4342
      %4368 = vmatpush.bf16.msra.mxu0 %v4341
      %4369 = vmatpush.bf16.msra.mxu0 %v4340
      %4370 = vmatpush.bf16.msra.mxu0 %v4339
      %4371 = vmatpush.bf16.msra.mxu0 %v4338
      %4372 = vmatpush.bf16.msra.mxu0 %v4337
      %4373 = vmatpush.bf16.msra.mxu0 %v4336
      %4374 = vmatpush.bf16.msra.mxu0 %v4335
      %4375 = vmatmul.bf16.gmra.mxu0 %v4219
      %v4376 = vpop.f32.mrf.mxu0
      %v4377 = vadd.f32 %v4269, %v4376
      %v4378 = vpop.f32.mrf.mxu0
      %v4379 = vadd.f32 %v4269, %v4378
      %4380 = vmatmul.bf16.gmra.mxu0 %v4221
      %v4381 = vpop.f32.mrf.mxu0
      %v4382 = vadd.f32 %v4269, %v4381
      %v4383 = vpop.f32.mrf.mxu0
      %v4384 = vadd.f32 %v4269, %v4383
      %4385 = vmatmul.bf16.gmra.mxu0 %v4223
      %v4386 = vpop.f32.mrf.mxu0
      %v4387 = vadd.f32 %v4269, %v4386
      %v4388 = vpop.f32.mrf.mxu0
      %v4389 = vadd.f32 %v4269, %v4388
      %4390 = vmatmul.bf16.gmra.mxu0 %v4225
      %v4391 = vpop.f32.mrf.mxu0
      %v4392 = vadd.f32 %v4269, %v4391
      %v4393 = vpop.f32.mrf.mxu0
      %v4394 = vadd.f32 %v4269, %v4393
      %4395 = vmatmul.bf16.gmra.mxu0 %v4227
      %v4396 = vpop.f32.mrf.mxu0
      %v4397 = vadd.f32 %v4269, %v4396
      %v4398 = vpop.f32.mrf.mxu0
      %v4399 = vadd.f32 %v4269, %v4398
      %4400 = vmatmul.bf16.gmra.mxu0 %v4229
      %v4401 = vpop.f32.mrf.mxu0
      %v4402 = vadd.f32 %v4269, %v4401
      %v4403 = vpop.f32.mrf.mxu0
      %v4404 = vadd.f32 %v4269, %v4403
      %4405 = vmatmul.bf16.gmra.mxu0 %v4231
      %v4406 = vpop.f32.mrf.mxu0
      %v4407 = vadd.f32 %v4269, %v4406
      %v4408 = vpop.f32.mrf.mxu0
      %v4409 = vadd.f32 %v4269, %v4408
      %4410 = vmatmul.bf16.gmra.mxu0 %v4233
      %v4411 = vpop.f32.mrf.mxu0
      %v4412 = vadd.f32 %v4269, %v4411
      %v4413 = vpop.f32.mrf.mxu0
      %v4414 = vadd.f32 %v4269, %v4413
      %4415 = vdwg.mxu0
      %4416 = vmatpush.bf16.msra.mxu0 %v4350
      %4417 = vmatpush.bf16.msra.mxu0 %v4349
      %4418 = vmatpush.bf16.msra.mxu0 %v4348
      %4419 = vmatpush.bf16.msra.mxu0 %v4347
      %4420 = vmatpush.bf16.msra.mxu0 %v4346
      %4421 = vmatpush.bf16.msra.mxu0 %v4345
      %4422 = vmatpush.bf16.msra.mxu0 %v4344
      %4423 = vmatpush.bf16.msra.mxu0 %v4343
      %4424 = vmatmul.bf16.gmra.mxu0 %v4220
      %v4425 = vpop.f32.mrf.mxu0
      %v4426 = vadd.f32 %v4377, %v4425
      %v4427 = vpop.f32.mrf.mxu0
      %v4428 = vadd.f32 %v4379, %v4427
      %4429 = vmatmul.bf16.gmra.mxu0 %v4222
      %v4430 = vpop.f32.mrf.mxu0
      %v4431 = vadd.f32 %v4382, %v4430
      %v4432 = vpop.f32.mrf.mxu0
      %v4433 = vadd.f32 %v4384, %v4432
      %4434 = vmatmul.bf16.gmra.mxu0 %v4224
      %v4435 = vpop.f32.mrf.mxu0
      %v4436 = vadd.f32 %v4387, %v4435
      %v4437 = vpop.f32.mrf.mxu0
      %v4438 = vadd.f32 %v4389, %v4437
      %4439 = vmatmul.bf16.gmra.mxu0 %v4226
      %v4440 = vpop.f32.mrf.mxu0
      %v4441 = vadd.f32 %v4392, %v4440
      %v4442 = vpop.f32.mrf.mxu0
      %v4443 = vadd.f32 %v4394, %v4442
      %4444 = vmatmul.bf16.gmra.mxu0 %v4228
      %v4445 = vpop.f32.mrf.mxu0
      %v4446 = vadd.f32 %v4397, %v4445
      %v4447 = vpop.f32.mrf.mxu0
      %v4448 = vadd.f32 %v4399, %v4447
      %4449 = vmatmul.bf16.gmra.mxu0 %v4230
      %v4450 = vpop.f32.mrf.mxu0
      %v4451 = vadd.f32 %v4402, %v4450
      %v4452 = vpop.f32.mrf.mxu0
      %v4453 = vadd.f32 %v4404, %v4452
      %4454 = vmatmul.bf16.gmra.mxu0 %v4232
      %v4455 = vpop.f32.mrf.mxu0
      %v4456 = vadd.f32 %v4407, %v4455
      %v4457 = vpop.f32.mrf.mxu0
      %v4458 = vadd.f32 %v4409, %v4457
      %4459 = vmatmul.bf16.gmra.mxu0 %v4234
      %v4460 = vpop.f32.mrf.mxu0
      %v4461 = vadd.f32 %v4412, %v4460
      %v4462 = vpop.f32.mrf.mxu0
      %v4463 = vadd.f32 %v4414, %v4462
      %4464 = vdwg.mxu0
      %v4465 = vmax.f32 %v4426, 0.0
      %v4466 = vmax.f32 %v4428, 0.0
      %v4467 = vmax.f32 %v4431, 0.0
      %v4468 = vmax.f32 %v4433, 0.0
      %v4469 = vmax.f32 %v4436, 0.0
      %v4470 = vmax.f32 %v4438, 0.0
      %v4471 = vmax.f32 %v4441, 0.0
      %v4472 = vmax.f32 %v4443, 0.0
      %v4473 = vmax.f32 %v4446, 0.0
      %v4474 = vmax.f32 %v4448, 0.0
      %v4475 = vmax.f32 %v4451, 0.0
      %v4476 = vmax.f32 %v4453, 0.0
      %v4477 = vmax.f32 %v4456, 0.0
      %v4478 = vmax.f32 %v4458, 0.0
      %v4479 = vmax.f32 %v4461, 0.0
      %v4480 = vmax.f32 %v4463, 0.0
      %v4481 = vpack.c.bf16 %v4466, %v4465
      %v4482 = vpack.c.bf16 %v4468, %v4467
      %v4483 = vpack.c.bf16 %v4470, %v4469
      %v4484 = vpack.c.bf16 %v4472, %v4471
      %v4485 = vpack.c.bf16 %v4474, %v4473
      %v4486 = vpack.c.bf16 %v4476, %v4475
      %v4487 = vpack.c.bf16 %v4478, %v4477
      %v4488 = vpack.c.bf16 %v4480, %v4479
      %v4489 = vld [vmem:[%s7] sm:$0xf]
      %v4490 = vld [vmem:[%s7 + $0x4] sm:$0xf]
      %v4491 = vld [vmem:[%s7 + $0x8] sm:$0xf]
      %v4492 = vld [vmem:[%s7 + $0xc] sm:$0xf]
      %v4493 = vld [vmem:[%s7 + $0x10] sm:$0xf]
      %v4494 = vld [vmem:[%s7 + $0x14] sm:$0xf]
      %v4495 = vld [vmem:[%s7 + $0x18] sm:$0xf]
      %v4496 = vld [vmem:[%s7 + $0x1c] sm:$0xf]
      %v4497 = vld [vmem:[%s7 + $0x20] sm:$0xf]
      %v4498 = vld [vmem:[%s7 + $0x24] sm:$0xf]
      %v4499 = vld [vmem:[%s7 + $0x28] sm:$0xf]
      %v4500 = vld [vmem:[%s7 + $0x2c] sm:$0xf]
      %v4501 = vld [vmem:[%s7 + $0x30] sm:$0xf]
      %v4502 = vld [vmem:[%s7 + $0x34] sm:$0xf]
      %v4503 = vld [vmem:[%s7 + $0x38] sm:$0xf]
      %v4504 = vld [vmem:[%s7 + $0x3c] sm:$0xf]
      %v4505 = vld [vmem:[%s8] sm:$0x1]
      %v4507 = vperm.slane %v4505, 0
      %v4525 = vunpack.c.l.b16 %v4489
      %v4526 = vunpack.c.l.b16 %v4490
      %v4527 = vunpack.c.l.b16 %v4491
      %v4528 = vunpack.c.l.b16 %v4492
      %v4529 = vunpack.c.l.b16 %v4493
      %v4530 = vunpack.c.l.b16 %v4494
      %v4531 = vunpack.c.l.b16 %v4495
      %v4532 = vunpack.c.l.b16 %v4496
      %v4533 = vunpack.c.l.b16 %v4497
      %v4534 = vunpack.c.l.b16 %v4498
      %v4535 = vunpack.c.l.b16 %v4499
      %v4536 = vunpack.c.l.b16 %v4500
      %v4537 = vunpack.c.l.b16 %v4501
      %v4538 = vunpack.c.l.b16 %v4502
      %v4539 = vunpack.c.l.b16 %v4503
      %v4540 = vunpack.c.l.b16 %v4504
      %v4541 = vpack.c.b16 %v4526, %v4525
      %v4542 = vpack.c.b16 %v4528, %v4527
      %v4543 = vpack.c.b16 %v4530, %v4529
      %v4544 = vpack.c.b16 %v4532, %v4531
      %v4545 = vpack.c.b16 %v4534, %v4533
      %v4546 = vpack.c.b16 %v4536, %v4535
      %v4547 = vpack.c.b16 %v4538, %v4537
      %v4548 = vpack.c.b16 %v4540, %v4539
      %4557 = vmatpush.bf16.msra.mxu0 %v4548
      %4558 = vmatpush.bf16.msra.mxu0 %v4547
      %4559 = vmatpush.bf16.msra.mxu0 %v4546
      %4560 = vmatpush.bf16.msra.mxu0 %v4545
      %4561 = vmatpush.bf16.msra.mxu0 %v4544
      %4562 = vmatpush.bf16.msra.mxu0 %v4543
      %4563 = vmatpush.bf16.msra.mxu0 %v4542
      %4564 = vmatpush.bf16.msra.mxu0 %v4541
      %4565 = vmatmul.bf16.gmra.mxu0 %v4481
      %v4566 = vpop.f32.mrf.mxu0
      %v4567 = vadd.f32 %v4507, %v4566
      %v4568 = vpop.f32.mrf.mxu0
      %v4569 = vadd.f32 %v4507, %v4568
      %4570 = vmatmul.bf16.gmra.mxu0 %v4482
      %v4571 = vpop.f32.mrf.mxu0
      %v4572 = vadd.f32 %v4507, %v4571
      %v4573 = vpop.f32.mrf.mxu0
      %v4574 = vadd.f32 %v4507, %v4573
      %4575 = vmatmul.bf16.gmra.mxu0 %v4483
      %v4576 = vpop.f32.mrf.mxu0
      %v4577 = vadd.f32 %v4507, %v4576
      %v4578 = vpop.f32.mrf.mxu0
      %v4579 = vadd.f32 %v4507, %v4578
      %4580 = vmatmul.bf16.gmra.mxu0 %v4484
      %v4581 = vpop.f32.mrf.mxu0
      %v4582 = vadd.f32 %v4507, %v4581
      %v4583 = vpop.f32.mrf.mxu0
      %v4584 = vadd.f32 %v4507, %v4583
      %4585 = vmatmul.bf16.gmra.mxu0 %v4485
      %v4586 = vpop.f32.mrf.mxu0
      %v4587 = vadd.f32 %v4507, %v4586
      %v4588 = vpop.f32.mrf.mxu0
      %v4589 = vadd.f32 %v4507, %v4588
      %4590 = vmatmul.bf16.gmra.mxu0 %v4486
      %v4591 = vpop.f32.mrf.mxu0
      %v4592 = vadd.f32 %v4507, %v4591
      %v4593 = vpop.f32.mrf.mxu0
      %v4594 = vadd.f32 %v4507, %v4593
      %4595 = vmatmul.bf16.gmra.mxu0 %v4487
      %v4596 = vpop.f32.mrf.mxu0
      %v4597 = vadd.f32 %v4507, %v4596
      %v4598 = vpop.f32.mrf.mxu0
      %v4599 = vadd.f32 %v4507, %v4598
      %4600 = vmatmul.bf16.gmra.mxu0 %v4488
      %v4601 = vpop.f32.mrf.mxu0
      %v4602 = vadd.f32 %v4507, %v4601
      %v4603 = vpop.f32.mrf.mxu0
      %v4604 = vadd.f32 %v4507, %v4603
      %4605 = vdwg.mxu0
      %v4606 = vmax.f32 %v4567, 0.0
      %v4607 = vmax.f32 %v4569, 0.0
      %v4608 = vmax.f32 %v4572, 0.0
      %v4609 = vmax.f32 %v4574, 0.0
      %v4610 = vmax.f32 %v4577, 0.0
      %v4611 = vmax.f32 %v4579, 0.0
      %v4612 = vmax.f32 %v4582, 0.0
      %v4613 = vmax.f32 %v4584, 0.0
      %v4614 = vmax.f32 %v4587, 0.0
      %v4615 = vmax.f32 %v4589, 0.0
      %v4616 = vmax.f32 %v4592, 0.0
      %v4617 = vmax.f32 %v4594, 0.0
      %v4618 = vmax.f32 %v4597, 0.0
      %v4619 = vmax.f32 %v4599, 0.0
      %v4620 = vmax.f32 %v4602, 0.0
      %v4621 = vmax.f32 %v4604, 0.0
      %v4622 = vpack.c.bf16 %v4607, %v4606
      %v4623 = vpack.c.bf16 %v4609, %v4608
      %v4624 = vpack.c.bf16 %v4611, %v4610
      %v4625 = vpack.c.bf16 %v4613, %v4612
      %v4626 = vpack.c.bf16 %v4615, %v4614
      %v4627 = vpack.c.bf16 %v4617, %v4616
      %v4628 = vpack.c.bf16 %v4619, %v4618
      %v4629 = vpack.c.bf16 %v4621, %v4620
      %v4630 = vld [vmem:[%s9] sm:$0xf]
      %v4631 = vld [vmem:[%s9 + $0x4] sm:$0xf]
      %v4632 = vld [vmem:[%s9 + $0x8] sm:$0xf]
      %v4633 = vld [vmem:[%s9 + $0xc] sm:$0xf]
      %v4634 = vld [vmem:[%s9 + $0x10] sm:$0xf]
      %v4635 = vld [vmem:[%s9 + $0x14] sm:$0xf]
      %v4636 = vld [vmem:[%s9 + $0x18] sm:$0xf]
      %v4637 = vld [vmem:[%s9 + $0x1c] sm:$0xf]
      %v4638 = vld [vmem:[%s9 + $0x20] sm:$0xf]
      %v4639 = vld [vmem:[%s9 + $0x24] sm:$0xf]
      %v4640 = vld [vmem:[%s9 + $0x28] sm:$0xf]
      %v4641 = vld [vmem:[%s9 + $0x2c] sm:$0xf]
      %v4642 = vld [vmem:[%s9 + $0x30] sm:$0xf]
      %v4643 = vld [vmem:[%s9 + $0x34] sm:$0xf]
      %v4644 = vld [vmem:[%s9 + $0x38] sm:$0xf]
      %v4645 = vld [vmem:[%s9 + $0x3c] sm:$0xf]
      %v4646 = vld [vmem:[%s10] sm:$0x1]
      %v4648 = vperm.slane %v4646, 0
      %v4666 = vunpack.c.l.b16 %v4630
      %v4667 = vunpack.c.l.b16 %v4631
      %v4668 = vunpack.c.l.b16 %v4632
      %v4669 = vunpack.c.l.b16 %v4633
      %v4670 = vunpack.c.l.b16 %v4634
      %v4671 = vunpack.c.l.b16 %v4635
      %v4672 = vunpack.c.l.b16 %v4636
      %v4673 = vunpack.c.l.b16 %v4637
      %v4674 = vunpack.c.l.b16 %v4638
      %v4675 = vunpack.c.l.b16 %v4639
      %v4676 = vunpack.c.l.b16 %v4640
      %v4677 = vunpack.c.l.b16 %v4641
      %v4678 = vunpack.c.l.b16 %v4642
      %v4679 = vunpack.c.l.b16 %v4643
      %v4680 = vunpack.c.l.b16 %v4644
      %v4681 = vunpack.c.l.b16 %v4645
      %v4682 = vpack.c.b16 %v4667, %v4666
      %v4683 = vpack.c.b16 %v4669, %v4668
      %v4684 = vpack.c.b16 %v4671, %v4670
      %v4685 = vpack.c.b16 %v4673, %v4672
      %v4686 = vpack.c.b16 %v4675, %v4674
      %v4687 = vpack.c.b16 %v4677, %v4676
      %v4688 = vpack.c.b16 %v4679, %v4678
      %v4689 = vpack.c.b16 %v4681, %v4680
      %4698 = vmatpush.bf16.msra.mxu0 %v4689
      %4699 = vmatpush.bf16.msra.mxu0 %v4688
      %4700 = vmatpush.bf16.msra.mxu0 %v4687
      %4701 = vmatpush.bf16.msra.mxu0 %v4686
      %4702 = vmatpush.bf16.msra.mxu0 %v4685
      %4703 = vmatpush.bf16.msra.mxu0 %v4684
      %4704 = vmatpush.bf16.msra.mxu0 %v4683
      %4705 = vmatpush.bf16.msra.mxu0 %v4682
      %4706 = vmatmul.bf16.gmra.mxu0 %v4622
      %v4707 = vpop.f32.mrf.mxu0
      %v4708 = vadd.f32 %v4648, %v4707
      %v4709 = vpop.f32.mrf.mxu0
      %v4710 = vadd.f32 %v4648, %v4709
      %4711 = vmatmul.bf16.gmra.mxu0 %v4623
      %v4712 = vpop.f32.mrf.mxu0
      %v4713 = vadd.f32 %v4648, %v4712
      %v4714 = vpop.f32.mrf.mxu0
      %v4715 = vadd.f32 %v4648, %v4714
      %4716 = vmatmul.bf16.gmra.mxu0 %v4624
      %v4717 = vpop.f32.mrf.mxu0
      %v4718 = vadd.f32 %v4648, %v4717
      %v4719 = vpop.f32.mrf.mxu0
      %v4720 = vadd.f32 %v4648, %v4719
      %4721 = vmatmul.bf16.gmra.mxu0 %v4625
      %v4722 = vpop.f32.mrf.mxu0
      %v4723 = vadd.f32 %v4648, %v4722
      %v4724 = vpop.f32.mrf.mxu0
      %v4725 = vadd.f32 %v4648, %v4724
      %4726 = vmatmul.bf16.gmra.mxu0 %v4626
      %v4727 = vpop.f32.mrf.mxu0
      %v4728 = vadd.f32 %v4648, %v4727
      %v4729 = vpop.f32.mrf.mxu0
      %v4730 = vadd.f32 %v4648, %v4729
      %4731 = vmatmul.bf16.gmra.mxu0 %v4627
      %v4732 = vpop.f32.mrf.mxu0
      %v4733 = vadd.f32 %v4648, %v4732
      %v4734 = vpop.f32.mrf.mxu0
      %v4735 = vadd.f32 %v4648, %v4734
      %4736 = vmatmul.bf16.gmra.mxu0 %v4628
      %v4737 = vpop.f32.mrf.mxu0
      %v4738 = vadd.f32 %v4648, %v4737
      %v4739 = vpop.f32.mrf.mxu0
      %v4740 = vadd.f32 %v4648, %v4739
      %4741 = vmatmul.bf16.gmra.mxu0 %v4629
      %v4742 = vpop.f32.mrf.mxu0
      %v4743 = vadd.f32 %v4648, %v4742
      %v4744 = vpop.f32.mrf.mxu0
      %v4745 = vadd.f32 %v4648, %v4744
      %4746 = vdwg.mxu0
      %v4747 = vmax.f32 %v4708, 0.0
      %v4748 = vmax.f32 %v4710, 0.0
      %v4749 = vmax.f32 %v4713, 0.0
      %v4750 = vmax.f32 %v4715, 0.0
      %v4751 = vmax.f32 %v4718, 0.0
      %v4752 = vmax.f32 %v4720, 0.0
      %v4753 = vmax.f32 %v4723, 0.0
      %v4754 = vmax.f32 %v4725, 0.0
      %v4755 = vmax.f32 %v4728, 0.0
      %v4756 = vmax.f32 %v4730, 0.0
      %v4757 = vmax.f32 %v4733, 0.0
      %v4758 = vmax.f32 %v4735, 0.0
      %v4759 = vmax.f32 %v4738, 0.0
      %v4760 = vmax.f32 %v4740, 0.0
      %v4761 = vmax.f32 %v4743, 0.0
      %v4762 = vmax.f32 %v4745, 0.0
      %v4763 = vpack.c.bf16 %v4748, %v4747
      %v4764 = vpack.c.bf16 %v4750, %v4749
      %v4765 = vpack.c.bf16 %v4752, %v4751
      %v4766 = vpack.c.bf16 %v4754, %v4753
      %v4767 = vpack.c.bf16 %v4756, %v4755
      %v4768 = vpack.c.bf16 %v4758, %v4757
      %v4769 = vpack.c.bf16 %v4760, %v4759
      %v4770 = vpack.c.bf16 %v4762, %v4761
      %v4771 = vld [vmem:[%s11] sm:$0xff]
      %v4772 = vld [vmem:[%s11 + $0x8] sm:$0xff]
      %v4773 = vld [vmem:[%s11 + $0x10] sm:$0xff]
      %v4774 = vld [vmem:[%s11 + $0x18] sm:$0xff]
      %v4775 = vld [vmem:[%s11 + $0x20] sm:$0xff]
      %v4776 = vld [vmem:[%s11 + $0x28] sm:$0xff]
      %v4777 = vld [vmem:[%s11 + $0x30] sm:$0xff]
      %v4778 = vld [vmem:[%s11 + $0x38] sm:$0xff]
      %v4779 = vld [vmem:[%s11 + $0x40] sm:$0xff]
      %v4780 = vld [vmem:[%s11 + $0x48] sm:$0xff]
      %v4781 = vld [vmem:[%s11 + $0x50] sm:$0xff]
      %v4782 = vld [vmem:[%s11 + $0x58] sm:$0xff]
      %v4783 = vld [vmem:[%s11 + $0x60] sm:$0xff]
      %v4784 = vld [vmem:[%s11 + $0x68] sm:$0xff]
      %v4785 = vld [vmem:[%s11 + $0x70] sm:$0xff]
      %v4786 = vld [vmem:[%s11 + $0x78] sm:$0xff]
      %v4787 = vld [vmem:[%s12] sm:$0x3]
      %v4789 = vperm.slane %v4787, 0
      %v4790 = vperm.slane %v4787, 1
      %v4809 = vunpack.c.l.b16 %v4771
      %v4810 = vunpack.c.h.b16 %v4771
      %v4811 = vunpack.c.l.b16 %v4772
      %v4812 = vunpack.c.h.b16 %v4772
      %v4813 = vunpack.c.l.b16 %v4773
      %v4814 = vunpack.c.h.b16 %v4773
      %v4815 = vunpack.c.l.b16 %v4774
      %v4816 = vunpack.c.h.b16 %v4774
      %v4817 = vunpack.c.l.b16 %v4775
      %v4818 = vunpack.c.h.b16 %v4775
      %v4819 = vunpack.c.l.b16 %v4776
      %v4820 = vunpack.c.h.b16 %v4776
      %v4821 = vunpack.c.l.b16 %v4777
      %v4822 = vunpack.c.h.b16 %v4777
      %v4823 = vunpack.c.l.b16 %v4778
      %v4824 = vunpack.c.h.b16 %v4778
      %v4825 = vunpack.c.l.b16 %v4779
      %v4826 = vunpack.c.h.b16 %v4779
      %v4827 = vunpack.c.l.b16 %v4780
      %v4828 = vunpack.c.h.b16 %v4780
      %v4829 = vunpack.c.l.b16 %v4781
      %v4830 = vunpack.c.h.b16 %v4781
      %v4831 = vunpack.c.l.b16 %v4782
      %v4832 = vunpack.c.h.b16 %v4782
      %v4833 = vunpack.c.l.b16 %v4783
      %v4834 = vunpack.c.h.b16 %v4783
      %v4835 = vunpack.c.l.b16 %v4784
      %v4836 = vunpack.c.h.b16 %v4784
      %v4837 = vunpack.c.l.b16 %v4785
      %v4838 = vunpack.c.h.b16 %v4785
      %v4839 = vunpack.c.l.b16 %v4786
      %v4840 = vunpack.c.h.b16 %v4786
      %v4841 = vpack.c.b16 %v4811, %v4809
      %v4842 = vpack.c.b16 %v4812, %v4810
      %v4843 = vpack.c.b16 %v4815, %v4813
      %v4844 = vpack.c.b16 %v4816, %v4814
      %v4845 = vpack.c.b16 %v4819, %v4817
      %v4846 = vpack.c.b16 %v4820, %v4818
      %v4847 = vpack.c.b16 %v4823, %v4821
      %v4848 = vpack.c.b16 %v4824, %v4822
      %v4849 = vpack.c.b16 %v4827, %v4825
      %v4850 = vpack.c.b16 %v4828, %v4826
      %v4851 = vpack.c.b16 %v4831, %v4829
      %v4852 = vpack.c.b16 %v4832, %v4830
      %v4853 = vpack.c.b16 %v4835, %v4833
      %v4854 = vpack.c.b16 %v4836, %v4834
      %v4855 = vpack.c.b16 %v4839, %v4837
      %v4856 = vpack.c.b16 %v4840, %v4838
      %4873 = vmatpush.bf16.msra.mxu0 %v4855
      %4874 = vmatpush.bf16.msra.mxu0 %v4853
      %4875 = vmatpush.bf16.msra.mxu0 %v4851
      %4876 = vmatpush.bf16.msra.mxu0 %v4849
      %4877 = vmatpush.bf16.msra.mxu0 %v4847
      %4878 = vmatpush.bf16.msra.mxu0 %v4845
      %4879 = vmatpush.bf16.msra.mxu0 %v4843
      %4880 = vmatpush.bf16.msra.mxu0 %v4841
      %4881 = vmatmul.bf16.gmra.mxu0 %v4763
      %v4882 = vpop.f32.mrf.mxu0
      %v4883 = vadd.f32 %v4789, %v4882
      %v4884 = vpop.f32.mrf.mxu0
      %v4885 = vadd.f32 %v4789, %v4884
      %4886 = vmatmul.bf16.gmra.mxu0 %v4764
      %v4887 = vpop.f32.mrf.mxu0
      %v4888 = vadd.f32 %v4789, %v4887
      %v4889 = vpop.f32.mrf.mxu0
      %v4890 = vadd.f32 %v4789, %v4889
      %4891 = vmatmul.bf16.gmra.mxu0 %v4765
      %v4892 = vpop.f32.mrf.mxu0
      %v4893 = vadd.f32 %v4789, %v4892
      %v4894 = vpop.f32.mrf.mxu0
      %v4895 = vadd.f32 %v4789, %v4894
      %4896 = vmatmul.bf16.gmra.mxu0 %v4766
      %v4897 = vpop.f32.mrf.mxu0
      %v4898 = vadd.f32 %v4789, %v4897
      %v4899 = vpop.f32.mrf.mxu0
      %v4900 = vadd.f32 %v4789, %v4899
      %4901 = vmatmul.bf16.gmra.mxu0 %v4767
      %v4902 = vpop.f32.mrf.mxu0
      %v4903 = vadd.f32 %v4789, %v4902
      %v4904 = vpop.f32.mrf.mxu0
      %v4905 = vadd.f32 %v4789, %v4904
      %4906 = vmatmul.bf16.gmra.mxu0 %v4768
      %v4907 = vpop.f32.mrf.mxu0
      %v4908 = vadd.f32 %v4789, %v4907
      %v4909 = vpop.f32.mrf.mxu0
      %v4910 = vadd.f32 %v4789, %v4909
      %4911 = vmatmul.bf16.gmra.mxu0 %v4769
      %v4912 = vpop.f32.mrf.mxu0
      %v4913 = vadd.f32 %v4789, %v4912
      %v4914 = vpop.f32.mrf.mxu0
      %v4915 = vadd.f32 %v4789, %v4914
      %4916 = vmatmul.bf16.gmra.mxu0 %v4770
      %v4917 = vpop.f32.mrf.mxu0
      %v4918 = vadd.f32 %v4789, %v4917
      %v4919 = vpop.f32.mrf.mxu0
      %v4920 = vadd.f32 %v4789, %v4919
      %4921 = vdwg.mxu0
      %4922 = vmatpush.bf16.msra.mxu0 %v4856
      %4923 = vmatpush.bf16.msra.mxu0 %v4854
      %4924 = vmatpush.bf16.msra.mxu0 %v4852
      %4925 = vmatpush.bf16.msra.mxu0 %v4850
      %4926 = vmatpush.bf16.msra.mxu0 %v4848
      %4927 = vmatpush.bf16.msra.mxu0 %v4846
      %4928 = vmatpush.bf16.msra.mxu0 %v4844
      %4929 = vmatpush.bf16.msra.mxu0 %v4842
      %4930 = vmatmul.bf16.gmra.mxu0 %v4763
      %v4931 = vpop.f32.mrf.mxu0
      %v4932 = vadd.f32 %v4790, %v4931
      %v4933 = vpop.f32.mrf.mxu0
      %v4934 = vadd.f32 %v4790, %v4933
      %4935 = vmatmul.bf16.gmra.mxu0 %v4764
      %v4936 = vpop.f32.mrf.mxu0
      %v4937 = vadd.f32 %v4790, %v4936
      %v4938 = vpop.f32.mrf.mxu0
      %v4939 = vadd.f32 %v4790, %v4938
      %4940 = vmatmul.bf16.gmra.mxu0 %v4765
      %v4941 = vpop.f32.mrf.mxu0
      %v4942 = vadd.f32 %v4790, %v4941
      %v4943 = vpop.f32.mrf.mxu0
      %v4944 = vadd.f32 %v4790, %v4943
      %4945 = vmatmul.bf16.gmra.mxu0 %v4766
      %v4946 = vpop.f32.mrf.mxu0
      %v4947 = vadd.f32 %v4790, %v4946
      %v4948 = vpop.f32.mrf.mxu0
      %v4949 = vadd.f32 %v4790, %v4948
      %4950 = vmatmul.bf16.gmra.mxu0 %v4767
      %v4951 = vpop.f32.mrf.mxu0
      %v4952 = vadd.f32 %v4790, %v4951
      %v4953 = vpop.f32.mrf.mxu0
      %v4954 = vadd.f32 %v4790, %v4953
      %4955 = vmatmul.bf16.gmra.mxu0 %v4768
      %v4956 = vpop.f32.mrf.mxu0
      %v4957 = vadd.f32 %v4790, %v4956
      %v4958 = vpop.f32.mrf.mxu0
      %v4959 = vadd.f32 %v4790, %v4958
      %4960 = vmatmul.bf16.gmra.mxu0 %v4769
      %v4961 = vpop.f32.mrf.mxu0
      %v4962 = vadd.f32 %v4790, %v4961
      %v4963 = vpop.f32.mrf.mxu0
      %v4964 = vadd.f32 %v4790, %v4963
      %4965 = vmatmul.bf16.gmra.mxu0 %v4770
      %v4966 = vpop.f32.mrf.mxu0
      %v4967 = vadd.f32 %v4790, %v4966
      %v4968 = vpop.f32.mrf.mxu0
      %v4969 = vadd.f32 %v4790, %v4968
      %4970 = vdwg.mxu0
      %v4971 = vmax.f32 %v4883, 0.0
      %v4972 = vmax.f32 %v4932, 0.0
      %v4973 = vmax.f32 %v4885, 0.0
      %v4974 = vmax.f32 %v4934, 0.0
      %v4975 = vmax.f32 %v4888, 0.0
      %v4976 = vmax.f32 %v4937, 0.0
      %v4977 = vmax.f32 %v4890, 0.0
      %v4978 = vmax.f32 %v4939, 0.0
      %v4979 = vmax.f32 %v4893, 0.0
      %v4980 = vmax.f32 %v4942, 0.0
      %v4981 = vmax.f32 %v4895, 0.0
      %v4982 = vmax.f32 %v4944, 0.0
      %v4983 = vmax.f32 %v4898, 0.0
      %v4984 = vmax.f32 %v4947, 0.0
      %v4985 = vmax.f32 %v4900, 0.0
      %v4986 = vmax.f32 %v4949, 0.0
      %v4987 = vmax.f32 %v4903, 0.0
      %v4988 = vmax.f32 %v4952, 0.0
      %v4989 = vmax.f32 %v4905, 0.0
      %v4990 = vmax.f32 %v4954, 0.0
      %v4991 = vmax.f32 %v4908, 0.0
      %v4992 = vmax.f32 %v4957, 0.0
      %v4993 = vmax.f32 %v4910, 0.0
      %v4994 = vmax.f32 %v4959, 0.0
      %v4995 = vmax.f32 %v4913, 0.0
      %v4996 = vmax.f32 %v4962, 0.0
      %v4997 = vmax.f32 %v4915, 0.0
      %v4998 = vmax.f32 %v4964, 0.0
      %v4999 = vmax.f32 %v4918, 0.0
      %v5000 = vmax.f32 %v4967, 0.0
      %v5001 = vmax.f32 %v4920, 0.0
      %v5002 = vmax.f32 %v4969, 0.0
      %v5003 = vpack.c.bf16 %v4973, %v4971
      %v5004 = vpack.c.bf16 %v4974, %v4972
      %v5005 = vpack.c.bf16 %v4977, %v4975
      %v5006 = vpack.c.bf16 %v4978, %v4976
      %v5007 = vpack.c.bf16 %v4981, %v4979
      %v5008 = vpack.c.bf16 %v4982, %v4980
      %v5009 = vpack.c.bf16 %v4985, %v4983
      %v5010 = vpack.c.bf16 %v4986, %v4984
      %v5011 = vpack.c.bf16 %v4989, %v4987
      %v5012 = vpack.c.bf16 %v4990, %v4988
      %v5013 = vpack.c.bf16 %v4993, %v4991
      %v5014 = vpack.c.bf16 %v4994, %v4992
      %v5015 = vpack.c.bf16 %v4997, %v4995
      %v5016 = vpack.c.bf16 %v4998, %v4996
      %v5017 = vpack.c.bf16 %v5001, %v4999
      %v5018 = vpack.c.bf16 %v5002, %v5000
      %v5019 = vld [vmem:[%s13] sm:$0xff]
      %v5020 = vld [vmem:[%s13 + $0x8] sm:$0xff]
      %v5021 = vld [vmem:[%s13 + $0x10] sm:$0xff]
      %v5022 = vld [vmem:[%s13 + $0x18] sm:$0xff]
      %v5023 = vld [vmem:[%s13 + $0x20] sm:$0xff]
      %v5024 = vld [vmem:[%s13 + $0x28] sm:$0xff]
      %v5025 = vld [vmem:[%s13 + $0x30] sm:$0xff]
      %v5026 = vld [vmem:[%s13 + $0x38] sm:$0xff]
      %v5027 = vld [vmem:[%s13 + $0x40] sm:$0xff]
      %v5028 = vld [vmem:[%s13 + $0x48] sm:$0xff]
      %v5029 = vld [vmem:[%s13 + $0x50] sm:$0xff]
      %v5030 = vld [vmem:[%s13 + $0x58] sm:$0xff]
      %v5031 = vld [vmem:[%s13 + $0x60] sm:$0xff]
      %v5032 = vld [vmem:[%s13 + $0x68] sm:$0xff]
      %v5033 = vld [vmem:[%s13 + $0x70] sm:$0xff]
      %v5034 = vld [vmem:[%s13 + $0x78] sm:$0xff]
      %v5035 = vld [vmem:[%s13 + $0x80] sm:$0xff]
      %v5036 = vld [vmem:[%s13 + $0x88] sm:$0xff]
      %v5037 = vld [vmem:[%s13 + $0x90] sm:$0xff]
      %v5038 = vld [vmem:[%s13 + $0x98] sm:$0xff]
      %v5039 = vld [vmem:[%s13 + $0xa0] sm:$0xff]
      %v5040 = vld [vmem:[%s13 + $0xa8] sm:$0xff]
      %v5041 = vld [vmem:[%s13 + $0xb0] sm:$0xff]
      %v5042 = vld [vmem:[%s13 + $0xb8] sm:$0xff]
      %v5043 = vld [vmem:[%s13 + $0xc0] sm:$0xff]
      %v5044 = vld [vmem:[%s13 + $0xc8] sm:$0xff]
      %v5045 = vld [vmem:[%s13 + $0xd0] sm:$0xff]
      %v5046 = vld [vmem:[%s13 + $0xd8] sm:$0xff]
      %v5047 = vld [vmem:[%s13 + $0xe0] sm:$0xff]
      %v5048 = vld [vmem:[%s13 + $0xe8] sm:$0xff]
      %v5049 = vld [vmem:[%s13 + $0xf0] sm:$0xff]
      %v5050 = vld [vmem:[%s13 + $0xf8] sm:$0xff]
      %v5051 = vld [vmem:[%s13 + $0x100] sm:$0xff]
      %v5052 = vld [vmem:[%s13 + $0x108] sm:$0xff]
      %v5053 = vld [vmem:[%s13 + $0x110] sm:$0xff]
      %v5054 = vld [vmem:[%s13 + $0x118] sm:$0xff]
      %v5055 = vld [vmem:[%s13 + $0x120] sm:$0xff]
      %v5056 = vld [vmem:[%s13 + $0x128] sm:$0xff]
      %v5057 = vld [vmem:[%s13 + $0x130] sm:$0xff]
      %v5058 = vld [vmem:[%s13 + $0x138] sm:$0xff]
      %v5059 = vld [vmem:[%s13 + $0x140] sm:$0xff]
      %v5060 = vld [vmem:[%s13 + $0x148] sm:$0xff]
      %v5061 = vld [vmem:[%s13 + $0x150] sm:$0xff]
      %v5062 = vld [vmem:[%s13 + $0x158] sm:$0xff]
      %v5063 = vld [vmem:[%s13 + $0x160] sm:$0xff]
      %v5064 = vld [vmem:[%s13 + $0x168] sm:$0xff]
      %v5065 = vld [vmem:[%s13 + $0x170] sm:$0xff]
      %v5066 = vld [vmem:[%s13 + $0x178] sm:$0xff]
      %v5067 = vld [vmem:[%s13 + $0x180] sm:$0xff]
      %v5068 = vld [vmem:[%s13 + $0x188] sm:$0xff]
      %v5069 = vld [vmem:[%s13 + $0x190] sm:$0xff]
      %v5070 = vld [vmem:[%s13 + $0x198] sm:$0xff]
      %v5071 = vld [vmem:[%s13 + $0x1a0] sm:$0xff]
      %v5072 = vld [vmem:[%s13 + $0x1a8] sm:$0xff]
      %v5073 = vld [vmem:[%s13 + $0x1b0] sm:$0xff]
      %v5074 = vld [vmem:[%s13 + $0x1b8] sm:$0xff]
      %v5075 = vld [vmem:[%s13 + $0x1c0] sm:$0xff]
      %v5076 = vld [vmem:[%s13 + $0x1c8] sm:$0xff]
      %v5077 = vld [vmem:[%s13 + $0x1d0] sm:$0xff]
      %v5078 = vld [vmem:[%s13 + $0x1d8] sm:$0xff]
      %v5079 = vld [vmem:[%s13 + $0x1e0] sm:$0xff]
      %v5080 = vld [vmem:[%s13 + $0x1e8] sm:$0xff]
      %v5081 = vld [vmem:[%s13 + $0x1f0] sm:$0xff]
      %v5082 = vld [vmem:[%s13 + $0x1f8] sm:$0xff]
      %v5083 = vld [vmem:[%s14] sm:$0xf]
      %v5085 = vperm.slane %v5083, 0
      %v5086 = vperm.slane %v5083, 1
      %v5087 = vperm.slane %v5083, 2
      %v5088 = vperm.slane %v5083, 3
      %v5157 = vunpack.c.l.b16 %v5019
      %v5158 = vunpack.c.h.b16 %v5019
      %v5159 = vunpack.c.l.b16 %v5020
      %v5160 = vunpack.c.h.b16 %v5020
      %v5161 = vunpack.c.l.b16 %v5021
      %v5162 = vunpack.c.h.b16 %v5021
      %v5163 = vunpack.c.l.b16 %v5022
      %v5164 = vunpack.c.h.b16 %v5022
      %v5165 = vunpack.c.l.b16 %v5023
      %v5166 = vunpack.c.h.b16 %v5023
      %v5167 = vunpack.c.l.b16 %v5024
      %v5168 = vunpack.c.h.b16 %v5024
      %v5169 = vunpack.c.l.b16 %v5025
      %v5170 = vunpack.c.h.b16 %v5025
      %v5171 = vunpack.c.l.b16 %v5026
      %v5172 = vunpack.c.h.b16 %v5026
      %v5173 = vunpack.c.l.b16 %v5027
      %v5174 = vunpack.c.h.b16 %v5027
      %v5175 = vunpack.c.l.b16 %v5028
      %v5176 = vunpack.c.h.b16 %v5028
      %v5177 = vunpack.c.l.b16 %v5029
      %v5178 = vunpack.c.h.b16 %v5029
      %v5179 = vunpack.c.l.b16 %v5030
      %v5180 = vunpack.c.h.b16 %v5030
      %v5181 = vunpack.c.l.b16 %v5031
      %v5182 = vunpack.c.h.b16 %v5031
      %v5183 = vunpack.c.l.b16 %v5032
      %v5184 = vunpack.c.h.b16 %v5032
      %v5185 = vunpack.c.l.b16 %v5033
      %v5186 = vunpack.c.h.b16 %v5033
      %v5187 = vunpack.c.l.b16 %v5034
      %v5188 = vunpack.c.h.b16 %v5034
      %v5189 = vunpack.c.l.b16 %v5035
      %v5190 = vunpack.c.h.b16 %v5035
      %v5191 = vunpack.c.l.b16 %v5036
      %v5192 = vunpack.c.h.b16 %v5036
      %v5193 = vunpack.c.l.b16 %v5037
      %v5194 = vunpack.c.h.b16 %v5037
      %v5195 = vunpack.c.l.b16 %v5038
      %v5196 = vunpack.c.h.b16 %v5038
      %v5197 = vunpack.c.l.b16 %v5039
      %v5198 = vunpack.c.h.b16 %v5039
      %v5199 = vunpack.c.l.b16 %v5040
      %v5200 = vunpack.c.h.b16 %v5040
      %v5201 = vunpack.c.l.b16 %v5041
      %v5202 = vunpack.c.h.b16 %v5041
      %v5203 = vunpack.c.l.b16 %v5042
      %v5204 = vunpack.c.h.b16 %v5042
      %v5205 = vunpack.c.l.b16 %v5043
      %v5206 = vunpack.c.h.b16 %v5043
      %v5207 = vunpack.c.l.b16 %v5044
      %v5208 = vunpack.c.h.b16 %v5044
      %v5209 = vunpack.c.l.b16 %v5045
      %v5210 = vunpack.c.h.b16 %v5045
      %v5211 = vunpack.c.l.b16 %v5046
      %v5212 = vunpack.c.h.b16 %v5046
      %v5213 = vunpack.c.l.b16 %v5047
      %v5214 = vunpack.c.h.b16 %v5047
      %v5215 = vunpack.c.l.b16 %v5048
      %v5216 = vunpack.c.h.b16 %v5048
      %v5217 = vunpack.c.l.b16 %v5049
      %v5218 = vunpack.c.h.b16 %v5049
      %v5219 = vunpack.c.l.b16 %v5050
      %v5220 = vunpack.c.h.b16 %v5050
      %v5221 = vunpack.c.l.b16 %v5051
      %v5222 = vunpack.c.h.b16 %v5051
      %v5223 = vunpack.c.l.b16 %v5052
      %v5224 = vunpack.c.h.b16 %v5052
      %v5225 = vunpack.c.l.b16 %v5053
      %v5226 = vunpack.c.h.b16 %v5053
      %v5227 = vunpack.c.l.b16 %v5054
      %v5228 = vunpack.c.h.b16 %v5054
      %v5229 = vunpack.c.l.b16 %v5055
      %v5230 = vunpack.c.h.b16 %v5055
      %v5231 = vunpack.c.l.b16 %v5056
      %v5232 = vunpack.c.h.b16 %v5056
      %v5233 = vunpack.c.l.b16 %v5057
      %v5234 = vunpack.c.h.b16 %v5057
      %v5235 = vunpack.c.l.b16 %v5058
      %v5236 = vunpack.c.h.b16 %v5058
      %v5237 = vunpack.c.l.b16 %v5059
      %v5238 = vunpack.c.h.b16 %v5059
      %v5239 = vunpack.c.l.b16 %v5060
      %v5240 = vunpack.c.h.b16 %v5060
      %v5241 = vunpack.c.l.b16 %v5061
      %v5242 = vunpack.c.h.b16 %v5061
      %v5243 = vunpack.c.l.b16 %v5062
      %v5244 = vunpack.c.h.b16 %v5062
      %v5245 = vunpack.c.l.b16 %v5063
      %v5246 = vunpack.c.h.b16 %v5063
      %v5247 = vunpack.c.l.b16 %v5064
      %v5248 = vunpack.c.h.b16 %v5064
      %v5249 = vunpack.c.l.b16 %v5065
      %v5250 = vunpack.c.h.b16 %v5065
      %v5251 = vunpack.c.l.b16 %v5066
      %v5252 = vunpack.c.h.b16 %v5066
      %v5253 = vunpack.c.l.b16 %v5067
      %v5254 = vunpack.c.h.b16 %v5067
      %v5255 = vunpack.c.l.b16 %v5068
      %v5256 = vunpack.c.h.b16 %v5068
      %v5257 = vunpack.c.l.b16 %v5069
      %v5258 = vunpack.c.h.b16 %v5069
      %v5259 = vunpack.c.l.b16 %v5070
      %v5260 = vunpack.c.h.b16 %v5070
      %v5261 = vunpack.c.l.b16 %v5071
      %v5262 = vunpack.c.h.b16 %v5071
      %v5263 = vunpack.c.l.b16 %v5072
      %v5264 = vunpack.c.h.b16 %v5072
      %v5265 = vunpack.c.l.b16 %v5073
      %v5266 = vunpack.c.h.b16 %v5073
      %v5267 = vunpack.c.l.b16 %v5074
      %v5268 = vunpack.c.h.b16 %v5074
      %v5269 = vunpack.c.l.b16 %v5075
      %v5270 = vunpack.c.h.b16 %v5075
      %v5271 = vunpack.c.l.b16 %v5076
      %v5272 = vunpack.c.h.b16 %v5076
      %v5273 = vunpack.c.l.b16 %v5077
      %v5274 = vunpack.c.h.b16 %v5077
      %v5275 = vunpack.c.l.b16 %v5078
      %v5276 = vunpack.c.h.b16 %v5078
      %v5277 = vunpack.c.l.b16 %v5079
      %v5278 = vunpack.c.h.b16 %v5079
      %v5279 = vunpack.c.l.b16 %v5080
      %v5280 = vunpack.c.h.b16 %v5080
      %v5281 = vunpack.c.l.b16 %v5081
      %v5282 = vunpack.c.h.b16 %v5081
      %v5283 = vunpack.c.l.b16 %v5082
      %v5284 = vunpack.c.h.b16 %v5082
      %v5285 = vpack.c.b16 %v5161, %v5157
      %v5286 = vpack.c.b16 %v5162, %v5158
      %v5287 = vpack.c.b16 %v5163, %v5159
      %v5288 = vpack.c.b16 %v5164, %v5160
      %v5289 = vpack.c.b16 %v5169, %v5165
      %v5290 = vpack.c.b16 %v5170, %v5166
      %v5291 = vpack.c.b16 %v5171, %v5167
      %v5292 = vpack.c.b16 %v5172, %v5168
      %v5293 = vpack.c.b16 %v5177, %v5173
      %v5294 = vpack.c.b16 %v5178, %v5174
      %v5295 = vpack.c.b16 %v5179, %v5175
      %v5296 = vpack.c.b16 %v5180, %v5176
      %v5297 = vpack.c.b16 %v5185, %v5181
      %v5298 = vpack.c.b16 %v5186, %v5182
      %v5299 = vpack.c.b16 %v5187, %v5183
      %v5300 = vpack.c.b16 %v5188, %v5184
      %v5301 = vpack.c.b16 %v5193, %v5189
      %v5302 = vpack.c.b16 %v5194, %v5190
      %v5303 = vpack.c.b16 %v5195, %v5191
      %v5304 = vpack.c.b16 %v5196, %v5192
      %v5305 = vpack.c.b16 %v5201, %v5197
      %v5306 = vpack.c.b16 %v5202, %v5198
      %v5307 = vpack.c.b16 %v5203, %v5199
      %v5308 = vpack.c.b16 %v5204, %v5200
      %v5309 = vpack.c.b16 %v5209, %v5205
      %v5310 = vpack.c.b16 %v5210, %v5206
      %v5311 = vpack.c.b16 %v5211, %v5207
      %v5312 = vpack.c.b16 %v5212, %v5208
      %v5313 = vpack.c.b16 %v5217, %v5213
      %v5314 = vpack.c.b16 %v5218, %v5214
      %v5315 = vpack.c.b16 %v5219, %v5215
      %v5316 = vpack.c.b16 %v5220, %v5216
      %v5317 = vpack.c.b16 %v5225, %v5221
      %v5318 = vpack.c.b16 %v5226, %v5222
      %v5319 = vpack.c.b16 %v5227, %v5223
      %v5320 = vpack.c.b16 %v5228, %v5224
      %v5321 = vpack.c.b16 %v5233, %v5229
      %v5322 = vpack.c.b16 %v5234, %v5230
      %v5323 = vpack.c.b16 %v5235, %v5231
      %v5324 = vpack.c.b16 %v5236, %v5232
      %v5325 = vpack.c.b16 %v5241, %v5237
      %v5326 = vpack.c.b16 %v5242, %v5238
      %v5327 = vpack.c.b16 %v5243, %v5239
      %v5328 = vpack.c.b16 %v5244, %v5240
      %v5329 = vpack.c.b16 %v5249, %v5245
      %v5330 = vpack.c.b16 %v5250, %v5246
      %v5331 = vpack.c.b16 %v5251, %v5247
      %v5332 = vpack.c.b16 %v5252, %v5248
      %v5333 = vpack.c.b16 %v5257, %v5253
      %v5334 = vpack.c.b16 %v5258, %v5254
      %v5335 = vpack.c.b16 %v5259, %v5255
      %v5336 = vpack.c.b16 %v5260, %v5256
      %v5337 = vpack.c.b16 %v5265, %v5261
      %v5338 = vpack.c.b16 %v5266, %v5262
      %v5339 = vpack.c.b16 %v5267, %v5263
      %v5340 = vpack.c.b16 %v5268, %v5264
      %v5341 = vpack.c.b16 %v5273, %v5269
      %v5342 = vpack.c.b16 %v5274, %v5270
      %v5343 = vpack.c.b16 %v5275, %v5271
      %v5344 = vpack.c.b16 %v5276, %v5272
      %v5345 = vpack.c.b16 %v5281, %v5277
      %v5346 = vpack.c.b16 %v5282, %v5278
      %v5347 = vpack.c.b16 %v5283, %v5279
      %v5348 = vpack.c.b16 %v5284, %v5280
      %5413 = vmatpush.bf16.msra.mxu0 %v5313
      %5414 = vmatpush.bf16.msra.mxu0 %v5309
      %5415 = vmatpush.bf16.msra.mxu0 %v5305
      %5416 = vmatpush.bf16.msra.mxu0 %v5301
      %5417 = vmatpush.bf16.msra.mxu0 %v5297
      %5418 = vmatpush.bf16.msra.mxu0 %v5293
      %5419 = vmatpush.bf16.msra.mxu0 %v5289
      %5420 = vmatpush.bf16.msra.mxu0 %v5285
      %5421 = vmatmul.bf16.gmra.mxu0 %v5003
      %v5422 = vpop.f32.mrf.mxu0
      %v5423 = vadd.f32 %v5085, %v5422
      %v5424 = vpop.f32.mrf.mxu0
      %v5425 = vadd.f32 %v5085, %v5424
      %5426 = vmatmul.bf16.gmra.mxu0 %v5005
      %v5427 = vpop.f32.mrf.mxu0
      %v5428 = vadd.f32 %v5085, %v5427
      %v5429 = vpop.f32.mrf.mxu0
      %v5430 = vadd.f32 %v5085, %v5429
      %5431 = vmatmul.bf16.gmra.mxu0 %v5007
      %v5432 = vpop.f32.mrf.mxu0
      %v5433 = vadd.f32 %v5085, %v5432
      %v5434 = vpop.f32.mrf.mxu0
      %v5435 = vadd.f32 %v5085, %v5434
      %5436 = vmatmul.bf16.gmra.mxu0 %v5009
      %v5437 = vpop.f32.mrf.mxu0
      %v5438 = vadd.f32 %v5085, %v5437
      %v5439 = vpop.f32.mrf.mxu0
      %v5440 = vadd.f32 %v5085, %v5439
      %5441 = vmatmul.bf16.gmra.mxu0 %v5011
      %v5442 = vpop.f32.mrf.mxu0
      %v5443 = vadd.f32 %v5085, %v5442
      %v5444 = vpop.f32.mrf.mxu0
      %v5445 = vadd.f32 %v5085, %v5444
      %5446 = vmatmul.bf16.gmra.mxu0 %v5013
      %v5447 = vpop.f32.mrf.mxu0
      %v5448 = vadd.f32 %v5085, %v5447
      %v5449 = vpop.f32.mrf.mxu0
      %v5450 = vadd.f32 %v5085, %v5449
      %5451 = vmatmul.bf16.gmra.mxu0 %v5015
      %v5452 = vpop.f32.mrf.mxu0
      %v5453 = vadd.f32 %v5085, %v5452
      %v5454 = vpop.f32.mrf.mxu0
      %v5455 = vadd.f32 %v5085, %v5454
      %5456 = vmatmul.bf16.gmra.mxu0 %v5017
      %v5457 = vpop.f32.mrf.mxu0
      %v5458 = vadd.f32 %v5085, %v5457
      %v5459 = vpop.f32.mrf.mxu0
      %v5460 = vadd.f32 %v5085, %v5459
      %5461 = vdwg.mxu0
      %5462 = vmatpush.bf16.msra.mxu0 %v5345
      %5463 = vmatpush.bf16.msra.mxu0 %v5341
      %5464 = vmatpush.bf16.msra.mxu0 %v5337
      %5465 = vmatpush.bf16.msra.mxu0 %v5333
      %5466 = vmatpush.bf16.msra.mxu0 %v5329
      %5467 = vmatpush.bf16.msra.mxu0 %v5325
      %5468 = vmatpush.bf16.msra.mxu0 %v5321
      %5469 = vmatpush.bf16.msra.mxu0 %v5317
      %5470 = vmatmul.bf16.gmra.mxu0 %v5004
      %v5471 = vpop.f32.mrf.mxu0
      %v5472 = vadd.f32 %v5423, %v5471
      %v5473 = vpop.f32.mrf.mxu0
      %v5474 = vadd.f32 %v5425, %v5473
      %5475 = vmatmul.bf16.gmra.mxu0 %v5006
      %v5476 = vpop.f32.mrf.mxu0
      %v5477 = vadd.f32 %v5428, %v5476
      %v5478 = vpop.f32.mrf.mxu0
      %v5479 = vadd.f32 %v5430, %v5478
      %5480 = vmatmul.bf16.gmra.mxu0 %v5008
      %v5481 = vpop.f32.mrf.mxu0
      %v5482 = vadd.f32 %v5433, %v5481
      %v5483 = vpop.f32.mrf.mxu0
      %v5484 = vadd.f32 %v5435, %v5483
      %5485 = vmatmul.bf16.gmra.mxu0 %v5010
      %v5486 = vpop.f32.mrf.mxu0
      %v5487 = vadd.f32 %v5438, %v5486
      %v5488 = vpop.f32.mrf.mxu0
      %v5489 = vadd.f32 %v5440, %v5488
      %5490 = vmatmul.bf16.gmra.mxu0 %v5012
      %v5491 = vpop.f32.mrf.mxu0
      %v5492 = vadd.f32 %v5443, %v5491
      %v5493 = vpop.f32.mrf.mxu0
      %v5494 = vadd.f32 %v5445, %v5493
      %5495 = vmatmul.bf16.gmra.mxu0 %v5014
      %v5496 = vpop.f32.mrf.mxu0
      %v5497 = vadd.f32 %v5448, %v5496
      %v5498 = vpop.f32.mrf.mxu0
      %v5499 = vadd.f32 %v5450, %v5498
      %5500 = vmatmul.bf16.gmra.mxu0 %v5016
      %v5501 = vpop.f32.mrf.mxu0
      %v5502 = vadd.f32 %v5453, %v5501
      %v5503 = vpop.f32.mrf.mxu0
      %v5504 = vadd.f32 %v5455, %v5503
      %5505 = vmatmul.bf16.gmra.mxu0 %v5018
      %v5506 = vpop.f32.mrf.mxu0
      %v5507 = vadd.f32 %v5458, %v5506
      %v5508 = vpop.f32.mrf.mxu0
      %v5509 = vadd.f32 %v5460, %v5508
      %5510 = vdwg.mxu0
      %5511 = vmatpush.bf16.msra.mxu0 %v5314
      %5512 = vmatpush.bf16.msra.mxu0 %v5310
      %5513 = vmatpush.bf16.msra.mxu0 %v5306
      %5514 = vmatpush.bf16.msra.mxu0 %v5302
      %5515 = vmatpush.bf16.msra.mxu0 %v5298
      %5516 = vmatpush.bf16.msra.mxu0 %v5294
      %5517 = vmatpush.bf16.msra.mxu0 %v5290
      %5518 = vmatpush.bf16.msra.mxu0 %v5286
      %5519 = vmatmul.bf16.gmra.mxu0 %v5003
      %v5520 = vpop.f32.mrf.mxu0
      %v5521 = vadd.f32 %v5086, %v5520
      %v5522 = vpop.f32.mrf.mxu0
      %v5523 = vadd.f32 %v5086, %v5522
      %5524 = vmatmul.bf16.gmra.mxu0 %v5005
      %v5525 = vpop.f32.mrf.mxu0
      %v5526 = vadd.f32 %v5086, %v5525
      %v5527 = vpop.f32.mrf.mxu0
      %v5528 = vadd.f32 %v5086, %v5527
      %5529 = vmatmul.bf16.gmra.mxu0 %v5007
      %v5530 = vpop.f32.mrf.mxu0
      %v5531 = vadd.f32 %v5086, %v5530
      %v5532 = vpop.f32.mrf.mxu0
      %v5533 = vadd.f32 %v5086, %v5532
      %5534 = vmatmul.bf16.gmra.mxu0 %v5009
      %v5535 = vpop.f32.mrf.mxu0
      %v5536 = vadd.f32 %v5086, %v5535
      %v5537 = vpop.f32.mrf.mxu0
      %v5538 = vadd.f32 %v5086, %v5537
      %5539 = vmatmul.bf16.gmra.mxu0 %v5011
      %v5540 = vpop.f32.mrf.mxu0
      %v5541 = vadd.f32 %v5086, %v5540
      %v5542 = vpop.f32.mrf.mxu0
      %v5543 = vadd.f32 %v5086, %v5542
      %5544 = vmatmul.bf16.gmra.mxu0 %v5013
      %v5545 = vpop.f32.mrf.mxu0
      %v5546 = vadd.f32 %v5086, %v5545
      %v5547 = vpop.f32.mrf.mxu0
      %v5548 = vadd.f32 %v5086, %v5547
      %5549 = vmatmul.bf16.gmra.mxu0 %v5015
      %v5550 = vpop.f32.mrf.mxu0
      %v5551 = vadd.f32 %v5086, %v5550
      %v5552 = vpop.f32.mrf.mxu0
      %v5553 = vadd.f32 %v5086, %v5552
      %5554 = vmatmul.bf16.gmra.mxu0 %v5017
      %v5555 = vpop.f32.mrf.mxu0
      %v5556 = vadd.f32 %v5086, %v5555
      %v5557 = vpop.f32.mrf.mxu0
      %v5558 = vadd.f32 %v5086, %v5557
      %5559 = vdwg.mxu0
      %5560 = vmatpush.bf16.msra.mxu0 %v5346
      %5561 = vmatpush.bf16.msra.mxu0 %v5342
      %5562 = vmatpush.bf16.msra.mxu0 %v5338
      %5563 = vmatpush.bf16.msra.mxu0 %v5334
      %5564 = vmatpush.bf16.msra.mxu0 %v5330
      %5565 = vmatpush.bf16.msra.mxu0 %v5326
      %5566 = vmatpush.bf16.msra.mxu0 %v5322
      %5567 = vmatpush.bf16.msra.mxu0 %v5318
      %5568 = vmatmul.bf16.gmra.mxu0 %v5004
      %v5569 = vpop.f32.mrf.mxu0
      %v5570 = vadd.f32 %v5521, %v5569
      %v5571 = vpop.f32.mrf.mxu0
      %v5572 = vadd.f32 %v5523, %v5571
      %5573 = vmatmul.bf16.gmra.mxu0 %v5006
      %v5574 = vpop.f32.mrf.mxu0
      %v5575 = vadd.f32 %v5526, %v5574
      %v5576 = vpop.f32.mrf.mxu0
      %v5577 = vadd.f32 %v5528, %v5576
      %5578 = vmatmul.bf16.gmra.mxu0 %v5008
      %v5579 = vpop.f32.mrf.mxu0
      %v5580 = vadd.f32 %v5531, %v5579
      %v5581 = vpop.f32.mrf.mxu0
      %v5582 = vadd.f32 %v5533, %v5581
      %5583 = vmatmul.bf16.gmra.mxu0 %v5010
      %v5584 = vpop.f32.mrf.mxu0
      %v5585 = vadd.f32 %v5536, %v5584
      %v5586 = vpop.f32.mrf.mxu0
      %v5587 = vadd.f32 %v5538, %v5586
      %5588 = vmatmul.bf16.gmra.mxu0 %v5012
      %v5589 = vpop.f32.mrf.mxu0
      %v5590 = vadd.f32 %v5541, %v5589
      %v5591 = vpop.f32.mrf.mxu0
      %v5592 = vadd.f32 %v5543, %v5591
      %5593 = vmatmul.bf16.gmra.mxu0 %v5014
      %v5594 = vpop.f32.mrf.mxu0
      %v5595 = vadd.f32 %v5546, %v5594
      %v5596 = vpop.f32.mrf.mxu0
      %v5597 = vadd.f32 %v5548, %v5596
      %5598 = vmatmul.bf16.gmra.mxu0 %v5016
      %v5599 = vpop.f32.mrf.mxu0
      %v5600 = vadd.f32 %v5551, %v5599
      %v5601 = vpop.f32.mrf.mxu0
      %v5602 = vadd.f32 %v5553, %v5601
      %5603 = vmatmul.bf16.gmra.mxu0 %v5018
      %v5604 = vpop.f32.mrf.mxu0
      %v5605 = vadd.f32 %v5556, %v5604
      %v5606 = vpop.f32.mrf.mxu0
      %v5607 = vadd.f32 %v5558, %v5606
      %5608 = vdwg.mxu0
      %5609 = vmatpush.bf16.msra.mxu0 %v5315
      %5610 = vmatpush.bf16.msra.mxu0 %v5311
      %5611 = vmatpush.bf16.msra.mxu0 %v5307
      %5612 = vmatpush.bf16.msra.mxu0 %v5303
      %5613 = vmatpush.bf16.msra.mxu0 %v5299
      %5614 = vmatpush.bf16.msra.mxu0 %v5295
      %5615 = vmatpush.bf16.msra.mxu0 %v5291
      %5616 = vmatpush.bf16.msra.mxu0 %v5287
      %5617 = vmatmul.bf16.gmra.mxu0 %v5003
      %v5618 = vpop.f32.mrf.mxu0
      %v5619 = vadd.f32 %v5087, %v5618
      %v5620 = vpop.f32.mrf.mxu0
      %v5621 = vadd.f32 %v5087, %v5620
      %5622 = vmatmul.bf16.gmra.mxu0 %v5005
      %v5623 = vpop.f32.mrf.mxu0
      %v5624 = vadd.f32 %v5087, %v5623
      %v5625 = vpop.f32.mrf.mxu0
      %v5626 = vadd.f32 %v5087, %v5625
      %5627 = vmatmul.bf16.gmra.mxu0 %v5007
      %v5628 = vpop.f32.mrf.mxu0
      %v5629 = vadd.f32 %v5087, %v5628
      %v5630 = vpop.f32.mrf.mxu0
      %v5631 = vadd.f32 %v5087, %v5630
      %5632 = vmatmul.bf16.gmra.mxu0 %v5009
      %v5633 = vpop.f32.mrf.mxu0
      %v5634 = vadd.f32 %v5087, %v5633
      %v5635 = vpop.f32.mrf.mxu0
      %v5636 = vadd.f32 %v5087, %v5635
      %5637 = vmatmul.bf16.gmra.mxu0 %v5011
      %v5638 = vpop.f32.mrf.mxu0
      %v5639 = vadd.f32 %v5087, %v5638
      %v5640 = vpop.f32.mrf.mxu0
      %v5641 = vadd.f32 %v5087, %v5640
      %5642 = vmatmul.bf16.gmra.mxu0 %v5013
      %v5643 = vpop.f32.mrf.mxu0
      %v5644 = vadd.f32 %v5087, %v5643
      %v5645 = vpop.f32.mrf.mxu0
      %v5646 = vadd.f32 %v5087, %v5645
      %5647 = vmatmul.bf16.gmra.mxu0 %v5015
      %v5648 = vpop.f32.mrf.mxu0
      %v5649 = vadd.f32 %v5087, %v5648
      %v5650 = vpop.f32.mrf.mxu0
      %v5651 = vadd.f32 %v5087, %v5650
      %5652 = vmatmul.bf16.gmra.mxu0 %v5017
      %v5653 = vpop.f32.mrf.mxu0
      %v5654 = vadd.f32 %v5087, %v5653
      %v5655 = vpop.f32.mrf.mxu0
      %v5656 = vadd.f32 %v5087, %v5655
      %5657 = vdwg.mxu0
      %5658 = vmatpush.bf16.msra.mxu0 %v5347
      %5659 = vmatpush.bf16.msra.mxu0 %v5343
      %5660 = vmatpush.bf16.msra.mxu0 %v5339
      %5661 = vmatpush.bf16.msra.mxu0 %v5335
      %5662 = vmatpush.bf16.msra.mxu0 %v5331
      %5663 = vmatpush.bf16.msra.mxu0 %v5327
      %5664 = vmatpush.bf16.msra.mxu0 %v5323
      %5665 = vmatpush.bf16.msra.mxu0 %v5319
      %5666 = vmatmul.bf16.gmra.mxu0 %v5004
      %v5667 = vpop.f32.mrf.mxu0
      %v5668 = vadd.f32 %v5619, %v5667
      %v5669 = vpop.f32.mrf.mxu0
      %v5670 = vadd.f32 %v5621, %v5669
      %5671 = vmatmul.bf16.gmra.mxu0 %v5006
      %v5672 = vpop.f32.mrf.mxu0
      %v5673 = vadd.f32 %v5624, %v5672
      %v5674 = vpop.f32.mrf.mxu0
      %v5675 = vadd.f32 %v5626, %v5674
      %5676 = vmatmul.bf16.gmra.mxu0 %v5008
      %v5677 = vpop.f32.mrf.mxu0
      %v5678 = vadd.f32 %v5629, %v5677
      %v5679 = vpop.f32.mrf.mxu0
      %v5680 = vadd.f32 %v5631, %v5679
      %5681 = vmatmul.bf16.gmra.mxu0 %v5010
      %v5682 = vpop.f32.mrf.mxu0
      %v5683 = vadd.f32 %v5634, %v5682
      %v5684 = vpop.f32.mrf.mxu0
      %v5685 = vadd.f32 %v5636, %v5684
      %5686 = vmatmul.bf16.gmra.mxu0 %v5012
      %v5687 = vpop.f32.mrf.mxu0
      %v5688 = vadd.f32 %v5639, %v5687
      %v5689 = vpop.f32.mrf.mxu0
      %v5690 = vadd.f32 %v5641, %v5689
      %5691 = vmatmul.bf16.gmra.mxu0 %v5014
      %v5692 = vpop.f32.mrf.mxu0
      %v5693 = vadd.f32 %v5644, %v5692
      %v5694 = vpop.f32.mrf.mxu0
      %v5695 = vadd.f32 %v5646, %v5694
      %5696 = vmatmul.bf16.gmra.mxu0 %v5016
      %v5697 = vpop.f32.mrf.mxu0
      %v5698 = vadd.f32 %v5649, %v5697
      %v5699 = vpop.f32.mrf.mxu0
      %v5700 = vadd.f32 %v5651, %v5699
      %5701 = vmatmul.bf16.gmra.mxu0 %v5018
      %v5702 = vpop.f32.mrf.mxu0
      %v5703 = vadd.f32 %v5654, %v5702
      %v5704 = vpop.f32.mrf.mxu0
      %v5705 = vadd.f32 %v5656, %v5704
      %5706 = vdwg.mxu0
      %5707 = vmatpush.bf16.msra.mxu0 %v5316
      %5708 = vmatpush.bf16.msra.mxu0 %v5312
      %5709 = vmatpush.bf16.msra.mxu0 %v5308
      %5710 = vmatpush.bf16.msra.mxu0 %v5304
      %5711 = vmatpush.bf16.msra.mxu0 %v5300
      %5712 = vmatpush.bf16.msra.mxu0 %v5296
      %5713 = vmatpush.bf16.msra.mxu0 %v5292
      %5714 = vmatpush.bf16.msra.mxu0 %v5288
      %5715 = vmatmul.bf16.gmra.mxu0 %v5003
      %v5716 = vpop.f32.mrf.mxu0
      %v5717 = vadd.f32 %v5088, %v5716
      %v5718 = vpop.f32.mrf.mxu0
      %v5719 = vadd.f32 %v5088, %v5718
      %5720 = vmatmul.bf16.gmra.mxu0 %v5005
      %v5721 = vpop.f32.mrf.mxu0
      %v5722 = vadd.f32 %v5088, %v5721
      %v5723 = vpop.f32.mrf.mxu0
      %v5724 = vadd.f32 %v5088, %v5723
      %5725 = vmatmul.bf16.gmra.mxu0 %v5007
      %v5726 = vpop.f32.mrf.mxu0
      %v5727 = vadd.f32 %v5088, %v5726
      %v5728 = vpop.f32.mrf.mxu0
      %v5729 = vadd.f32 %v5088, %v5728
      %5730 = vmatmul.bf16.gmra.mxu0 %v5009
      %v5731 = vpop.f32.mrf.mxu0
      %v5732 = vadd.f32 %v5088, %v5731
      %v5733 = vpop.f32.mrf.mxu0
      %v5734 = vadd.f32 %v5088, %v5733
      %5735 = vmatmul.bf16.gmra.mxu0 %v5011
      %v5736 = vpop.f32.mrf.mxu0
      %v5737 = vadd.f32 %v5088, %v5736
      %v5738 = vpop.f32.mrf.mxu0
      %v5739 = vadd.f32 %v5088, %v5738
      %5740 = vmatmul.bf16.gmra.mxu0 %v5013
      %v5741 = vpop.f32.mrf.mxu0
      %v5742 = vadd.f32 %v5088, %v5741
      %v5743 = vpop.f32.mrf.mxu0
      %v5744 = vadd.f32 %v5088, %v5743
      %5745 = vmatmul.bf16.gmra.mxu0 %v5015
      %v5746 = vpop.f32.mrf.mxu0
      %v5747 = vadd.f32 %v5088, %v5746
      %v5748 = vpop.f32.mrf.mxu0
      %v5749 = vadd.f32 %v5088, %v5748
      %5750 = vmatmul.bf16.gmra.mxu0 %v5017
      %v5751 = vpop.f32.mrf.mxu0
      %v5752 = vadd.f32 %v5088, %v5751
      %v5753 = vpop.f32.mrf.mxu0
      %v5754 = vadd.f32 %v5088, %v5753
      %5755 = vdwg.mxu0
      %5756 = vmatpush.bf16.msra.mxu0 %v5348
      %5757 = vmatpush.bf16.msra.mxu0 %v5344
      %5758 = vmatpush.bf16.msra.mxu0 %v5340
      %5759 = vmatpush.bf16.msra.mxu0 %v5336
      %5760 = vmatpush.bf16.msra.mxu0 %v5332
      %5761 = vmatpush.bf16.msra.mxu0 %v5328
      %5762 = vmatpush.bf16.msra.mxu0 %v5324
      %5763 = vmatpush.bf16.msra.mxu0 %v5320
      %5764 = vmatmul.bf16.gmra.mxu0 %v5004
      %v5765 = vpop.f32.mrf.mxu0
      %v5766 = vadd.f32 %v5717, %v5765
      %v5767 = vpop.f32.mrf.mxu0
      %v5768 = vadd.f32 %v5719, %v5767
      %5769 = vmatmul.bf16.gmra.mxu0 %v5006
      %v5770 = vpop.f32.mrf.mxu0
      %v5771 = vadd.f32 %v5722, %v5770
      %v5772 = vpop.f32.mrf.mxu0
      %v5773 = vadd.f32 %v5724, %v5772
      %5774 = vmatmul.bf16.gmra.mxu0 %v5008
      %v5775 = vpop.f32.mrf.mxu0
      %v5776 = vadd.f32 %v5727, %v5775
      %v5777 = vpop.f32.mrf.mxu0
      %v5778 = vadd.f32 %v5729, %v5777
      %5779 = vmatmul.bf16.gmra.mxu0 %v5010
      %v5780 = vpop.f32.mrf.mxu0
      %v5781 = vadd.f32 %v5732, %v5780
      %v5782 = vpop.f32.mrf.mxu0
      %v5783 = vadd.f32 %v5734, %v5782
      %5784 = vmatmul.bf16.gmra.mxu0 %v5012
      %v5785 = vpop.f32.mrf.mxu0
      %v5786 = vadd.f32 %v5737, %v5785
      %v5787 = vpop.f32.mrf.mxu0
      %v5788 = vadd.f32 %v5739, %v5787
      %5789 = vmatmul.bf16.gmra.mxu0 %v5014
      %v5790 = vpop.f32.mrf.mxu0
      %v5791 = vadd.f32 %v5742, %v5790
      %v5792 = vpop.f32.mrf.mxu0
      %v5793 = vadd.f32 %v5744, %v5792
      %5794 = vmatmul.bf16.gmra.mxu0 %v5016
      %v5795 = vpop.f32.mrf.mxu0
      %v5796 = vadd.f32 %v5747, %v5795
      %v5797 = vpop.f32.mrf.mxu0
      %v5798 = vadd.f32 %v5749, %v5797
      %5799 = vmatmul.bf16.gmra.mxu0 %v5018
      %v5800 = vpop.f32.mrf.mxu0
      %v5801 = vadd.f32 %v5752, %v5800
      %v5802 = vpop.f32.mrf.mxu0
      %v5803 = vadd.f32 %v5754, %v5802
      %5804 = vdwg.mxu0
      %v5805 = vmax.f32 %v5472, 0.0
      %v5806 = vmax.f32 %v5570, 0.0
      %v5807 = vmax.f32 %v5668, 0.0
      %v5808 = vmax.f32 %v5766, 0.0
      %v5809 = vmax.f32 %v5474, 0.0
      %v5810 = vmax.f32 %v5572, 0.0
      %v5811 = vmax.f32 %v5670, 0.0
      %v5812 = vmax.f32 %v5768, 0.0
      %v5813 = vmax.f32 %v5477, 0.0
      %v5814 = vmax.f32 %v5575, 0.0
      %v5815 = vmax.f32 %v5673, 0.0
      %v5816 = vmax.f32 %v5771, 0.0
      %v5817 = vmax.f32 %v5479, 0.0
      %v5818 = vmax.f32 %v5577, 0.0
      %v5819 = vmax.f32 %v5675, 0.0
      %v5820 = vmax.f32 %v5773, 0.0
      %v5821 = vmax.f32 %v5482, 0.0
      %v5822 = vmax.f32 %v5580, 0.0
      %v5823 = vmax.f32 %v5678, 0.0
      %v5824 = vmax.f32 %v5776, 0.0
      %v5825 = vmax.f32 %v5484, 0.0
      %v5826 = vmax.f32 %v5582, 0.0
      %v5827 = vmax.f32 %v5680, 0.0
      %v5828 = vmax.f32 %v5778, 0.0
      %v5829 = vmax.f32 %v5487, 0.0
      %v5830 = vmax.f32 %v5585, 0.0
      %v5831 = vmax.f32 %v5683, 0.0
      %v5832 = vmax.f32 %v5781, 0.0
      %v5833 = vmax.f32 %v5489, 0.0
      %v5834 = vmax.f32 %v5587, 0.0
      %v5835 = vmax.f32 %v5685, 0.0
      %v5836 = vmax.f32 %v5783, 0.0
      %v5837 = vmax.f32 %v5492, 0.0
      %v5838 = vmax.f32 %v5590, 0.0
      %v5839 = vmax.f32 %v5688, 0.0
      %v5840 = vmax.f32 %v5786, 0.0
      %v5841 = vmax.f32 %v5494, 0.0
      %v5842 = vmax.f32 %v5592, 0.0
      %v5843 = vmax.f32 %v5690, 0.0
      %v5844 = vmax.f32 %v5788, 0.0
      %v5845 = vmax.f32 %v5497, 0.0
      %v5846 = vmax.f32 %v5595, 0.0
      %v5847 = vmax.f32 %v5693, 0.0
      %v5848 = vmax.f32 %v5791, 0.0
      %v5849 = vmax.f32 %v5499, 0.0
      %v5850 = vmax.f32 %v5597, 0.0
      %v5851 = vmax.f32 %v5695, 0.0
      %v5852 = vmax.f32 %v5793, 0.0
      %v5853 = vmax.f32 %v5502, 0.0
      %v5854 = vmax.f32 %v5600, 0.0
      %v5855 = vmax.f32 %v5698, 0.0
      %v5856 = vmax.f32 %v5796, 0.0
      %v5857 = vmax.f32 %v5504, 0.0
      %v5858 = vmax.f32 %v5602, 0.0
      %v5859 = vmax.f32 %v5700, 0.0
      %v5860 = vmax.f32 %v5798, 0.0
      %v5861 = vmax.f32 %v5507, 0.0
      %v5862 = vmax.f32 %v5605, 0.0
      %v5863 = vmax.f32 %v5703, 0.0
      %v5864 = vmax.f32 %v5801, 0.0
      %v5865 = vmax.f32 %v5509, 0.0
      %v5866 = vmax.f32 %v5607, 0.0
      %v5867 = vmax.f32 %v5705, 0.0
      %v5868 = vmax.f32 %v5803, 0.0
      %v5869 = vpack.c.bf16 %v5809, %v5805
      %v5870 = vpack.c.bf16 %v5810, %v5806
      %v5871 = vpack.c.bf16 %v5811, %v5807
      %v5872 = vpack.c.bf16 %v5812, %v5808
      %v5873 = vpack.c.bf16 %v5817, %v5813
      %v5874 = vpack.c.bf16 %v5818, %v5814
      %v5875 = vpack.c.bf16 %v5819, %v5815
      %v5876 = vpack.c.bf16 %v5820, %v5816
      %v5877 = vpack.c.bf16 %v5825, %v5821
      %v5878 = vpack.c.bf16 %v5826, %v5822
      %v5879 = vpack.c.bf16 %v5827, %v5823
      %v5880 = vpack.c.bf16 %v5828, %v5824
      %v5881 = vpack.c.bf16 %v5833, %v5829
      %v5882 = vpack.c.bf16 %v5834, %v5830
      %v5883 = vpack.c.bf16 %v5835, %v5831
      %v5884 = vpack.c.bf16 %v5836, %v5832
      %v5885 = vpack.c.bf16 %v5841, %v5837
      %v5886 = vpack.c.bf16 %v5842, %v5838
      %v5887 = vpack.c.bf16 %v5843, %v5839
      %v5888 = vpack.c.bf16 %v5844, %v5840
      %v5889 = vpack.c.bf16 %v5849, %v5845
      %v5890 = vpack.c.bf16 %v5850, %v5846
      %v5891 = vpack.c.bf16 %v5851, %v5847
      %v5892 = vpack.c.bf16 %v5852, %v5848
      %v5893 = vpack.c.bf16 %v5857, %v5853
      %v5894 = vpack.c.bf16 %v5858, %v5854
      %v5895 = vpack.c.bf16 %v5859, %v5855
      %v5896 = vpack.c.bf16 %v5860, %v5856
      %v5897 = vpack.c.bf16 %v5865, %v5861
      %v5898 = vpack.c.bf16 %v5866, %v5862
      %v5899 = vpack.c.bf16 %v5867, %v5863
      %v5900 = vpack.c.bf16 %v5868, %v5864
      %v5901 = vld [vmem:[%s15] sm:$0xff]
      %v5902 = vld [vmem:[%s15 + $0x8] sm:$0xff]
      %v5903 = vld [vmem:[%s15 + $0x10] sm:$0xff]
      %v5904 = vld [vmem:[%s15 + $0x18] sm:$0xf]
      %v5905 = vld [vmem:[%s15 + $0x1c] sm:$0xff]
      %v5906 = vld [vmem:[%s15 + $0x24] sm:$0xff]
      %v5907 = vld [vmem:[%s15 + $0x2c] sm:$0xff]
      %v5908 = vld [vmem:[%s15 + $0x34] sm:$0xf]
      %v5909 = vld [vmem:[%s15 + $0x38] sm:$0xff]
      %v5910 = vld [vmem:[%s15 + $0x40] sm:$0xff]
      %v5911 = vld [vmem:[%s15 + $0x48] sm:$0xff]
      %v5912 = vld [vmem:[%s15 + $0x50] sm:$0xf]
      %v5913 = vld [vmem:[%s15 + $0x54] sm:$0xff]
      %v5914 = vld [vmem:[%s15 + $0x5c] sm:$0xff]
      %v5915 = vld [vmem:[%s15 + $0x64] sm:$0xff]
      %v5916 = vld [vmem:[%s15 + $0x6c] sm:$0xf]
      %v5917 = vld [vmem:[%s15 + $0x70] sm:$0xff]
      %v5918 = vld [vmem:[%s15 + $0x78] sm:$0xff]
      %v5919 = vld [vmem:[%s15 + $0x80] sm:$0xff]
      %v5920 = vld [vmem:[%s15 + $0x88] sm:$0xf]
      %v5921 = vld [vmem:[%s15 + $0x8c] sm:$0xff]
      %v5922 = vld [vmem:[%s15 + $0x94] sm:$0xff]
      %v5923 = vld [vmem:[%s15 + $0x9c] sm:$0xff]
      %v5924 = vld [vmem:[%s15 + $0xa4] sm:$0xf]
      %v5925 = vld [vmem:[%s15 + $0xa8] sm:$0xff]
      %v5926 = vld [vmem:[%s15 + $0xb0] sm:$0xff]
      %v5927 = vld [vmem:[%s15 + $0xb8] sm:$0xff]
      %v5928 = vld [vmem:[%s15 + $0xc0] sm:$0xf]
      %v5929 = vld [vmem:[%s15 + $0xc4] sm:$0xff]
      %v5930 = vld [vmem:[%s15 + $0xcc] sm:$0xff]
      %v5931 = vld [vmem:[%s15 + $0xd4] sm:$0xff]
      %v5932 = vld [vmem:[%s15 + $0xdc] sm:$0xf]
      %v5933 = vld [vmem:[%s15 + $0xe0] sm:$0xff]
      %v5934 = vld [vmem:[%s15 + $0xe8] sm:$0xff]
      %v5935 = vld [vmem:[%s15 + $0xf0] sm:$0xff]
      %v5936 = vld [vmem:[%s15 + $0xf8] sm:$0xf]
      %v5937 = vld [vmem:[%s15 + $0xfc] sm:$0xff]
      %v5938 = vld [vmem:[%s15 + $0x104] sm:$0xff]
      %v5939 = vld [vmem:[%s15 + $0x10c] sm:$0xff]
      %v5940 = vld [vmem:[%s15 + $0x114] sm:$0xf]
      %v5941 = vld [vmem:[%s15 + $0x118] sm:$0xff]
      %v5942 = vld [vmem:[%s15 + $0x120] sm:$0xff]
      %v5943 = vld [vmem:[%s15 + $0x128] sm:$0xff]
      %v5944 = vld [vmem:[%s15 + $0x130] sm:$0xf]
      %v5945 = vld [vmem:[%s15 + $0x134] sm:$0xff]
      %v5946 = vld [vmem:[%s15 + $0x13c] sm:$0xff]
      %v5947 = vld [vmem:[%s15 + $0x144] sm:$0xff]
      %v5948 = vld [vmem:[%s15 + $0x14c] sm:$0xf]
      %v5949 = vld [vmem:[%s15 + $0x150] sm:$0xff]
      %v5950 = vld [vmem:[%s15 + $0x158] sm:$0xff]
      %v5951 = vld [vmem:[%s15 + $0x160] sm:$0xff]
      %v5952 = vld [vmem:[%s15 + $0x168] sm:$0xf]
      %v5953 = vld [vmem:[%s15 + $0x16c] sm:$0xff]
      %v5954 = vld [vmem:[%s15 + $0x174] sm:$0xff]
      %v5955 = vld [vmem:[%s15 + $0x17c] sm:$0xff]
      %v5956 = vld [vmem:[%s15 + $0x184] sm:$0xf]
      %v5957 = vld [vmem:[%s15 + $0x188] sm:$0xff]
      %v5958 = vld [vmem:[%s15 + $0x190] sm:$0xff]
      %v5959 = vld [vmem:[%s15 + $0x198] sm:$0xff]
      %v5960 = vld [vmem:[%s15 + $0x1a0] sm:$0xf]
      %v5961 = vld [vmem:[%s15 + $0x1a4] sm:$0xff]
      %v5962 = vld [vmem:[%s15 + $0x1ac] sm:$0xff]
      %v5963 = vld [vmem:[%s15 + $0x1b4] sm:$0xff]
      %v5964 = vld [vmem:[%s15 + $0x1bc] sm:$0xf]
      %v5965 = vld [vmem:[%s15 + $0x1c0] sm:$0xff]
      %v5966 = vld [vmem:[%s15 + $0x1c8] sm:$0xff]
      %v5967 = vld [vmem:[%s15 + $0x1d0] sm:$0xff]
      %v5968 = vld [vmem:[%s15 + $0x1d8] sm:$0xf]
      %v5969 = vld [vmem:[%s15 + $0x1dc] sm:$0xff]
      %v5970 = vld [vmem:[%s15 + $0x1e4] sm:$0xff]
      %v5971 = vld [vmem:[%s15 + $0x1ec] sm:$0xff]
      %v5972 = vld [vmem:[%s15 + $0x1f4] sm:$0xf]
      %v5973 = vld [vmem:[%s15 + $0x1f8] sm:$0xff]
      %v5974 = vld [vmem:[%s15 + $0x200] sm:$0xff]
      %v5975 = vld [vmem:[%s15 + $0x208] sm:$0xff]
      %v5976 = vld [vmem:[%s15 + $0x210] sm:$0xf]
      %v5977 = vld [vmem:[%s15 + $0x214] sm:$0xff]
      %v5978 = vld [vmem:[%s15 + $0x21c] sm:$0xff]
      %v5979 = vld [vmem:[%s15 + $0x224] sm:$0xff]
      %v5980 = vld [vmem:[%s15 + $0x22c] sm:$0xf]
      %v5981 = vld [vmem:[%s15 + $0x230] sm:$0xff]
      %v5982 = vld [vmem:[%s15 + $0x238] sm:$0xff]
      %v5983 = vld [vmem:[%s15 + $0x240] sm:$0xff]
      %v5984 = vld [vmem:[%s15 + $0x248] sm:$0xf]
      %v5985 = vld [vmem:[%s15 + $0x24c] sm:$0xff]
      %v5986 = vld [vmem:[%s15 + $0x254] sm:$0xff]
      %v5987 = vld [vmem:[%s15 + $0x25c] sm:$0xff]
      %v5988 = vld [vmem:[%s15 + $0x264] sm:$0xf]
      %v5989 = vld [vmem:[%s15 + $0x268] sm:$0xff]
      %v5990 = vld [vmem:[%s15 + $0x270] sm:$0xff]
      %v5991 = vld [vmem:[%s15 + $0x278] sm:$0xff]
      %v5992 = vld [vmem:[%s15 + $0x280] sm:$0xf]
      %v5993 = vld [vmem:[%s15 + $0x284] sm:$0xff]
      %v5994 = vld [vmem:[%s15 + $0x28c] sm:$0xff]
      %v5995 = vld [vmem:[%s15 + $0x294] sm:$0xff]
      %v5996 = vld [vmem:[%s15 + $0x29c] sm:$0xf]
      %v5997 = vld [vmem:[%s15 + $0x2a0] sm:$0xff]
      %v5998 = vld [vmem:[%s15 + $0x2a8] sm:$0xff]
      %v5999 = vld [vmem:[%s15 + $0x2b0] sm:$0xff]
      %v6000 = vld [vmem:[%s15 + $0x2b8] sm:$0xf]
      %v6001 = vld [vmem:[%s15 + $0x2bc] sm:$0xff]
      %v6002 = vld [vmem:[%s15 + $0x2c4] sm:$0xff]
      %v6003 = vld [vmem:[%s15 + $0x2cc] sm:$0xff]
      %v6004 = vld [vmem:[%s15 + $0x2d4] sm:$0xf]
      %v6005 = vld [vmem:[%s15 + $0x2d8] sm:$0xff]
      %v6006 = vld [vmem:[%s15 + $0x2e0] sm:$0xff]
      %v6007 = vld [vmem:[%s15 + $0x2e8] sm:$0xff]
      %v6008 = vld [vmem:[%s15 + $0x2f0] sm:$0xf]
      %v6009 = vld [vmem:[%s15 + $0x2f4] sm:$0xff]
      %v6010 = vld [vmem:[%s15 + $0x2fc] sm:$0xff]
      %v6011 = vld [vmem:[%s15 + $0x304] sm:$0xff]
      %v6012 = vld [vmem:[%s15 + $0x30c] sm:$0xf]
      %v6013 = vld [vmem:[%s15 + $0x310] sm:$0xff]
      %v6014 = vld [vmem:[%s15 + $0x318] sm:$0xff]
      %v6015 = vld [vmem:[%s15 + $0x320] sm:$0xff]
      %v6016 = vld [vmem:[%s15 + $0x328] sm:$0xf]
      %v6017 = vld [vmem:[%s15 + $0x32c] sm:$0xff]
      %v6018 = vld [vmem:[%s15 + $0x334] sm:$0xff]
      %v6019 = vld [vmem:[%s15 + $0x33c] sm:$0xff]
      %v6020 = vld [vmem:[%s15 + $0x344] sm:$0xf]
      %v6021 = vld [vmem:[%s15 + $0x348] sm:$0xff]
      %v6022 = vld [vmem:[%s15 + $0x350] sm:$0xff]
      %v6023 = vld [vmem:[%s15 + $0x358] sm:$0xff]
      %v6024 = vld [vmem:[%s15 + $0x360] sm:$0xf]
      %v6025 = vld [vmem:[%s15 + $0x364] sm:$0xff]
      %v6026 = vld [vmem:[%s15 + $0x36c] sm:$0xff]
      %v6027 = vld [vmem:[%s15 + $0x374] sm:$0xff]
      %v6028 = vld [vmem:[%s15 + $0x37c] sm:$0xf]
      %v6029 = vld [vmem:[%s15 + $0x380] sm:$0xff]
      %v6030 = vld [vmem:[%s15 + $0x388] sm:$0xff]
      %v6031 = vld [vmem:[%s15 + $0x390] sm:$0xff]
      %v6032 = vld [vmem:[%s15 + $0x398] sm:$0xf]
      %v6033 = vld [vmem:[%s15 + $0x39c] sm:$0xff]
      %v6034 = vld [vmem:[%s15 + $0x3a4] sm:$0xff]
      %v6035 = vld [vmem:[%s15 + $0x3ac] sm:$0xff]
      %v6036 = vld [vmem:[%s15 + $0x3b4] sm:$0xf]
      %v6037 = vld [vmem:[%s15 + $0x3b8] sm:$0xff]
      %v6038 = vld [vmem:[%s15 + $0x3c0] sm:$0xff]
      %v6039 = vld [vmem:[%s15 + $0x3c8] sm:$0xff]
      %v6040 = vld [vmem:[%s15 + $0x3d0] sm:$0xf]
      %v6041 = vld [vmem:[%s15 + $0x3d4] sm:$0xff]
      %v6042 = vld [vmem:[%s15 + $0x3dc] sm:$0xff]
      %v6043 = vld [vmem:[%s15 + $0x3e4] sm:$0xff]
      %v6044 = vld [vmem:[%s15 + $0x3ec] sm:$0xf]
      %v6045 = vld [vmem:[%s15 + $0x3f0] sm:$0xff]
      %v6046 = vld [vmem:[%s15 + $0x3f8] sm:$0xff]
      %v6047 = vld [vmem:[%s15 + $0x400] sm:$0xff]
      %v6048 = vld [vmem:[%s15 + $0x408] sm:$0xf]
      %v6049 = vld [vmem:[%s15 + $0x40c] sm:$0xff]
      %v6050 = vld [vmem:[%s15 + $0x414] sm:$0xff]
      %v6051 = vld [vmem:[%s15 + $0x41c] sm:$0xff]
      %v6052 = vld [vmem:[%s15 + $0x424] sm:$0xf]
      %v6053 = vld [vmem:[%s15 + $0x428] sm:$0xff]
      %v6054 = vld [vmem:[%s15 + $0x430] sm:$0xff]
      %v6055 = vld [vmem:[%s15 + $0x438] sm:$0xff]
      %v6056 = vld [vmem:[%s15 + $0x440] sm:$0xf]
      %v6057 = vld [vmem:[%s15 + $0x444] sm:$0xff]
      %v6058 = vld [vmem:[%s15 + $0x44c] sm:$0xff]
      %v6059 = vld [vmem:[%s15 + $0x454] sm:$0xff]
      %v6060 = vld [vmem:[%s15 + $0x45c] sm:$0xf]
      %v6061 = vld [vmem:[%s15 + $0x460] sm:$0xff]
      %v6062 = vld [vmem:[%s15 + $0x468] sm:$0xff]
      %v6063 = vld [vmem:[%s15 + $0x470] sm:$0xff]
      %v6064 = vld [vmem:[%s15 + $0x478] sm:$0xf]
      %v6065 = vld [vmem:[%s15 + $0x47c] sm:$0xff]
      %v6066 = vld [vmem:[%s15 + $0x484] sm:$0xff]
      %v6067 = vld [vmem:[%s15 + $0x48c] sm:$0xff]
      %v6068 = vld [vmem:[%s15 + $0x494] sm:$0xf]
      %v6069 = vld [vmem:[%s15 + $0x498] sm:$0xff]
      %v6070 = vld [vmem:[%s15 + $0x4a0] sm:$0xff]
      %v6071 = vld [vmem:[%s15 + $0x4a8] sm:$0xff]
      %v6072 = vld [vmem:[%s15 + $0x4b0] sm:$0xf]
      %v6073 = vld [vmem:[%s15 + $0x4b4] sm:$0xff]
      %v6074 = vld [vmem:[%s15 + $0x4bc] sm:$0xff]
      %v6075 = vld [vmem:[%s15 + $0x4c4] sm:$0xff]
      %v6076 = vld [vmem:[%s15 + $0x4cc] sm:$0xf]
      %v6077 = vld [vmem:[%s15 + $0x4d0] sm:$0xff]
      %v6078 = vld [vmem:[%s15 + $0x4d8] sm:$0xff]
      %v6079 = vld [vmem:[%s15 + $0x4e0] sm:$0xff]
      %v6080 = vld [vmem:[%s15 + $0x4e8] sm:$0xf]
      %v6081 = vld [vmem:[%s15 + $0x4ec] sm:$0xff]
      %v6082 = vld [vmem:[%s15 + $0x4f4] sm:$0xff]
      %v6083 = vld [vmem:[%s15 + $0x4fc] sm:$0xff]
      %v6084 = vld [vmem:[%s15 + $0x504] sm:$0xf]
      %v6085 = vld [vmem:[%s15 + $0x508] sm:$0xff]
      %v6086 = vld [vmem:[%s15 + $0x510] sm:$0xff]
      %v6087 = vld [vmem:[%s15 + $0x518] sm:$0xff]
      %v6088 = vld [vmem:[%s15 + $0x520] sm:$0xf]
      %v6089 = vld [vmem:[%s15 + $0x524] sm:$0xff]
      %v6090 = vld [vmem:[%s15 + $0x52c] sm:$0xff]
      %v6091 = vld [vmem:[%s15 + $0x534] sm:$0xff]
      %v6092 = vld [vmem:[%s15 + $0x53c] sm:$0xf]
      %v6093 = vld [vmem:[%s15 + $0x540] sm:$0xff]
      %v6094 = vld [vmem:[%s15 + $0x548] sm:$0xff]
      %v6095 = vld [vmem:[%s15 + $0x550] sm:$0xff]
      %v6096 = vld [vmem:[%s15 + $0x558] sm:$0xf]
      %v6097 = vld [vmem:[%s15 + $0x55c] sm:$0xff]
      %v6098 = vld [vmem:[%s15 + $0x564] sm:$0xff]
      %v6099 = vld [vmem:[%s15 + $0x56c] sm:$0xff]
      %v6100 = vld [vmem:[%s15 + $0x574] sm:$0xf]
      %v6101 = vld [vmem:[%s15 + $0x578] sm:$0xff]
      %v6102 = vld [vmem:[%s15 + $0x580] sm:$0xff]
      %v6103 = vld [vmem:[%s15 + $0x588] sm:$0xff]
      %v6104 = vld [vmem:[%s15 + $0x590] sm:$0xf]
      %v6105 = vld [vmem:[%s15 + $0x594] sm:$0xff]
      %v6106 = vld [vmem:[%s15 + $0x59c] sm:$0xff]
      %v6107 = vld [vmem:[%s15 + $0x5a4] sm:$0xff]
      %v6108 = vld [vmem:[%s15 + $0x5ac] sm:$0xf]
      %v6109 = vld [vmem:[%s15 + $0x5b0] sm:$0xff]
      %v6110 = vld [vmem:[%s15 + $0x5b8] sm:$0xff]
      %v6111 = vld [vmem:[%s15 + $0x5c0] sm:$0xff]
      %v6112 = vld [vmem:[%s15 + $0x5c8] sm:$0xf]
      %v6113 = vld [vmem:[%s15 + $0x5cc] sm:$0xff]
      %v6114 = vld [vmem:[%s15 + $0x5d4] sm:$0xff]
      %v6115 = vld [vmem:[%s15 + $0x5dc] sm:$0xff]
      %v6116 = vld [vmem:[%s15 + $0x5e4] sm:$0xf]
      %v6117 = vld [vmem:[%s15 + $0x5e8] sm:$0xff]
      %v6118 = vld [vmem:[%s15 + $0x5f0] sm:$0xff]
      %v6119 = vld [vmem:[%s15 + $0x5f8] sm:$0xff]
      %v6120 = vld [vmem:[%s15 + $0x600] sm:$0xf]
      %v6121 = vld [vmem:[%s15 + $0x604] sm:$0xff]
      %v6122 = vld [vmem:[%s15 + $0x60c] sm:$0xff]
      %v6123 = vld [vmem:[%s15 + $0x614] sm:$0xff]
      %v6124 = vld [vmem:[%s15 + $0x61c] sm:$0xf]
      %v6125 = vld [vmem:[%s15 + $0x620] sm:$0xff]
      %v6126 = vld [vmem:[%s15 + $0x628] sm:$0xff]
      %v6127 = vld [vmem:[%s15 + $0x630] sm:$0xff]
      %v6128 = vld [vmem:[%s15 + $0x638] sm:$0xf]
      %v6129 = vld [vmem:[%s15 + $0x63c] sm:$0xff]
      %v6130 = vld [vmem:[%s15 + $0x644] sm:$0xff]
      %v6131 = vld [vmem:[%s15 + $0x64c] sm:$0xff]
      %v6132 = vld [vmem:[%s15 + $0x654] sm:$0xf]
      %v6133 = vld [vmem:[%s15 + $0x658] sm:$0xff]
      %v6134 = vld [vmem:[%s15 + $0x660] sm:$0xff]
      %v6135 = vld [vmem:[%s15 + $0x668] sm:$0xff]
      %v6136 = vld [vmem:[%s15 + $0x670] sm:$0xf]
      %v6137 = vld [vmem:[%s15 + $0x674] sm:$0xff]
      %v6138 = vld [vmem:[%s15 + $0x67c] sm:$0xff]
      %v6139 = vld [vmem:[%s15 + $0x684] sm:$0xff]
      %v6140 = vld [vmem:[%s15 + $0x68c] sm:$0xf]
      %v6141 = vld [vmem:[%s15 + $0x690] sm:$0xff]
      %v6142 = vld [vmem:[%s15 + $0x698] sm:$0xff]
      %v6143 = vld [vmem:[%s15 + $0x6a0] sm:$0xff]
      %v6144 = vld [vmem:[%s15 + $0x6a8] sm:$0xf]
      %v6145 = vld [vmem:[%s15 + $0x6ac] sm:$0xff]
      %v6146 = vld [vmem:[%s15 + $0x6b4] sm:$0xff]
      %v6147 = vld [vmem:[%s15 + $0x6bc] sm:$0xff]
      %v6148 = vld [vmem:[%s15 + $0x6c4] sm:$0xf]
      %v6149 = vld [vmem:[%s15 + $0x6c8] sm:$0xff]
      %v6150 = vld [vmem:[%s15 + $0x6d0] sm:$0xff]
      %v6151 = vld [vmem:[%s15 + $0x6d8] sm:$0xff]
      %v6152 = vld [vmem:[%s15 + $0x6e0] sm:$0xf]
      %v6153 = vld [vmem:[%s15 + $0x6e4] sm:$0xff]
      %v6154 = vld [vmem:[%s15 + $0x6ec] sm:$0xff]
      %v6155 = vld [vmem:[%s15 + $0x6f4] sm:$0xff]
      %v6156 = vld [vmem:[%s15 + $0x6fc] sm:$0xf]
      %v6157 = vld [vmem:[%s16] sm:$0x7f]
      %v6159 = vperm.slane %v6157, 0
      %v6160 = vperm.slane %v6157, 1
      %v6161 = vperm.slane %v6157, 2
      %v6162 = vperm.slane %v6157, 3
      %v6163 = vperm.slane %v6157, 4
      %v6164 = vperm.slane %v6157, 5
      %v6165 = vperm.slane %v6157, 6
      %v6429 = vunpack.c.l.b16 %v5901
      %v6430 = vunpack.c.h.b16 %v5901
      %v6431 = vunpack.c.l.b16 %v5902
      %v6432 = vunpack.c.h.b16 %v5902
      %v6433 = vunpack.c.l.b16 %v5903
      %v6434 = vunpack.c.h.b16 %v5903
      %v6435 = vunpack.c.l.b16 %v5904
      %v6436 = vunpack.c.l.b16 %v5905
      %v6437 = vunpack.c.h.b16 %v5905
      %v6438 = vunpack.c.l.b16 %v5906
      %v6439 = vunpack.c.h.b16 %v5906
      %v6440 = vunpack.c.l.b16 %v5907
      %v6441 = vunpack.c.h.b16 %v5907
      %v6442 = vunpack.c.l.b16 %v5908
      %v6443 = vunpack.c.l.b16 %v5909
      %v6444 = vunpack.c.h.b16 %v5909
      %v6445 = vunpack.c.l.b16 %v5910
      %v6446 = vunpack.c.h.b16 %v5910
      %v6447 = vunpack.c.l.b16 %v5911
      %v6448 = vunpack.c.h.b16 %v5911
      %v6449 = vunpack.c.l.b16 %v5912
      %v6450 = vunpack.c.l.b16 %v5913
      %v6451 = vunpack.c.h.b16 %v5913
      %v6452 = vunpack.c.l.b16 %v5914
      %v6453 = vunpack.c.h.b16 %v5914
      %v6454 = vunpack.c.l.b16 %v5915
      %v6455 = vunpack.c.h.b16 %v5915
      %v6456 = vunpack.c.l.b16 %v5916
      %v6457 = vunpack.c.l.b16 %v5917
      %v6458 = vunpack.c.h.b16 %v5917
      %v6459 = vunpack.c.l.b16 %v5918
      %v6460 = vunpack.c.h.b16 %v5918
      %v6461 = vunpack.c.l.b16 %v5919
      %v6462 = vunpack.c.h.b16 %v5919
      %v6463 = vunpack.c.l.b16 %v5920
      %v6464 = vunpack.c.l.b16 %v5921
      %v6465 = vunpack.c.h.b16 %v5921
      %v6466 = vunpack.c.l.b16 %v5922
      %v6467 = vunpack.c.h.b16 %v5922
      %v6468 = vunpack.c.l.b16 %v5923
      %v6469 = vunpack.c.h.b16 %v5923
      %v6470 = vunpack.c.l.b16 %v5924
      %v6471 = vunpack.c.l.b16 %v5925
      %v6472 = vunpack.c.h.b16 %v5925
      %v6473 = vunpack.c.l.b16 %v5926
      %v6474 = vunpack.c.h.b16 %v5926
      %v6475 = vunpack.c.l.b16 %v5927
      %v6476 = vunpack.c.h.b16 %v5927
      %v6477 = vunpack.c.l.b16 %v5928
      %v6478 = vunpack.c.l.b16 %v5929
      %v6479 = vunpack.c.h.b16 %v5929
      %v6480 = vunpack.c.l.b16 %v5930
      %v6481 = vunpack.c.h.b16 %v5930
      %v6482 = vunpack.c.l.b16 %v5931
      %v6483 = vunpack.c.h.b16 %v5931
      %v6484 = vunpack.c.l.b16 %v5932
      %v6485 = vunpack.c.l.b16 %v5933
      %v6486 = vunpack.c.h.b16 %v5933
      %v6487 = vunpack.c.l.b16 %v5934
      %v6488 = vunpack.c.h.b16 %v5934
      %v6489 = vunpack.c.l.b16 %v5935
      %v6490 = vunpack.c.h.b16 %v5935
      %v6491 = vunpack.c.l.b16 %v5936
      %v6492 = vunpack.c.l.b16 %v5937
      %v6493 = vunpack.c.h.b16 %v5937
      %v6494 = vunpack.c.l.b16 %v5938
      %v6495 = vunpack.c.h.b16 %v5938
      %v6496 = vunpack.c.l.b16 %v5939
      %v6497 = vunpack.c.h.b16 %v5939
      %v6498 = vunpack.c.l.b16 %v5940
      %v6499 = vunpack.c.l.b16 %v5941
      %v6500 = vunpack.c.h.b16 %v5941
      %v6501 = vunpack.c.l.b16 %v5942
      %v6502 = vunpack.c.h.b16 %v5942
      %v6503 = vunpack.c.l.b16 %v5943
      %v6504 = vunpack.c.h.b16 %v5943
      %v6505 = vunpack.c.l.b16 %v5944
      %v6506 = vunpack.c.l.b16 %v5945
      %v6507 = vunpack.c.h.b16 %v5945
      %v6508 = vunpack.c.l.b16 %v5946
      %v6509 = vunpack.c.h.b16 %v5946
      %v6510 = vunpack.c.l.b16 %v5947
      %v6511 = vunpack.c.h.b16 %v5947
      %v6512 = vunpack.c.l.b16 %v5948
      %v6513 = vunpack.c.l.b16 %v5949
      %v6514 = vunpack.c.h.b16 %v5949
      %v6515 = vunpack.c.l.b16 %v5950
      %v6516 = vunpack.c.h.b16 %v5950
      %v6517 = vunpack.c.l.b16 %v5951
      %v6518 = vunpack.c.h.b16 %v5951
      %v6519 = vunpack.c.l.b16 %v5952
      %v6520 = vunpack.c.l.b16 %v5953
      %v6521 = vunpack.c.h.b16 %v5953
      %v6522 = vunpack.c.l.b16 %v5954
      %v6523 = vunpack.c.h.b16 %v5954
      %v6524 = vunpack.c.l.b16 %v5955
      %v6525 = vunpack.c.h.b16 %v5955
      %v6526 = vunpack.c.l.b16 %v5956
      %v6527 = vunpack.c.l.b16 %v5957
      %v6528 = vunpack.c.h.b16 %v5957
      %v6529 = vunpack.c.l.b16 %v5958
      %v6530 = vunpack.c.h.b16 %v5958
      %v6531 = vunpack.c.l.b16 %v5959
      %v6532 = vunpack.c.h.b16 %v5959
      %v6533 = vunpack.c.l.b16 %v5960
      %v6534 = vunpack.c.l.b16 %v5961
      %v6535 = vunpack.c.h.b16 %v5961
      %v6536 = vunpack.c.l.b16 %v5962
      %v6537 = vunpack.c.h.b16 %v5962
      %v6538 = vunpack.c.l.b16 %v5963
      %v6539 = vunpack.c.h.b16 %v5963
      %v6540 = vunpack.c.l.b16 %v5964
      %v6541 = vunpack.c.l.b16 %v5965
      %v6542 = vunpack.c.h.b16 %v5965
      %v6543 = vunpack.c.l.b16 %v5966
      %v6544 = vunpack.c.h.b16 %v5966
      %v6545 = vunpack.c.l.b16 %v5967
      %v6546 = vunpack.c.h.b16 %v5967
      %v6547 = vunpack.c.l.b16 %v5968
      %v6548 = vunpack.c.l.b16 %v5969
      %v6549 = vunpack.c.h.b16 %v5969
      %v6550 = vunpack.c.l.b16 %v5970
      %v6551 = vunpack.c.h.b16 %v5970
      %v6552 = vunpack.c.l.b16 %v5971
      %v6553 = vunpack.c.h.b16 %v5971
      %v6554 = vunpack.c.l.b16 %v5972
      %v6555 = vunpack.c.l.b16 %v5973
      %v6556 = vunpack.c.h.b16 %v5973
      %v6557 = vunpack.c.l.b16 %v5974
      %v6558 = vunpack.c.h.b16 %v5974
      %v6559 = vunpack.c.l.b16 %v5975
      %v6560 = vunpack.c.h.b16 %v5975
      %v6561 = vunpack.c.l.b16 %v5976
      %v6562 = vunpack.c.l.b16 %v5977
      %v6563 = vunpack.c.h.b16 %v5977
      %v6564 = vunpack.c.l.b16 %v5978
      %v6565 = vunpack.c.h.b16 %v5978
      %v6566 = vunpack.c.l.b16 %v5979
      %v6567 = vunpack.c.h.b16 %v5979
      %v6568 = vunpack.c.l.b16 %v5980
      %v6569 = vunpack.c.l.b16 %v5981
      %v6570 = vunpack.c.h.b16 %v5981
      %v6571 = vunpack.c.l.b16 %v5982
      %v6572 = vunpack.c.h.b16 %v5982
      %v6573 = vunpack.c.l.b16 %v5983
      %v6574 = vunpack.c.h.b16 %v5983
      %v6575 = vunpack.c.l.b16 %v5984
      %v6576 = vunpack.c.l.b16 %v5985
      %v6577 = vunpack.c.h.b16 %v5985
      %v6578 = vunpack.c.l.b16 %v5986
      %v6579 = vunpack.c.h.b16 %v5986
      %v6580 = vunpack.c.l.b16 %v5987
      %v6581 = vunpack.c.h.b16 %v5987
      %v6582 = vunpack.c.l.b16 %v5988
      %v6583 = vunpack.c.l.b16 %v5989
      %v6584 = vunpack.c.h.b16 %v5989
      %v6585 = vunpack.c.l.b16 %v5990
      %v6586 = vunpack.c.h.b16 %v5990
      %v6587 = vunpack.c.l.b16 %v5991
      %v6588 = vunpack.c.h.b16 %v5991
      %v6589 = vunpack.c.l.b16 %v5992
      %v6590 = vunpack.c.l.b16 %v5993
      %v6591 = vunpack.c.h.b16 %v5993
      %v6592 = vunpack.c.l.b16 %v5994
      %v6593 = vunpack.c.h.b16 %v5994
      %v6594 = vunpack.c.l.b16 %v5995
      %v6595 = vunpack.c.h.b16 %v5995
      %v6596 = vunpack.c.l.b16 %v5996
      %v6597 = vunpack.c.l.b16 %v5997
      %v6598 = vunpack.c.h.b16 %v5997
      %v6599 = vunpack.c.l.b16 %v5998
      %v6600 = vunpack.c.h.b16 %v5998
      %v6601 = vunpack.c.l.b16 %v5999
      %v6602 = vunpack.c.h.b16 %v5999
      %v6603 = vunpack.c.l.b16 %v6000
      %v6604 = vunpack.c.l.b16 %v6001
      %v6605 = vunpack.c.h.b16 %v6001
      %v6606 = vunpack.c.l.b16 %v6002
      %v6607 = vunpack.c.h.b16 %v6002
      %v6608 = vunpack.c.l.b16 %v6003
      %v6609 = vunpack.c.h.b16 %v6003
      %v6610 = vunpack.c.l.b16 %v6004
      %v6611 = vunpack.c.l.b16 %v6005
      %v6612 = vunpack.c.h.b16 %v6005
      %v6613 = vunpack.c.l.b16 %v6006
      %v6614 = vunpack.c.h.b16 %v6006
      %v6615 = vunpack.c.l.b16 %v6007
      %v6616 = vunpack.c.h.b16 %v6007
      %v6617 = vunpack.c.l.b16 %v6008
      %v6618 = vunpack.c.l.b16 %v6009
      %v6619 = vunpack.c.h.b16 %v6009
      %v6620 = vunpack.c.l.b16 %v6010
      %v6621 = vunpack.c.h.b16 %v6010
      %v6622 = vunpack.c.l.b16 %v6011
      %v6623 = vunpack.c.h.b16 %v6011
      %v6624 = vunpack.c.l.b16 %v6012
      %v6625 = vunpack.c.l.b16 %v6013
      %v6626 = vunpack.c.h.b16 %v6013
      %v6627 = vunpack.c.l.b16 %v6014
      %v6628 = vunpack.c.h.b16 %v6014
      %v6629 = vunpack.c.l.b16 %v6015
      %v6630 = vunpack.c.h.b16 %v6015
      %v6631 = vunpack.c.l.b16 %v6016
      %v6632 = vunpack.c.l.b16 %v6017
      %v6633 = vunpack.c.h.b16 %v6017
      %v6634 = vunpack.c.l.b16 %v6018
      %v6635 = vunpack.c.h.b16 %v6018
      %v6636 = vunpack.c.l.b16 %v6019
      %v6637 = vunpack.c.h.b16 %v6019
      %v6638 = vunpack.c.l.b16 %v6020
      %v6639 = vunpack.c.l.b16 %v6021
      %v6640 = vunpack.c.h.b16 %v6021
      %v6641 = vunpack.c.l.b16 %v6022
      %v6642 = vunpack.c.h.b16 %v6022
      %v6643 = vunpack.c.l.b16 %v6023
      %v6644 = vunpack.c.h.b16 %v6023
      %v6645 = vunpack.c.l.b16 %v6024
      %v6646 = vunpack.c.l.b16 %v6025
      %v6647 = vunpack.c.h.b16 %v6025
      %v6648 = vunpack.c.l.b16 %v6026
      %v6649 = vunpack.c.h.b16 %v6026
      %v6650 = vunpack.c.l.b16 %v6027
      %v6651 = vunpack.c.h.b16 %v6027
      %v6652 = vunpack.c.l.b16 %v6028
      %v6653 = vunpack.c.l.b16 %v6029
      %v6654 = vunpack.c.h.b16 %v6029
      %v6655 = vunpack.c.l.b16 %v6030
      %v6656 = vunpack.c.h.b16 %v6030
      %v6657 = vunpack.c.l.b16 %v6031
      %v6658 = vunpack.c.h.b16 %v6031
      %v6659 = vunpack.c.l.b16 %v6032
      %v6660 = vunpack.c.l.b16 %v6033
      %v6661 = vunpack.c.h.b16 %v6033
      %v6662 = vunpack.c.l.b16 %v6034
      %v6663 = vunpack.c.h.b16 %v6034
      %v6664 = vunpack.c.l.b16 %v6035
      %v6665 = vunpack.c.h.b16 %v6035
      %v6666 = vunpack.c.l.b16 %v6036
      %v6667 = vunpack.c.l.b16 %v6037
      %v6668 = vunpack.c.h.b16 %v6037
      %v6669 = vunpack.c.l.b16 %v6038
      %v6670 = vunpack.c.h.b16 %v6038
      %v6671 = vunpack.c.l.b16 %v6039
      %v6672 = vunpack.c.h.b16 %v6039
      %v6673 = vunpack.c.l.b16 %v6040
      %v6674 = vunpack.c.l.b16 %v6041
      %v6675 = vunpack.c.h.b16 %v6041
      %v6676 = vunpack.c.l.b16 %v6042
      %v6677 = vunpack.c.h.b16 %v6042
      %v6678 = vunpack.c.l.b16 %v6043
      %v6679 = vunpack.c.h.b16 %v6043
      %v6680 = vunpack.c.l.b16 %v6044
      %v6681 = vunpack.c.l.b16 %v6045
      %v6682 = vunpack.c.h.b16 %v6045
      %v6683 = vunpack.c.l.b16 %v6046
      %v6684 = vunpack.c.h.b16 %v6046
      %v6685 = vunpack.c.l.b16 %v6047
      %v6686 = vunpack.c.h.b16 %v6047
      %v6687 = vunpack.c.l.b16 %v6048
      %v6688 = vunpack.c.l.b16 %v6049
      %v6689 = vunpack.c.h.b16 %v6049
      %v6690 = vunpack.c.l.b16 %v6050
      %v6691 = vunpack.c.h.b16 %v6050
      %v6692 = vunpack.c.l.b16 %v6051
      %v6693 = vunpack.c.h.b16 %v6051
      %v6694 = vunpack.c.l.b16 %v6052
      %v6695 = vunpack.c.l.b16 %v6053
      %v6696 = vunpack.c.h.b16 %v6053
      %v6697 = vunpack.c.l.b16 %v6054
      %v6698 = vunpack.c.h.b16 %v6054
      %v6699 = vunpack.c.l.b16 %v6055
      %v6700 = vunpack.c.h.b16 %v6055
      %v6701 = vunpack.c.l.b16 %v6056
      %v6702 = vunpack.c.l.b16 %v6057
      %v6703 = vunpack.c.h.b16 %v6057
      %v6704 = vunpack.c.l.b16 %v6058
      %v6705 = vunpack.c.h.b16 %v6058
      %v6706 = vunpack.c.l.b16 %v6059
      %v6707 = vunpack.c.h.b16 %v6059
      %v6708 = vunpack.c.l.b16 %v6060
      %v6709 = vunpack.c.l.b16 %v6061
      %v6710 = vunpack.c.h.b16 %v6061
      %v6711 = vunpack.c.l.b16 %v6062
      %v6712 = vunpack.c.h.b16 %v6062
      %v6713 = vunpack.c.l.b16 %v6063
      %v6714 = vunpack.c.h.b16 %v6063
      %v6715 = vunpack.c.l.b16 %v6064
      %v6716 = vunpack.c.l.b16 %v6065
      %v6717 = vunpack.c.h.b16 %v6065
      %v6718 = vunpack.c.l.b16 %v6066
      %v6719 = vunpack.c.h.b16 %v6066
      %v6720 = vunpack.c.l.b16 %v6067
      %v6721 = vunpack.c.h.b16 %v6067
      %v6722 = vunpack.c.l.b16 %v6068
      %v6723 = vunpack.c.l.b16 %v6069
      %v6724 = vunpack.c.h.b16 %v6069
      %v6725 = vunpack.c.l.b16 %v6070
      %v6726 = vunpack.c.h.b16 %v6070
      %v6727 = vunpack.c.l.b16 %v6071
      %v6728 = vunpack.c.h.b16 %v6071
      %v6729 = vunpack.c.l.b16 %v6072
      %v6730 = vunpack.c.l.b16 %v6073
      %v6731 = vunpack.c.h.b16 %v6073
      %v6732 = vunpack.c.l.b16 %v6074
      %v6733 = vunpack.c.h.b16 %v6074
      %v6734 = vunpack.c.l.b16 %v6075
      %v6735 = vunpack.c.h.b16 %v6075
      %v6736 = vunpack.c.l.b16 %v6076
      %v6737 = vunpack.c.l.b16 %v6077
      %v6738 = vunpack.c.h.b16 %v6077
      %v6739 = vunpack.c.l.b16 %v6078
      %v6740 = vunpack.c.h.b16 %v6078
      %v6741 = vunpack.c.l.b16 %v6079
      %v6742 = vunpack.c.h.b16 %v6079
      %v6743 = vunpack.c.l.b16 %v6080
      %v6744 = vunpack.c.l.b16 %v6081
      %v6745 = vunpack.c.h.b16 %v6081
      %v6746 = vunpack.c.l.b16 %v6082
      %v6747 = vunpack.c.h.b16 %v6082
      %v6748 = vunpack.c.l.b16 %v6083
      %v6749 = vunpack.c.h.b16 %v6083
      %v6750 = vunpack.c.l.b16 %v6084
      %v6751 = vunpack.c.l.b16 %v6085
      %v6752 = vunpack.c.h.b16 %v6085
      %v6753 = vunpack.c.l.b16 %v6086
      %v6754 = vunpack.c.h.b16 %v6086
      %v6755 = vunpack.c.l.b16 %v6087
      %v6756 = vunpack.c.h.b16 %v6087
      %v6757 = vunpack.c.l.b16 %v6088
      %v6758 = vunpack.c.l.b16 %v6089
      %v6759 = vunpack.c.h.b16 %v6089
      %v6760 = vunpack.c.l.b16 %v6090
      %v6761 = vunpack.c.h.b16 %v6090
      %v6762 = vunpack.c.l.b16 %v6091
      %v6763 = vunpack.c.h.b16 %v6091
      %v6764 = vunpack.c.l.b16 %v6092
      %v6765 = vunpack.c.l.b16 %v6093
      %v6766 = vunpack.c.h.b16 %v6093
      %v6767 = vunpack.c.l.b16 %v6094
      %v6768 = vunpack.c.h.b16 %v6094
      %v6769 = vunpack.c.l.b16 %v6095
      %v6770 = vunpack.c.h.b16 %v6095
      %v6771 = vunpack.c.l.b16 %v6096
      %v6772 = vunpack.c.l.b16 %v6097
      %v6773 = vunpack.c.h.b16 %v6097
      %v6774 = vunpack.c.l.b16 %v6098
      %v6775 = vunpack.c.h.b16 %v6098
      %v6776 = vunpack.c.l.b16 %v6099
      %v6777 = vunpack.c.h.b16 %v6099
      %v6778 = vunpack.c.l.b16 %v6100
      %v6779 = vunpack.c.l.b16 %v6101
      %v6780 = vunpack.c.h.b16 %v6101
      %v6781 = vunpack.c.l.b16 %v6102
      %v6782 = vunpack.c.h.b16 %v6102
      %v6783 = vunpack.c.l.b16 %v6103
      %v6784 = vunpack.c.h.b16 %v6103
      %v6785 = vunpack.c.l.b16 %v6104
      %v6786 = vunpack.c.l.b16 %v6105
      %v6787 = vunpack.c.h.b16 %v6105
      %v6788 = vunpack.c.l.b16 %v6106
      %v6789 = vunpack.c.h.b16 %v6106
      %v6790 = vunpack.c.l.b16 %v6107
      %v6791 = vunpack.c.h.b16 %v6107
      %v6792 = vunpack.c.l.b16 %v6108
      %v6793 = vunpack.c.l.b16 %v6109
      %v6794 = vunpack.c.h.b16 %v6109
      %v6795 = vunpack.c.l.b16 %v6110
      %v6796 = vunpack.c.h.b16 %v6110
      %v6797 = vunpack.c.l.b16 %v6111
      %v6798 = vunpack.c.h.b16 %v6111
      %v6799 = vunpack.c.l.b16 %v6112
      %v6800 = vunpack.c.l.b16 %v6113
      %v6801 = vunpack.c.h.b16 %v6113
      %v6802 = vunpack.c.l.b16 %v6114
      %v6803 = vunpack.c.h.b16 %v6114
      %v6804 = vunpack.c.l.b16 %v6115
      %v6805 = vunpack.c.h.b16 %v6115
      %v6806 = vunpack.c.l.b16 %v6116
      %v6807 = vunpack.c.l.b16 %v6117
      %v6808 = vunpack.c.h.b16 %v6117
      %v6809 = vunpack.c.l.b16 %v6118
      %v6810 = vunpack.c.h.b16 %v6118
      %v6811 = vunpack.c.l.b16 %v6119
      %v6812 = vunpack.c.h.b16 %v6119
      %v6813 = vunpack.c.l.b16 %v6120
      %v6814 = vunpack.c.l.b16 %v6121
      %v6815 = vunpack.c.h.b16 %v6121
      %v6816 = vunpack.c.l.b16 %v6122
      %v6817 = vunpack.c.h.b16 %v6122
      %v6818 = vunpack.c.l.b16 %v6123
      %v6819 = vunpack.c.h.b16 %v6123
      %v6820 = vunpack.c.l.b16 %v6124
      %v6821 = vunpack.c.l.b16 %v6125
      %v6822 = vunpack.c.h.b16 %v6125
      %v6823 = vunpack.c.l.b16 %v6126
      %v6824 = vunpack.c.h.b16 %v6126
      %v6825 = vunpack.c.l.b16 %v6127
      %v6826 = vunpack.c.h.b16 %v6127
      %v6827 = vunpack.c.l.b16 %v6128
      %v6828 = vunpack.c.l.b16 %v6129
      %v6829 = vunpack.c.h.b16 %v6129
      %v6830 = vunpack.c.l.b16 %v6130
      %v6831 = vunpack.c.h.b16 %v6130
      %v6832 = vunpack.c.l.b16 %v6131
      %v6833 = vunpack.c.h.b16 %v6131
      %v6834 = vunpack.c.l.b16 %v6132
      %v6835 = vunpack.c.l.b16 %v6133
      %v6836 = vunpack.c.h.b16 %v6133
      %v6837 = vunpack.c.l.b16 %v6134
      %v6838 = vunpack.c.h.b16 %v6134
      %v6839 = vunpack.c.l.b16 %v6135
      %v6840 = vunpack.c.h.b16 %v6135
      %v6841 = vunpack.c.l.b16 %v6136
      %v6842 = vunpack.c.l.b16 %v6137
      %v6843 = vunpack.c.h.b16 %v6137
      %v6844 = vunpack.c.l.b16 %v6138
      %v6845 = vunpack.c.h.b16 %v6138
      %v6846 = vunpack.c.l.b16 %v6139
      %v6847 = vunpack.c.h.b16 %v6139
      %v6848 = vunpack.c.l.b16 %v6140
      %v6849 = vunpack.c.l.b16 %v6141
      %v6850 = vunpack.c.h.b16 %v6141
      %v6851 = vunpack.c.l.b16 %v6142
      %v6852 = vunpack.c.h.b16 %v6142
      %v6853 = vunpack.c.l.b16 %v6143
      %v6854 = vunpack.c.h.b16 %v6143
      %v6855 = vunpack.c.l.b16 %v6144
      %v6856 = vunpack.c.l.b16 %v6145
      %v6857 = vunpack.c.h.b16 %v6145
      %v6858 = vunpack.c.l.b16 %v6146
      %v6859 = vunpack.c.h.b16 %v6146
      %v6860 = vunpack.c.l.b16 %v6147
      %v6861 = vunpack.c.h.b16 %v6147
      %v6862 = vunpack.c.l.b16 %v6148
      %v6863 = vunpack.c.l.b16 %v6149
      %v6864 = vunpack.c.h.b16 %v6149
      %v6865 = vunpack.c.l.b16 %v6150
      %v6866 = vunpack.c.h.b16 %v6150
      %v6867 = vunpack.c.l.b16 %v6151
      %v6868 = vunpack.c.h.b16 %v6151
      %v6869 = vunpack.c.l.b16 %v6152
      %v6870 = vunpack.c.l.b16 %v6153
      %v6871 = vunpack.c.h.b16 %v6153
      %v6872 = vunpack.c.l.b16 %v6154
      %v6873 = vunpack.c.h.b16 %v6154
      %v6874 = vunpack.c.l.b16 %v6155
      %v6875 = vunpack.c.h.b16 %v6155
      %v6876 = vunpack.c.l.b16 %v6156
      %v6877 = vpack.c.b16 %v6436, %v6429
      %v6878 = vpack.c.b16 %v6437, %v6430
      %v6879 = vpack.c.b16 %v6438, %v6431
      %v6880 = vpack.c.b16 %v6439, %v6432
      %v6881 = vpack.c.b16 %v6440, %v6433
      %v6882 = vpack.c.b16 %v6441, %v6434
      %v6883 = vpack.c.b16 %v6442, %v6435
      %v6884 = vpack.c.b16 %v6450, %v6443
      %v6885 = vpack.c.b16 %v6451, %v6444
      %v6886 = vpack.c.b16 %v6452, %v6445
      %v6887 = vpack.c.b16 %v6453, %v6446
      %v6888 = vpack.c.b16 %v6454, %v6447
      %v6889 = vpack.c.b16 %v6455, %v6448
      %v6890 = vpack.c.b16 %v6456, %v6449
      %v6891 = vpack.c.b16 %v6464, %v6457
      %v6892 = vpack.c.b16 %v6465, %v6458
      %v6893 = vpack.c.b16 %v6466, %v6459
      %v6894 = vpack.c.b16 %v6467, %v6460
      %v6895 = vpack.c.b16 %v6468, %v6461
      %v6896 = vpack.c.b16 %v6469, %v6462
      %v6897 = vpack.c.b16 %v6470, %v6463
      %v6898 = vpack.c.b16 %v6478, %v6471
      %v6899 = vpack.c.b16 %v6479, %v6472
      %v6900 = vpack.c.b16 %v6480, %v6473
      %v6901 = vpack.c.b16 %v6481, %v6474
      %v6902 = vpack.c.b16 %v6482, %v6475
      %v6903 = vpack.c.b16 %v6483, %v6476
      %v6904 = vpack.c.b16 %v6484, %v6477
      %v6905 = vpack.c.b16 %v6492, %v6485
      %v6906 = vpack.c.b16 %v6493, %v6486
      %v6907 = vpack.c.b16 %v6494, %v6487
      %v6908 = vpack.c.b16 %v6495, %v6488
      %v6909 = vpack.c.b16 %v6496, %v6489
      %v6910 = vpack.c.b16 %v6497, %v6490
      %v6911 = vpack.c.b16 %v6498, %v6491
      %v6912 = vpack.c.b16 %v6506, %v6499
      %v6913 = vpack.c.b16 %v6507, %v6500
      %v6914 = vpack.c.b16 %v6508, %v6501
      %v6915 = vpack.c.b16 %v6509, %v6502
      %v6916 = vpack.c.b16 %v6510, %v6503
      %v6917 = vpack.c.b16 %v6511, %v6504
      %v6918 = vpack.c.b16 %v6512, %v6505
      %v6919 = vpack.c.b16 %v6520, %v6513
      %v6920 = vpack.c.b16 %v6521, %v6514
      %v6921 = vpack.c.b16 %v6522, %v6515
      %v6922 = vpack.c.b16 %v6523, %v6516
      %v6923 = vpack.c.b16 %v6524, %v6517
      %v6924 = vpack.c.b16 %v6525, %v6518
      %v6925 = vpack.c.b16 %v6526, %v6519
      %v6926 = vpack.c.b16 %v6534, %v6527
      %v6927 = vpack.c.b16 %v6535, %v6528
      %v6928 = vpack.c.b16 %v6536, %v6529
      %v6929 = vpack.c.b16 %v6537, %v6530
      %v6930 = vpack.c.b16 %v6538, %v6531
      %v6931 = vpack.c.b16 %v6539, %v6532
      %v6932 = vpack.c.b16 %v6540, %v6533
      %v6933 = vpack.c.b16 %v6548, %v6541
      %v6934 = vpack.c.b16 %v6549, %v6542
      %v6935 = vpack.c.b16 %v6550, %v6543
      %v6936 = vpack.c.b16 %v6551, %v6544
      %v6937 = vpack.c.b16 %v6552, %v6545
      %v6938 = vpack.c.b16 %v6553, %v6546
      %v6939 = vpack.c.b16 %v6554, %v6547
      %v6940 = vpack.c.b16 %v6562, %v6555
      %v6941 = vpack.c.b16 %v6563, %v6556
      %v6942 = vpack.c.b16 %v6564, %v6557
      %v6943 = vpack.c.b16 %v6565, %v6558
      %v6944 = vpack.c.b16 %v6566, %v6559
      %v6945 = vpack.c.b16 %v6567, %v6560
      %v6946 = vpack.c.b16 %v6568, %v6561
      %v6947 = vpack.c.b16 %v6576, %v6569
      %v6948 = vpack.c.b16 %v6577, %v6570
      %v6949 = vpack.c.b16 %v6578, %v6571
      %v6950 = vpack.c.b16 %v6579, %v6572
      %v6951 = vpack.c.b16 %v6580, %v6573
      %v6952 = vpack.c.b16 %v6581, %v6574
      %v6953 = vpack.c.b16 %v6582, %v6575
      %v6954 = vpack.c.b16 %v6590, %v6583
      %v6955 = vpack.c.b16 %v6591, %v6584
      %v6956 = vpack.c.b16 %v6592, %v6585
      %v6957 = vpack.c.b16 %v6593, %v6586
      %v6958 = vpack.c.b16 %v6594, %v6587
      %v6959 = vpack.c.b16 %v6595, %v6588
      %v6960 = vpack.c.b16 %v6596, %v6589
      %v6961 = vpack.c.b16 %v6604, %v6597
      %v6962 = vpack.c.b16 %v6605, %v6598
      %v6963 = vpack.c.b16 %v6606, %v6599
      %v6964 = vpack.c.b16 %v6607, %v6600
      %v6965 = vpack.c.b16 %v6608, %v6601
      %v6966 = vpack.c.b16 %v6609, %v6602
      %v6967 = vpack.c.b16 %v6610, %v6603
      %v6968 = vpack.c.b16 %v6618, %v6611
      %v6969 = vpack.c.b16 %v6619, %v6612
      %v6970 = vpack.c.b16 %v6620, %v6613
      %v6971 = vpack.c.b16 %v6621, %v6614
      %v6972 = vpack.c.b16 %v6622, %v6615
      %v6973 = vpack.c.b16 %v6623, %v6616
      %v6974 = vpack.c.b16 %v6624, %v6617
      %v6975 = vpack.c.b16 %v6632, %v6625
      %v6976 = vpack.c.b16 %v6633, %v6626
      %v6977 = vpack.c.b16 %v6634, %v6627
      %v6978 = vpack.c.b16 %v6635, %v6628
      %v6979 = vpack.c.b16 %v6636, %v6629
      %v6980 = vpack.c.b16 %v6637, %v6630
      %v6981 = vpack.c.b16 %v6638, %v6631
      %v6982 = vpack.c.b16 %v6646, %v6639
      %v6983 = vpack.c.b16 %v6647, %v6640
      %v6984 = vpack.c.b16 %v6648, %v6641
      %v6985 = vpack.c.b16 %v6649, %v6642
      %v6986 = vpack.c.b16 %v6650, %v6643
      %v6987 = vpack.c.b16 %v6651, %v6644
      %v6988 = vpack.c.b16 %v6652, %v6645
      %v6989 = vpack.c.b16 %v6660, %v6653
      %v6990 = vpack.c.b16 %v6661, %v6654
      %v6991 = vpack.c.b16 %v6662, %v6655
      %v6992 = vpack.c.b16 %v6663, %v6656
      %v6993 = vpack.c.b16 %v6664, %v6657
      %v6994 = vpack.c.b16 %v6665, %v6658
      %v6995 = vpack.c.b16 %v6666, %v6659
      %v6996 = vpack.c.b16 %v6674, %v6667
      %v6997 = vpack.c.b16 %v6675, %v6668
      %v6998 = vpack.c.b16 %v6676, %v6669
      %v6999 = vpack.c.b16 %v6677, %v6670
      %v7000 = vpack.c.b16 %v6678, %v6671
      %v7001 = vpack.c.b16 %v6679, %v6672
      %v7002 = vpack.c.b16 %v6680, %v6673
      %v7003 = vpack.c.b16 %v6688, %v6681
      %v7004 = vpack.c.b16 %v6689, %v6682
      %v7005 = vpack.c.b16 %v6690, %v6683
      %v7006 = vpack.c.b16 %v6691, %v6684
      %v7007 = vpack.c.b16 %v6692, %v6685
      %v7008 = vpack.c.b16 %v6693, %v6686
      %v7009 = vpack.c.b16 %v6694, %v6687
      %v7010 = vpack.c.b16 %v6702, %v6695
      %v7011 = vpack.c.b16 %v6703, %v6696
      %v7012 = vpack.c.b16 %v6704, %v6697
      %v7013 = vpack.c.b16 %v6705, %v6698
      %v7014 = vpack.c.b16 %v6706, %v6699
      %v7015 = vpack.c.b16 %v6707, %v6700
      %v7016 = vpack.c.b16 %v6708, %v6701
      %v7017 = vpack.c.b16 %v6716, %v6709
      %v7018 = vpack.c.b16 %v6717, %v6710
      %v7019 = vpack.c.b16 %v6718, %v6711
      %v7020 = vpack.c.b16 %v6719, %v6712
      %v7021 = vpack.c.b16 %v6720, %v6713
      %v7022 = vpack.c.b16 %v6721, %v6714
      %v7023 = vpack.c.b16 %v6722, %v6715
      %v7024 = vpack.c.b16 %v6730, %v6723
      %v7025 = vpack.c.b16 %v6731, %v6724
      %v7026 = vpack.c.b16 %v6732, %v6725
      %v7027 = vpack.c.b16 %v6733, %v6726
      %v7028 = vpack.c.b16 %v6734, %v6727
      %v7029 = vpack.c.b16 %v6735, %v6728
      %v7030 = vpack.c.b16 %v6736, %v6729
      %v7031 = vpack.c.b16 %v6744, %v6737
      %v7032 = vpack.c.b16 %v6745, %v6738
      %v7033 = vpack.c.b16 %v6746, %v6739
      %v7034 = vpack.c.b16 %v6747, %v6740
      %v7035 = vpack.c.b16 %v6748, %v6741
      %v7036 = vpack.c.b16 %v6749, %v6742
      %v7037 = vpack.c.b16 %v6750, %v6743
      %v7038 = vpack.c.b16 %v6758, %v6751
      %v7039 = vpack.c.b16 %v6759, %v6752
      %v7040 = vpack.c.b16 %v6760, %v6753
      %v7041 = vpack.c.b16 %v6761, %v6754
      %v7042 = vpack.c.b16 %v6762, %v6755
      %v7043 = vpack.c.b16 %v6763, %v6756
      %v7044 = vpack.c.b16 %v6764, %v6757
      %v7045 = vpack.c.b16 %v6772, %v6765
      %v7046 = vpack.c.b16 %v6773, %v6766
      %v7047 = vpack.c.b16 %v6774, %v6767
      %v7048 = vpack.c.b16 %v6775, %v6768
      %v7049 = vpack.c.b16 %v6776, %v6769
      %v7050 = vpack.c.b16 %v6777, %v6770
      %v7051 = vpack.c.b16 %v6778, %v6771
      %v7052 = vpack.c.b16 %v6786, %v6779
      %v7053 = vpack.c.b16 %v6787, %v6780
      %v7054 = vpack.c.b16 %v6788, %v6781
      %v7055 = vpack.c.b16 %v6789, %v6782
      %v7056 = vpack.c.b16 %v6790, %v6783
      %v7057 = vpack.c.b16 %v6791, %v6784
      %v7058 = vpack.c.b16 %v6792, %v6785
      %v7059 = vpack.c.b16 %v6800, %v6793
      %v7060 = vpack.c.b16 %v6801, %v6794
      %v7061 = vpack.c.b16 %v6802, %v6795
      %v7062 = vpack.c.b16 %v6803, %v6796
      %v7063 = vpack.c.b16 %v6804, %v6797
      %v7064 = vpack.c.b16 %v6805, %v6798
      %v7065 = vpack.c.b16 %v6806, %v6799
      %v7066 = vpack.c.b16 %v6814, %v6807
      %v7067 = vpack.c.b16 %v6815, %v6808
      %v7068 = vpack.c.b16 %v6816, %v6809
      %v7069 = vpack.c.b16 %v6817, %v6810
      %v7070 = vpack.c.b16 %v6818, %v6811
      %v7071 = vpack.c.b16 %v6819, %v6812
      %v7072 = vpack.c.b16 %v6820, %v6813
      %v7073 = vpack.c.b16 %v6828, %v6821
      %v7074 = vpack.c.b16 %v6829, %v6822
      %v7075 = vpack.c.b16 %v6830, %v6823
      %v7076 = vpack.c.b16 %v6831, %v6824
      %v7077 = vpack.c.b16 %v6832, %v6825
      %v7078 = vpack.c.b16 %v6833, %v6826
      %v7079 = vpack.c.b16 %v6834, %v6827
      %v7080 = vpack.c.b16 %v6842, %v6835
      %v7081 = vpack.c.b16 %v6843, %v6836
      %v7082 = vpack.c.b16 %v6844, %v6837
      %v7083 = vpack.c.b16 %v6845, %v6838
      %v7084 = vpack.c.b16 %v6846, %v6839
      %v7085 = vpack.c.b16 %v6847, %v6840
      %v7086 = vpack.c.b16 %v6848, %v6841
      %v7087 = vpack.c.b16 %v6856, %v6849
      %v7088 = vpack.c.b16 %v6857, %v6850
      %v7089 = vpack.c.b16 %v6858, %v6851
      %v7090 = vpack.c.b16 %v6859, %v6852
      %v7091 = vpack.c.b16 %v6860, %v6853
      %v7092 = vpack.c.b16 %v6861, %v6854
      %v7093 = vpack.c.b16 %v6862, %v6855
      %v7094 = vpack.c.b16 %v6870, %v6863
      %v7095 = vpack.c.b16 %v6871, %v6864
      %v7096 = vpack.c.b16 %v6872, %v6865
      %v7097 = vpack.c.b16 %v6873, %v6866
      %v7098 = vpack.c.b16 %v6874, %v6867
      %v7099 = vpack.c.b16 %v6875, %v6868
      %v7100 = vpack.c.b16 %v6876, %v6869
      %7325 = vmatpush.bf16.msra.mxu0 %v6926
      %7326 = vmatpush.bf16.msra.mxu0 %v6919
      %7327 = vmatpush.bf16.msra.mxu0 %v6912
      %7328 = vmatpush.bf16.msra.mxu0 %v6905
      %7329 = vmatpush.bf16.msra.mxu0 %v6898
      %7330 = vmatpush.bf16.msra.mxu0 %v6891
      %7331 = vmatpush.bf16.msra.mxu0 %v6884
      %7332 = vmatpush.bf16.msra.mxu0 %v6877
      %7333 = vmatmul.bf16.gmra.mxu0 %v5869
      %v7334 = vpop.f32.mrf.mxu0
      %v7335 = vadd.f32 %v6159, %v7334
      %v7336 = vpop.f32.mrf.mxu0
      %v7337 = vadd.f32 %v6159, %v7336
      %7338 = vmatmul.bf16.gmra.mxu0 %v5873
      %v7339 = vpop.f32.mrf.mxu0
      %v7340 = vadd.f32 %v6159, %v7339
      %v7341 = vpop.f32.mrf.mxu0
      %v7342 = vadd.f32 %v6159, %v7341
      %7343 = vmatmul.bf16.gmra.mxu0 %v5877
      %v7344 = vpop.f32.mrf.mxu0
      %v7345 = vadd.f32 %v6159, %v7344
      %v7346 = vpop.f32.mrf.mxu0
      %v7347 = vadd.f32 %v6159, %v7346
      %7348 = vmatmul.bf16.gmra.mxu0 %v5881
      %v7349 = vpop.f32.mrf.mxu0
      %v7350 = vadd.f32 %v6159, %v7349
      %v7351 = vpop.f32.mrf.mxu0
      %v7352 = vadd.f32 %v6159, %v7351
      %7353 = vmatmul.bf16.gmra.mxu0 %v5885
      %v7354 = vpop.f32.mrf.mxu0
      %v7355 = vadd.f32 %v6159, %v7354
      %v7356 = vpop.f32.mrf.mxu0
      %v7357 = vadd.f32 %v6159, %v7356
      %7358 = vmatmul.bf16.gmra.mxu0 %v5889
      %v7359 = vpop.f32.mrf.mxu0
      %v7360 = vadd.f32 %v6159, %v7359
      %v7361 = vpop.f32.mrf.mxu0
      %v7362 = vadd.f32 %v6159, %v7361
      %7363 = vmatmul.bf16.gmra.mxu0 %v5893
      %v7364 = vpop.f32.mrf.mxu0
      %v7365 = vadd.f32 %v6159, %v7364
      %v7366 = vpop.f32.mrf.mxu0
      %v7367 = vadd.f32 %v6159, %v7366
      %7368 = vmatmul.bf16.gmra.mxu0 %v5897
      %v7369 = vpop.f32.mrf.mxu0
      %v7370 = vadd.f32 %v6159, %v7369
      %v7371 = vpop.f32.mrf.mxu0
      %v7372 = vadd.f32 %v6159, %v7371
      %7373 = vdwg.mxu0
      %7374 = vmatpush.bf16.msra.mxu0 %v6982
      %7375 = vmatpush.bf16.msra.mxu0 %v6975
      %7376 = vmatpush.bf16.msra.mxu0 %v6968
      %7377 = vmatpush.bf16.msra.mxu0 %v6961
      %7378 = vmatpush.bf16.msra.mxu0 %v6954
      %7379 = vmatpush.bf16.msra.mxu0 %v6947
      %7380 = vmatpush.bf16.msra.mxu0 %v6940
      %7381 = vmatpush.bf16.msra.mxu0 %v6933
      %7382 = vmatmul.bf16.gmra.mxu0 %v5870
      %v7383 = vpop.f32.mrf.mxu0
      %v7384 = vadd.f32 %v7335, %v7383
      %v7385 = vpop.f32.mrf.mxu0
      %v7386 = vadd.f32 %v7337, %v7385
      %7387 = vmatmul.bf16.gmra.mxu0 %v5874
      %v7388 = vpop.f32.mrf.mxu0
      %v7389 = vadd.f32 %v7340, %v7388
      %v7390 = vpop.f32.mrf.mxu0
      %v7391 = vadd.f32 %v7342, %v7390
      %7392 = vmatmul.bf16.gmra.mxu0 %v5878
      %v7393 = vpop.f32.mrf.mxu0
      %v7394 = vadd.f32 %v7345, %v7393
      %v7395 = vpop.f32.mrf.mxu0
      %v7396 = vadd.f32 %v7347, %v7395
      %7397 = vmatmul.bf16.gmra.mxu0 %v5882
      %v7398 = vpop.f32.mrf.mxu0
      %v7399 = vadd.f32 %v7350, %v7398
      %v7400 = vpop.f32.mrf.mxu0
      %v7401 = vadd.f32 %v7352, %v7400
      %7402 = vmatmul.bf16.gmra.mxu0 %v5886
      %v7403 = vpop.f32.mrf.mxu0
      %v7404 = vadd.f32 %v7355, %v7403
      %v7405 = vpop.f32.mrf.mxu0
      %v7406 = vadd.f32 %v7357, %v7405
      %7407 = vmatmul.bf16.gmra.mxu0 %v5890
      %v7408 = vpop.f32.mrf.mxu0
      %v7409 = vadd.f32 %v7360, %v7408
      %v7410 = vpop.f32.mrf.mxu0
      %v7411 = vadd.f32 %v7362, %v7410
      %7412 = vmatmul.bf16.gmra.mxu0 %v5894
      %v7413 = vpop.f32.mrf.mxu0
      %v7414 = vadd.f32 %v7365, %v7413
      %v7415 = vpop.f32.mrf.mxu0
      %v7416 = vadd.f32 %v7367, %v7415
      %7417 = vmatmul.bf16.gmra.mxu0 %v5898
      %v7418 = vpop.f32.mrf.mxu0
      %v7419 = vadd.f32 %v7370, %v7418
      %v7420 = vpop.f32.mrf.mxu0
      %v7421 = vadd.f32 %v7372, %v7420
      %7422 = vdwg.mxu0
      %7423 = vmatpush.bf16.msra.mxu0 %v7038
      %7424 = vmatpush.bf16.msra.mxu0 %v7031
      %7425 = vmatpush.bf16.msra.mxu0 %v7024
      %7426 = vmatpush.bf16.msra.mxu0 %v7017
      %7427 = vmatpush.bf16.msra.mxu0 %v7010
      %7428 = vmatpush.bf16.msra.mxu0 %v7003
      %7429 = vmatpush.bf16.msra.mxu0 %v6996
      %7430 = vmatpush.bf16.msra.mxu0 %v6989
      %7431 = vmatmul.bf16.gmra.mxu0 %v5871
      %v7432 = vpop.f32.mrf.mxu0
      %v7433 = vadd.f32 %v7384, %v7432
      %v7434 = vpop.f32.mrf.mxu0
      %v7435 = vadd.f32 %v7386, %v7434
      %7436 = vmatmul.bf16.gmra.mxu0 %v5875
      %v7437 = vpop.f32.mrf.mxu0
      %v7438 = vadd.f32 %v7389, %v7437
      %v7439 = vpop.f32.mrf.mxu0
      %v7440 = vadd.f32 %v7391, %v7439
      %7441 = vmatmul.bf16.gmra.mxu0 %v5879
      %v7442 = vpop.f32.mrf.mxu0
      %v7443 = vadd.f32 %v7394, %v7442
      %v7444 = vpop.f32.mrf.mxu0
      %v7445 = vadd.f32 %v7396, %v7444
      %7446 = vmatmul.bf16.gmra.mxu0 %v5883
      %v7447 = vpop.f32.mrf.mxu0
      %v7448 = vadd.f32 %v7399, %v7447
      %v7449 = vpop.f32.mrf.mxu0
      %v7450 = vadd.f32 %v7401, %v7449
      %7451 = vmatmul.bf16.gmra.mxu0 %v5887
      %v7452 = vpop.f32.mrf.mxu0
      %v7453 = vadd.f32 %v7404, %v7452
      %v7454 = vpop.f32.mrf.mxu0
      %v7455 = vadd.f32 %v7406, %v7454
      %7456 = vmatmul.bf16.gmra.mxu0 %v5891
      %v7457 = vpop.f32.mrf.mxu0
      %v7458 = vadd.f32 %v7409, %v7457
      %v7459 = vpop.f32.mrf.mxu0
      %v7460 = vadd.f32 %v7411, %v7459
      %7461 = vmatmul.bf16.gmra.mxu0 %v5895
      %v7462 = vpop.f32.mrf.mxu0
      %v7463 = vadd.f32 %v7414, %v7462
      %v7464 = vpop.f32.mrf.mxu0
      %v7465 = vadd.f32 %v7416, %v7464
      %7466 = vmatmul.bf16.gmra.mxu0 %v5899
      %v7467 = vpop.f32.mrf.mxu0
      %v7468 = vadd.f32 %v7419, %v7467
      %v7469 = vpop.f32.mrf.mxu0
      %v7470 = vadd.f32 %v7421, %v7469
      %7471 = vdwg.mxu0
      %7472 = vmatpush.bf16.msra.mxu0 %v7094
      %7473 = vmatpush.bf16.msra.mxu0 %v7087
      %7474 = vmatpush.bf16.msra.mxu0 %v7080
      %7475 = vmatpush.bf16.msra.mxu0 %v7073
      %7476 = vmatpush.bf16.msra.mxu0 %v7066
      %7477 = vmatpush.bf16.msra.mxu0 %v7059
      %7478 = vmatpush.bf16.msra.mxu0 %v7052
      %7479 = vmatpush.bf16.msra.mxu0 %v7045
      %7480 = vmatmul.bf16.gmra.mxu0 %v5872
      %v7481 = vpop.f32.mrf.mxu0
      %v7482 = vadd.f32 %v7433, %v7481
      %v7483 = vpop.f32.mrf.mxu0
      %v7484 = vadd.f32 %v7435, %v7483
      %7485 = vmatmul.bf16.gmra.mxu0 %v5876
      %v7486 = vpop.f32.mrf.mxu0
      %v7487 = vadd.f32 %v7438, %v7486
      %v7488 = vpop.f32.mrf.mxu0
      %v7489 = vadd.f32 %v7440, %v7488
      %7490 = vmatmul.bf16.gmra.mxu0 %v5880
      %v7491 = vpop.f32.mrf.mxu0
      %v7492 = vadd.f32 %v7443, %v7491
      %v7493 = vpop.f32.mrf.mxu0
      %v7494 = vadd.f32 %v7445, %v7493
      %7495 = vmatmul.bf16.gmra.mxu0 %v5884
      %v7496 = vpop.f32.mrf.mxu0
      %v7497 = vadd.f32 %v7448, %v7496
      %v7498 = vpop.f32.mrf.mxu0
      %v7499 = vadd.f32 %v7450, %v7498
      %7500 = vmatmul.bf16.gmra.mxu0 %v5888
      %v7501 = vpop.f32.mrf.mxu0
      %v7502 = vadd.f32 %v7453, %v7501
      %v7503 = vpop.f32.mrf.mxu0
      %v7504 = vadd.f32 %v7455, %v7503
      %7505 = vmatmul.bf16.gmra.mxu0 %v5892
      %v7506 = vpop.f32.mrf.mxu0
      %v7507 = vadd.f32 %v7458, %v7506
      %v7508 = vpop.f32.mrf.mxu0
      %v7509 = vadd.f32 %v7460, %v7508
      %7510 = vmatmul.bf16.gmra.mxu0 %v5896
      %v7511 = vpop.f32.mrf.mxu0
      %v7512 = vadd.f32 %v7463, %v7511
      %v7513 = vpop.f32.mrf.mxu0
      %v7514 = vadd.f32 %v7465, %v7513
      %7515 = vmatmul.bf16.gmra.mxu0 %v5900
      %v7516 = vpop.f32.mrf.mxu0
      %v7517 = vadd.f32 %v7468, %v7516
      %v7518 = vpop.f32.mrf.mxu0
      %v7519 = vadd.f32 %v7470, %v7518
      %7520 = vdwg.mxu0
      %7521 = vmatpush.bf16.msra.mxu0 %v6927
      %7522 = vmatpush.bf16.msra.mxu0 %v6920
      %7523 = vmatpush.bf16.msra.mxu0 %v6913
      %7524 = vmatpush.bf16.msra.mxu0 %v6906
      %7525 = vmatpush.bf16.msra.mxu0 %v6899
      %7526 = vmatpush.bf16.msra.mxu0 %v6892
      %7527 = vmatpush.bf16.msra.mxu0 %v6885
      %7528 = vmatpush.bf16.msra.mxu0 %v6878
      %7529 = vmatmul.bf16.gmra.mxu0 %v5869
      %v7530 = vpop.f32.mrf.mxu0
      %v7531 = vadd.f32 %v6160, %v7530
      %v7532 = vpop.f32.mrf.mxu0
      %v7533 = vadd.f32 %v6160, %v7532
      %7534 = vmatmul.bf16.gmra.mxu0 %v5873
      %v7535 = vpop.f32.mrf.mxu0
      %v7536 = vadd.f32 %v6160, %v7535
      %v7537 = vpop.f32.mrf.mxu0
      %v7538 = vadd.f32 %v6160, %v7537
      %7539 = vmatmul.bf16.gmra.mxu0 %v5877
      %v7540 = vpop.f32.mrf.mxu0
      %v7541 = vadd.f32 %v6160, %v7540
      %v7542 = vpop.f32.mrf.mxu0
      %v7543 = vadd.f32 %v6160, %v7542
      %7544 = vmatmul.bf16.gmra.mxu0 %v5881
      %v7545 = vpop.f32.mrf.mxu0
      %v7546 = vadd.f32 %v6160, %v7545
      %v7547 = vpop.f32.mrf.mxu0
      %v7548 = vadd.f32 %v6160, %v7547
      %7549 = vmatmul.bf16.gmra.mxu0 %v5885
      %v7550 = vpop.f32.mrf.mxu0
      %v7551 = vadd.f32 %v6160, %v7550
      %v7552 = vpop.f32.mrf.mxu0
      %v7553 = vadd.f32 %v6160, %v7552
      %7554 = vmatmul.bf16.gmra.mxu0 %v5889
      %v7555 = vpop.f32.mrf.mxu0
      %v7556 = vadd.f32 %v6160, %v7555
      %v7557 = vpop.f32.mrf.mxu0
      %v7558 = vadd.f32 %v6160, %v7557
      %7559 = vmatmul.bf16.gmra.mxu0 %v5893
      %v7560 = vpop.f32.mrf.mxu0
      %v7561 = vadd.f32 %v6160, %v7560
      %v7562 = vpop.f32.mrf.mxu0
      %v7563 = vadd.f32 %v6160, %v7562
      %7564 = vmatmul.bf16.gmra.mxu0 %v5897
      %v7565 = vpop.f32.mrf.mxu0
      %v7566 = vadd.f32 %v6160, %v7565
      %v7567 = vpop.f32.mrf.mxu0
      %v7568 = vadd.f32 %v6160, %v7567
      %7569 = vdwg.mxu0
      %7570 = vmatpush.bf16.msra.mxu0 %v6983
      %7571 = vmatpush.bf16.msra.mxu0 %v6976
      %7572 = vmatpush.bf16.msra.mxu0 %v6969
      %7573 = vmatpush.bf16.msra.mxu0 %v6962
      %7574 = vmatpush.bf16.msra.mxu0 %v6955
      %7575 = vmatpush.bf16.msra.mxu0 %v6948
      %7576 = vmatpush.bf16.msra.mxu0 %v6941
      %7577 = vmatpush.bf16.msra.mxu0 %v6934
      %7578 = vmatmul.bf16.gmra.mxu0 %v5870
      %v7579 = vpop.f32.mrf.mxu0
      %v7580 = vadd.f32 %v7531, %v7579
      %v7581 = vpop.f32.mrf.mxu0
      %v7582 = vadd.f32 %v7533, %v7581
      %7583 = vmatmul.bf16.gmra.mxu0 %v5874
      %v7584 = vpop.f32.mrf.mxu0
      %v7585 = vadd.f32 %v7536, %v7584
      %v7586 = vpop.f32.mrf.mxu0
      %v7587 = vadd.f32 %v7538, %v7586
      %7588 = vmatmul.bf16.gmra.mxu0 %v5878
      %v7589 = vpop.f32.mrf.mxu0
      %v7590 = vadd.f32 %v7541, %v7589
      %v7591 = vpop.f32.mrf.mxu0
      %v7592 = vadd.f32 %v7543, %v7591
      %7593 = vmatmul.bf16.gmra.mxu0 %v5882
      %v7594 = vpop.f32.mrf.mxu0
      %v7595 = vadd.f32 %v7546, %v7594
      %v7596 = vpop.f32.mrf.mxu0
      %v7597 = vadd.f32 %v7548, %v7596
      %7598 = vmatmul.bf16.gmra.mxu0 %v5886
      %v7599 = vpop.f32.mrf.mxu0
      %v7600 = vadd.f32 %v7551, %v7599
      %v7601 = vpop.f32.mrf.mxu0
      %v7602 = vadd.f32 %v7553, %v7601
      %7603 = vmatmul.bf16.gmra.mxu0 %v5890
      %v7604 = vpop.f32.mrf.mxu0
      %v7605 = vadd.f32 %v7556, %v7604
      %v7606 = vpop.f32.mrf.mxu0
      %v7607 = vadd.f32 %v7558, %v7606
      %7608 = vmatmul.bf16.gmra.mxu0 %v5894
      %v7609 = vpop.f32.mrf.mxu0
      %v7610 = vadd.f32 %v7561, %v7609
      %v7611 = vpop.f32.mrf.mxu0
      %v7612 = vadd.f32 %v7563, %v7611
      %7613 = vmatmul.bf16.gmra.mxu0 %v5898
      %v7614 = vpop.f32.mrf.mxu0
      %v7615 = vadd.f32 %v7566, %v7614
      %v7616 = vpop.f32.mrf.mxu0
      %v7617 = vadd.f32 %v7568, %v7616
      %7618 = vdwg.mxu0
      %7619 = vmatpush.bf16.msra.mxu0 %v7039
      %7620 = vmatpush.bf16.msra.mxu0 %v7032
      %7621 = vmatpush.bf16.msra.mxu0 %v7025
      %7622 = vmatpush.bf16.msra.mxu0 %v7018
      %7623 = vmatpush.bf16.msra.mxu0 %v7011
      %7624 = vmatpush.bf16.msra.mxu0 %v7004
      %7625 = vmatpush.bf16.msra.mxu0 %v6997
      %7626 = vmatpush.bf16.msra.mxu0 %v6990
      %7627 = vmatmul.bf16.gmra.mxu0 %v5871
      %v7628 = vpop.f32.mrf.mxu0
      %v7629 = vadd.f32 %v7580, %v7628
      %v7630 = vpop.f32.mrf.mxu0
      %v7631 = vadd.f32 %v7582, %v7630
      %7632 = vmatmul.bf16.gmra.mxu0 %v5875
      %v7633 = vpop.f32.mrf.mxu0
      %v7634 = vadd.f32 %v7585, %v7633
      %v7635 = vpop.f32.mrf.mxu0
      %v7636 = vadd.f32 %v7587, %v7635
      %7637 = vmatmul.bf16.gmra.mxu0 %v5879
      %v7638 = vpop.f32.mrf.mxu0
      %v7639 = vadd.f32 %v7590, %v7638
      %v7640 = vpop.f32.mrf.mxu0
      %v7641 = vadd.f32 %v7592, %v7640
      %7642 = vmatmul.bf16.gmra.mxu0 %v5883
      %v7643 = vpop.f32.mrf.mxu0
      %v7644 = vadd.f32 %v7595, %v7643
      %v7645 = vpop.f32.mrf.mxu0
      %v7646 = vadd.f32 %v7597, %v7645
      %7647 = vmatmul.bf16.gmra.mxu0 %v5887
      %v7648 = vpop.f32.mrf.mxu0
      %v7649 = vadd.f32 %v7600, %v7648
      %v7650 = vpop.f32.mrf.mxu0
      %v7651 = vadd.f32 %v7602, %v7650
      %7652 = vmatmul.bf16.gmra.mxu0 %v5891
      %v7653 = vpop.f32.mrf.mxu0
      %v7654 = vadd.f32 %v7605, %v7653
      %v7655 = vpop.f32.mrf.mxu0
      %v7656 = vadd.f32 %v7607, %v7655
      %7657 = vmatmul.bf16.gmra.mxu0 %v5895
      %v7658 = vpop.f32.mrf.mxu0
      %v7659 = vadd.f32 %v7610, %v7658
      %v7660 = vpop.f32.mrf.mxu0
      %v7661 = vadd.f32 %v7612, %v7660
      %7662 = vmatmul.bf16.gmra.mxu0 %v5899
      %v7663 = vpop.f32.mrf.mxu0
      %v7664 = vadd.f32 %v7615, %v7663
      %v7665 = vpop.f32.mrf.mxu0
      %v7666 = vadd.f32 %v7617, %v7665
      %7667 = vdwg.mxu0
      %7668 = vmatpush.bf16.msra.mxu0 %v7095
      %7669 = vmatpush.bf16.msra.mxu0 %v7088
      %7670 = vmatpush.bf16.msra.mxu0 %v7081
      %7671 = vmatpush.bf16.msra.mxu0 %v7074
      %7672 = vmatpush.bf16.msra.mxu0 %v7067
      %7673 = vmatpush.bf16.msra.mxu0 %v7060
      %7674 = vmatpush.bf16.msra.mxu0 %v7053
      %7675 = vmatpush.bf16.msra.mxu0 %v7046
      %7676 = vmatmul.bf16.gmra.mxu0 %v5872
      %v7677 = vpop.f32.mrf.mxu0
      %v7678 = vadd.f32 %v7629, %v7677
      %v7679 = vpop.f32.mrf.mxu0
      %v7680 = vadd.f32 %v7631, %v7679
      %7681 = vmatmul.bf16.gmra.mxu0 %v5876
      %v7682 = vpop.f32.mrf.mxu0
      %v7683 = vadd.f32 %v7634, %v7682
      %v7684 = vpop.f32.mrf.mxu0
      %v7685 = vadd.f32 %v7636, %v7684
      %7686 = vmatmul.bf16.gmra.mxu0 %v5880
      %v7687 = vpop.f32.mrf.mxu0
      %v7688 = vadd.f32 %v7639, %v7687
      %v7689 = vpop.f32.mrf.mxu0
      %v7690 = vadd.f32 %v7641, %v7689
      %7691 = vmatmul.bf16.gmra.mxu0 %v5884
      %v7692 = vpop.f32.mrf.mxu0
      %v7693 = vadd.f32 %v7644, %v7692
      %v7694 = vpop.f32.mrf.mxu0
      %v7695 = vadd.f32 %v7646, %v7694
      %7696 = vmatmul.bf16.gmra.mxu0 %v5888
      %v7697 = vpop.f32.mrf.mxu0
      %v7698 = vadd.f32 %v7649, %v7697
      %v7699 = vpop.f32.mrf.mxu0
      %v7700 = vadd.f32 %v7651, %v7699
      %7701 = vmatmul.bf16.gmra.mxu0 %v5892
      %v7702 = vpop.f32.mrf.mxu0
      %v7703 = vadd.f32 %v7654, %v7702
      %v7704 = vpop.f32.mrf.mxu0
      %v7705 = vadd.f32 %v7656, %v7704
      %7706 = vmatmul.bf16.gmra.mxu0 %v5896
      %v7707 = vpop.f32.mrf.mxu0
      %v7708 = vadd.f32 %v7659, %v7707
      %v7709 = vpop.f32.mrf.mxu0
      %v7710 = vadd.f32 %v7661, %v7709
      %7711 = vmatmul.bf16.gmra.mxu0 %v5900
      %v7712 = vpop.f32.mrf.mxu0
      %v7713 = vadd.f32 %v7664, %v7712
      %v7714 = vpop.f32.mrf.mxu0
      %v7715 = vadd.f32 %v7666, %v7714
      %7716 = vdwg.mxu0
      %7717 = vmatpush.bf16.msra.mxu0 %v6928
      %7718 = vmatpush.bf16.msra.mxu0 %v6921
      %7719 = vmatpush.bf16.msra.mxu0 %v6914
      %7720 = vmatpush.bf16.msra.mxu0 %v6907
      %7721 = vmatpush.bf16.msra.mxu0 %v6900
      %7722 = vmatpush.bf16.msra.mxu0 %v6893
      %7723 = vmatpush.bf16.msra.mxu0 %v6886
      %7724 = vmatpush.bf16.msra.mxu0 %v6879
      %7725 = vmatmul.bf16.gmra.mxu0 %v5869
      %v7726 = vpop.f32.mrf.mxu0
      %v7727 = vadd.f32 %v6161, %v7726
      %v7728 = vpop.f32.mrf.mxu0
      %v7729 = vadd.f32 %v6161, %v7728
      %7730 = vmatmul.bf16.gmra.mxu0 %v5873
      %v7731 = vpop.f32.mrf.mxu0
      %v7732 = vadd.f32 %v6161, %v7731
      %v7733 = vpop.f32.mrf.mxu0
      %v7734 = vadd.f32 %v6161, %v7733
      %7735 = vmatmul.bf16.gmra.mxu0 %v5877
      %v7736 = vpop.f32.mrf.mxu0
      %v7737 = vadd.f32 %v6161, %v7736
      %v7738 = vpop.f32.mrf.mxu0
      %v7739 = vadd.f32 %v6161, %v7738
      %7740 = vmatmul.bf16.gmra.mxu0 %v5881
      %v7741 = vpop.f32.mrf.mxu0
      %v7742 = vadd.f32 %v6161, %v7741
      %v7743 = vpop.f32.mrf.mxu0
      %v7744 = vadd.f32 %v6161, %v7743
      %7745 = vmatmul.bf16.gmra.mxu0 %v5885
      %v7746 = vpop.f32.mrf.mxu0
      %v7747 = vadd.f32 %v6161, %v7746
      %v7748 = vpop.f32.mrf.mxu0
      %v7749 = vadd.f32 %v6161, %v7748
      %7750 = vmatmul.bf16.gmra.mxu0 %v5889
      %v7751 = vpop.f32.mrf.mxu0
      %v7752 = vadd.f32 %v6161, %v7751
      %v7753 = vpop.f32.mrf.mxu0
      %v7754 = vadd.f32 %v6161, %v7753
      %7755 = vmatmul.bf16.gmra.mxu0 %v5893
      %v7756 = vpop.f32.mrf.mxu0
      %v7757 = vadd.f32 %v6161, %v7756
      %v7758 = vpop.f32.mrf.mxu0
      %v7759 = vadd.f32 %v6161, %v7758
      %7760 = vmatmul.bf16.gmra.mxu0 %v5897
      %v7761 = vpop.f32.mrf.mxu0
      %v7762 = vadd.f32 %v6161, %v7761
      %v7763 = vpop.f32.mrf.mxu0
      %v7764 = vadd.f32 %v6161, %v7763
      %7765 = vdwg.mxu0
      %7766 = vmatpush.bf16.msra.mxu0 %v6984
      %7767 = vmatpush.bf16.msra.mxu0 %v6977
      %7768 = vmatpush.bf16.msra.mxu0 %v6970
      %7769 = vmatpush.bf16.msra.mxu0 %v6963
      %7770 = vmatpush.bf16.msra.mxu0 %v6956
      %7771 = vmatpush.bf16.msra.mxu0 %v6949
      %7772 = vmatpush.bf16.msra.mxu0 %v6942
      %7773 = vmatpush.bf16.msra.mxu0 %v6935
      %7774 = vmatmul.bf16.gmra.mxu0 %v5870
      %v7775 = vpop.f32.mrf.mxu0
      %v7776 = vadd.f32 %v7727, %v7775
      %v7777 = vpop.f32.mrf.mxu0
      %v7778 = vadd.f32 %v7729, %v7777
      %7779 = vmatmul.bf16.gmra.mxu0 %v5874
      %v7780 = vpop.f32.mrf.mxu0
      %v7781 = vadd.f32 %v7732, %v7780
      %v7782 = vpop.f32.mrf.mxu0
      %v7783 = vadd.f32 %v7734, %v7782
      %7784 = vmatmul.bf16.gmra.mxu0 %v5878
      %v7785 = vpop.f32.mrf.mxu0
      %v7786 = vadd.f32 %v7737, %v7785
      %v7787 = vpop.f32.mrf.mxu0
      %v7788 = vadd.f32 %v7739, %v7787
      %7789 = vmatmul.bf16.gmra.mxu0 %v5882
      %v7790 = vpop.f32.mrf.mxu0
      %v7791 = vadd.f32 %v7742, %v7790
      %v7792 = vpop.f32.mrf.mxu0
      %v7793 = vadd.f32 %v7744, %v7792
      %7794 = vmatmul.bf16.gmra.mxu0 %v5886
      %v7795 = vpop.f32.mrf.mxu0
      %v7796 = vadd.f32 %v7747, %v7795
      %v7797 = vpop.f32.mrf.mxu0
      %v7798 = vadd.f32 %v7749, %v7797
      %7799 = vmatmul.bf16.gmra.mxu0 %v5890
      %v7800 = vpop.f32.mrf.mxu0
      %v7801 = vadd.f32 %v7752, %v7800
      %v7802 = vpop.f32.mrf.mxu0
      %v7803 = vadd.f32 %v7754, %v7802
      %7804 = vmatmul.bf16.gmra.mxu0 %v5894
      %v7805 = vpop.f32.mrf.mxu0
      %v7806 = vadd.f32 %v7757, %v7805
      %v7807 = vpop.f32.mrf.mxu0
      %v7808 = vadd.f32 %v7759, %v7807
      %7809 = vmatmul.bf16.gmra.mxu0 %v5898
      %v7810 = vpop.f32.mrf.mxu0
      %v7811 = vadd.f32 %v7762, %v7810
      %v7812 = vpop.f32.mrf.mxu0
      %v7813 = vadd.f32 %v7764, %v7812
      %7814 = vdwg.mxu0
      %7815 = vmatpush.bf16.msra.mxu0 %v7040
      %7816 = vmatpush.bf16.msra.mxu0 %v7033
      %7817 = vmatpush.bf16.msra.mxu0 %v7026
      %7818 = vmatpush.bf16.msra.mxu0 %v7019
      %7819 = vmatpush.bf16.msra.mxu0 %v7012
      %7820 = vmatpush.bf16.msra.mxu0 %v7005
      %7821 = vmatpush.bf16.msra.mxu0 %v6998
      %7822 = vmatpush.bf16.msra.mxu0 %v6991
      %7823 = vmatmul.bf16.gmra.mxu0 %v5871
      %v7824 = vpop.f32.mrf.mxu0
      %v7825 = vadd.f32 %v7776, %v7824
      %v7826 = vpop.f32.mrf.mxu0
      %v7827 = vadd.f32 %v7778, %v7826
      %7828 = vmatmul.bf16.gmra.mxu0 %v5875
      %v7829 = vpop.f32.mrf.mxu0
      %v7830 = vadd.f32 %v7781, %v7829
      %v7831 = vpop.f32.mrf.mxu0
      %v7832 = vadd.f32 %v7783, %v7831
      %7833 = vmatmul.bf16.gmra.mxu0 %v5879
      %v7834 = vpop.f32.mrf.mxu0
      %v7835 = vadd.f32 %v7786, %v7834
      %v7836 = vpop.f32.mrf.mxu0
      %v7837 = vadd.f32 %v7788, %v7836
      %7838 = vmatmul.bf16.gmra.mxu0 %v5883
      %v7839 = vpop.f32.mrf.mxu0
      %v7840 = vadd.f32 %v7791, %v7839
      %v7841 = vpop.f32.mrf.mxu0
      %v7842 = vadd.f32 %v7793, %v7841
      %7843 = vmatmul.bf16.gmra.mxu0 %v5887
      %v7844 = vpop.f32.mrf.mxu0
      %v7845 = vadd.f32 %v7796, %v7844
      %v7846 = vpop.f32.mrf.mxu0
      %v7847 = vadd.f32 %v7798, %v7846
      %7848 = vmatmul.bf16.gmra.mxu0 %v5891
      %v7849 = vpop.f32.mrf.mxu0
      %v7850 = vadd.f32 %v7801, %v7849
      %v7851 = vpop.f32.mrf.mxu0
      %v7852 = vadd.f32 %v7803, %v7851
      %7853 = vmatmul.bf16.gmra.mxu0 %v5895
      %v7854 = vpop.f32.mrf.mxu0
      %v7855 = vadd.f32 %v7806, %v7854
      %v7856 = vpop.f32.mrf.mxu0
      %v7857 = vadd.f32 %v7808, %v7856
      %7858 = vmatmul.bf16.gmra.mxu0 %v5899
      %v7859 = vpop.f32.mrf.mxu0
      %v7860 = vadd.f32 %v7811, %v7859
      %v7861 = vpop.f32.mrf.mxu0
      %v7862 = vadd.f32 %v7813, %v7861
      %7863 = vdwg.mxu0
      %7864 = vmatpush.bf16.msra.mxu0 %v7096
      %7865 = vmatpush.bf16.msra.mxu0 %v7089
      %7866 = vmatpush.bf16.msra.mxu0 %v7082
      %7867 = vmatpush.bf16.msra.mxu0 %v7075
      %7868 = vmatpush.bf16.msra.mxu0 %v7068
      %7869 = vmatpush.bf16.msra.mxu0 %v7061
      %7870 = vmatpush.bf16.msra.mxu0 %v7054
      %7871 = vmatpush.bf16.msra.mxu0 %v7047
      %7872 = vmatmul.bf16.gmra.mxu0 %v5872
      %v7873 = vpop.f32.mrf.mxu0
      %v7874 = vadd.f32 %v7825, %v7873
      %v7875 = vpop.f32.mrf.mxu0
      %v7876 = vadd.f32 %v7827, %v7875
      %7877 = vmatmul.bf16.gmra.mxu0 %v5876
      %v7878 = vpop.f32.mrf.mxu0
      %v7879 = vadd.f32 %v7830, %v7878
      %v7880 = vpop.f32.mrf.mxu0
      %v7881 = vadd.f32 %v7832, %v7880
      %7882 = vmatmul.bf16.gmra.mxu0 %v5880
      %v7883 = vpop.f32.mrf.mxu0
      %v7884 = vadd.f32 %v7835, %v7883
      %v7885 = vpop.f32.mrf.mxu0
      %v7886 = vadd.f32 %v7837, %v7885
      %7887 = vmatmul.bf16.gmra.mxu0 %v5884
      %v7888 = vpop.f32.mrf.mxu0
      %v7889 = vadd.f32 %v7840, %v7888
      %v7890 = vpop.f32.mrf.mxu0
      %v7891 = vadd.f32 %v7842, %v7890
      %7892 = vmatmul.bf16.gmra.mxu0 %v5888
      %v7893 = vpop.f32.mrf.mxu0
      %v7894 = vadd.f32 %v7845, %v7893
      %v7895 = vpop.f32.mrf.mxu0
      %v7896 = vadd.f32 %v7847, %v7895
      %7897 = vmatmul.bf16.gmra.mxu0 %v5892
      %v7898 = vpop.f32.mrf.mxu0
      %v7899 = vadd.f32 %v7850, %v7898
      %v7900 = vpop.f32.mrf.mxu0
      %v7901 = vadd.f32 %v7852, %v7900
      %7902 = vmatmul.bf16.gmra.mxu0 %v5896
      %v7903 = vpop.f32.mrf.mxu0
      %v7904 = vadd.f32 %v7855, %v7903
      %v7905 = vpop.f32.mrf.mxu0
      %v7906 = vadd.f32 %v7857, %v7905
      %7907 = vmatmul.bf16.gmra.mxu0 %v5900
      %v7908 = vpop.f32.mrf.mxu0
      %v7909 = vadd.f32 %v7860, %v7908
      %v7910 = vpop.f32.mrf.mxu0
      %v7911 = vadd.f32 %v7862, %v7910
      %7912 = vdwg.mxu0
      %7913 = vmatpush.bf16.msra.mxu0 %v6929
      %7914 = vmatpush.bf16.msra.mxu0 %v6922
      %7915 = vmatpush.bf16.msra.mxu0 %v6915
      %7916 = vmatpush.bf16.msra.mxu0 %v6908
      %7917 = vmatpush.bf16.msra.mxu0 %v6901
      %7918 = vmatpush.bf16.msra.mxu0 %v6894
      %7919 = vmatpush.bf16.msra.mxu0 %v6887
      %7920 = vmatpush.bf16.msra.mxu0 %v6880
      %7921 = vmatmul.bf16.gmra.mxu0 %v5869
      %v7922 = vpop.f32.mrf.mxu0
      %v7923 = vadd.f32 %v6162, %v7922
      %v7924 = vpop.f32.mrf.mxu0
      %v7925 = vadd.f32 %v6162, %v7924
      %7926 = vmatmul.bf16.gmra.mxu0 %v5873
      %v7927 = vpop.f32.mrf.mxu0
      %v7928 = vadd.f32 %v6162, %v7927
      %v7929 = vpop.f32.mrf.mxu0
      %v7930 = vadd.f32 %v6162, %v7929
      %7931 = vmatmul.bf16.gmra.mxu0 %v5877
      %v7932 = vpop.f32.mrf.mxu0
      %v7933 = vadd.f32 %v6162, %v7932
      %v7934 = vpop.f32.mrf.mxu0
      %v7935 = vadd.f32 %v6162, %v7934
      %7936 = vmatmul.bf16.gmra.mxu0 %v5881
      %v7937 = vpop.f32.mrf.mxu0
      %v7938 = vadd.f32 %v6162, %v7937
      %v7939 = vpop.f32.mrf.mxu0
      %v7940 = vadd.f32 %v6162, %v7939
      %7941 = vmatmul.bf16.gmra.mxu0 %v5885
      %v7942 = vpop.f32.mrf.mxu0
      %v7943 = vadd.f32 %v6162, %v7942
      %v7944 = vpop.f32.mrf.mxu0
      %v7945 = vadd.f32 %v6162, %v7944
      %7946 = vmatmul.bf16.gmra.mxu0 %v5889
      %v7947 = vpop.f32.mrf.mxu0
      %v7948 = vadd.f32 %v6162, %v7947
      %v7949 = vpop.f32.mrf.mxu0
      %v7950 = vadd.f32 %v6162, %v7949
      %7951 = vmatmul.bf16.gmra.mxu0 %v5893
      %v7952 = vpop.f32.mrf.mxu0
      %v7953 = vadd.f32 %v6162, %v7952
      %v7954 = vpop.f32.mrf.mxu0
      %v7955 = vadd.f32 %v6162, %v7954
      %7956 = vmatmul.bf16.gmra.mxu0 %v5897
      %v7957 = vpop.f32.mrf.mxu0
      %v7958 = vadd.f32 %v6162, %v7957
      %v7959 = vpop.f32.mrf.mxu0
      %v7960 = vadd.f32 %v6162, %v7959
      %7961 = vdwg.mxu0
      %7962 = vmatpush.bf16.msra.mxu0 %v6985
      %7963 = vmatpush.bf16.msra.mxu0 %v6978
      %7964 = vmatpush.bf16.msra.mxu0 %v6971
      %7965 = vmatpush.bf16.msra.mxu0 %v6964
      %7966 = vmatpush.bf16.msra.mxu0 %v6957
      %7967 = vmatpush.bf16.msra.mxu0 %v6950
      %7968 = vmatpush.bf16.msra.mxu0 %v6943
      %7969 = vmatpush.bf16.msra.mxu0 %v6936
      %7970 = vmatmul.bf16.gmra.mxu0 %v5870
      %v7971 = vpop.f32.mrf.mxu0
      %v7972 = vadd.f32 %v7923, %v7971
      %v7973 = vpop.f32.mrf.mxu0
      %v7974 = vadd.f32 %v7925, %v7973
      %7975 = vmatmul.bf16.gmra.mxu0 %v5874
      %v7976 = vpop.f32.mrf.mxu0
      %v7977 = vadd.f32 %v7928, %v7976
      %v7978 = vpop.f32.mrf.mxu0
      %v7979 = vadd.f32 %v7930, %v7978
      %7980 = vmatmul.bf16.gmra.mxu0 %v5878
      %v7981 = vpop.f32.mrf.mxu0
      %v7982 = vadd.f32 %v7933, %v7981
      %v7983 = vpop.f32.mrf.mxu0
      %v7984 = vadd.f32 %v7935, %v7983
      %7985 = vmatmul.bf16.gmra.mxu0 %v5882
      %v7986 = vpop.f32.mrf.mxu0
      %v7987 = vadd.f32 %v7938, %v7986
      %v7988 = vpop.f32.mrf.mxu0
      %v7989 = vadd.f32 %v7940, %v7988
      %7990 = vmatmul.bf16.gmra.mxu0 %v5886
      %v7991 = vpop.f32.mrf.mxu0
      %v7992 = vadd.f32 %v7943, %v7991
      %v7993 = vpop.f32.mrf.mxu0
      %v7994 = vadd.f32 %v7945, %v7993
      %7995 = vmatmul.bf16.gmra.mxu0 %v5890
      %v7996 = vpop.f32.mrf.mxu0
      %v7997 = vadd.f32 %v7948, %v7996
      %v7998 = vpop.f32.mrf.mxu0
      %v7999 = vadd.f32 %v7950, %v7998
      %8000 = vmatmul.bf16.gmra.mxu0 %v5894
      %v8001 = vpop.f32.mrf.mxu0
      %v8002 = vadd.f32 %v7953, %v8001
      %v8003 = vpop.f32.mrf.mxu0
      %v8004 = vadd.f32 %v7955, %v8003
      %8005 = vmatmul.bf16.gmra.mxu0 %v5898
      %v8006 = vpop.f32.mrf.mxu0
      %v8007 = vadd.f32 %v7958, %v8006
      %v8008 = vpop.f32.mrf.mxu0
      %v8009 = vadd.f32 %v7960, %v8008
      %8010 = vdwg.mxu0
      %8011 = vmatpush.bf16.msra.mxu0 %v7041
      %8012 = vmatpush.bf16.msra.mxu0 %v7034
      %8013 = vmatpush.bf16.msra.mxu0 %v7027
      %8014 = vmatpush.bf16.msra.mxu0 %v7020
      %8015 = vmatpush.bf16.msra.mxu0 %v7013
      %8016 = vmatpush.bf16.msra.mxu0 %v7006
      %8017 = vmatpush.bf16.msra.mxu0 %v6999
      %8018 = vmatpush.bf16.msra.mxu0 %v6992
      %8019 = vmatmul.bf16.gmra.mxu0 %v5871
      %v8020 = vpop.f32.mrf.mxu0
      %v8021 = vadd.f32 %v7972, %v8020
      %v8022 = vpop.f32.mrf.mxu0
      %v8023 = vadd.f32 %v7974, %v8022
      %8024 = vmatmul.bf16.gmra.mxu0 %v5875
      %v8025 = vpop.f32.mrf.mxu0
      %v8026 = vadd.f32 %v7977, %v8025
      %v8027 = vpop.f32.mrf.mxu0
      %v8028 = vadd.f32 %v7979, %v8027
      %8029 = vmatmul.bf16.gmra.mxu0 %v5879
      %v8030 = vpop.f32.mrf.mxu0
      %v8031 = vadd.f32 %v7982, %v8030
      %v8032 = vpop.f32.mrf.mxu0
      %v8033 = vadd.f32 %v7984, %v8032
      %8034 = vmatmul.bf16.gmra.mxu0 %v5883
      %v8035 = vpop.f32.mrf.mxu0
      %v8036 = vadd.f32 %v7987, %v8035
      %v8037 = vpop.f32.mrf.mxu0
      %v8038 = vadd.f32 %v7989, %v8037
      %8039 = vmatmul.bf16.gmra.mxu0 %v5887
      %v8040 = vpop.f32.mrf.mxu0
      %v8041 = vadd.f32 %v7992, %v8040
      %v8042 = vpop.f32.mrf.mxu0
      %v8043 = vadd.f32 %v7994, %v8042
      %8044 = vmatmul.bf16.gmra.mxu0 %v5891
      %v8045 = vpop.f32.mrf.mxu0
      %v8046 = vadd.f32 %v7997, %v8045
      %v8047 = vpop.f32.mrf.mxu0
      %v8048 = vadd.f32 %v7999, %v8047
      %8049 = vmatmul.bf16.gmra.mxu0 %v5895
      %v8050 = vpop.f32.mrf.mxu0
      %v8051 = vadd.f32 %v8002, %v8050
      %v8052 = vpop.f32.mrf.mxu0
      %v8053 = vadd.f32 %v8004, %v8052
      %8054 = vmatmul.bf16.gmra.mxu0 %v5899
      %v8055 = vpop.f32.mrf.mxu0
      %v8056 = vadd.f32 %v8007, %v8055
      %v8057 = vpop.f32.mrf.mxu0
      %v8058 = vadd.f32 %v8009, %v8057
      %8059 = vdwg.mxu0
      %8060 = vmatpush.bf16.msra.mxu0 %v7097
      %8061 = vmatpush.bf16.msra.mxu0 %v7090
      %8062 = vmatpush.bf16.msra.mxu0 %v7083
      %8063 = vmatpush.bf16.msra.mxu0 %v7076
      %8064 = vmatpush.bf16.msra.mxu0 %v7069
      %8065 = vmatpush.bf16.msra.mxu0 %v7062
      %8066 = vmatpush.bf16.msra.mxu0 %v7055
      %8067 = vmatpush.bf16.msra.mxu0 %v7048
      %8068 = vmatmul.bf16.gmra.mxu0 %v5872
      %v8069 = vpop.f32.mrf.mxu0
      %v8070 = vadd.f32 %v8021, %v8069
      %v8071 = vpop.f32.mrf.mxu0
      %v8072 = vadd.f32 %v8023, %v8071
      %8073 = vmatmul.bf16.gmra.mxu0 %v5876
      %v8074 = vpop.f32.mrf.mxu0
      %v8075 = vadd.f32 %v8026, %v8074
      %v8076 = vpop.f32.mrf.mxu0
      %v8077 = vadd.f32 %v8028, %v8076
      %8078 = vmatmul.bf16.gmra.mxu0 %v5880
      %v8079 = vpop.f32.mrf.mxu0
      %v8080 = vadd.f32 %v8031, %v8079
      %v8081 = vpop.f32.mrf.mxu0
      %v8082 = vadd.f32 %v8033, %v8081
      %8083 = vmatmul.bf16.gmra.mxu0 %v5884
      %v8084 = vpop.f32.mrf.mxu0
      %v8085 = vadd.f32 %v8036, %v8084
      %v8086 = vpop.f32.mrf.mxu0
      %v8087 = vadd.f32 %v8038, %v8086
      %8088 = vmatmul.bf16.gmra.mxu0 %v5888
      %v8089 = vpop.f32.mrf.mxu0
      %v8090 = vadd.f32 %v8041, %v8089
      %v8091 = vpop.f32.mrf.mxu0
      %v8092 = vadd.f32 %v8043, %v8091
      %8093 = vmatmul.bf16.gmra.mxu0 %v5892
      %v8094 = vpop.f32.mrf.mxu0
      %v8095 = vadd.f32 %v8046, %v8094
      %v8096 = vpop.f32.mrf.mxu0
      %v8097 = vadd.f32 %v8048, %v8096
      %8098 = vmatmul.bf16.gmra.mxu0 %v5896
      %v8099 = vpop.f32.mrf.mxu0
      %v8100 = vadd.f32 %v8051, %v8099
      %v8101 = vpop.f32.mrf.mxu0
      %v8102 = vadd.f32 %v8053, %v8101
      %8103 = vmatmul.bf16.gmra.mxu0 %v5900
      %v8104 = vpop.f32.mrf.mxu0
      %v8105 = vadd.f32 %v8056, %v8104
      %v8106 = vpop.f32.mrf.mxu0
      %v8107 = vadd.f32 %v8058, %v8106
      %8108 = vdwg.mxu0
      %8109 = vmatpush.bf16.msra.mxu0 %v6930
      %8110 = vmatpush.bf16.msra.mxu0 %v6923
      %8111 = vmatpush.bf16.msra.mxu0 %v6916
      %8112 = vmatpush.bf16.msra.mxu0 %v6909
      %8113 = vmatpush.bf16.msra.mxu0 %v6902
      %8114 = vmatpush.bf16.msra.mxu0 %v6895
      %8115 = vmatpush.bf16.msra.mxu0 %v6888
      %8116 = vmatpush.bf16.msra.mxu0 %v6881
      %8117 = vmatmul.bf16.gmra.mxu0 %v5869
      %v8118 = vpop.f32.mrf.mxu0
      %v8119 = vadd.f32 %v6163, %v8118
      %v8120 = vpop.f32.mrf.mxu0
      %v8121 = vadd.f32 %v6163, %v8120
      %8122 = vmatmul.bf16.gmra.mxu0 %v5873
      %v8123 = vpop.f32.mrf.mxu0
      %v8124 = vadd.f32 %v6163, %v8123
      %v8125 = vpop.f32.mrf.mxu0
      %v8126 = vadd.f32 %v6163, %v8125
      %8127 = vmatmul.bf16.gmra.mxu0 %v5877
      %v8128 = vpop.f32.mrf.mxu0
      %v8129 = vadd.f32 %v6163, %v8128
      %v8130 = vpop.f32.mrf.mxu0
      %v8131 = vadd.f32 %v6163, %v8130
      %8132 = vmatmul.bf16.gmra.mxu0 %v5881
      %v8133 = vpop.f32.mrf.mxu0
      %v8134 = vadd.f32 %v6163, %v8133
      %v8135 = vpop.f32.mrf.mxu0
      %v8136 = vadd.f32 %v6163, %v8135
      %8137 = vmatmul.bf16.gmra.mxu0 %v5885
      %v8138 = vpop.f32.mrf.mxu0
      %v8139 = vadd.f32 %v6163, %v8138
      %v8140 = vpop.f32.mrf.mxu0
      %v8141 = vadd.f32 %v6163, %v8140
      %8142 = vmatmul.bf16.gmra.mxu0 %v5889
      %v8143 = vpop.f32.mrf.mxu0
      %v8144 = vadd.f32 %v6163, %v8143
      %v8145 = vpop.f32.mrf.mxu0
      %v8146 = vadd.f32 %v6163, %v8145
      %8147 = vmatmul.bf16.gmra.mxu0 %v5893
      %v8148 = vpop.f32.mrf.mxu0
      %v8149 = vadd.f32 %v6163, %v8148
      %v8150 = vpop.f32.mrf.mxu0
      %v8151 = vadd.f32 %v6163, %v8150
      %8152 = vmatmul.bf16.gmra.mxu0 %v5897
      %v8153 = vpop.f32.mrf.mxu0
      %v8154 = vadd.f32 %v6163, %v8153
      %v8155 = vpop.f32.mrf.mxu0
      %v8156 = vadd.f32 %v6163, %v8155
      %8157 = vdwg.mxu0
      %8158 = vmatpush.bf16.msra.mxu0 %v6986
      %8159 = vmatpush.bf16.msra.mxu0 %v6979
      %8160 = vmatpush.bf16.msra.mxu0 %v6972
      %8161 = vmatpush.bf16.msra.mxu0 %v6965
      %8162 = vmatpush.bf16.msra.mxu0 %v6958
      %8163 = vmatpush.bf16.msra.mxu0 %v6951
      %8164 = vmatpush.bf16.msra.mxu0 %v6944
      %8165 = vmatpush.bf16.msra.mxu0 %v6937
      %8166 = vmatmul.bf16.gmra.mxu0 %v5870
      %v8167 = vpop.f32.mrf.mxu0
      %v8168 = vadd.f32 %v8119, %v8167
      %v8169 = vpop.f32.mrf.mxu0
      %v8170 = vadd.f32 %v8121, %v8169
      %8171 = vmatmul.bf16.gmra.mxu0 %v5874
      %v8172 = vpop.f32.mrf.mxu0
      %v8173 = vadd.f32 %v8124, %v8172
      %v8174 = vpop.f32.mrf.mxu0
      %v8175 = vadd.f32 %v8126, %v8174
      %8176 = vmatmul.bf16.gmra.mxu0 %v5878
      %v8177 = vpop.f32.mrf.mxu0
      %v8178 = vadd.f32 %v8129, %v8177
      %v8179 = vpop.f32.mrf.mxu0
      %v8180 = vadd.f32 %v8131, %v8179
      %8181 = vmatmul.bf16.gmra.mxu0 %v5882
      %v8182 = vpop.f32.mrf.mxu0
      %v8183 = vadd.f32 %v8134, %v8182
      %v8184 = vpop.f32.mrf.mxu0
      %v8185 = vadd.f32 %v8136, %v8184
      %8186 = vmatmul.bf16.gmra.mxu0 %v5886
      %v8187 = vpop.f32.mrf.mxu0
      %v8188 = vadd.f32 %v8139, %v8187
      %v8189 = vpop.f32.mrf.mxu0
      %v8190 = vadd.f32 %v8141, %v8189
      %8191 = vmatmul.bf16.gmra.mxu0 %v5890
      %v8192 = vpop.f32.mrf.mxu0
      %v8193 = vadd.f32 %v8144, %v8192
      %v8194 = vpop.f32.mrf.mxu0
      %v8195 = vadd.f32 %v8146, %v8194
      %8196 = vmatmul.bf16.gmra.mxu0 %v5894
      %v8197 = vpop.f32.mrf.mxu0
      %v8198 = vadd.f32 %v8149, %v8197
      %v8199 = vpop.f32.mrf.mxu0
      %v8200 = vadd.f32 %v8151, %v8199
      %8201 = vmatmul.bf16.gmra.mxu0 %v5898
      %v8202 = vpop.f32.mrf.mxu0
      %v8203 = vadd.f32 %v8154, %v8202
      %v8204 = vpop.f32.mrf.mxu0
      %v8205 = vadd.f32 %v8156, %v8204
      %8206 = vdwg.mxu0
      %8207 = vmatpush.bf16.msra.mxu0 %v7042
      %8208 = vmatpush.bf16.msra.mxu0 %v7035
      %8209 = vmatpush.bf16.msra.mxu0 %v7028
      %8210 = vmatpush.bf16.msra.mxu0 %v7021
      %8211 = vmatpush.bf16.msra.mxu0 %v7014
      %8212 = vmatpush.bf16.msra.mxu0 %v7007
      %8213 = vmatpush.bf16.msra.mxu0 %v7000
      %8214 = vmatpush.bf16.msra.mxu0 %v6993
      %8215 = vmatmul.bf16.gmra.mxu0 %v5871
      %v8216 = vpop.f32.mrf.mxu0
      %v8217 = vadd.f32 %v8168, %v8216
      %v8218 = vpop.f32.mrf.mxu0
      %v8219 = vadd.f32 %v8170, %v8218
      %8220 = vmatmul.bf16.gmra.mxu0 %v5875
      %v8221 = vpop.f32.mrf.mxu0
      %v8222 = vadd.f32 %v8173, %v8221
      %v8223 = vpop.f32.mrf.mxu0
      %v8224 = vadd.f32 %v8175, %v8223
      %8225 = vmatmul.bf16.gmra.mxu0 %v5879
      %v8226 = vpop.f32.mrf.mxu0
      %v8227 = vadd.f32 %v8178, %v8226
      %v8228 = vpop.f32.mrf.mxu0
      %v8229 = vadd.f32 %v8180, %v8228
      %8230 = vmatmul.bf16.gmra.mxu0 %v5883
      %v8231 = vpop.f32.mrf.mxu0
      %v8232 = vadd.f32 %v8183, %v8231
      %v8233 = vpop.f32.mrf.mxu0
      %v8234 = vadd.f32 %v8185, %v8233
      %8235 = vmatmul.bf16.gmra.mxu0 %v5887
      %v8236 = vpop.f32.mrf.mxu0
      %v8237 = vadd.f32 %v8188, %v8236
      %v8238 = vpop.f32.mrf.mxu0
      %v8239 = vadd.f32 %v8190, %v8238
      %8240 = vmatmul.bf16.gmra.mxu0 %v5891
      %v8241 = vpop.f32.mrf.mxu0
      %v8242 = vadd.f32 %v8193, %v8241
      %v8243 = vpop.f32.mrf.mxu0
      %v8244 = vadd.f32 %v8195, %v8243
      %8245 = vmatmul.bf16.gmra.mxu0 %v5895
      %v8246 = vpop.f32.mrf.mxu0
      %v8247 = vadd.f32 %v8198, %v8246
      %v8248 = vpop.f32.mrf.mxu0
      %v8249 = vadd.f32 %v8200, %v8248
      %8250 = vmatmul.bf16.gmra.mxu0 %v5899
      %v8251 = vpop.f32.mrf.mxu0
      %v8252 = vadd.f32 %v8203, %v8251
      %v8253 = vpop.f32.mrf.mxu0
      %v8254 = vadd.f32 %v8205, %v8253
      %8255 = vdwg.mxu0
      %8256 = vmatpush.bf16.msra.mxu0 %v7098
      %8257 = vmatpush.bf16.msra.mxu0 %v7091
      %8258 = vmatpush.bf16.msra.mxu0 %v7084
      %8259 = vmatpush.bf16.msra.mxu0 %v7077
      %8260 = vmatpush.bf16.msra.mxu0 %v7070
      %8261 = vmatpush.bf16.msra.mxu0 %v7063
      %8262 = vmatpush.bf16.msra.mxu0 %v7056
      %8263 = vmatpush.bf16.msra.mxu0 %v7049
      %8264 = vmatmul.bf16.gmra.mxu0 %v5872
      %v8265 = vpop.f32.mrf.mxu0
      %v8266 = vadd.f32 %v8217, %v8265
      %v8267 = vpop.f32.mrf.mxu0
      %v8268 = vadd.f32 %v8219, %v8267
      %8269 = vmatmul.bf16.gmra.mxu0 %v5876
      %v8270 = vpop.f32.mrf.mxu0
      %v8271 = vadd.f32 %v8222, %v8270
      %v8272 = vpop.f32.mrf.mxu0
      %v8273 = vadd.f32 %v8224, %v8272
      %8274 = vmatmul.bf16.gmra.mxu0 %v5880
      %v8275 = vpop.f32.mrf.mxu0
      %v8276 = vadd.f32 %v8227, %v8275
      %v8277 = vpop.f32.mrf.mxu0
      %v8278 = vadd.f32 %v8229, %v8277
      %8279 = vmatmul.bf16.gmra.mxu0 %v5884
      %v8280 = vpop.f32.mrf.mxu0
      %v8281 = vadd.f32 %v8232, %v8280
      %v8282 = vpop.f32.mrf.mxu0
      %v8283 = vadd.f32 %v8234, %v8282
      %8284 = vmatmul.bf16.gmra.mxu0 %v5888
      %v8285 = vpop.f32.mrf.mxu0
      %v8286 = vadd.f32 %v8237, %v8285
      %v8287 = vpop.f32.mrf.mxu0
      %v8288 = vadd.f32 %v8239, %v8287
      %8289 = vmatmul.bf16.gmra.mxu0 %v5892
      %v8290 = vpop.f32.mrf.mxu0
      %v8291 = vadd.f32 %v8242, %v8290
      %v8292 = vpop.f32.mrf.mxu0
      %v8293 = vadd.f32 %v8244, %v8292
      %8294 = vmatmul.bf16.gmra.mxu0 %v5896
      %v8295 = vpop.f32.mrf.mxu0
      %v8296 = vadd.f32 %v8247, %v8295
      %v8297 = vpop.f32.mrf.mxu0
      %v8298 = vadd.f32 %v8249, %v8297
      %8299 = vmatmul.bf16.gmra.mxu0 %v5900
      %v8300 = vpop.f32.mrf.mxu0
      %v8301 = vadd.f32 %v8252, %v8300
      %v8302 = vpop.f32.mrf.mxu0
      %v8303 = vadd.f32 %v8254, %v8302
      %8304 = vdwg.mxu0
      %8305 = vmatpush.bf16.msra.mxu0 %v6931
      %8306 = vmatpush.bf16.msra.mxu0 %v6924
      %8307 = vmatpush.bf16.msra.mxu0 %v6917
      %8308 = vmatpush.bf16.msra.mxu0 %v6910
      %8309 = vmatpush.bf16.msra.mxu0 %v6903
      %8310 = vmatpush.bf16.msra.mxu0 %v6896
      %8311 = vmatpush.bf16.msra.mxu0 %v6889
      %8312 = vmatpush.bf16.msra.mxu0 %v6882
      %8313 = vmatmul.bf16.gmra.mxu0 %v5869
      %v8314 = vpop.f32.mrf.mxu0
      %v8315 = vadd.f32 %v6164, %v8314
      %v8316 = vpop.f32.mrf.mxu0
      %v8317 = vadd.f32 %v6164, %v8316
      %8318 = vmatmul.bf16.gmra.mxu0 %v5873
      %v8319 = vpop.f32.mrf.mxu0
      %v8320 = vadd.f32 %v6164, %v8319
      %v8321 = vpop.f32.mrf.mxu0
      %v8322 = vadd.f32 %v6164, %v8321
      %8323 = vmatmul.bf16.gmra.mxu0 %v5877
      %v8324 = vpop.f32.mrf.mxu0
      %v8325 = vadd.f32 %v6164, %v8324
      %v8326 = vpop.f32.mrf.mxu0
      %v8327 = vadd.f32 %v6164, %v8326
      %8328 = vmatmul.bf16.gmra.mxu0 %v5881
      %v8329 = vpop.f32.mrf.mxu0
      %v8330 = vadd.f32 %v6164, %v8329
      %v8331 = vpop.f32.mrf.mxu0
      %v8332 = vadd.f32 %v6164, %v8331
      %8333 = vmatmul.bf16.gmra.mxu0 %v5885
      %v8334 = vpop.f32.mrf.mxu0
      %v8335 = vadd.f32 %v6164, %v8334
      %v8336 = vpop.f32.mrf.mxu0
      %v8337 = vadd.f32 %v6164, %v8336
      %8338 = vmatmul.bf16.gmra.mxu0 %v5889
      %v8339 = vpop.f32.mrf.mxu0
      %v8340 = vadd.f32 %v6164, %v8339
      %v8341 = vpop.f32.mrf.mxu0
      %v8342 = vadd.f32 %v6164, %v8341
      %8343 = vmatmul.bf16.gmra.mxu0 %v5893
      %v8344 = vpop.f32.mrf.mxu0
      %v8345 = vadd.f32 %v6164, %v8344
      %v8346 = vpop.f32.mrf.mxu0
      %v8347 = vadd.f32 %v6164, %v8346
      %8348 = vmatmul.bf16.gmra.mxu0 %v5897
      %v8349 = vpop.f32.mrf.mxu0
      %v8350 = vadd.f32 %v6164, %v8349
      %v8351 = vpop.f32.mrf.mxu0
      %v8352 = vadd.f32 %v6164, %v8351
      %8353 = vdwg.mxu0
      %8354 = vmatpush.bf16.msra.mxu0 %v6987
      %8355 = vmatpush.bf16.msra.mxu0 %v6980
      %8356 = vmatpush.bf16.msra.mxu0 %v6973
      %8357 = vmatpush.bf16.msra.mxu0 %v6966
      %8358 = vmatpush.bf16.msra.mxu0 %v6959
      %8359 = vmatpush.bf16.msra.mxu0 %v6952
      %8360 = vmatpush.bf16.msra.mxu0 %v6945
      %8361 = vmatpush.bf16.msra.mxu0 %v6938
      %8362 = vmatmul.bf16.gmra.mxu0 %v5870
      %v8363 = vpop.f32.mrf.mxu0
      %v8364 = vadd.f32 %v8315, %v8363
      %v8365 = vpop.f32.mrf.mxu0
      %v8366 = vadd.f32 %v8317, %v8365
      %8367 = vmatmul.bf16.gmra.mxu0 %v5874
      %v8368 = vpop.f32.mrf.mxu0
      %v8369 = vadd.f32 %v8320, %v8368
      %v8370 = vpop.f32.mrf.mxu0
      %v8371 = vadd.f32 %v8322, %v8370
      %8372 = vmatmul.bf16.gmra.mxu0 %v5878
      %v8373 = vpop.f32.mrf.mxu0
      %v8374 = vadd.f32 %v8325, %v8373
      %v8375 = vpop.f32.mrf.mxu0
      %v8376 = vadd.f32 %v8327, %v8375
      %8377 = vmatmul.bf16.gmra.mxu0 %v5882
      %v8378 = vpop.f32.mrf.mxu0
      %v8379 = vadd.f32 %v8330, %v8378
      %v8380 = vpop.f32.mrf.mxu0
      %v8381 = vadd.f32 %v8332, %v8380
      %8382 = vmatmul.bf16.gmra.mxu0 %v5886
      %v8383 = vpop.f32.mrf.mxu0
      %v8384 = vadd.f32 %v8335, %v8383
      %v8385 = vpop.f32.mrf.mxu0
      %v8386 = vadd.f32 %v8337, %v8385
      %8387 = vmatmul.bf16.gmra.mxu0 %v5890
      %v8388 = vpop.f32.mrf.mxu0
      %v8389 = vadd.f32 %v8340, %v8388
      %v8390 = vpop.f32.mrf.mxu0
      %v8391 = vadd.f32 %v8342, %v8390
      %8392 = vmatmul.bf16.gmra.mxu0 %v5894
      %v8393 = vpop.f32.mrf.mxu0
      %v8394 = vadd.f32 %v8345, %v8393
      %v8395 = vpop.f32.mrf.mxu0
      %v8396 = vadd.f32 %v8347, %v8395
      %8397 = vmatmul.bf16.gmra.mxu0 %v5898
      %v8398 = vpop.f32.mrf.mxu0
      %v8399 = vadd.f32 %v8350, %v8398
      %v8400 = vpop.f32.mrf.mxu0
      %v8401 = vadd.f32 %v8352, %v8400
      %8402 = vdwg.mxu0
      %8403 = vmatpush.bf16.msra.mxu0 %v7043
      %8404 = vmatpush.bf16.msra.mxu0 %v7036
      %8405 = vmatpush.bf16.msra.mxu0 %v7029
      %8406 = vmatpush.bf16.msra.mxu0 %v7022
      %8407 = vmatpush.bf16.msra.mxu0 %v7015
      %8408 = vmatpush.bf16.msra.mxu0 %v7008
      %8409 = vmatpush.bf16.msra.mxu0 %v7001
      %8410 = vmatpush.bf16.msra.mxu0 %v6994
      %8411 = vmatmul.bf16.gmra.mxu0 %v5871
      %v8412 = vpop.f32.mrf.mxu0
      %v8413 = vadd.f32 %v8364, %v8412
      %v8414 = vpop.f32.mrf.mxu0
      %v8415 = vadd.f32 %v8366, %v8414
      %8416 = vmatmul.bf16.gmra.mxu0 %v5875
      %v8417 = vpop.f32.mrf.mxu0
      %v8418 = vadd.f32 %v8369, %v8417
      %v8419 = vpop.f32.mrf.mxu0
      %v8420 = vadd.f32 %v8371, %v8419
      %8421 = vmatmul.bf16.gmra.mxu0 %v5879
      %v8422 = vpop.f32.mrf.mxu0
      %v8423 = vadd.f32 %v8374, %v8422
      %v8424 = vpop.f32.mrf.mxu0
      %v8425 = vadd.f32 %v8376, %v8424
      %8426 = vmatmul.bf16.gmra.mxu0 %v5883
      %v8427 = vpop.f32.mrf.mxu0
      %v8428 = vadd.f32 %v8379, %v8427
      %v8429 = vpop.f32.mrf.mxu0
      %v8430 = vadd.f32 %v8381, %v8429
      %8431 = vmatmul.bf16.gmra.mxu0 %v5887
      %v8432 = vpop.f32.mrf.mxu0
      %v8433 = vadd.f32 %v8384, %v8432
      %v8434 = vpop.f32.mrf.mxu0
      %v8435 = vadd.f32 %v8386, %v8434
      %8436 = vmatmul.bf16.gmra.mxu0 %v5891
      %v8437 = vpop.f32.mrf.mxu0
      %v8438 = vadd.f32 %v8389, %v8437
      %v8439 = vpop.f32.mrf.mxu0
      %v8440 = vadd.f32 %v8391, %v8439
      %8441 = vmatmul.bf16.gmra.mxu0 %v5895
      %v8442 = vpop.f32.mrf.mxu0
      %v8443 = vadd.f32 %v8394, %v8442
      %v8444 = vpop.f32.mrf.mxu0
      %v8445 = vadd.f32 %v8396, %v8444
      %8446 = vmatmul.bf16.gmra.mxu0 %v5899
      %v8447 = vpop.f32.mrf.mxu0
      %v8448 = vadd.f32 %v8399, %v8447
      %v8449 = vpop.f32.mrf.mxu0
      %v8450 = vadd.f32 %v8401, %v8449
      %8451 = vdwg.mxu0
      %8452 = vmatpush.bf16.msra.mxu0 %v7099
      %8453 = vmatpush.bf16.msra.mxu0 %v7092
      %8454 = vmatpush.bf16.msra.mxu0 %v7085
      %8455 = vmatpush.bf16.msra.mxu0 %v7078
      %8456 = vmatpush.bf16.msra.mxu0 %v7071
      %8457 = vmatpush.bf16.msra.mxu0 %v7064
      %8458 = vmatpush.bf16.msra.mxu0 %v7057
      %8459 = vmatpush.bf16.msra.mxu0 %v7050
      %8460 = vmatmul.bf16.gmra.mxu0 %v5872
      %v8461 = vpop.f32.mrf.mxu0
      %v8462 = vadd.f32 %v8413, %v8461
      %v8463 = vpop.f32.mrf.mxu0
      %v8464 = vadd.f32 %v8415, %v8463
      %8465 = vmatmul.bf16.gmra.mxu0 %v5876
      %v8466 = vpop.f32.mrf.mxu0
      %v8467 = vadd.f32 %v8418, %v8466
      %v8468 = vpop.f32.mrf.mxu0
      %v8469 = vadd.f32 %v8420, %v8468
      %8470 = vmatmul.bf16.gmra.mxu0 %v5880
      %v8471 = vpop.f32.mrf.mxu0
      %v8472 = vadd.f32 %v8423, %v8471
      %v8473 = vpop.f32.mrf.mxu0
      %v8474 = vadd.f32 %v8425, %v8473
      %8475 = vmatmul.bf16.gmra.mxu0 %v5884
      %v8476 = vpop.f32.mrf.mxu0
      %v8477 = vadd.f32 %v8428, %v8476
      %v8478 = vpop.f32.mrf.mxu0
      %v8479 = vadd.f32 %v8430, %v8478
      %8480 = vmatmul.bf16.gmra.mxu0 %v5888
      %v8481 = vpop.f32.mrf.mxu0
      %v8482 = vadd.f32 %v8433, %v8481
      %v8483 = vpop.f32.mrf.mxu0
      %v8484 = vadd.f32 %v8435, %v8483
      %8485 = vmatmul.bf16.gmra.mxu0 %v5892
      %v8486 = vpop.f32.mrf.mxu0
      %v8487 = vadd.f32 %v8438, %v8486
      %v8488 = vpop.f32.mrf.mxu0
      %v8489 = vadd.f32 %v8440, %v8488
      %8490 = vmatmul.bf16.gmra.mxu0 %v5896
      %v8491 = vpop.f32.mrf.mxu0
      %v8492 = vadd.f32 %v8443, %v8491
      %v8493 = vpop.f32.mrf.mxu0
      %v8494 = vadd.f32 %v8445, %v8493
      %8495 = vmatmul.bf16.gmra.mxu0 %v5900
      %v8496 = vpop.f32.mrf.mxu0
      %v8497 = vadd.f32 %v8448, %v8496
      %v8498 = vpop.f32.mrf.mxu0
      %v8499 = vadd.f32 %v8450, %v8498
      %8500 = vdwg.mxu0
      %8501 = vmatpush.bf16.msra.mxu0 %v6932
      %8502 = vmatpush.bf16.msra.mxu0 %v6925
      %8503 = vmatpush.bf16.msra.mxu0 %v6918
      %8504 = vmatpush.bf16.msra.mxu0 %v6911
      %8505 = vmatpush.bf16.msra.mxu0 %v6904
      %8506 = vmatpush.bf16.msra.mxu0 %v6897
      %8507 = vmatpush.bf16.msra.mxu0 %v6890
      %8508 = vmatpush.bf16.msra.mxu0 %v6883
      %8509 = vmatmul.bf16.gmra.mxu0 %v5869
      %v8510 = vpop.f32.mrf.mxu0
      %v8511 = vadd.f32 %v6165, %v8510
      %v8512 = vpop.f32.mrf.mxu0
      %v8513 = vadd.f32 %v6165, %v8512
      %8514 = vmatmul.bf16.gmra.mxu0 %v5873
      %v8515 = vpop.f32.mrf.mxu0
      %v8516 = vadd.f32 %v6165, %v8515
      %v8517 = vpop.f32.mrf.mxu0
      %v8518 = vadd.f32 %v6165, %v8517
      %8519 = vmatmul.bf16.gmra.mxu0 %v5877
      %v8520 = vpop.f32.mrf.mxu0
      %v8521 = vadd.f32 %v6165, %v8520
      %v8522 = vpop.f32.mrf.mxu0
      %v8523 = vadd.f32 %v6165, %v8522
      %8524 = vmatmul.bf16.gmra.mxu0 %v5881
      %v8525 = vpop.f32.mrf.mxu0
      %v8526 = vadd.f32 %v6165, %v8525
      %v8527 = vpop.f32.mrf.mxu0
      %v8528 = vadd.f32 %v6165, %v8527
      %8529 = vmatmul.bf16.gmra.mxu0 %v5885
      %v8530 = vpop.f32.mrf.mxu0
      %v8531 = vadd.f32 %v6165, %v8530
      %v8532 = vpop.f32.mrf.mxu0
      %v8533 = vadd.f32 %v6165, %v8532
      %8534 = vmatmul.bf16.gmra.mxu0 %v5889
      %v8535 = vpop.f32.mrf.mxu0
      %v8536 = vadd.f32 %v6165, %v8535
      %v8537 = vpop.f32.mrf.mxu0
      %v8538 = vadd.f32 %v6165, %v8537
      %8539 = vmatmul.bf16.gmra.mxu0 %v5893
      %v8540 = vpop.f32.mrf.mxu0
      %v8541 = vadd.f32 %v6165, %v8540
      %v8542 = vpop.f32.mrf.mxu0
      %v8543 = vadd.f32 %v6165, %v8542
      %8544 = vmatmul.bf16.gmra.mxu0 %v5897
      %v8545 = vpop.f32.mrf.mxu0
      %v8546 = vadd.f32 %v6165, %v8545
      %v8547 = vpop.f32.mrf.mxu0
      %v8548 = vadd.f32 %v6165, %v8547
      %8549 = vdwg.mxu0
      %8550 = vmatpush.bf16.msra.mxu0 %v6988
      %8551 = vmatpush.bf16.msra.mxu0 %v6981
      %8552 = vmatpush.bf16.msra.mxu0 %v6974
      %8553 = vmatpush.bf16.msra.mxu0 %v6967
      %8554 = vmatpush.bf16.msra.mxu0 %v6960
      %8555 = vmatpush.bf16.msra.mxu0 %v6953
      %8556 = vmatpush.bf16.msra.mxu0 %v6946
      %8557 = vmatpush.bf16.msra.mxu0 %v6939
      %8558 = vmatmul.bf16.gmra.mxu0 %v5870
      %v8559 = vpop.f32.mrf.mxu0
      %v8560 = vadd.f32 %v8511, %v8559
      %v8561 = vpop.f32.mrf.mxu0
      %v8562 = vadd.f32 %v8513, %v8561
      %8563 = vmatmul.bf16.gmra.mxu0 %v5874
      %v8564 = vpop.f32.mrf.mxu0
      %v8565 = vadd.f32 %v8516, %v8564
      %v8566 = vpop.f32.mrf.mxu0
      %v8567 = vadd.f32 %v8518, %v8566
      %8568 = vmatmul.bf16.gmra.mxu0 %v5878
      %v8569 = vpop.f32.mrf.mxu0
      %v8570 = vadd.f32 %v8521, %v8569
      %v8571 = vpop.f32.mrf.mxu0
      %v8572 = vadd.f32 %v8523, %v8571
      %8573 = vmatmul.bf16.gmra.mxu0 %v5882
      %v8574 = vpop.f32.mrf.mxu0
      %v8575 = vadd.f32 %v8526, %v8574
      %v8576 = vpop.f32.mrf.mxu0
      %v8577 = vadd.f32 %v8528, %v8576
      %8578 = vmatmul.bf16.gmra.mxu0 %v5886
      %v8579 = vpop.f32.mrf.mxu0
      %v8580 = vadd.f32 %v8531, %v8579
      %v8581 = vpop.f32.mrf.mxu0
      %v8582 = vadd.f32 %v8533, %v8581
      %8583 = vmatmul.bf16.gmra.mxu0 %v5890
      %v8584 = vpop.f32.mrf.mxu0
      %v8585 = vadd.f32 %v8536, %v8584
      %v8586 = vpop.f32.mrf.mxu0
      %v8587 = vadd.f32 %v8538, %v8586
      %8588 = vmatmul.bf16.gmra.mxu0 %v5894
      %v8589 = vpop.f32.mrf.mxu0
      %v8590 = vadd.f32 %v8541, %v8589
      %v8591 = vpop.f32.mrf.mxu0
      %v8592 = vadd.f32 %v8543, %v8591
      %8593 = vmatmul.bf16.gmra.mxu0 %v5898
      %v8594 = vpop.f32.mrf.mxu0
      %v8595 = vadd.f32 %v8546, %v8594
      %v8596 = vpop.f32.mrf.mxu0
      %v8597 = vadd.f32 %v8548, %v8596
      %8598 = vdwg.mxu0
      %8599 = vmatpush.bf16.msra.mxu0 %v7044
      %8600 = vmatpush.bf16.msra.mxu0 %v7037
      %8601 = vmatpush.bf16.msra.mxu0 %v7030
      %8602 = vmatpush.bf16.msra.mxu0 %v7023
      %8603 = vmatpush.bf16.msra.mxu0 %v7016
      %8604 = vmatpush.bf16.msra.mxu0 %v7009
      %8605 = vmatpush.bf16.msra.mxu0 %v7002
      %8606 = vmatpush.bf16.msra.mxu0 %v6995
      %8607 = vmatmul.bf16.gmra.mxu0 %v5871
      %v8608 = vpop.f32.mrf.mxu0
      %v8609 = vadd.f32 %v8560, %v8608
      %v8610 = vpop.f32.mrf.mxu0
      %v8611 = vadd.f32 %v8562, %v8610
      %8612 = vmatmul.bf16.gmra.mxu0 %v5875
      %v8613 = vpop.f32.mrf.mxu0
      %v8614 = vadd.f32 %v8565, %v8613
      %v8615 = vpop.f32.mrf.mxu0
      %v8616 = vadd.f32 %v8567, %v8615
      %8617 = vmatmul.bf16.gmra.mxu0 %v5879
      %v8618 = vpop.f32.mrf.mxu0
      %v8619 = vadd.f32 %v8570, %v8618
      %v8620 = vpop.f32.mrf.mxu0
      %v8621 = vadd.f32 %v8572, %v8620
      %8622 = vmatmul.bf16.gmra.mxu0 %v5883
      %v8623 = vpop.f32.mrf.mxu0
      %v8624 = vadd.f32 %v8575, %v8623
      %v8625 = vpop.f32.mrf.mxu0
      %v8626 = vadd.f32 %v8577, %v8625
      %8627 = vmatmul.bf16.gmra.mxu0 %v5887
      %v8628 = vpop.f32.mrf.mxu0
      %v8629 = vadd.f32 %v8580, %v8628
      %v8630 = vpop.f32.mrf.mxu0
      %v8631 = vadd.f32 %v8582, %v8630
      %8632 = vmatmul.bf16.gmra.mxu0 %v5891
      %v8633 = vpop.f32.mrf.mxu0
      %v8634 = vadd.f32 %v8585, %v8633
      %v8635 = vpop.f32.mrf.mxu0
      %v8636 = vadd.f32 %v8587, %v8635
      %8637 = vmatmul.bf16.gmra.mxu0 %v5895
      %v8638 = vpop.f32.mrf.mxu0
      %v8639 = vadd.f32 %v8590, %v8638
      %v8640 = vpop.f32.mrf.mxu0
      %v8641 = vadd.f32 %v8592, %v8640
      %8642 = vmatmul.bf16.gmra.mxu0 %v5899
      %v8643 = vpop.f32.mrf.mxu0
      %v8644 = vadd.f32 %v8595, %v8643
      %v8645 = vpop.f32.mrf.mxu0
      %v8646 = vadd.f32 %v8597, %v8645
      %8647 = vdwg.mxu0
      %8648 = vmatpush.bf16.msra.mxu0 %v7100
      %8649 = vmatpush.bf16.msra.mxu0 %v7093
      %8650 = vmatpush.bf16.msra.mxu0 %v7086
      %8651 = vmatpush.bf16.msra.mxu0 %v7079
      %8652 = vmatpush.bf16.msra.mxu0 %v7072
      %8653 = vmatpush.bf16.msra.mxu0 %v7065
      %8654 = vmatpush.bf16.msra.mxu0 %v7058
      %8655 = vmatpush.bf16.msra.mxu0 %v7051
      %8656 = vmatmul.bf16.gmra.mxu0 %v5872
      %v8657 = vpop.f32.mrf.mxu0
      %v8658 = vadd.f32 %v8609, %v8657
      %v8659 = vpop.f32.mrf.mxu0
      %v8660 = vadd.f32 %v8611, %v8659
      %8661 = vmatmul.bf16.gmra.mxu0 %v5876
      %v8662 = vpop.f32.mrf.mxu0
      %v8663 = vadd.f32 %v8614, %v8662
      %v8664 = vpop.f32.mrf.mxu0
      %v8665 = vadd.f32 %v8616, %v8664
      %8666 = vmatmul.bf16.gmra.mxu0 %v5880
      %v8667 = vpop.f32.mrf.mxu0
      %v8668 = vadd.f32 %v8619, %v8667
      %v8669 = vpop.f32.mrf.mxu0
      %v8670 = vadd.f32 %v8621, %v8669
      %8671 = vmatmul.bf16.gmra.mxu0 %v5884
      %v8672 = vpop.f32.mrf.mxu0
      %v8673 = vadd.f32 %v8624, %v8672
      %v8674 = vpop.f32.mrf.mxu0
      %v8675 = vadd.f32 %v8626, %v8674
      %8676 = vmatmul.bf16.gmra.mxu0 %v5888
      %v8677 = vpop.f32.mrf.mxu0
      %v8678 = vadd.f32 %v8629, %v8677
      %v8679 = vpop.f32.mrf.mxu0
      %v8680 = vadd.f32 %v8631, %v8679
      %8681 = vmatmul.bf16.gmra.mxu0 %v5892
      %v8682 = vpop.f32.mrf.mxu0
      %v8683 = vadd.f32 %v8634, %v8682
      %v8684 = vpop.f32.mrf.mxu0
      %v8685 = vadd.f32 %v8636, %v8684
      %8686 = vmatmul.bf16.gmra.mxu0 %v5896
      %v8687 = vpop.f32.mrf.mxu0
      %v8688 = vadd.f32 %v8639, %v8687
      %v8689 = vpop.f32.mrf.mxu0
      %v8690 = vadd.f32 %v8641, %v8689
      %8691 = vmatmul.bf16.gmra.mxu0 %v5900
      %v8692 = vpop.f32.mrf.mxu0
      %v8693 = vadd.f32 %v8644, %v8692
      %v8694 = vpop.f32.mrf.mxu0
      %v8695 = vadd.f32 %v8646, %v8694
      %8696 = vdwg.mxu0
      %v8697 = vmax.f32 %v7482, 0.0
      %v8698 = vmax.f32 %v7678, 0.0
      %v8699 = vmax.f32 %v7874, 0.0
      %v8700 = vmax.f32 %v8070, 0.0
      %v8701 = vmax.f32 %v8266, 0.0
      %v8702 = vmax.f32 %v8462, 0.0
      %v8703 = vmax.f32 %v8658, 0.0
      %v8704 = vmax.f32 %v7484, 0.0
      %v8705 = vmax.f32 %v7680, 0.0
      %v8706 = vmax.f32 %v7876, 0.0
      %v8707 = vmax.f32 %v8072, 0.0
      %v8708 = vmax.f32 %v8268, 0.0
      %v8709 = vmax.f32 %v8464, 0.0
      %v8710 = vmax.f32 %v8660, 0.0
      %v8711 = vmax.f32 %v7487, 0.0
      %v8712 = vmax.f32 %v7683, 0.0
      %v8713 = vmax.f32 %v7879, 0.0
      %v8714 = vmax.f32 %v8075, 0.0
      %v8715 = vmax.f32 %v8271, 0.0
      %v8716 = vmax.f32 %v8467, 0.0
      %v8717 = vmax.f32 %v8663, 0.0
      %v8718 = vmax.f32 %v7489, 0.0
      %v8719 = vmax.f32 %v7685, 0.0
      %v8720 = vmax.f32 %v7881, 0.0
      %v8721 = vmax.f32 %v8077, 0.0
      %v8722 = vmax.f32 %v8273, 0.0
      %v8723 = vmax.f32 %v8469, 0.0
      %v8724 = vmax.f32 %v8665, 0.0
      %v8725 = vmax.f32 %v7492, 0.0
      %v8726 = vmax.f32 %v7688, 0.0
      %v8727 = vmax.f32 %v7884, 0.0
      %v8728 = vmax.f32 %v8080, 0.0
      %v8729 = vmax.f32 %v8276, 0.0
      %v8730 = vmax.f32 %v8472, 0.0
      %v8731 = vmax.f32 %v8668, 0.0
      %v8732 = vmax.f32 %v7494, 0.0
      %v8733 = vmax.f32 %v7690, 0.0
      %v8734 = vmax.f32 %v7886, 0.0
      %v8735 = vmax.f32 %v8082, 0.0
      %v8736 = vmax.f32 %v8278, 0.0
      %v8737 = vmax.f32 %v8474, 0.0
      %v8738 = vmax.f32 %v8670, 0.0
      %v8739 = vmax.f32 %v7497, 0.0
      %v8740 = vmax.f32 %v7693, 0.0
      %v8741 = vmax.f32 %v7889, 0.0
      %v8742 = vmax.f32 %v8085, 0.0
      %v8743 = vmax.f32 %v8281, 0.0
      %v8744 = vmax.f32 %v8477, 0.0
      %v8745 = vmax.f32 %v8673, 0.0
      %v8746 = vmax.f32 %v7499, 0.0
      %v8747 = vmax.f32 %v7695, 0.0
      %v8748 = vmax.f32 %v7891, 0.0
      %v8749 = vmax.f32 %v8087, 0.0
      %v8750 = vmax.f32 %v8283, 0.0
      %v8751 = vmax.f32 %v8479, 0.0
      %v8752 = vmax.f32 %v8675, 0.0
      %v8753 = vmax.f32 %v7502, 0.0
      %v8754 = vmax.f32 %v7698, 0.0
      %v8755 = vmax.f32 %v7894, 0.0
      %v8756 = vmax.f32 %v8090, 0.0
      %v8757 = vmax.f32 %v8286, 0.0
      %v8758 = vmax.f32 %v8482, 0.0
      %v8759 = vmax.f32 %v8678, 0.0
      %v8760 = vmax.f32 %v7504, 0.0
      %v8761 = vmax.f32 %v7700, 0.0
      %v8762 = vmax.f32 %v7896, 0.0
      %v8763 = vmax.f32 %v8092, 0.0
      %v8764 = vmax.f32 %v8288, 0.0
      %v8765 = vmax.f32 %v8484, 0.0
      %v8766 = vmax.f32 %v8680, 0.0
      %v8767 = vmax.f32 %v7507, 0.0
      %v8768 = vmax.f32 %v7703, 0.0
      %v8769 = vmax.f32 %v7899, 0.0
      %v8770 = vmax.f32 %v8095, 0.0
      %v8771 = vmax.f32 %v8291, 0.0
      %v8772 = vmax.f32 %v8487, 0.0
      %v8773 = vmax.f32 %v8683, 0.0
      %v8774 = vmax.f32 %v7509, 0.0
      %v8775 = vmax.f32 %v7705, 0.0
      %v8776 = vmax.f32 %v7901, 0.0
      %v8777 = vmax.f32 %v8097, 0.0
      %v8778 = vmax.f32 %v8293, 0.0
      %v8779 = vmax.f32 %v8489, 0.0
      %v8780 = vmax.f32 %v8685, 0.0
      %v8781 = vmax.f32 %v7512, 0.0
      %v8782 = vmax.f32 %v7708, 0.0
      %v8783 = vmax.f32 %v7904, 0.0
      %v8784 = vmax.f32 %v8100, 0.0
      %v8785 = vmax.f32 %v8296, 0.0
      %v8786 = vmax.f32 %v8492, 0.0
      %v8787 = vmax.f32 %v8688, 0.0
      %v8788 = vmax.f32 %v7514, 0.0
      %v8789 = vmax.f32 %v7710, 0.0
      %v8790 = vmax.f32 %v7906, 0.0
      %v8791 = vmax.f32 %v8102, 0.0
      %v8792 = vmax.f32 %v8298, 0.0
      %v8793 = vmax.f32 %v8494, 0.0
      %v8794 = vmax.f32 %v8690, 0.0
      %v8795 = vmax.f32 %v7517, 0.0
      %v8796 = vmax.f32 %v7713, 0.0
      %v8797 = vmax.f32 %v7909, 0.0
      %v8798 = vmax.f32 %v8105, 0.0
      %v8799 = vmax.f32 %v8301, 0.0
      %v8800 = vmax.f32 %v8497, 0.0
      %v8801 = vmax.f32 %v8693, 0.0
      %v8802 = vmax.f32 %v7519, 0.0
      %v8803 = vmax.f32 %v7715, 0.0
      %v8804 = vmax.f32 %v7911, 0.0
      %v8805 = vmax.f32 %v8107, 0.0
      %v8806 = vmax.f32 %v8303, 0.0
      %v8807 = vmax.f32 %v8499, 0.0
      %v8808 = vmax.f32 %v8695, 0.0
      %8809 = vst [vmem:[%s555] sm:$0xff] %v8697
      %8810 = vst [vmem:[%s555 + $0x8] sm:$0xff] %v8698
      %8811 = vst [vmem:[%s555 + $0x10] sm:$0xff] %v8699
      %8812 = vst [vmem:[%s555 + $0x18] sm:$0xff] %v8700
      %8813 = vst [vmem:[%s555 + $0x20] sm:$0xff] %v8701
      %8814 = vst [vmem:[%s555 + $0x28] sm:$0xff] %v8702
      %8815 = vst.msk [vmem:[%s555 + $0x30] sm:$0xff] %vm1912, %v8703
      %8816 = vst [vmem:[%s555 + $0x38] sm:$0xff] %v8704
      %8817 = vst [vmem:[%s555 + $0x40] sm:$0xff] %v8705
      %8818 = vst [vmem:[%s555 + $0x48] sm:$0xff] %v8706
      %8819 = vst [vmem:[%s555 + $0x50] sm:$0xff] %v8707
      %8820 = vst [vmem:[%s555 + $0x58] sm:$0xff] %v8708
      %8821 = vst [vmem:[%s555 + $0x60] sm:$0xff] %v8709
      %8822 = vst.msk [vmem:[%s555 + $0x68] sm:$0xff] %vm1912, %v8710
      %8823 = vst [vmem:[%s555 + $0x70] sm:$0xff] %v8711
      %8824 = vst [vmem:[%s555 + $0x78] sm:$0xff] %v8712
      %8825 = vst [vmem:[%s555 + $0x80] sm:$0xff] %v8713
      %8826 = vst [vmem:[%s555 + $0x88] sm:$0xff] %v8714
      %8827 = vst [vmem:[%s555 + $0x90] sm:$0xff] %v8715
      %8828 = vst [vmem:[%s555 + $0x98] sm:$0xff] %v8716
      %8829 = vst.msk [vmem:[%s555 + $0xa0] sm:$0xff] %vm1912, %v8717
      %8830 = vst [vmem:[%s555 + $0xa8] sm:$0xff] %v8718
      %8831 = vst [vmem:[%s555 + $0xb0] sm:$0xff] %v8719
      %8832 = vst [vmem:[%s555 + $0xb8] sm:$0xff] %v8720
      %8833 = vst [vmem:[%s555 + $0xc0] sm:$0xff] %v8721
      %8834 = vst [vmem:[%s555 + $0xc8] sm:$0xff] %v8722
      %8835 = vst [vmem:[%s555 + $0xd0] sm:$0xff] %v8723
      %8836 = vst.msk [vmem:[%s555 + $0xd8] sm:$0xff] %vm1912, %v8724
      %8837 = vst [vmem:[%s555 + $0xe0] sm:$0xff] %v8725
      %8838 = vst [vmem:[%s555 + $0xe8] sm:$0xff] %v8726
      %8839 = vst [vmem:[%s555 + $0xf0] sm:$0xff] %v8727
      %8840 = vst [vmem:[%s555 + $0xf8] sm:$0xff] %v8728
      %8841 = vst [vmem:[%s555 + $0x100] sm:$0xff] %v8729
      %8842 = vst [vmem:[%s555 + $0x108] sm:$0xff] %v8730
      %8843 = vst.msk [vmem:[%s555 + $0x110] sm:$0xff] %vm1912, %v8731
      %8844 = vst [vmem:[%s555 + $0x118] sm:$0xff] %v8732
      %8845 = vst [vmem:[%s555 + $0x120] sm:$0xff] %v8733
      %8846 = vst [vmem:[%s555 + $0x128] sm:$0xff] %v8734
      %8847 = vst [vmem:[%s555 + $0x130] sm:$0xff] %v8735
      %8848 = vst [vmem:[%s555 + $0x138] sm:$0xff] %v8736
      %8849 = vst [vmem:[%s555 + $0x140] sm:$0xff] %v8737
      %8850 = vst.msk [vmem:[%s555 + $0x148] sm:$0xff] %vm1912, %v8738
      %8851 = vst [vmem:[%s555 + $0x150] sm:$0xff] %v8739
      %8852 = vst [vmem:[%s555 + $0x158] sm:$0xff] %v8740
      %8853 = vst [vmem:[%s555 + $0x160] sm:$0xff] %v8741
      %8854 = vst [vmem:[%s555 + $0x168] sm:$0xff] %v8742
      %8855 = vst [vmem:[%s555 + $0x170] sm:$0xff] %v8743
      %8856 = vst [vmem:[%s555 + $0x178] sm:$0xff] %v8744
      %8857 = vst.msk [vmem:[%s555 + $0x180] sm:$0xff] %vm1912, %v8745
      %8858 = vst [vmem:[%s555 + $0x188] sm:$0xff] %v8746
      %8859 = vst [vmem:[%s555 + $0x190] sm:$0xff] %v8747
      %8860 = vst [vmem:[%s555 + $0x198] sm:$0xff] %v8748
      %8861 = vst [vmem:[%s555 + $0x1a0] sm:$0xff] %v8749
      %8862 = vst [vmem:[%s555 + $0x1a8] sm:$0xff] %v8750
      %8863 = vst [vmem:[%s555 + $0x1b0] sm:$0xff] %v8751
      %8864 = vst.msk [vmem:[%s555 + $0x1b8] sm:$0xff] %vm1912, %v8752
      %8865 = vst [vmem:[%s555 + $0x1c0] sm:$0xff] %v8753
      %8866 = vst [vmem:[%s555 + $0x1c8] sm:$0xff] %v8754
      %8867 = vst [vmem:[%s555 + $0x1d0] sm:$0xff] %v8755
      %8868 = vst [vmem:[%s555 + $0x1d8] sm:$0xff] %v8756
      %8869 = vst [vmem:[%s555 + $0x1e0] sm:$0xff] %v8757
      %8870 = vst [vmem:[%s555 + $0x1e8] sm:$0xff] %v8758
      %8871 = vst.msk [vmem:[%s555 + $0x1f0] sm:$0xff] %vm1912, %v8759
      %8872 = vst [vmem:[%s555 + $0x1f8] sm:$0xff] %v8760
      %8873 = vst [vmem:[%s555 + $0x200] sm:$0xff] %v8761
      %8874 = vst [vmem:[%s555 + $0x208] sm:$0xff] %v8762
      %8875 = vst [vmem:[%s555 + $0x210] sm:$0xff] %v8763
      %8876 = vst [vmem:[%s555 + $0x218] sm:$0xff] %v8764
      %8877 = vst [vmem:[%s555 + $0x220] sm:$0xff] %v8765
      %8878 = vst.msk [vmem:[%s555 + $0x228] sm:$0xff] %vm1912, %v8766
      %8879 = vst [vmem:[%s555 + $0x230] sm:$0xff] %v8767
      %8880 = vst [vmem:[%s555 + $0x238] sm:$0xff] %v8768
      %8881 = vst [vmem:[%s555 + $0x240] sm:$0xff] %v8769
      %8882 = vst [vmem:[%s555 + $0x248] sm:$0xff] %v8770
      %8883 = vst [vmem:[%s555 + $0x250] sm:$0xff] %v8771
      %8884 = vst [vmem:[%s555 + $0x258] sm:$0xff] %v8772
      %8885 = vst.msk [vmem:[%s555 + $0x260] sm:$0xff] %vm1912, %v8773
      %8886 = vst [vmem:[%s555 + $0x268] sm:$0xff] %v8774
      %8887 = vst [vmem:[%s555 + $0x270] sm:$0xff] %v8775
      %8888 = vst [vmem:[%s555 + $0x278] sm:$0xff] %v8776
      %8889 = vst [vmem:[%s555 + $0x280] sm:$0xff] %v8777
      %8890 = vst [vmem:[%s555 + $0x288] sm:$0xff] %v8778
      %8891 = vst [vmem:[%s555 + $0x290] sm:$0xff] %v8779
      %8892 = vst.msk [vmem:[%s555 + $0x298] sm:$0xff] %vm1912, %v8780
      %8893 = vst [vmem:[%s555 + $0x2a0] sm:$0xff] %v8781
      %8894 = vst [vmem:[%s555 + $0x2a8] sm:$0xff] %v8782
      %8895 = vst [vmem:[%s555 + $0x2b0] sm:$0xff] %v8783
      %8896 = vst [vmem:[%s555 + $0x2b8] sm:$0xff] %v8784
      %8897 = vst [vmem:[%s555 + $0x2c0] sm:$0xff] %v8785
      %8898 = vst [vmem:[%s555 + $0x2c8] sm:$0xff] %v8786
      %8899 = vst.msk [vmem:[%s555 + $0x2d0] sm:$0xff] %vm1912, %v8787
      %8900 = vst [vmem:[%s555 + $0x2d8] sm:$0xff] %v8788
      %8901 = vst [vmem:[%s555 + $0x2e0] sm:$0xff] %v8789
      %8902 = vst [vmem:[%s555 + $0x2e8] sm:$0xff] %v8790
      %8903 = vst [vmem:[%s555 + $0x2f0] sm:$0xff] %v8791
      %8904 = vst [vmem:[%s555 + $0x2f8] sm:$0xff] %v8792
      %8905 = vst [vmem:[%s555 + $0x300] sm:$0xff] %v8793
      %8906 = vst.msk [vmem:[%s555 + $0x308] sm:$0xff] %vm1912, %v8794
      %8907 = vst [vmem:[%s555 + $0x310] sm:$0xff] %v8795
      %8908 = vst [vmem:[%s555 + $0x318] sm:$0xff] %v8796
      %8909 = vst [vmem:[%s555 + $0x320] sm:$0xff] %v8797
      %8910 = vst [vmem:[%s555 + $0x328] sm:$0xff] %v8798
      %8911 = vst [vmem:[%s555 + $0x330] sm:$0xff] %v8799
      %8912 = vst [vmem:[%s555 + $0x338] sm:$0xff] %v8800
      %8913 = vst.msk [vmem:[%s555 + $0x340] sm:$0xff] %vm1912, %v8801
      %8914 = vst [vmem:[%s555 + $0x348] sm:$0xff] %v8802
      %8915 = vst [vmem:[%s555 + $0x350] sm:$0xff] %v8803
      %8916 = vst [vmem:[%s555 + $0x358] sm:$0xff] %v8804
      %8917 = vst [vmem:[%s555 + $0x360] sm:$0xff] %v8805
      %8918 = vst [vmem:[%s555 + $0x368] sm:$0xff] %v8806
      %8919 = vst [vmem:[%s555 + $0x370] sm:$0xff] %v8807
      %8920 = vst.msk [vmem:[%s555 + $0x378] sm:$0xff] %vm1912, %v8808
      %s8921 = smul.u32 16, %s28
      %p8922 = scmp.lt.s32.totalorder %s8921, 31
      %s8923 = scalar_select %p8922, %s8921, 31
      %s8924 = smul.addr %s8923, 7
      %s8925 = smul.addr %s8924, 8
      %s8926 = scalar_lea.vmem %s17, %s8925
      // Predicated region
      $region89: #{ae_forward.1} parent=87 // pred_check
        %p8927 = pneg %p408
      $region90: #{ae_forward.1} parent=87 // pred_check_branch
        %8929 = sbr.rel (%p8927) target = $region92
      $region91: #{ae_forward.1} parent=87 // pred_region
        %s8930 = smul.u32 16, %s28
      $region92: #{ae_forward.1} parent=87 // pred_fallthru
        _
    $region88: #{ae_forward.1} parent=5 // pred_fallthru
      _
    %p8931 = scmp.le.s32.totalorder 2, %s23
    // Predicated region
    $region93: #{ae_forward.1} parent=5 // pred_check
      %p8932 = pneg %p8931
    $region94: #{ae_forward.1} parent=5 // pred_check_branch
      %8934 = sbr.rel (%p8932) target = $region96
    $region95: #{ae_forward.1} parent=5 // pred_region
      %s8935 = ssub.s32 %s23, 2
      // Predicated region
      $region97: #{ae_forward.1} parent=95 // pred_check
        %p8936 = pneg %p414
      $region98: #{ae_forward.1} parent=95 // pred_check_branch
        %8938 = sbr.rel (%p8936) target = $region100
      $region99: #{ae_forward.1} parent=95 // pred_region
        %s8939 = smul.u32 16, %s29
        %p8940 = scmp.lt.s32.totalorder %s8939, 31
        %s8941 = scalar_select %p8940, %s8939, 31
        %s8942 = smul.addr %s8941, 7
        %s8943 = smul.addr %s8942, 8
        %s8944 = scalar_lea.vmem %s17, %s8943
      $region100: #{ae_forward.1} parent=95 // pred_fallthru
        _
    $region96: #{ae_forward.1} parent=5 // pred_fallthru
      _
  $region6: #{ae_forward.1} parent=0 // loop_footer
    %s27 = sadd.s32 1, %s23
  $region7: #{ae_forward.1} parent=0 // loop_footer_branch
    %22 = sbr.rel target = $region3
  $region8: #{ae_forward.1} parent=0 // loop_exit
    _

</llo_original>
